<compile_context>
chip_gen: v7x
topology: tpu7x:2x2x1
jax: 0.10.0
libtpu: 0.0.40
codegen_flags: <defaults>
</compile_context>

<pallas_src>
import functools
import math

import jax
import jax.numpy as jnp
from jax.experimental import pallas as pl
from jax.experimental.pallas import tpu as pltpu


# ----------------------------------------------------------------------------
# In-kernel helpers
# ----------------------------------------------------------------------------
def _softplus(x):
    # Numerically stable softplus (log1p(exp(x)) overflows for large x).
    return jnp.maximum(x, 0.0) + jnp.log1p(jnp.exp(-jnp.abs(x)))


def _kl_sum(mu, sigma, prior_mu, prior_sigma):
    """Summed KL( N(mu, sigma^2) || N(prior_mu, prior_sigma^2) )."""
    return jnp.sum(math.log(prior_sigma) - jnp.log(sigma)
                   + (sigma * sigma + (mu - prior_mu) ** 2)
                   / (2.0 * prior_sigma * prior_sigma) - 0.5)


def _lstm_step(x_t, h, c, w, bias, e, hdim):
    """One LSTM step.  w: packed (E+H, 4H) weight [W_ih^T ; W_hh^T];
    bias: (1, 4H) = b_ih + b_hh.  Gate order (i, f, g, o)."""
    gates = (jnp.dot(x_t, w[:e, :], preferred_element_type=jnp.float32)
             + jnp.dot(h, w[e:, :], preferred_element_type=jnp.float32)
             + bias)                                              # (B, 4H)
    # Full-width activations: 1 sigmoid + 1 tanh over (B, 4H), sliced after.
    sig = jax.nn.sigmoid(gates)
    tan = jnp.tanh(gates)
    i_t = sig[:, 0:hdim]
    f_t = sig[:, hdim:2 * hdim]
    o_t = sig[:, 3 * hdim:4 * hdim]
    g_t = tan[:, 2 * hdim:3 * hdim]
    c_new = f_t * c + i_t * g_t
    h_new = o_t * jnp.tanh(c_new)
    return h_new, c_new


# ----------------------------------------------------------------------------
# Fully fused kernel: encoder + decoder + NLL for one Monte-Carlo sample
# (the MC sample index is the "parallel" grid axis).
# ----------------------------------------------------------------------------
def _fused_kernel(
        # data (shared across MC samples)
        x_ref, y_ref, tgt_ref, lp_ref, dabs_ref,
        # embedding params, transposed: weight (in, E), bias (1, E)
        ew_mu_ref, ew_rho_ref, eb_mu_ref, eb_rho_ref,
        # lstm1 packed params: weight (E+H, 4H), bias (2, 4H)
        l1w_mu_ref, l1w_rho_ref, l1b_mu_ref, l1b_rho_ref,
        # lstm2 packed params
        l2w_mu_ref, l2w_rho_ref, l2b_mu_ref, l2b_rho_ref,
        # decoder params: weight (H, out+3), bias (1, out+3)
        dw_mu_ref, dw_rho_ref, db_mu_ref, db_rho_ref,
        # per-MC eps blocks (leading num_mc axis squeezed away by BlockSpec)
        eps_e1w_ref, eps_e1b_ref, eps_l1w_ref, eps_l1b_ref,
        eps_e2w_ref, eps_e2b_ref, eps_l2w_ref, eps_l2b_ref,
        eps_dw_ref, eps_db_ref,
        # outputs
        pred_ref, nll_ref, kl_ref,
        # scratch (per-step sampled LSTM weights, kept in VMEM not vregs)
        w1_scr, w2_scr,
        *, obs_len, pred_len, batch, emb_dim, hid_dim,
        training, dt, prior_mu, prior_sigma):
    T, P, B, E, H = obs_len, pred_len, batch, emb_dim, hid_dim

    # ---- hoisted: sigma = softplus(rho) and the eps-independent KL ----------
    ew_mu = ew_mu_ref[...];   ew_sig = _softplus(ew_rho_ref[...])
    eb_mu = eb_mu_ref[...];   eb_sig = _softplus(eb_rho_ref[...])
    l1w_mu = l1w_mu_ref[...]; l1w_sig = _softplus(l1w_rho_ref[...])
    l1b_mu = l1b_mu_ref[...]; l1b_sig = _softplus(l1b_rho_ref[...])
    l2w_mu = l2w_mu_ref[...]; l2w_sig = _softplus(l2w_rho_ref[...])
    l2b_mu = l2b_mu_ref[...]; l2b_sig = _softplus(l2b_rho_ref[...])
    dw_mu = dw_mu_ref[...];   dw_sig = _softplus(dw_rho_ref[...])
    db_mu = db_mu_ref[...];   db_sig = _softplus(db_rho_ref[...])

    kl_emb = (_kl_sum(ew_mu, ew_sig, prior_mu, prior_sigma)
              + _kl_sum(eb_mu, eb_sig, prior_mu, prior_sigma))
    kl_l1 = (_kl_sum(l1w_mu, l1w_sig, prior_mu, prior_sigma)
             + _kl_sum(l1b_mu, l1b_sig, prior_mu, prior_sigma))
    kl_l2 = (_kl_sum(l2w_mu, l2w_sig, prior_mu, prior_sigma)
             + _kl_sum(l2b_mu, l2b_sig, prior_mu, prior_sigma))
    kl_dec = (_kl_sum(dw_mu, dw_sig, prior_mu, prior_sigma)
              + _kl_sum(db_mu, db_sig, prior_mu, prior_sigma))
    # Reference: encode() adds kl_emb + (T * per-step lstm1 KL)/T (== one copy
    # of each), decode()'s KL (emb + lstm2 + decoder) is added at i == 0 only.
    kl_total = (kl_emb + kl_l1) + (kl_emb + kl_l2 + kl_dec)
    kl_ref[...] = jnp.broadcast_to(kl_total, (1, 1))

    # ---- encoder -------------------------------------------------------------
    # Embedding is sampled once for the whole observed sequence; compute it for
    # all T steps with ONE matmul on the flattened (T*B, in) input.
    w_e1 = ew_mu + ew_sig * eps_e1w_ref[...]                       # (in, E)
    b_e1 = eb_mu + eb_sig * eps_e1b_ref[...]                       # (1, E)
    emb_all = jnp.dot(x_ref[...], w_e1,
                      preferred_element_type=jnp.float32) + b_e1   # (T*B, E)

    # Per-step lstm1 weights: one vectorized sampling pass into VMEM scratch.
    w1_scr[...] = l1w_mu[None] + l1w_sig[None] * eps_l1w_ref[...]  # (T, E+H, 4H)
    b1_all = l1b_mu[None] + l1b_sig[None] * eps_l1b_ref[...]       # (T, 2, 4H)

    h = jnp.zeros((B, H), jnp.float32)
    c = jnp.zeros((B, H), jnp.float32)
    # TODO(synk): switch to lax.fori_loop(..., unroll=True) / a grid axis over
    # time if obs_len/pred_len grow large (bounds vreg pressure + compile time).
    for t in range(T):
        b_t = b1_all[t]                                            # (2, 4H)
        bias = b_t[0:1, :] + b_t[1:2, :]                           # b_ih + b_hh
        h, c = _lstm_step(emb_all[t * B:(t + 1) * B, :], h, c,
                          w1_scr[t], bias, E, H)

    # ---- decoder: all per-step weight sampling hoisted out of the recurrence
    we2_all = ew_mu[None] + ew_sig[None] * eps_e2w_ref[...]        # (P, in, E)
    be2_all = eb_mu[None] + eb_sig[None] * eps_e2b_ref[...]        # (P, 1, E)
    w2_scr[...] = l2w_mu[None] + l2w_sig[None] * eps_l2w_ref[...]  # (P, E+H, 4H)
    b2_all = l2b_mu[None] + l2b_sig[None] * eps_l2b_ref[...]       # (P, 2, 4H)
    wd_all = dw_mu[None] + dw_sig[None] * eps_dw_ref[...]          # (P, H, 5)
    bd_all = db_mu[None] + db_sig[None] * eps_db_ref[...]          # (P, 1, 5)

    last_pos = lp_ref[...]                                         # (B, 2)
    pred_list = []
    sig_list = []
    for i in range(P):
        emb = jnp.dot(last_pos, we2_all[i],
                      preferred_element_type=jnp.float32) + be2_all[i]   # (B, E)
        b_i = b2_all[i]
        bias = b_i[0:1, :] + b_i[1:2, :]
        h, c = _lstm_step(emb, h, c, w2_scr[i], bias, E, H)
        dec = jnp.dot(h, wd_all[i],
                      preferred_element_type=jnp.float32) + bd_all[i]    # (B, 5)
        pred_pos = dec[:, 0:2] + last_pos
        pred_list.append(pred_pos)
        sig_list.append(dec[:, 2:5])
        last_pos = y_ref[i] if training else pred_pos              # teacher force

    pred_all = jnp.stack(pred_list, axis=0)                        # (P, B, 2)
    sig_all = jnp.stack(sig_list, axis=0)                          # (P, B, 3)
    pred_ref[...] = pred_all                                       # one bulk store

    # ---- Gaussian2D NLL, vectorized over all P roll-out steps ---------------
    # The reference re-sums the growing prefix each step; since the exp/tanh
    # conversions are elementwise, prefix sums of converted per-step values
    # give identical math in O(L).
    sxsy = jnp.exp(sig_all[:, :, 0:2]) + 0.01                      # (P, B, 2)
    cov = (jnp.sqrt(sxsy[:, :, 0:1] * sxsy[:, :, 1:2])
           * jnp.tanh(sig_all[:, :, 2:3]))                         # (P, B, 1)

    def _prefix(x):        # prefix sums along the (small, static) P axis
        run = jnp.zeros_like(x[0])
        outs = []
        for p in range(P):
            run = run + x[p]
            outs.append(run)
        return jnp.stack(outs, axis=0)

    dt2 = dt * dt
    s_pref = dt2 * _prefix(sxsy)                                   # (P, B, 2)
    c_pref = dt2 * _prefix(cov)                                    # (P, B, 1)
    means = dabs_ref[...][None] + _prefix(pred_all)                # (P, B, 2)

    sx = s_pref[:, :, 0:1]
    sy = s_pref[:, :, 1:2]
    det = sx * sy - c_pref * c_pref
    norm = tgt_ref[...] - means
    nx = norm[:, :, 0:1]
    ny = norm[:, :, 1:2]
    z = (nx * nx * sy + ny * ny * sx - 2.0 * c_pref * nx * ny) / det
    loss = jnp.sum(0.5 * (z + jnp.log(det)))
    nll_ref[...] = jnp.broadcast_to(loss, (1, 1))


# ----------------------------------------------------------------------------
# pallas_call wrapper
# ----------------------------------------------------------------------------
def _const_index_map(ndim):
    def imap(m):
        return (0,) * ndim
    return imap


def _mc_index_map(ndim_rest):
    def imap(m):
        return (m,) + (0,) * ndim_rest
    return imap


def fused_forward(x_flat, y_tm, tgt_tm, last_pos0, dabs_last,
                  emb_p, l1_p, l2_p, dec_p, eps, *,
                  num_mc, obs_len, pred_len, batch, emb_dim, hid_dim,
                  training, dt, prior_mu, prior_sigma):
    P, B = pred_len, batch
    kernel = functools.partial(
        _fused_kernel, obs_len=obs_len, pred_len=pred_len, batch=batch,
        emb_dim=emb_dim, hid_dim=hid_dim, training=bool(training),
        dt=float(dt), prior_mu=float(prior_mu), prior_sigma=float(prior_sigma))

    shared_args = (x_flat, y_tm, tgt_tm, last_pos0, dabs_last,
                   *emb_p, *l1_p, *l2_p, *dec_p)
    in_specs = ([pl.BlockSpec(a.shape, _const_index_map(a.ndim))
                 for a in shared_args]
                + [pl.BlockSpec((None,) + a.shape[1:],
                                _mc_index_map(a.ndim - 1))
                   for a in eps])

    out_shape = (jax.ShapeDtypeStruct((num_mc, P, B, 2), jnp.float32),
                 jax.ShapeDtypeStruct((num_mc, 1, 1), jnp.float32),
                 jax.ShapeDtypeStruct((num_mc, 1, 1), jnp.float32))
    out_specs = (pl.BlockSpec((None, P, B, 2), _mc_index_map(3)),
                 pl.BlockSpec((None, 1, 1), _mc_index_map(2)),
                 pl.BlockSpec((None, 1, 1), _mc_index_map(2)))

    scratch = [
        pltpu.VMEM((obs_len, emb_dim + hid_dim, 4 * hid_dim), jnp.float32),
        pltpu.VMEM((pred_len, emb_dim + hid_dim, 4 * hid_dim), jnp.float32),
    ]

    # TODO(synk): cast sampled weights/activations to bf16 for the MXU on
    # v6e/v7x (keep f32 on v5e) if B or H are scaled up.
    return pl.pallas_call(
        kernel,
        grid=(num_mc,),
        in_specs=in_specs,
        out_specs=out_specs,
        out_shape=out_shape,
        scratch_shapes=scratch,
        compiler_params=pltpu.CompilerParams(
            dimension_semantics=("parallel",)),
    )(*shared_args, *eps)


# ----------------------------------------------------------------------------
# Model: parameter init (torch layout) + lane-dense packing + forward
# ----------------------------------------------------------------------------
def init_linear_params(key, in_f, out_f, mu_init, rho_init):
    k1, k2, k3, k4 = jax.random.split(key, 4)
    return dict(
        mu_w=mu_init + 0.1 * jax.random.normal(k1, (out_f, in_f), jnp.float32),
        rho_w=rho_init + 0.1 * jax.random.normal(k2, (out_f, in_f), jnp.float32),
        mu_b=mu_init + 0.1 * jax.random.normal(k3, (out_f,), jnp.float32),
        rho_b=rho_init + 0.1 * jax.random.normal(k4, (out_f,), jnp.float32),
    )


def init_lstm_params(key, in_f, hid, mu_init, rho_init):
    k1, k2 = jax.random.split(key)
    ih = init_linear_params(k1, in_f, 4 * hid, mu_init, rho_init)
    hh = init_linear_params(k2, hid, 4 * hid, mu_init, rho_init)
    return dict(mu_w_ih=ih["mu_w"], rho_w_ih=ih["rho_w"],
                mu_b_ih=ih["mu_b"], rho_b_ih=ih["rho_b"],
                mu_w_hh=hh["mu_w"], rho_w_hh=hh["rho_w"],
                mu_b_hh=hh["mu_b"], rho_b_hh=hh["rho_b"])


def init_model_params(key, in_size, emb_dim, hid_dim, out_size,
                      mu_init, rho_init):
    k1, k2, k3, k4 = jax.random.split(key, 4)
    return dict(
        embedding=init_linear_params(k1, in_size, emb_dim, mu_init, rho_init),
        lstm1=init_lstm_params(k2, emb_dim, hid_dim, mu_init, rho_init),
        lstm2=init_lstm_params(k3, emb_dim, hid_dim, mu_init, rho_init),
        decoder=init_linear_params(k4, hid_dim, out_size + 3, mu_init, rho_init),
    )


def _pack_linear_t(p):
    # torch weight is (out, in); stored transposed so 'out' is the lane axis.
    return (p["mu_w"].T, p["rho_w"].T,
            p["mu_b"].reshape(1, -1), p["rho_b"].reshape(1, -1))


def _pack_lstm_t(p):
    # Packed (E+H, 4H) weight [W_ih^T ; W_hh^T] (4H = lane axis) and stacked
    # (2, 4H) biases: one sampling / KL pass and lane-dense FMAs per step.
    mu_w = jnp.concatenate([p["mu_w_ih"].T, p["mu_w_hh"].T], axis=0)
    rho_w = jnp.concatenate([p["rho_w_ih"].T, p["rho_w_hh"].T], axis=0)
    mu_b = jnp.stack([p["mu_b_ih"], p["mu_b_hh"]], axis=0)
    rho_b = jnp.stack([p["rho_b_ih"], p["rho_b_hh"]], axis=0)
    return (mu_w, rho_w, mu_b, rho_b)


def model_forward(params, X, y, data_abs, target_abs, key, *, training=False,
                  num_mc=1, dt=0.4, prior_mu=0.0, prior_sigma=1.0):
    B, T, in_size = X.shape
    P = y.shape[1]
    E = params["embedding"]["mu_w"].shape[0]
    H = params["lstm1"]["mu_w_hh"].shape[1]
    n_dec = params["decoder"]["mu_w"].shape[0]          # out_size + 3

    emb_p = _pack_linear_t(params["embedding"])
    dec_p = _pack_linear_t(params["decoder"])
    l1_p = _pack_lstm_t(params["lstm1"])
    l2_p = _pack_lstm_t(params["lstm2"])

    # Time-major views so the kernel indexes the leading axis; X is flattened
    # to (T*B, in) so the once-sampled encoder embedding is a single matmul.
    x_flat = jnp.transpose(X, (1, 0, 2)).reshape(T * B, in_size)
    y_tm = jnp.transpose(y, (1, 0, 2))                   # (P, B, in)
    tgt_tm = jnp.transpose(target_abs, (1, 0, 2))        # (P, B, 2)
    last_pos0 = X[:, -1, :]                              # (B, in)
    dabs_last = data_abs[:, -1, :]                       # (B, 2)

    # One batched N(0,1) draw per sampling site, covering ALL MC samples and
    # all timesteps (leading num_mc axis -> consumed via the parallel grid).
    M = num_mc
    eps_shapes = (
        (M, in_size, E), (M, 1, E),                       # encoder embedding
        (M, T, E + H, 4 * H), (M, T, 2, 4 * H),           # lstm1 per step
        (M, P, in_size, E), (M, P, 1, E),                 # decoder embedding
        (M, P, E + H, 4 * H), (M, P, 2, 4 * H),           # lstm2 per step
        (M, P, H, n_dec), (M, P, 1, n_dec),               # decoder head
    )
    keys = jax.random.split(key, len(eps_shapes))
    eps = tuple(jax.random.normal(k, s, jnp.float32)
                for k, s in zip(keys, eps_shapes))

    pred_mc, nll_mc, kl_mc = fused_forward(
        x_flat, y_tm, tgt_tm, last_pos0, dabs_last,
        emb_p, l1_p, l2_p, dec_p, eps,
        num_mc=M, obs_len=T, pred_len=P, batch=B, emb_dim=E, hid_dim=H,
        training=training, dt=dt, prior_mu=prior_mu, prior_sigma=prior_sigma)

    pred = jnp.mean(jnp.transpose(pred_mc, (0, 2, 1, 3)), axis=0)  # (B, P, 2)
    nll_loss = jnp.sum(nll_mc) / num_mc
    kl_loss = jnp.mean(kl_mc)
    return pred, nll_loss, kl_loss


# ----------------------------------------------------------------------------
if __name__ == "__main__":
    key = jax.random.PRNGKey(0)

    B, obs_len, pred_len = 8, 8, 4
    in_size, emb_dim, hid_dim, out_size = 2, 16, 32, 2
    num_mc = 2
    prior_mu, prior_sigma = 0.0, 1.0
    post_mu_init, post_rho_init = 0.0, -3.0

    k_params, k_data, k_fwd = jax.random.split(key, 3)
    params = init_model_params(k_params, in_size, emb_dim, hid_dim, out_size,
                               post_mu_init, post_rho_init)

    k1, k2, k3, k4 = jax.random.split(k_data, 4)
    X = jax.random.normal(k1, (B, obs_len, in_size), jnp.float32)
    y = jax.random.normal(k2, (B, pred_len, in_size), jnp.float32)
    data_abs = jax.random.normal(k3, (B, obs_len, in_size), jnp.float32)
    target_abs = jax.random.normal(k4, (B, pred_len, in_size), jnp.float32)

    fwd = jax.jit(functools.partial(
        model_forward, training=False, num_mc=num_mc, dt=0.4,
        prior_mu=prior_mu, prior_sigma=prior_sigma))
    pred, nll_loss, kl_loss = fwd(params, X, y, data_abs, target_abs, k_fwd)
    jax.block_until_ready((pred, nll_loss, kl_loss))

    assert pred.shape == (B, pred_len, out_size)
    assert nll_loss.shape == ()
    assert kl_loss.shape == ()
    assert bool(jnp.all(jnp.isfinite(pred)))
    assert bool(jnp.isfinite(nll_loss)) and bool(jnp.isfinite(kl_loss))
    print("KERNEL_OK")
</pallas_src>

<mosaic_0001>
module attributes {stable_mosaic.version = 11 : i64} {
  func.func @_fused_kernel(%arg0: i32, %arg1: memref<64x2xf32, #tpu.memory_space<vmem>>, %arg2: memref<4x8x2xf32, #tpu.memory_space<vmem>>, %arg3: memref<4x8x2xf32, #tpu.memory_space<vmem>>, %arg4: memref<8x2xf32, #tpu.memory_space<vmem>>, %arg5: memref<8x2xf32, #tpu.memory_space<vmem>>, %arg6: memref<2x16xf32, #tpu.memory_space<vmem>>, %arg7: memref<2x16xf32, #tpu.memory_space<vmem>>, %arg8: memref<1x16xf32, #tpu.memory_space<vmem>>, %arg9: memref<1x16xf32, #tpu.memory_space<vmem>>, %arg10: memref<48x128xf32, #tpu.memory_space<vmem>>, %arg11: memref<48x128xf32, #tpu.memory_space<vmem>>, %arg12: memref<2x128xf32, #tpu.memory_space<vmem>>, %arg13: memref<2x128xf32, #tpu.memory_space<vmem>>, %arg14: memref<48x128xf32, #tpu.memory_space<vmem>>, %arg15: memref<48x128xf32, #tpu.memory_space<vmem>>, %arg16: memref<2x128xf32, #tpu.memory_space<vmem>>, %arg17: memref<2x128xf32, #tpu.memory_space<vmem>>, %arg18: memref<32x5xf32, #tpu.memory_space<vmem>>, %arg19: memref<32x5xf32, #tpu.memory_space<vmem>>, %arg20: memref<1x5xf32, #tpu.memory_space<vmem>>, %arg21: memref<1x5xf32, #tpu.memory_space<vmem>>, %arg22: memref<1x2x16xf32, #tpu.memory_space<vmem>>, %arg23: memref<1x1x16xf32, #tpu.memory_space<vmem>>, %arg24: memref<1x8x48x128xf32, #tpu.memory_space<vmem>>, %arg25: memref<1x8x2x128xf32, #tpu.memory_space<vmem>>, %arg26: memref<1x4x2x16xf32, #tpu.memory_space<vmem>>, %arg27: memref<1x4x1x16xf32, #tpu.memory_space<vmem>>, %arg28: memref<1x4x48x128xf32, #tpu.memory_space<vmem>>, %arg29: memref<1x4x2x128xf32, #tpu.memory_space<vmem>>, %arg30: memref<1x4x32x5xf32, #tpu.memory_space<vmem>>, %arg31: memref<1x4x1x5xf32, #tpu.memory_space<vmem>>, %arg32: memref<1x4x8x2xf32, #tpu.memory_space<vmem>>, %arg33: memref<1x1x1xf32, #tpu.memory_space<vmem>>, %arg34: memref<1x1x1xf32, #tpu.memory_space<vmem>>, %arg35: memref<8x48x128xf32, #tpu.memory_space<vmem>>, %arg36: memref<4x48x128xf32, #tpu.memory_space<vmem>>) attributes {dimension_semantics = [#tpu.dimension_semantics<parallel>], iteration_bounds = array<i64: 2>, scalar_prefetch = 0 : i64, scratch_operands = 2 : i64, tpu.core_type = #tpu.core_type<tc>, window_params = [{pipeline_mode = #tpu.pipeline_mode<synchronous>, transform_indices = @transform_0, window_bounds = array<i64: 64, 2>}, {pipeline_mode = #tpu.pipeline_mode<synchronous>, transform_indices = @transform_1, window_bounds = array<i64: 4, 8, 2>}, {pipeline_mode = #tpu.pipeline_mode<synchronous>, transform_indices = @transform_2, window_bounds = array<i64: 4, 8, 2>}, {pipeline_mode = #tpu.pipeline_mode<synchronous>, transform_indices = @transform_3, window_bounds = array<i64: 8, 2>}, {pipeline_mode = #tpu.pipeline_mode<synchronous>, transform_indices = @transform_4, window_bounds = array<i64: 8, 2>}, {pipeline_mode = #tpu.pipeline_mode<synchronous>, transform_indices = @transform_5, window_bounds = array<i64: 2, 16>}, {pipeline_mode = #tpu.pipeline_mode<synchronous>, transform_indices = @transform_6, window_bounds = array<i64: 2, 16>}, {pipeline_mode = #tpu.pipeline_mode<synchronous>, transform_indices = @transform_7, window_bounds = array<i64: 1, 16>}, {pipeline_mode = #tpu.pipeline_mode<synchronous>, transform_indices = @transform_8, window_bounds = array<i64: 1, 16>}, {pipeline_mode = #tpu.pipeline_mode<synchronous>, transform_indices = @transform_9, window_bounds = array<i64: 48, 128>}, {pipeline_mode = #tpu.pipeline_mode<synchronous>, transform_indices = @transform_10, window_bounds = array<i64: 48, 128>}, {pipeline_mode = #tpu.pipeline_mode<synchronous>, transform_indices = @transform_11, window_bounds = array<i64: 2, 128>}, {pipeline_mode = #tpu.pipeline_mode<synchronous>, transform_indices = @transform_12, window_bounds = array<i64: 2, 128>}, {pipeline_mode = #tpu.pipeline_mode<synchronous>, transform_indices = @transform_13, window_bounds = array<i64: 48, 128>}, {pipeline_mode = #tpu.pipeline_mode<synchronous>, transform_indices = @transform_14, window_bounds = array<i64: 48, 128>}, {pipeline_mode = #tpu.pipeline_mode<synchronous>, transform_indices = @transform_15, window_bounds = array<i64: 2, 128>}, {pipeline_mode = #tpu.pipeline_mode<synchronous>, transform_indices = @transform_16, window_bounds = array<i64: 2, 128>}, {pipeline_mode = #tpu.pipeline_mode<synchronous>, transform_indices = @transform_17, window_bounds = array<i64: 32, 5>}, {pipeline_mode = #tpu.pipeline_mode<synchronous>, transform_indices = @transform_18, window_bounds = array<i64: 32, 5>}, {pipeline_mode = #tpu.pipeline_mode<synchronous>, transform_indices = @transform_19, window_bounds = array<i64: 1, 5>}, {pipeline_mode = #tpu.pipeline_mode<synchronous>, transform_indices = @transform_20, window_bounds = array<i64: 1, 5>}, {transform_indices = @transform_21, window_bounds = array<i64: 1, 2, 16>}, {transform_indices = @transform_22, window_bounds = array<i64: 1, 1, 16>}, {transform_indices = @transform_23, window_bounds = array<i64: 1, 8, 48, 128>}, {transform_indices = @transform_24, window_bounds = array<i64: 1, 8, 2, 128>}, {transform_indices = @transform_25, window_bounds = array<i64: 1, 4, 2, 16>}, {transform_indices = @transform_26, window_bounds = array<i64: 1, 4, 1, 16>}, {transform_indices = @transform_27, window_bounds = array<i64: 1, 4, 48, 128>}, {transform_indices = @transform_28, window_bounds = array<i64: 1, 4, 2, 128>}, {transform_indices = @transform_29, window_bounds = array<i64: 1, 4, 32, 5>}, {transform_indices = @transform_30, window_bounds = array<i64: 1, 4, 1, 5>}, {transform_indices = @transform_31, window_bounds = array<i64: 1, 4, 8, 2>}, {transform_indices = @transform_32, window_bounds = array<i64: 1, 1, 1>}, {transform_indices = @transform_33, window_bounds = array<i64: 1, 1, 1>}]} {
    %c0 = arith.constant 0 : index
    %c0_0 = arith.constant 0 : index
    %0 = vector.load %arg6[%c0, %c0_0] : memref<2x16xf32, #tpu.memory_space<vmem>>, vector<2x16xf32>
    %c0_1 = arith.constant 0 : index
    %c0_2 = arith.constant 0 : index
    %1 = vector.load %arg7[%c0_1, %c0_2] : memref<2x16xf32, #tpu.memory_space<vmem>>, vector<2x16xf32>
    %cst = arith.constant 0.000000e+00 : f32
    %2 = vector.broadcast %cst : f32 to vector<2x16xf32>
    %3 = arith.maximumf %1, %2 : vector<2x16xf32>
    %4 = math.absf %1 : vector<2x16xf32>
    %cst_3 = arith.constant 0.000000e+00 : f32
    %5 = vector.broadcast %cst_3 : f32 to vector<2x16xf32>
    %6 = arith.subf %5, %4 : vector<2x16xf32>
    %7 = math.exp %6 : vector<2x16xf32>
    %8 = math.log1p %7 : vector<2x16xf32>
    %9 = arith.addf %3, %8 : vector<2x16xf32>
    %c0_4 = arith.constant 0 : index
    %c0_5 = arith.constant 0 : index
    %10 = vector.load %arg8[%c0_4, %c0_5] : memref<1x16xf32, #tpu.memory_space<vmem>>, vector<1x16xf32>
    %c0_6 = arith.constant 0 : index
    %c0_7 = arith.constant 0 : index
    %11 = vector.load %arg9[%c0_6, %c0_7] : memref<1x16xf32, #tpu.memory_space<vmem>>, vector<1x16xf32>
    %cst_8 = arith.constant 0.000000e+00 : f32
    %12 = vector.broadcast %cst_8 : f32 to vector<1x16xf32>
    %13 = arith.maximumf %11, %12 : vector<1x16xf32>
    %14 = math.absf %11 : vector<1x16xf32>
    %cst_9 = arith.constant 0.000000e+00 : f32
    %15 = vector.broadcast %cst_9 : f32 to vector<1x16xf32>
    %16 = arith.subf %15, %14 : vector<1x16xf32>
    %17 = math.exp %16 : vector<1x16xf32>
    %18 = math.log1p %17 : vector<1x16xf32>
    %19 = arith.addf %13, %18 : vector<1x16xf32>
    %c0_10 = arith.constant 0 : index
    %c0_11 = arith.constant 0 : index
    %20 = vector.load %arg10[%c0_10, %c0_11] : memref<48x128xf32, #tpu.memory_space<vmem>>, vector<48x128xf32>
    %c0_12 = arith.constant 0 : index
    %c0_13 = arith.constant 0 : index
    %21 = vector.load %arg11[%c0_12, %c0_13] : memref<48x128xf32, #tpu.memory_space<vmem>>, vector<48x128xf32>
    %cst_14 = arith.constant 0.000000e+00 : f32
    %22 = vector.broadcast %cst_14 : f32 to vector<48x128xf32>
    %23 = arith.maximumf %21, %22 : vector<48x128xf32>
    %24 = math.absf %21 : vector<48x128xf32>
    %cst_15 = arith.constant 0.000000e+00 : f32
    %25 = vector.broadcast %cst_15 : f32 to vector<48x128xf32>
    %26 = arith.subf %25, %24 : vector<48x128xf32>
    %27 = math.exp %26 : vector<48x128xf32>
    %28 = math.log1p %27 : vector<48x128xf32>
    %29 = arith.addf %23, %28 : vector<48x128xf32>
    %c0_16 = arith.constant 0 : index
    %c0_17 = arith.constant 0 : index
    %30 = vector.load %arg12[%c0_16, %c0_17] : memref<2x128xf32, #tpu.memory_space<vmem>>, vector<2x128xf32>
    %c0_18 = arith.constant 0 : index
    %c0_19 = arith.constant 0 : index
    %31 = vector.load %arg13[%c0_18, %c0_19] : memref<2x128xf32, #tpu.memory_space<vmem>>, vector<2x128xf32>
    %cst_20 = arith.constant 0.000000e+00 : f32
    %32 = vector.broadcast %cst_20 : f32 to vector<2x128xf32>
    %33 = arith.maximumf %31, %32 : vector<2x128xf32>
    %34 = math.absf %31 : vector<2x128xf32>
    %cst_21 = arith.constant 0.000000e+00 : f32
    %35 = vector.broadcast %cst_21 : f32 to vector<2x128xf32>
    %36 = arith.subf %35, %34 : vector<2x128xf32>
    %37 = math.exp %36 : vector<2x128xf32>
    %38 = math.log1p %37 : vector<2x128xf32>
    %39 = arith.addf %33, %38 : vector<2x128xf32>
    %c0_22 = arith.constant 0 : index
    %c0_23 = arith.constant 0 : index
    %40 = vector.load %arg14[%c0_22, %c0_23] : memref<48x128xf32, #tpu.memory_space<vmem>>, vector<48x128xf32>
    %c0_24 = arith.constant 0 : index
    %c0_25 = arith.constant 0 : index
    %41 = vector.load %arg15[%c0_24, %c0_25] : memref<48x128xf32, #tpu.memory_space<vmem>>, vector<48x128xf32>
    %cst_26 = arith.constant 0.000000e+00 : f32
    %42 = vector.broadcast %cst_26 : f32 to vector<48x128xf32>
    %43 = arith.maximumf %41, %42 : vector<48x128xf32>
    %44 = math.absf %41 : vector<48x128xf32>
    %cst_27 = arith.constant 0.000000e+00 : f32
    %45 = vector.broadcast %cst_27 : f32 to vector<48x128xf32>
    %46 = arith.subf %45, %44 : vector<48x128xf32>
    %47 = math.exp %46 : vector<48x128xf32>
    %48 = math.log1p %47 : vector<48x128xf32>
    %49 = arith.addf %43, %48 : vector<48x128xf32>
    %c0_28 = arith.constant 0 : index
    %c0_29 = arith.constant 0 : index
    %50 = vector.load %arg16[%c0_28, %c0_29] : memref<2x128xf32, #tpu.memory_space<vmem>>, vector<2x128xf32>
    %c0_30 = arith.constant 0 : index
    %c0_31 = arith.constant 0 : index
    %51 = vector.load %arg17[%c0_30, %c0_31] : memref<2x128xf32, #tpu.memory_space<vmem>>, vector<2x128xf32>
    %cst_32 = arith.constant 0.000000e+00 : f32
    %52 = vector.broadcast %cst_32 : f32 to vector<2x128xf32>
    %53 = arith.maximumf %51, %52 : vector<2x128xf32>
    %54 = math.absf %51 : vector<2x128xf32>
    %cst_33 = arith.constant 0.000000e+00 : f32
    %55 = vector.broadcast %cst_33 : f32 to vector<2x128xf32>
    %56 = arith.subf %55, %54 : vector<2x128xf32>
    %57 = math.exp %56 : vector<2x128xf32>
    %58 = math.log1p %57 : vector<2x128xf32>
    %59 = arith.addf %53, %58 : vector<2x128xf32>
    %c0_34 = arith.constant 0 : index
    %c0_35 = arith.constant 0 : index
    %60 = vector.load %arg18[%c0_34, %c0_35] : memref<32x5xf32, #tpu.memory_space<vmem>>, vector<32x5xf32>
    %c0_36 = arith.constant 0 : index
    %c0_37 = arith.constant 0 : index
    %61 = vector.load %arg19[%c0_36, %c0_37] : memref<32x5xf32, #tpu.memory_space<vmem>>, vector<32x5xf32>
    %cst_38 = arith.constant 0.000000e+00 : f32
    %62 = vector.broadcast %cst_38 : f32 to vector<32x5xf32>
    %63 = arith.maximumf %61, %62 : vector<32x5xf32>
    %64 = math.absf %61 : vector<32x5xf32>
    %cst_39 = arith.constant 0.000000e+00 : f32
    %65 = vector.broadcast %cst_39 : f32 to vector<32x5xf32>
    %66 = arith.subf %65, %64 : vector<32x5xf32>
    %67 = math.exp %66 : vector<32x5xf32>
    %68 = math.log1p %67 : vector<32x5xf32>
    %69 = arith.addf %63, %68 : vector<32x5xf32>
    %c0_40 = arith.constant 0 : index
    %c0_41 = arith.constant 0 : index
    %70 = vector.load %arg20[%c0_40, %c0_41] : memref<1x5xf32, #tpu.memory_space<vmem>>, vector<1x5xf32>
    %c0_42 = arith.constant 0 : index
    %c0_43 = arith.constant 0 : index
    %71 = vector.load %arg21[%c0_42, %c0_43] : memref<1x5xf32, #tpu.memory_space<vmem>>, vector<1x5xf32>
    %cst_44 = arith.constant 0.000000e+00 : f32
    %72 = vector.broadcast %cst_44 : f32 to vector<1x5xf32>
    %73 = arith.maximumf %71, %72 : vector<1x5xf32>
    %74 = math.absf %71 : vector<1x5xf32>
    %cst_45 = arith.constant 0.000000e+00 : f32
    %75 = vector.broadcast %cst_45 : f32 to vector<1x5xf32>
    %76 = arith.subf %75, %74 : vector<1x5xf32>
    %77 = math.exp %76 : vector<1x5xf32>
    %78 = math.log1p %77 : vector<1x5xf32>
    %79 = arith.addf %73, %78 : vector<1x5xf32>
    %80 = math.log %9 : vector<2x16xf32>
    %cst_46 = arith.constant 0.000000e+00 : f32
    %81 = vector.broadcast %cst_46 : f32 to vector<2x16xf32>
    %82 = arith.subf %81, %80 : vector<2x16xf32>
    %83 = arith.mulf %9, %9 : vector<2x16xf32>
    %cst_47 = arith.constant 0.000000e+00 : f32
    %84 = vector.broadcast %cst_47 : f32 to vector<2x16xf32>
    %85 = arith.subf %0, %84 : vector<2x16xf32>
    %86 = arith.mulf %85, %85 : vector<2x16xf32>
    %87 = arith.addf %83, %86 : vector<2x16xf32>
    %cst_48 = arith.constant 2.000000e+00 : f32
    %88 = vector.broadcast %cst_48 : f32 to vector<2x16xf32>
    %89 = arith.divf %87, %88 : vector<2x16xf32>
    %90 = arith.addf %82, %89 : vector<2x16xf32>
    %cst_49 = arith.constant 5.000000e-01 : f32
    %91 = vector.broadcast %cst_49 : f32 to vector<2x16xf32>
    %92 = arith.subf %90, %91 : vector<2x16xf32>
    %93 = vector.shape_cast %92 : vector<2x16xf32> to vector<1x2x16xf32>
    %cst_50 = arith.constant dense<0.000000e+00> : vector<1xf32>
    %94 = vector.multi_reduction <add>, %93, %cst_50 [1, 2] : vector<1x2x16xf32> to vector<1xf32>
    %95 = vector.shape_cast %94 : vector<1xf32> to vector<1x1x1xf32>
    %96 = vector.extract %95[0, 0, 0] : f32 from vector<1x1x1xf32>
    %97 = math.log %19 : vector<1x16xf32>
    %cst_51 = arith.constant 0.000000e+00 : f32
    %98 = vector.broadcast %cst_51 : f32 to vector<1x16xf32>
    %99 = arith.subf %98, %97 : vector<1x16xf32>
    %100 = arith.mulf %19, %19 : vector<1x16xf32>
    %cst_52 = arith.constant 0.000000e+00 : f32
    %101 = vector.broadcast %cst_52 : f32 to vector<1x16xf32>
    %102 = arith.subf %10, %101 : vector<1x16xf32>
    %103 = arith.mulf %102, %102 : vector<1x16xf32>
    %104 = arith.addf %100, %103 : vector<1x16xf32>
    %cst_53 = arith.constant 2.000000e+00 : f32
    %105 = vector.broadcast %cst_53 : f32 to vector<1x16xf32>
    %106 = arith.divf %104, %105 : vector<1x16xf32>
    %107 = arith.addf %99, %106 : vector<1x16xf32>
    %cst_54 = arith.constant 5.000000e-01 : f32
    %108 = vector.broadcast %cst_54 : f32 to vector<1x16xf32>
    %109 = arith.subf %107, %108 : vector<1x16xf32>
    %110 = vector.shape_cast %109 : vector<1x16xf32> to vector<1x1x16xf32>
    %cst_55 = arith.constant dense<0.000000e+00> : vector<1xf32>
    %111 = vector.multi_reduction <add>, %110, %cst_55 [1, 2] : vector<1x1x16xf32> to vector<1xf32>
    %112 = vector.shape_cast %111 : vector<1xf32> to vector<1x1x1xf32>
    %113 = vector.extract %112[0, 0, 0] : f32 from vector<1x1x1xf32>
    %114 = arith.addf %96, %113 : f32
    %115 = math.log %29 : vector<48x128xf32>
    %cst_56 = arith.constant 0.000000e+00 : f32
    %116 = vector.broadcast %cst_56 : f32 to vector<48x128xf32>
    %117 = arith.subf %116, %115 : vector<48x128xf32>
    %118 = arith.mulf %29, %29 : vector<48x128xf32>
    %cst_57 = arith.constant 0.000000e+00 : f32
    %119 = vector.broadcast %cst_57 : f32 to vector<48x128xf32>
    %120 = arith.subf %20, %119 : vector<48x128xf32>
    %121 = arith.mulf %120, %120 : vector<48x128xf32>
    %122 = arith.addf %118, %121 : vector<48x128xf32>
    %cst_58 = arith.constant 2.000000e+00 : f32
    %123 = vector.broadcast %cst_58 : f32 to vector<48x128xf32>
    %124 = arith.divf %122, %123 : vector<48x128xf32>
    %125 = arith.addf %117, %124 : vector<48x128xf32>
    %cst_59 = arith.constant 5.000000e-01 : f32
    %126 = vector.broadcast %cst_59 : f32 to vector<48x128xf32>
    %127 = arith.subf %125, %126 : vector<48x128xf32>
    %128 = vector.shape_cast %127 : vector<48x128xf32> to vector<1x48x128xf32>
    %cst_60 = arith.constant dense<0.000000e+00> : vector<1xf32>
    %129 = vector.multi_reduction <add>, %128, %cst_60 [1, 2] : vector<1x48x128xf32> to vector<1xf32>
    %130 = vector.shape_cast %129 : vector<1xf32> to vector<1x1x1xf32>
    %131 = vector.extract %130[0, 0, 0] : f32 from vector<1x1x1xf32>
    %132 = math.log %39 : vector<2x128xf32>
    %cst_61 = arith.constant 0.000000e+00 : f32
    %133 = vector.broadcast %cst_61 : f32 to vector<2x128xf32>
    %134 = arith.subf %133, %132 : vector<2x128xf32>
    %135 = arith.mulf %39, %39 : vector<2x128xf32>
    %cst_62 = arith.constant 0.000000e+00 : f32
    %136 = vector.broadcast %cst_62 : f32 to vector<2x128xf32>
    %137 = arith.subf %30, %136 : vector<2x128xf32>
    %138 = arith.mulf %137, %137 : vector<2x128xf32>
    %139 = arith.addf %135, %138 : vector<2x128xf32>
    %cst_63 = arith.constant 2.000000e+00 : f32
    %140 = vector.broadcast %cst_63 : f32 to vector<2x128xf32>
    %141 = arith.divf %139, %140 : vector<2x128xf32>
    %142 = arith.addf %134, %141 : vector<2x128xf32>
    %cst_64 = arith.constant 5.000000e-01 : f32
    %143 = vector.broadcast %cst_64 : f32 to vector<2x128xf32>
    %144 = arith.subf %142, %143 : vector<2x128xf32>
    %145 = vector.shape_cast %144 : vector<2x128xf32> to vector<1x2x128xf32>
    %cst_65 = arith.constant dense<0.000000e+00> : vector<1xf32>
    %146 = vector.multi_reduction <add>, %145, %cst_65 [1, 2] : vector<1x2x128xf32> to vector<1xf32>
    %147 = vector.shape_cast %146 : vector<1xf32> to vector<1x1x1xf32>
    %148 = vector.extract %147[0, 0, 0] : f32 from vector<1x1x1xf32>
    %149 = arith.addf %131, %148 : f32
    %150 = math.log %49 : vector<48x128xf32>
    %cst_66 = arith.constant 0.000000e+00 : f32
    %151 = vector.broadcast %cst_66 : f32 to vector<48x128xf32>
    %152 = arith.subf %151, %150 : vector<48x128xf32>
    %153 = arith.mulf %49, %49 : vector<48x128xf32>
    %cst_67 = arith.constant 0.000000e+00 : f32
    %154 = vector.broadcast %cst_67 : f32 to vector<48x128xf32>
    %155 = arith.subf %40, %154 : vector<48x128xf32>
    %156 = arith.mulf %155, %155 : vector<48x128xf32>
    %157 = arith.addf %153, %156 : vector<48x128xf32>
    %cst_68 = arith.constant 2.000000e+00 : f32
    %158 = vector.broadcast %cst_68 : f32 to vector<48x128xf32>
    %159 = arith.divf %157, %158 : vector<48x128xf32>
    %160 = arith.addf %152, %159 : vector<48x128xf32>
    %cst_69 = arith.constant 5.000000e-01 : f32
    %161 = vector.broadcast %cst_69 : f32 to vector<48x128xf32>
    %162 = arith.subf %160, %161 : vector<48x128xf32>
    %163 = vector.shape_cast %162 : vector<48x128xf32> to vector<1x48x128xf32>
    %cst_70 = arith.constant dense<0.000000e+00> : vector<1xf32>
    %164 = vector.multi_reduction <add>, %163, %cst_70 [1, 2] : vector<1x48x128xf32> to vector<1xf32>
    %165 = vector.shape_cast %164 : vector<1xf32> to vector<1x1x1xf32>
    %166 = vector.extract %165[0, 0, 0] : f32 from vector<1x1x1xf32>
    %167 = math.log %59 : vector<2x128xf32>
    %cst_71 = arith.constant 0.000000e+00 : f32
    %168 = vector.broadcast %cst_71 : f32 to vector<2x128xf32>
    %169 = arith.subf %168, %167 : vector<2x128xf32>
    %170 = arith.mulf %59, %59 : vector<2x128xf32>
    %cst_72 = arith.constant 0.000000e+00 : f32
    %171 = vector.broadcast %cst_72 : f32 to vector<2x128xf32>
    %172 = arith.subf %50, %171 : vector<2x128xf32>
    %173 = arith.mulf %172, %172 : vector<2x128xf32>
    %174 = arith.addf %170, %173 : vector<2x128xf32>
    %cst_73 = arith.constant 2.000000e+00 : f32
    %175 = vector.broadcast %cst_73 : f32 to vector<2x128xf32>
    %176 = arith.divf %174, %175 : vector<2x128xf32>
    %177 = arith.addf %169, %176 : vector<2x128xf32>
    %cst_74 = arith.constant 5.000000e-01 : f32
    %178 = vector.broadcast %cst_74 : f32 to vector<2x128xf32>
    %179 = arith.subf %177, %178 : vector<2x128xf32>
    %180 = vector.shape_cast %179 : vector<2x128xf32> to vector<1x2x128xf32>
    %cst_75 = arith.constant dense<0.000000e+00> : vector<1xf32>
    %181 = vector.multi_reduction <add>, %180, %cst_75 [1, 2] : vector<1x2x128xf32> to vector<1xf32>
    %182 = vector.shape_cast %181 : vector<1xf32> to vector<1x1x1xf32>
    %183 = vector.extract %182[0, 0, 0] : f32 from vector<1x1x1xf32>
    %184 = arith.addf %166, %183 : f32
    %185 = math.log %69 : vector<32x5xf32>
    %cst_76 = arith.constant 0.000000e+00 : f32
    %186 = vector.broadcast %cst_76 : f32 to vector<32x5xf32>
    %187 = arith.subf %186, %185 : vector<32x5xf32>
    %188 = arith.mulf %69, %69 : vector<32x5xf32>
    %cst_77 = arith.constant 0.000000e+00 : f32
    %189 = vector.broadcast %cst_77 : f32 to vector<32x5xf32>
    %190 = arith.subf %60, %189 : vector<32x5xf32>
    %191 = arith.mulf %190, %190 : vector<32x5xf32>
    %192 = arith.addf %188, %191 : vector<32x5xf32>
    %cst_78 = arith.constant 2.000000e+00 : f32
    %193 = vector.broadcast %cst_78 : f32 to vector<32x5xf32>
    %194 = arith.divf %192, %193 : vector<32x5xf32>
    %195 = arith.addf %187, %194 : vector<32x5xf32>
    %cst_79 = arith.constant 5.000000e-01 : f32
    %196 = vector.broadcast %cst_79 : f32 to vector<32x5xf32>
    %197 = arith.subf %195, %196 : vector<32x5xf32>
    %198 = vector.shape_cast %197 : vector<32x5xf32> to vector<1x32x5xf32>
    %cst_80 = arith.constant dense<0.000000e+00> : vector<1xf32>
    %199 = vector.multi_reduction <add>, %198, %cst_80 [1, 2] : vector<1x32x5xf32> to vector<1xf32>
    %200 = vector.shape_cast %199 : vector<1xf32> to vector<1x1x1xf32>
    %201 = vector.extract %200[0, 0, 0] : f32 from vector<1x1x1xf32>
    %202 = math.log %79 : vector<1x5xf32>
    %cst_81 = arith.constant 0.000000e+00 : f32
    %203 = vector.broadcast %cst_81 : f32 to vector<1x5xf32>
    %204 = arith.subf %203, %202 : vector<1x5xf32>
    %205 = arith.mulf %79, %79 : vector<1x5xf32>
    %cst_82 = arith.constant 0.000000e+00 : f32
    %206 = vector.broadcast %cst_82 : f32 to vector<1x5xf32>
    %207 = arith.subf %70, %206 : vector<1x5xf32>
    %208 = arith.mulf %207, %207 : vector<1x5xf32>
    %209 = arith.addf %205, %208 : vector<1x5xf32>
    %cst_83 = arith.constant 2.000000e+00 : f32
    %210 = vector.broadcast %cst_83 : f32 to vector<1x5xf32>
    %211 = arith.divf %209, %210 : vector<1x5xf32>
    %212 = arith.addf %204, %211 : vector<1x5xf32>
    %cst_84 = arith.constant 5.000000e-01 : f32
    %213 = vector.broadcast %cst_84 : f32 to vector<1x5xf32>
    %214 = arith.subf %212, %213 : vector<1x5xf32>
    %215 = vector.shape_cast %214 : vector<1x5xf32> to vector<1x1x5xf32>
    %cst_85 = arith.constant dense<0.000000e+00> : vector<1xf32>
    %216 = vector.multi_reduction <add>, %215, %cst_85 [1, 2] : vector<1x1x5xf32> to vector<1xf32>
    %217 = vector.shape_cast %216 : vector<1xf32> to vector<1x1x1xf32>
    %218 = vector.extract %217[0, 0, 0] : f32 from vector<1x1x1xf32>
    %219 = arith.addf %201, %218 : f32
    %220 = arith.addf %114, %149 : f32
    %221 = arith.addf %114, %184 : f32
    %222 = arith.addf %221, %219 : f32
    %223 = arith.addf %220, %222 : f32
    %224 = vector.broadcast %223 : f32 to vector<1x1xf32>
    %c0_86 = arith.constant 0 : index
    %c0_87 = arith.constant 0 : index
    %c0_88 = arith.constant 0 : index
    %225 = vector.load %arg34[%c0_86, %c0_87, %c0_88] : memref<1x1x1xf32, #tpu.memory_space<vmem>>, vector<1x1x1xf32>
    %226 = vector.shape_cast %225 : vector<1x1x1xf32> to vector<1x1xf32>
    %227 = vector.shape_cast %224 : vector<1x1xf32> to vector<1x1x1xf32>
    tpu.vector_store %arg34[%c0_86, %c0_87, %c0_88], %227 {strides = array<i32>} : memref<1x1x1xf32, #tpu.memory_space<vmem>>, vector<1x1x1xf32>,
    %c0_89 = arith.constant 0 : index
    %c0_90 = arith.constant 0 : index
    %c0_91 = arith.constant 0 : index
    %228 = vector.load %arg22[%c0_89, %c0_90, %c0_91] : memref<1x2x16xf32, #tpu.memory_space<vmem>>, vector<1x2x16xf32>
    %229 = vector.shape_cast %228 : vector<1x2x16xf32> to vector<2x16xf32>
    %230 = arith.mulf %9, %229 : vector<2x16xf32>
    %231 = arith.addf %0, %230 : vector<2x16xf32>
    %c0_92 = arith.constant 0 : index
    %c0_93 = arith.constant 0 : index
    %c0_94 = arith.constant 0 : index
    %232 = vector.load %arg23[%c0_92, %c0_93, %c0_94] : memref<1x1x16xf32, #tpu.memory_space<vmem>>, vector<1x1x16xf32>
    %233 = vector.shape_cast %232 : vector<1x1x16xf32> to vector<1x16xf32>
    %234 = arith.mulf %19, %233 : vector<1x16xf32>
    %235 = arith.addf %10, %234 : vector<1x16xf32>
    %c0_95 = arith.constant 0 : index
    %c0_96 = arith.constant 0 : index
    %236 = vector.load %arg1[%c0_95, %c0_96] : memref<64x2xf32, #tpu.memory_space<vmem>>, vector<64x2xf32>
    %cst_97 = arith.constant dense<0.000000e+00> : vector<64x16xf32>
    %237 = tpu.matmul %236, %231, %cst_97 {dimension_numbers = #tpu.dot_dimension_numbers<[1], [0], [0], [1], [0, 0, 1, 1], [], []>} : vector<64x2xf32>, vector<2x16xf32>, vector<64x16xf32> -> vector<64x16xf32>
    %238 = vector.broadcast %235 : vector<1x16xf32> to vector<64x16xf32>
    %239 = arith.addf %237, %238 : vector<64x16xf32>
    %240 = vector.shape_cast %20 : vector<48x128xf32> to vector<1x48x128xf32>
    %241 = vector.shape_cast %29 : vector<48x128xf32> to vector<1x48x128xf32>
    %c0_98 = arith.constant 0 : index
    %c0_99 = arith.constant 0 : index
    %c0_100 = arith.constant 0 : index
    %c0_101 = arith.constant 0 : index
    %242 = vector.load %arg24[%c0_98, %c0_99, %c0_100, %c0_101] : memref<1x8x48x128xf32, #tpu.memory_space<vmem>>, vector<1x8x48x128xf32>
    %243 = vector.shape_cast %242 : vector<1x8x48x128xf32> to vector<8x48x128xf32>
    %244 = vector.broadcast %241 : vector<1x48x128xf32> to vector<8x48x128xf32>
    %245 = arith.mulf %244, %243 : vector<8x48x128xf32>
    %246 = vector.broadcast %240 : vector<1x48x128xf32> to vector<8x48x128xf32>
    %247 = arith.addf %246, %245 : vector<8x48x128xf32>
    %c0_102 = arith.constant 0 : index
    %c0_103 = arith.constant 0 : index
    %c0_104 = arith.constant 0 : index
    %248 = vector.load %arg35[%c0_102, %c0_103, %c0_104] : memref<8x48x128xf32, #tpu.memory_space<vmem>>, vector<8x48x128xf32>
    tpu.vector_store %arg35[%c0_102, %c0_103, %c0_104], %247 {strides = array<i32>} : memref<8x48x128xf32, #tpu.memory_space<vmem>>, vector<8x48x128xf32>,
    %249 = vector.shape_cast %30 : vector<2x128xf32> to vector<1x2x128xf32>
    %250 = vector.shape_cast %39 : vector<2x128xf32> to vector<1x2x128xf32>
    %c0_105 = arith.constant 0 : index
    %c0_106 = arith.constant 0 : index
    %c0_107 = arith.constant 0 : index
    %c0_108 = arith.constant 0 : index
    %251 = vector.load %arg25[%c0_105, %c0_106, %c0_107, %c0_108] : memref<1x8x2x128xf32, #tpu.memory_space<vmem>>, vector<1x8x2x128xf32>
    %252 = vector.shape_cast %251 : vector<1x8x2x128xf32> to vector<8x2x128xf32>
    %253 = vector.broadcast %250 : vector<1x2x128xf32> to vector<8x2x128xf32>
    %254 = arith.mulf %253, %252 : vector<8x2x128xf32>
    %255 = vector.broadcast %249 : vector<1x2x128xf32> to vector<8x2x128xf32>
    %256 = arith.addf %255, %254 : vector<8x2x128xf32>
    %cst_109 = arith.constant 0.000000e+00 : f32
    %257 = vector.broadcast %cst_109 : f32 to vector<8x32xf32>
    %cst_110 = arith.constant 0.000000e+00 : f32
    %258 = vector.broadcast %cst_110 : f32 to vector<8x32xf32>
    %259 = vector.extract_strided_slice %256 {offsets = [0, 0, 0], sizes = [1, 2, 128], strides = [1, 1, 1]} : vector<8x2x128xf32> to vector<1x2x128xf32>
    %260 = vector.shape_cast %259 : vector<1x2x128xf32> to vector<2x128xf32>
    %261 = vector.extract_strided_slice %260 {offsets = [0, 0], sizes = [1, 128], strides = [1, 1]} : vector<2x128xf32> to vector<1x128xf32>
    %262 = vector.extract_strided_slice %260 {offsets = [1, 0], sizes = [1, 128], strides = [1, 1]} : vector<2x128xf32> to vector<1x128xf32>
    %263 = arith.addf %261, %262 : vector<1x128xf32>
    %264 = vector.extract_strided_slice %239 {offsets = [0, 0], sizes = [8, 16], strides = [1, 1]} : vector<64x16xf32> to vector<8x16xf32>
    %c0_111 = arith.constant 0 : index
    %c0_112 = arith.constant 0 : index
    %c0_113 = arith.constant 0 : index
    %265 = vector.load %arg35[%c0_111, %c0_112, %c0_113] : memref<8x48x128xf32, #tpu.memory_space<vmem>>, vector<1x48x128xf32>
    %266 = vector.shape_cast %265 : vector<1x48x128xf32> to vector<48x128xf32>
    %267 = vector.extract_strided_slice %266 {offsets = [0, 0], sizes = [16, 128], strides = [1, 1]} : vector<48x128xf32> to vector<16x128xf32>
    %cst_114 = arith.constant dense<0.000000e+00> : vector<8x128xf32>
    %268 = tpu.matmul %264, %267, %cst_114 {dimension_numbers = #tpu.dot_dimension_numbers<[1], [0], [0], [1], [0, 0, 1, 1], [], []>} : vector<8x16xf32>, vector<16x128xf32>, vector<8x128xf32> -> vector<8x128xf32>
    %269 = vector.extract_strided_slice %266 {offsets = [16, 0], sizes = [32, 128], strides = [1, 1]} : vector<48x128xf32> to vector<32x128xf32>
    %cst_115 = arith.constant dense<0.000000e+00> : vector<8x128xf32>
    %270 = tpu.matmul %257, %269, %cst_115 {dimension_numbers = #tpu.dot_dimension_numbers<[1], [0], [0], [1], [0, 0, 1, 1], [], []>} : vector<8x32xf32>, vector<32x128xf32>, vector<8x128xf32> -> vector<8x128xf32>
    %271 = arith.addf %268, %270 : vector<8x128xf32>
    %272 = vector.broadcast %263 : vector<1x128xf32> to vector<8x128xf32>
    %273 = arith.addf %271, %272 : vector<8x128xf32>
    %274 = arith.negf %273 : vector<8x128xf32>
    %275 = math.exp %274 : vector<8x128xf32>
    %cst_116 = arith.constant 1.000000e+00 : f32
    %276 = vector.broadcast %cst_116 : f32 to vector<8x128xf32>
    %277 = arith.addf %276, %275 : vector<8x128xf32>
    %278 = arith.divf %276, %277 : vector<8x128xf32>
    %279 = math.tanh %273 : vector<8x128xf32>
    %280 = vector.extract_strided_slice %278 {offsets = [0, 0], sizes = [8, 32], strides = [1, 1]} : vector<8x128xf32> to vector<8x32xf32>
    %281 = vector.extract_strided_slice %278 {offsets = [0, 32], sizes = [8, 32], strides = [1, 1]} : vector<8x128xf32> to vector<8x32xf32>
    %282 = vector.extract_strided_slice %278 {offsets = [0, 96], sizes = [8, 32], strides = [1, 1]} : vector<8x128xf32> to vector<8x32xf32>
    %283 = vector.extract_strided_slice %279 {offsets = [0, 64], sizes = [8, 32], strides = [1, 1]} : vector<8x128xf32> to vector<8x32xf32>
    %284 = arith.mulf %281, %258 : vector<8x32xf32>
    %285 = arith.mulf %280, %283 : vector<8x32xf32>
    %286 = arith.addf %284, %285 : vector<8x32xf32>
    %287 = math.tanh %286 : vector<8x32xf32>
    %288 = arith.mulf %282, %287 : vector<8x32xf32>
    %289 = vector.extract_strided_slice %256 {offsets = [1, 0, 0], sizes = [1, 2, 128], strides = [1, 1, 1]} : vector<8x2x128xf32> to vector<1x2x128xf32>
    %290 = vector.shape_cast %289 : vector<1x2x128xf32> to vector<2x128xf32>
    %291 = vector.extract_strided_slice %290 {offsets = [0, 0], sizes = [1, 128], strides = [1, 1]} : vector<2x128xf32> to vector<1x128xf32>
    %292 = vector.extract_strided_slice %290 {offsets = [1, 0], sizes = [1, 128], strides = [1, 1]} : vector<2x128xf32> to vector<1x128xf32>
    %293 = arith.addf %291, %292 : vector<1x128xf32>
    %294 = vector.extract_strided_slice %239 {offsets = [8, 0], sizes = [8, 16], strides = [1, 1]} : vector<64x16xf32> to vector<8x16xf32>
    %c1 = arith.constant 1 : index
    %c0_117 = arith.constant 0 : index
    %c0_118 = arith.constant 0 : index
    %295 = vector.load %arg35[%c1, %c0_117, %c0_118] : memref<8x48x128xf32, #tpu.memory_space<vmem>>, vector<1x48x128xf32>
    %296 = vector.shape_cast %295 : vector<1x48x128xf32> to vector<48x128xf32>
    %297 = vector.extract_strided_slice %296 {offsets = [0, 0], sizes = [16, 128], strides = [1, 1]} : vector<48x128xf32> to vector<16x128xf32>
    %cst_119 = arith.constant dense<0.000000e+00> : vector<8x128xf32>
    %298 = tpu.matmul %294, %297, %cst_119 {dimension_numbers = #tpu.dot_dimension_numbers<[1], [0], [0], [1], [0, 0, 1, 1], [], []>} : vector<8x16xf32>, vector<16x128xf32>, vector<8x128xf32> -> vector<8x128xf32>
    %299 = vector.extract_strided_slice %296 {offsets = [16, 0], sizes = [32, 128], strides = [1, 1]} : vector<48x128xf32> to vector<32x128xf32>
    %cst_120 = arith.constant dense<0.000000e+00> : vector<8x128xf32>
    %300 = tpu.matmul %288, %299, %cst_120 {dimension_numbers = #tpu.dot_dimension_numbers<[1], [0], [0], [1], [0, 0, 1, 1], [], []>} : vector<8x32xf32>, vector<32x128xf32>, vector<8x128xf32> -> vector<8x128xf32>
    %301 = arith.addf %298, %300 : vector<8x128xf32>
    %302 = vector.broadcast %293 : vector<1x128xf32> to vector<8x128xf32>
    %303 = arith.addf %301, %302 : vector<8x128xf32>
    %304 = arith.negf %303 : vector<8x128xf32>
    %305 = math.exp %304 : vector<8x128xf32>
    %cst_121 = arith.constant 1.000000e+00 : f32
    %306 = vector.broadcast %cst_121 : f32 to vector<8x128xf32>
    %307 = arith.addf %306, %305 : vector<8x128xf32>
    %308 = arith.divf %306, %307 : vector<8x128xf32>
    %309 = math.tanh %303 : vector<8x128xf32>
    %310 = vector.extract_strided_slice %308 {offsets = [0, 0], sizes = [8, 32], strides = [1, 1]} : vector<8x128xf32> to vector<8x32xf32>
    %311 = vector.extract_strided_slice %308 {offsets = [0, 32], sizes = [8, 32], strides = [1, 1]} : vector<8x128xf32> to vector<8x32xf32>
    %312 = vector.extract_strided_slice %308 {offsets = [0, 96], sizes = [8, 32], strides = [1, 1]} : vector<8x128xf32> to vector<8x32xf32>
    %313 = vector.extract_strided_slice %309 {offsets = [0, 64], sizes = [8, 32], strides = [1, 1]} : vector<8x128xf32> to vector<8x32xf32>
    %314 = arith.mulf %311, %286 : vector<8x32xf32>
    %315 = arith.mulf %310, %313 : vector<8x32xf32>
    %316 = arith.addf %314, %315 : vector<8x32xf32>
    %317 = math.tanh %316 : vector<8x32xf32>
    %318 = arith.mulf %312, %317 : vector<8x32xf32>
    %319 = vector.extract_strided_slice %256 {offsets = [2, 0, 0], sizes = [1, 2, 128], strides = [1, 1, 1]} : vector<8x2x128xf32> to vector<1x2x128xf32>
    %320 = vector.shape_cast %319 : vector<1x2x128xf32> to vector<2x128xf32>
    %321 = vector.extract_strided_slice %320 {offsets = [0, 0], sizes = [1, 128], strides = [1, 1]} : vector<2x128xf32> to vector<1x128xf32>
    %322 = vector.extract_strided_slice %320 {offsets = [1, 0], sizes = [1, 128], strides = [1, 1]} : vector<2x128xf32> to vector<1x128xf32>
    %323 = arith.addf %321, %322 : vector<1x128xf32>
    %324 = vector.extract_strided_slice %239 {offsets = [16, 0], sizes = [8, 16], strides = [1, 1]} : vector<64x16xf32> to vector<8x16xf32>
    %c2 = arith.constant 2 : index
    %c0_122 = arith.constant 0 : index
    %c0_123 = arith.constant 0 : index
    %325 = vector.load %arg35[%c2, %c0_122, %c0_123] : memref<8x48x128xf32, #tpu.memory_space<vmem>>, vector<1x48x128xf32>
    %326 = vector.shape_cast %325 : vector<1x48x128xf32> to vector<48x128xf32>
    %327 = vector.extract_strided_slice %326 {offsets = [0, 0], sizes = [16, 128], strides = [1, 1]} : vector<48x128xf32> to vector<16x128xf32>
    %cst_124 = arith.constant dense<0.000000e+00> : vector<8x128xf32>
    %328 = tpu.matmul %324, %327, %cst_124 {dimension_numbers = #tpu.dot_dimension_numbers<[1], [0], [0], [1], [0, 0, 1, 1], [], []>} : vector<8x16xf32>, vector<16x128xf32>, vector<8x128xf32> -> vector<8x128xf32>
    %329 = vector.extract_strided_slice %326 {offsets = [16, 0], sizes = [32, 128], strides = [1, 1]} : vector<48x128xf32> to vector<32x128xf32>
    %cst_125 = arith.constant dense<0.000000e+00> : vector<8x128xf32>
    %330 = tpu.matmul %318, %329, %cst_125 {dimension_numbers = #tpu.dot_dimension_numbers<[1], [0], [0], [1], [0, 0, 1, 1], [], []>} : vector<8x32xf32>, vector<32x128xf32>, vector<8x128xf32> -> vector<8x128xf32>
    %331 = arith.addf %328, %330 : vector<8x128xf32>
    %332 = vector.broadcast %323 : vector<1x128xf32> to vector<8x128xf32>
    %333 = arith.addf %331, %332 : vector<8x128xf32>
    %334 = arith.negf %333 : vector<8x128xf32>
    %335 = math.exp %334 : vector<8x128xf32>
    %cst_126 = arith.constant 1.000000e+00 : f32
    %336 = vector.broadcast %cst_126 : f32 to vector<8x128xf32>
    %337 = arith.addf %336, %335 : vector<8x128xf32>
    %338 = arith.divf %336, %337 : vector<8x128xf32>
    %339 = math.tanh %333 : vector<8x128xf32>
    %340 = vector.extract_strided_slice %338 {offsets = [0, 0], sizes = [8, 32], strides = [1, 1]} : vector<8x128xf32> to vector<8x32xf32>
    %341 = vector.extract_strided_slice %338 {offsets = [0, 32], sizes = [8, 32], strides = [1, 1]} : vector<8x128xf32> to vector<8x32xf32>
    %342 = vector.extract_strided_slice %338 {offsets = [0, 96], sizes = [8, 32], strides = [1, 1]} : vector<8x128xf32> to vector<8x32xf32>
    %343 = vector.extract_strided_slice %339 {offsets = [0, 64], sizes = [8, 32], strides = [1, 1]} : vector<8x128xf32> to vector<8x32xf32>
    %344 = arith.mulf %341, %316 : vector<8x32xf32>
    %345 = arith.mulf %340, %343 : vector<8x32xf32>
    %346 = arith.addf %344, %345 : vector<8x32xf32>
    %347 = math.tanh %346 : vector<8x32xf32>
    %348 = arith.mulf %342, %347 : vector<8x32xf32>
    %349 = vector.extract_strided_slice %256 {offsets = [3, 0, 0], sizes = [1, 2, 128], strides = [1, 1, 1]} : vector<8x2x128xf32> to vector<1x2x128xf32>
    %350 = vector.shape_cast %349 : vector<1x2x128xf32> to vector<2x128xf32>
    %351 = vector.extract_strided_slice %350 {offsets = [0, 0], sizes = [1, 128], strides = [1, 1]} : vector<2x128xf32> to vector<1x128xf32>
    %352 = vector.extract_strided_slice %350 {offsets = [1, 0], sizes = [1, 128], strides = [1, 1]} : vector<2x128xf32> to vector<1x128xf32>
    %353 = arith.addf %351, %352 : vector<1x128xf32>
    %354 = vector.extract_strided_slice %239 {offsets = [24, 0], sizes = [8, 16], strides = [1, 1]} : vector<64x16xf32> to vector<8x16xf32>
    %c3 = arith.constant 3 : index
    %c0_127 = arith.constant 0 : index
    %c0_128 = arith.constant 0 : index
    %355 = vector.load %arg35[%c3, %c0_127, %c0_128] : memref<8x48x128xf32, #tpu.memory_space<vmem>>, vector<1x48x128xf32>
    %356 = vector.shape_cast %355 : vector<1x48x128xf32> to vector<48x128xf32>
    %357 = vector.extract_strided_slice %356 {offsets = [0, 0], sizes = [16, 128], strides = [1, 1]} : vector<48x128xf32> to vector<16x128xf32>
    %cst_129 = arith.constant dense<0.000000e+00> : vector<8x128xf32>
    %358 = tpu.matmul %354, %357, %cst_129 {dimension_numbers = #tpu.dot_dimension_numbers<[1], [0], [0], [1], [0, 0, 1, 1], [], []>} : vector<8x16xf32>, vector<16x128xf32>, vector<8x128xf32> -> vector<8x128xf32>
    %359 = vector.extract_strided_slice %356 {offsets = [16, 0], sizes = [32, 128], strides = [1, 1]} : vector<48x128xf32> to vector<32x128xf32>
    %cst_130 = arith.constant dense<0.000000e+00> : vector<8x128xf32>
    %360 = tpu.matmul %348, %359, %cst_130 {dimension_numbers = #tpu.dot_dimension_numbers<[1], [0], [0], [1], [0, 0, 1, 1], [], []>} : vector<8x32xf32>, vector<32x128xf32>, vector<8x128xf32> -> vector<8x128xf32>
    %361 = arith.addf %358, %360 : vector<8x128xf32>
    %362 = vector.broadcast %353 : vector<1x128xf32> to vector<8x128xf32>
    %363 = arith.addf %361, %362 : vector<8x128xf32>
    %364 = arith.negf %363 : vector<8x128xf32>
    %365 = math.exp %364 : vector<8x128xf32>
    %cst_131 = arith.constant 1.000000e+00 : f32
    %366 = vector.broadcast %cst_131 : f32 to vector<8x128xf32>
    %367 = arith.addf %366, %365 : vector<8x128xf32>
    %368 = arith.divf %366, %367 : vector<8x128xf32>
    %369 = math.tanh %363 : vector<8x128xf32>
    %370 = vector.extract_strided_slice %368 {offsets = [0, 0], sizes = [8, 32], strides = [1, 1]} : vector<8x128xf32> to vector<8x32xf32>
    %371 = vector.extract_strided_slice %368 {offsets = [0, 32], sizes = [8, 32], strides = [1, 1]} : vector<8x128xf32> to vector<8x32xf32>
    %372 = vector.extract_strided_slice %368 {offsets = [0, 96], sizes = [8, 32], strides = [1, 1]} : vector<8x128xf32> to vector<8x32xf32>
    %373 = vector.extract_strided_slice %369 {offsets = [0, 64], sizes = [8, 32], strides = [1, 1]} : vector<8x128xf32> to vector<8x32xf32>
    %374 = arith.mulf %371, %346 : vector<8x32xf32>
    %375 = arith.mulf %370, %373 : vector<8x32xf32>
    %376 = arith.addf %374, %375 : vector<8x32xf32>
    %377 = math.tanh %376 : vector<8x32xf32>
    %378 = arith.mulf %372, %377 : vector<8x32xf32>
    %379 = vector.extract_strided_slice %256 {offsets = [4, 0, 0], sizes = [1, 2, 128], strides = [1, 1, 1]} : vector<8x2x128xf32> to vector<1x2x128xf32>
    %380 = vector.shape_cast %379 : vector<1x2x128xf32> to vector<2x128xf32>
    %381 = vector.extract_strided_slice %380 {offsets = [0, 0], sizes = [1, 128], strides = [1, 1]} : vector<2x128xf32> to vector<1x128xf32>
    %382 = vector.extract_strided_slice %380 {offsets = [1, 0], sizes = [1, 128], strides = [1, 1]} : vector<2x128xf32> to vector<1x128xf32>
    %383 = arith.addf %381, %382 : vector<1x128xf32>
    %384 = vector.extract_strided_slice %239 {offsets = [32, 0], sizes = [8, 16], strides = [1, 1]} : vector<64x16xf32> to vector<8x16xf32>
    %c4 = arith.constant 4 : index
    %c0_132 = arith.constant 0 : index
    %c0_133 = arith.constant 0 : index
    %385 = vector.load %arg35[%c4, %c0_132, %c0_133] : memref<8x48x128xf32, #tpu.memory_space<vmem>>, vector<1x48x128xf32>
    %386 = vector.shape_cast %385 : vector<1x48x128xf32> to vector<48x128xf32>
    %387 = vector.extract_strided_slice %386 {offsets = [0, 0], sizes = [16, 128], strides = [1, 1]} : vector<48x128xf32> to vector<16x128xf32>
    %cst_134 = arith.constant dense<0.000000e+00> : vector<8x128xf32>
    %388 = tpu.matmul %384, %387, %cst_134 {dimension_numbers = #tpu.dot_dimension_numbers<[1], [0], [0], [1], [0, 0, 1, 1], [], []>} : vector<8x16xf32>, vector<16x128xf32>, vector<8x128xf32> -> vector<8x128xf32>
    %389 = vector.extract_strided_slice %386 {offsets = [16, 0], sizes = [32, 128], strides = [1, 1]} : vector<48x128xf32> to vector<32x128xf32>
    %cst_135 = arith.constant dense<0.000000e+00> : vector<8x128xf32>
    %390 = tpu.matmul %378, %389, %cst_135 {dimension_numbers = #tpu.dot_dimension_numbers<[1], [0], [0], [1], [0, 0, 1, 1], [], []>} : vector<8x32xf32>, vector<32x128xf32>, vector<8x128xf32> -> vector<8x128xf32>
    %391 = arith.addf %388, %390 : vector<8x128xf32>
    %392 = vector.broadcast %383 : vector<1x128xf32> to vector<8x128xf32>
    %393 = arith.addf %391, %392 : vector<8x128xf32>
    %394 = arith.negf %393 : vector<8x128xf32>
    %395 = math.exp %394 : vector<8x128xf32>
    %cst_136 = arith.constant 1.000000e+00 : f32
    %396 = vector.broadcast %cst_136 : f32 to vector<8x128xf32>
    %397 = arith.addf %396, %395 : vector<8x128xf32>
    %398 = arith.divf %396, %397 : vector<8x128xf32>
    %399 = math.tanh %393 : vector<8x128xf32>
    %400 = vector.extract_strided_slice %398 {offsets = [0, 0], sizes = [8, 32], strides = [1, 1]} : vector<8x128xf32> to vector<8x32xf32>
    %401 = vector.extract_strided_slice %398 {offsets = [0, 32], sizes = [8, 32], strides = [1, 1]} : vector<8x128xf32> to vector<8x32xf32>
    %402 = vector.extract_strided_slice %398 {offsets = [0, 96], sizes = [8, 32], strides = [1, 1]} : vector<8x128xf32> to vector<8x32xf32>
    %403 = vector.extract_strided_slice %399 {offsets = [0, 64], sizes = [8, 32], strides = [1, 1]} : vector<8x128xf32> to vector<8x32xf32>
    %404 = arith.mulf %401, %376 : vector<8x32xf32>
    %405 = arith.mulf %400, %403 : vector<8x32xf32>
    %406 = arith.addf %404, %405 : vector<8x32xf32>
    %407 = math.tanh %406 : vector<8x32xf32>
    %408 = arith.mulf %402, %407 : vector<8x32xf32>
    %409 = vector.extract_strided_slice %256 {offsets = [5, 0, 0], sizes = [1, 2, 128], strides = [1, 1, 1]} : vector<8x2x128xf32> to vector<1x2x128xf32>
    %410 = vector.shape_cast %409 : vector<1x2x128xf32> to vector<2x128xf32>
    %411 = vector.extract_strided_slice %410 {offsets = [0, 0], sizes = [1, 128], strides = [1, 1]} : vector<2x128xf32> to vector<1x128xf32>
    %412 = vector.extract_strided_slice %410 {offsets = [1, 0], sizes = [1, 128], strides = [1, 1]} : vector<2x128xf32> to vector<1x128xf32>
    %413 = arith.addf %411, %412 : vector<1x128xf32>
    %414 = vector.extract_strided_slice %239 {offsets = [40, 0], sizes = [8, 16], strides = [1, 1]} : vector<64x16xf32> to vector<8x16xf32>
    %c5 = arith.constant 5 : index
    %c0_137 = arith.constant 0 : index
    %c0_138 = arith.constant 0 : index
    %415 = vector.load %arg35[%c5, %c0_137, %c0_138] : memref<8x48x128xf32, #tpu.memory_space<vmem>>, vector<1x48x128xf32>
    %416 = vector.shape_cast %415 : vector<1x48x128xf32> to vector<48x128xf32>
    %417 = vector.extract_strided_slice %416 {offsets = [0, 0], sizes = [16, 128], strides = [1, 1]} : vector<48x128xf32> to vector<16x128xf32>
    %cst_139 = arith.constant dense<0.000000e+00> : vector<8x128xf32>
    %418 = tpu.matmul %414, %417, %cst_139 {dimension_numbers = #tpu.dot_dimension_numbers<[1], [0], [0], [1], [0, 0, 1, 1], [], []>} : vector<8x16xf32>, vector<16x128xf32>, vector<8x128xf32> -> vector<8x128xf32>
    %419 = vector.extract_strided_slice %416 {offsets = [16, 0], sizes = [32, 128], strides = [1, 1]} : vector<48x128xf32> to vector<32x128xf32>
    %cst_140 = arith.constant dense<0.000000e+00> : vector<8x128xf32>
    %420 = tpu.matmul %408, %419, %cst_140 {dimension_numbers = #tpu.dot_dimension_numbers<[1], [0], [0], [1], [0, 0, 1, 1], [], []>} : vector<8x32xf32>, vector<32x128xf32>, vector<8x128xf32> -> vector<8x128xf32>
    %421 = arith.addf %418, %420 : vector<8x128xf32>
    %422 = vector.broadcast %413 : vector<1x128xf32> to vector<8x128xf32>
    %423 = arith.addf %421, %422 : vector<8x128xf32>
    %424 = arith.negf %423 : vector<8x128xf32>
    %425 = math.exp %424 : vector<8x128xf32>
    %cst_141 = arith.constant 1.000000e+00 : f32
    %426 = vector.broadcast %cst_141 : f32 to vector<8x128xf32>
    %427 = arith.addf %426, %425 : vector<8x128xf32>
    %428 = arith.divf %426, %427 : vector<8x128xf32>
    %429 = math.tanh %423 : vector<8x128xf32>
    %430 = vector.extract_strided_slice %428 {offsets = [0, 0], sizes = [8, 32], strides = [1, 1]} : vector<8x128xf32> to vector<8x32xf32>
    %431 = vector.extract_strided_slice %428 {offsets = [0, 32], sizes = [8, 32], strides = [1, 1]} : vector<8x128xf32> to vector<8x32xf32>
    %432 = vector.extract_strided_slice %428 {offsets = [0, 96], sizes = [8, 32], strides = [1, 1]} : vector<8x128xf32> to vector<8x32xf32>
    %433 = vector.extract_strided_slice %429 {offsets = [0, 64], sizes = [8, 32], strides = [1, 1]} : vector<8x128xf32> to vector<8x32xf32>
    %434 = arith.mulf %431, %406 : vector<8x32xf32>
    %435 = arith.mulf %430, %433 : vector<8x32xf32>
    %436 = arith.addf %434, %435 : vector<8x32xf32>
    %437 = math.tanh %436 : vector<8x32xf32>
    %438 = arith.mulf %432, %437 : vector<8x32xf32>
    %439 = vector.extract_strided_slice %256 {offsets = [6, 0, 0], sizes = [1, 2, 128], strides = [1, 1, 1]} : vector<8x2x128xf32> to vector<1x2x128xf32>
    %440 = vector.shape_cast %439 : vector<1x2x128xf32> to vector<2x128xf32>
    %441 = vector.extract_strided_slice %440 {offsets = [0, 0], sizes = [1, 128], strides = [1, 1]} : vector<2x128xf32> to vector<1x128xf32>
    %442 = vector.extract_strided_slice %440 {offsets = [1, 0], sizes = [1, 128], strides = [1, 1]} : vector<2x128xf32> to vector<1x128xf32>
    %443 = arith.addf %441, %442 : vector<1x128xf32>
    %444 = vector.extract_strided_slice %239 {offsets = [48, 0], sizes = [8, 16], strides = [1, 1]} : vector<64x16xf32> to vector<8x16xf32>
    %c6 = arith.constant 6 : index
    %c0_142 = arith.constant 0 : index
    %c0_143 = arith.constant 0 : index
    %445 = vector.load %arg35[%c6, %c0_142, %c0_143] : memref<8x48x128xf32, #tpu.memory_space<vmem>>, vector<1x48x128xf32>
    %446 = vector.shape_cast %445 : vector<1x48x128xf32> to vector<48x128xf32>
    %447 = vector.extract_strided_slice %446 {offsets = [0, 0], sizes = [16, 128], strides = [1, 1]} : vector<48x128xf32> to vector<16x128xf32>
    %cst_144 = arith.constant dense<0.000000e+00> : vector<8x128xf32>
    %448 = tpu.matmul %444, %447, %cst_144 {dimension_numbers = #tpu.dot_dimension_numbers<[1], [0], [0], [1], [0, 0, 1, 1], [], []>} : vector<8x16xf32>, vector<16x128xf32>, vector<8x128xf32> -> vector<8x128xf32>
    %449 = vector.extract_strided_slice %446 {offsets = [16, 0], sizes = [32, 128], strides = [1, 1]} : vector<48x128xf32> to vector<32x128xf32>
    %cst_145 = arith.constant dense<0.000000e+00> : vector<8x128xf32>
    %450 = tpu.matmul %438, %449, %cst_145 {dimension_numbers = #tpu.dot_dimension_numbers<[1], [0], [0], [1], [0, 0, 1, 1], [], []>} : vector<8x32xf32>, vector<32x128xf32>, vector<8x128xf32> -> vector<8x128xf32>
    %451 = arith.addf %448, %450 : vector<8x128xf32>
    %452 = vector.broadcast %443 : vector<1x128xf32> to vector<8x128xf32>
    %453 = arith.addf %451, %452 : vector<8x128xf32>
    %454 = arith.negf %453 : vector<8x128xf32>
    %455 = math.exp %454 : vector<8x128xf32>
    %cst_146 = arith.constant 1.000000e+00 : f32
    %456 = vector.broadcast %cst_146 : f32 to vector<8x128xf32>
    %457 = arith.addf %456, %455 : vector<8x128xf32>
    %458 = arith.divf %456, %457 : vector<8x128xf32>
    %459 = math.tanh %453 : vector<8x128xf32>
    %460 = vector.extract_strided_slice %458 {offsets = [0, 0], sizes = [8, 32], strides = [1, 1]} : vector<8x128xf32> to vector<8x32xf32>
    %461 = vector.extract_strided_slice %458 {offsets = [0, 32], sizes = [8, 32], strides = [1, 1]} : vector<8x128xf32> to vector<8x32xf32>
    %462 = vector.extract_strided_slice %458 {offsets = [0, 96], sizes = [8, 32], strides = [1, 1]} : vector<8x128xf32> to vector<8x32xf32>
    %463 = vector.extract_strided_slice %459 {offsets = [0, 64], sizes = [8, 32], strides = [1, 1]} : vector<8x128xf32> to vector<8x32xf32>
    %464 = arith.mulf %461, %436 : vector<8x32xf32>
    %465 = arith.mulf %460, %463 : vector<8x32xf32>
    %466 = arith.addf %464, %465 : vector<8x32xf32>
    %467 = math.tanh %466 : vector<8x32xf32>
    %468 = arith.mulf %462, %467 : vector<8x32xf32>
    %469 = vector.extract_strided_slice %256 {offsets = [7, 0, 0], sizes = [1, 2, 128], strides = [1, 1, 1]} : vector<8x2x128xf32> to vector<1x2x128xf32>
    %470 = vector.shape_cast %469 : vector<1x2x128xf32> to vector<2x128xf32>
    %471 = vector.extract_strided_slice %470 {offsets = [0, 0], sizes = [1, 128], strides = [1, 1]} : vector<2x128xf32> to vector<1x128xf32>
    %472 = vector.extract_strided_slice %470 {offsets = [1, 0], sizes = [1, 128], strides = [1, 1]} : vector<2x128xf32> to vector<1x128xf32>
    %473 = arith.addf %471, %472 : vector<1x128xf32>
    %474 = vector.extract_strided_slice %239 {offsets = [56, 0], sizes = [8, 16], strides = [1, 1]} : vector<64x16xf32> to vector<8x16xf32>
    %c7 = arith.constant 7 : index
    %c0_147 = arith.constant 0 : index
    %c0_148 = arith.constant 0 : index
    %475 = vector.load %arg35[%c7, %c0_147, %c0_148] : memref<8x48x128xf32, #tpu.memory_space<vmem>>, vector<1x48x128xf32>
    %476 = vector.shape_cast %475 : vector<1x48x128xf32> to vector<48x128xf32>
    %477 = vector.extract_strided_slice %476 {offsets = [0, 0], sizes = [16, 128], strides = [1, 1]} : vector<48x128xf32> to vector<16x128xf32>
    %cst_149 = arith.constant dense<0.000000e+00> : vector<8x128xf32>
    %478 = tpu.matmul %474, %477, %cst_149 {dimension_numbers = #tpu.dot_dimension_numbers<[1], [0], [0], [1], [0, 0, 1, 1], [], []>} : vector<8x16xf32>, vector<16x128xf32>, vector<8x128xf32> -> vector<8x128xf32>
    %479 = vector.extract_strided_slice %476 {offsets = [16, 0], sizes = [32, 128], strides = [1, 1]} : vector<48x128xf32> to vector<32x128xf32>
    %cst_150 = arith.constant dense<0.000000e+00> : vector<8x128xf32>
    %480 = tpu.matmul %468, %479, %cst_150 {dimension_numbers = #tpu.dot_dimension_numbers<[1], [0], [0], [1], [0, 0, 1, 1], [], []>} : vector<8x32xf32>, vector<32x128xf32>, vector<8x128xf32> -> vector<8x128xf32>
    %481 = arith.addf %478, %480 : vector<8x128xf32>
    %482 = vector.broadcast %473 : vector<1x128xf32> to vector<8x128xf32>
    %483 = arith.addf %481, %482 : vector<8x128xf32>
    %484 = arith.negf %483 : vector<8x128xf32>
    %485 = math.exp %484 : vector<8x128xf32>
    %cst_151 = arith.constant 1.000000e+00 : f32
    %486 = vector.broadcast %cst_151 : f32 to vector<8x128xf32>
    %487 = arith.addf %486, %485 : vector<8x128xf32>
    %488 = arith.divf %486, %487 : vector<8x128xf32>
    %489 = math.tanh %483 : vector<8x128xf32>
    %490 = vector.extract_strided_slice %488 {offsets = [0, 0], sizes = [8, 32], strides = [1, 1]} : vector<8x128xf32> to vector<8x32xf32>
    %491 = vector.extract_strided_slice %488 {offsets = [0, 32], sizes = [8, 32], strides = [1, 1]} : vector<8x128xf32> to vector<8x32xf32>
    %492 = vector.extract_strided_slice %488 {offsets = [0, 96], sizes = [8, 32], strides = [1, 1]} : vector<8x128xf32> to vector<8x32xf32>
    %493 = vector.extract_strided_slice %489 {offsets = [0, 64], sizes = [8, 32], strides = [1, 1]} : vector<8x128xf32> to vector<8x32xf32>
    %494 = arith.mulf %491, %466 : vector<8x32xf32>
    %495 = arith.mulf %490, %493 : vector<8x32xf32>
    %496 = arith.addf %494, %495 : vector<8x32xf32>
    %497 = math.tanh %496 : vector<8x32xf32>
    %498 = arith.mulf %492, %497 : vector<8x32xf32>
    %499 = vector.shape_cast %0 : vector<2x16xf32> to vector<1x2x16xf32>
    %500 = vector.shape_cast %9 : vector<2x16xf32> to vector<1x2x16xf32>
    %c0_152 = arith.constant 0 : index
    %c0_153 = arith.constant 0 : index
    %c0_154 = arith.constant 0 : index
    %c0_155 = arith.constant 0 : index
    %501 = vector.load %arg26[%c0_152, %c0_153, %c0_154, %c0_155] : memref<1x4x2x16xf32, #tpu.memory_space<vmem>>, vector<1x4x2x16xf32>
    %502 = vector.shape_cast %501 : vector<1x4x2x16xf32> to vector<4x2x16xf32>
    %503 = vector.broadcast %500 : vector<1x2x16xf32> to vector<4x2x16xf32>
    %504 = arith.mulf %503, %502 : vector<4x2x16xf32>
    %505 = vector.broadcast %499 : vector<1x2x16xf32> to vector<4x2x16xf32>
    %506 = arith.addf %505, %504 : vector<4x2x16xf32>
    %507 = vector.shape_cast %10 : vector<1x16xf32> to vector<1x1x16xf32>
    %508 = vector.shape_cast %19 : vector<1x16xf32> to vector<1x1x16xf32>
    %c0_156 = arith.constant 0 : index
    %c0_157 = arith.constant 0 : index
    %c0_158 = arith.constant 0 : index
    %c0_159 = arith.constant 0 : index
    %509 = vector.load %arg27[%c0_156, %c0_157, %c0_158, %c0_159] : memref<1x4x1x16xf32, #tpu.memory_space<vmem>>, vector<1x4x1x16xf32>
    %510 = vector.shape_cast %509 : vector<1x4x1x16xf32> to vector<4x1x16xf32>
    %511 = vector.broadcast %508 : vector<1x1x16xf32> to vector<4x1x16xf32>
    %512 = arith.mulf %511, %510 : vector<4x1x16xf32>
    %513 = vector.broadcast %507 : vector<1x1x16xf32> to vector<4x1x16xf32>
    %514 = arith.addf %513, %512 : vector<4x1x16xf32>
    %515 = vector.shape_cast %40 : vector<48x128xf32> to vector<1x48x128xf32>
    %516 = vector.shape_cast %49 : vector<48x128xf32> to vector<1x48x128xf32>
    %c0_160 = arith.constant 0 : index
    %c0_161 = arith.constant 0 : index
    %c0_162 = arith.constant 0 : index
    %c0_163 = arith.constant 0 : index
    %517 = vector.load %arg28[%c0_160, %c0_161, %c0_162, %c0_163] : memref<1x4x48x128xf32, #tpu.memory_space<vmem>>, vector<1x4x48x128xf32>
    %518 = vector.shape_cast %517 : vector<1x4x48x128xf32> to vector<4x48x128xf32>
    %519 = vector.broadcast %516 : vector<1x48x128xf32> to vector<4x48x128xf32>
    %520 = arith.mulf %519, %518 : vector<4x48x128xf32>
    %521 = vector.broadcast %515 : vector<1x48x128xf32> to vector<4x48x128xf32>
    %522 = arith.addf %521, %520 : vector<4x48x128xf32>
    %c0_164 = arith.constant 0 : index
    %c0_165 = arith.constant 0 : index
    %c0_166 = arith.constant 0 : index
    %523 = vector.load %arg36[%c0_164, %c0_165, %c0_166] : memref<4x48x128xf32, #tpu.memory_space<vmem>>, vector<4x48x128xf32>
    tpu.vector_store %arg36[%c0_164, %c0_165, %c0_166], %522 {strides = array<i32>} : memref<4x48x128xf32, #tpu.memory_space<vmem>>, vector<4x48x128xf32>,
    %524 = vector.shape_cast %50 : vector<2x128xf32> to vector<1x2x128xf32>
    %525 = vector.shape_cast %59 : vector<2x128xf32> to vector<1x2x128xf32>
    %c0_167 = arith.constant 0 : index
    %c0_168 = arith.constant 0 : index
    %c0_169 = arith.constant 0 : index
    %c0_170 = arith.constant 0 : index
    %526 = vector.load %arg29[%c0_167, %c0_168, %c0_169, %c0_170] : memref<1x4x2x128xf32, #tpu.memory_space<vmem>>, vector<1x4x2x128xf32>
    %527 = vector.shape_cast %526 : vector<1x4x2x128xf32> to vector<4x2x128xf32>
    %528 = vector.broadcast %525 : vector<1x2x128xf32> to vector<4x2x128xf32>
    %529 = arith.mulf %528, %527 : vector<4x2x128xf32>
    %530 = vector.broadcast %524 : vector<1x2x128xf32> to vector<4x2x128xf32>
    %531 = arith.addf %530, %529 : vector<4x2x128xf32>
    %532 = vector.shape_cast %60 : vector<32x5xf32> to vector<1x32x5xf32>
    %533 = vector.shape_cast %69 : vector<32x5xf32> to vector<1x32x5xf32>
    %c0_171 = arith.constant 0 : index
    %c0_172 = arith.constant 0 : index
    %c0_173 = arith.constant 0 : index
    %c0_174 = arith.constant 0 : index
    %534 = vector.load %arg30[%c0_171, %c0_172, %c0_173, %c0_174] : memref<1x4x32x5xf32, #tpu.memory_space<vmem>>, vector<1x4x32x5xf32>
    %535 = vector.shape_cast %534 : vector<1x4x32x5xf32> to vector<4x32x5xf32>
    %536 = vector.broadcast %533 : vector<1x32x5xf32> to vector<4x32x5xf32>
    %537 = arith.mulf %536, %535 : vector<4x32x5xf32>
    %538 = vector.broadcast %532 : vector<1x32x5xf32> to vector<4x32x5xf32>
    %539 = arith.addf %538, %537 : vector<4x32x5xf32>
    %540 = vector.shape_cast %70 : vector<1x5xf32> to vector<1x1x5xf32>
    %541 = vector.shape_cast %79 : vector<1x5xf32> to vector<1x1x5xf32>
    %c0_175 = arith.constant 0 : index
    %c0_176 = arith.constant 0 : index
    %c0_177 = arith.constant 0 : index
    %c0_178 = arith.constant 0 : index
    %542 = vector.load %arg31[%c0_175, %c0_176, %c0_177, %c0_178] : memref<1x4x1x5xf32, #tpu.memory_space<vmem>>, vector<1x4x1x5xf32>
    %543 = vector.shape_cast %542 : vector<1x4x1x5xf32> to vector<4x1x5xf32>
    %544 = vector.broadcast %541 : vector<1x1x5xf32> to vector<4x1x5xf32>
    %545 = arith.mulf %544, %543 : vector<4x1x5xf32>
    %546 = vector.broadcast %540 : vector<1x1x5xf32> to vector<4x1x5xf32>
    %547 = arith.addf %546, %545 : vector<4x1x5xf32>
    %c0_179 = arith.constant 0 : index
    %c0_180 = arith.constant 0 : index
    %548 = vector.load %arg4[%c0_179, %c0_180] : memref<8x2xf32, #tpu.memory_space<vmem>>, vector<8x2xf32>
    %549 = vector.extract_strided_slice %506 {offsets = [0, 0, 0], sizes = [1, 2, 16], strides = [1, 1, 1]} : vector<4x2x16xf32> to vector<1x2x16xf32>
    %550 = vector.shape_cast %549 : vector<1x2x16xf32> to vector<2x16xf32>
    %cst_181 = arith.constant dense<0.000000e+00> : vector<8x16xf32>
    %551 = tpu.matmul %548, %550, %cst_181 {dimension_numbers = #tpu.dot_dimension_numbers<[1], [0], [0], [1], [0, 0, 1, 1], [], []>} : vector<8x2xf32>, vector<2x16xf32>, vector<8x16xf32> -> vector<8x16xf32>
    %552 = vector.extract_strided_slice %514 {offsets = [0, 0, 0], sizes = [1, 1, 16], strides = [1, 1, 1]} : vector<4x1x16xf32> to vector<1x1x16xf32>
    %553 = vector.shape_cast %552 : vector<1x1x16xf32> to vector<1x16xf32>
    %554 = vector.broadcast %553 : vector<1x16xf32> to vector<8x16xf32>
    %555 = arith.addf %551, %554 : vector<8x16xf32>
    %556 = vector.extract_strided_slice %531 {offsets = [0, 0, 0], sizes = [1, 2, 128], strides = [1, 1, 1]} : vector<4x2x128xf32> to vector<1x2x128xf32>
    %557 = vector.shape_cast %556 : vector<1x2x128xf32> to vector<2x128xf32>
    %558 = vector.extract_strided_slice %557 {offsets = [0, 0], sizes = [1, 128], strides = [1, 1]} : vector<2x128xf32> to vector<1x128xf32>
    %559 = vector.extract_strided_slice %557 {offsets = [1, 0], sizes = [1, 128], strides = [1, 1]} : vector<2x128xf32> to vector<1x128xf32>
    %560 = arith.addf %558, %559 : vector<1x128xf32>
    %c0_182 = arith.constant 0 : index
    %c0_183 = arith.constant 0 : index
    %c0_184 = arith.constant 0 : index
    %561 = vector.load %arg36[%c0_182, %c0_183, %c0_184] : memref<4x48x128xf32, #tpu.memory_space<vmem>>, vector<1x48x128xf32>
    %562 = vector.shape_cast %561 : vector<1x48x128xf32> to vector<48x128xf32>
    %563 = vector.extract_strided_slice %562 {offsets = [0, 0], sizes = [16, 128], strides = [1, 1]} : vector<48x128xf32> to vector<16x128xf32>
    %cst_185 = arith.constant dense<0.000000e+00> : vector<8x128xf32>
    %564 = tpu.matmul %555, %563, %cst_185 {dimension_numbers = #tpu.dot_dimension_numbers<[1], [0], [0], [1], [0, 0, 1, 1], [], []>} : vector<8x16xf32>, vector<16x128xf32>, vector<8x128xf32> -> vector<8x128xf32>
    %565 = vector.extract_strided_slice %562 {offsets = [16, 0], sizes = [32, 128], strides = [1, 1]} : vector<48x128xf32> to vector<32x128xf32>
    %cst_186 = arith.constant dense<0.000000e+00> : vector<8x128xf32>
    %566 = tpu.matmul %498, %565, %cst_186 {dimension_numbers = #tpu.dot_dimension_numbers<[1], [0], [0], [1], [0, 0, 1, 1], [], []>} : vector<8x32xf32>, vector<32x128xf32>, vector<8x128xf32> -> vector<8x128xf32>
    %567 = arith.addf %564, %566 : vector<8x128xf32>
    %568 = vector.broadcast %560 : vector<1x128xf32> to vector<8x128xf32>
    %569 = arith.addf %567, %568 : vector<8x128xf32>
    %570 = arith.negf %569 : vector<8x128xf32>
    %571 = math.exp %570 : vector<8x128xf32>
    %cst_187 = arith.constant 1.000000e+00 : f32
    %572 = vector.broadcast %cst_187 : f32 to vector<8x128xf32>
    %573 = arith.addf %572, %571 : vector<8x128xf32>
    %574 = arith.divf %572, %573 : vector<8x128xf32>
    %575 = math.tanh %569 : vector<8x128xf32>
    %576 = vector.extract_strided_slice %574 {offsets = [0, 0], sizes = [8, 32], strides = [1, 1]} : vector<8x128xf32> to vector<8x32xf32>
    %577 = vector.extract_strided_slice %574 {offsets = [0, 32], sizes = [8, 32], strides = [1, 1]} : vector<8x128xf32> to vector<8x32xf32>
    %578 = vector.extract_strided_slice %574 {offsets = [0, 96], sizes = [8, 32], strides = [1, 1]} : vector<8x128xf32> to vector<8x32xf32>
    %579 = vector.extract_strided_slice %575 {offsets = [0, 64], sizes = [8, 32], strides = [1, 1]} : vector<8x128xf32> to vector<8x32xf32>
    %580 = arith.mulf %577, %496 : vector<8x32xf32>
    %581 = arith.mulf %576, %579 : vector<8x32xf32>
    %582 = arith.addf %580, %581 : vector<8x32xf32>
    %583 = math.tanh %582 : vector<8x32xf32>
    %584 = arith.mulf %578, %583 : vector<8x32xf32>
    %585 = vector.extract_strided_slice %539 {offsets = [0, 0, 0], sizes = [1, 32, 5], strides = [1, 1, 1]} : vector<4x32x5xf32> to vector<1x32x5xf32>
    %586 = vector.shape_cast %585 : vector<1x32x5xf32> to vector<32x5xf32>
    %cst_188 = arith.constant dense<0.000000e+00> : vector<8x5xf32>
    %587 = tpu.matmul %584, %586, %cst_188 {dimension_numbers = #tpu.dot_dimension_numbers<[1], [0], [0], [1], [0, 0, 1, 1], [], []>} : vector<8x32xf32>, vector<32x5xf32>, vector<8x5xf32> -> vector<8x5xf32>
    %588 = vector.extract_strided_slice %547 {offsets = [0, 0, 0], sizes = [1, 1, 5], strides = [1, 1, 1]} : vector<4x1x5xf32> to vector<1x1x5xf32>
    %589 = vector.shape_cast %588 : vector<1x1x5xf32> to vector<1x5xf32>
    %590 = vector.broadcast %589 : vector<1x5xf32> to vector<8x5xf32>
    %591 = arith.addf %587, %590 : vector<8x5xf32>
    %592 = vector.extract_strided_slice %591 {offsets = [0, 0], sizes = [8, 2], strides = [1, 1]} : vector<8x5xf32> to vector<8x2xf32>
    %593 = arith.addf %592, %548 : vector<8x2xf32>
    %594 = vector.extract_strided_slice %591 {offsets = [0, 2], sizes = [8, 3], strides = [1, 1]} : vector<8x5xf32> to vector<8x3xf32>
    %595 = vector.extract_strided_slice %506 {offsets = [1, 0, 0], sizes = [1, 2, 16], strides = [1, 1, 1]} : vector<4x2x16xf32> to vector<1x2x16xf32>
    %596 = vector.shape_cast %595 : vector<1x2x16xf32> to vector<2x16xf32>
    %cst_189 = arith.constant dense<0.000000e+00> : vector<8x16xf32>
    %597 = tpu.matmul %593, %596, %cst_189 {dimension_numbers = #tpu.dot_dimension_numbers<[1], [0], [0], [1], [0, 0, 1, 1], [], []>} : vector<8x2xf32>, vector<2x16xf32>, vector<8x16xf32> -> vector<8x16xf32>
    %598 = vector.extract_strided_slice %514 {offsets = [1, 0, 0], sizes = [1, 1, 16], strides = [1, 1, 1]} : vector<4x1x16xf32> to vector<1x1x16xf32>
    %599 = vector.shape_cast %598 : vector<1x1x16xf32> to vector<1x16xf32>
    %600 = vector.broadcast %599 : vector<1x16xf32> to vector<8x16xf32>
    %601 = arith.addf %597, %600 : vector<8x16xf32>
    %602 = vector.extract_strided_slice %531 {offsets = [1, 0, 0], sizes = [1, 2, 128], strides = [1, 1, 1]} : vector<4x2x128xf32> to vector<1x2x128xf32>
    %603 = vector.shape_cast %602 : vector<1x2x128xf32> to vector<2x128xf32>
    %604 = vector.extract_strided_slice %603 {offsets = [0, 0], sizes = [1, 128], strides = [1, 1]} : vector<2x128xf32> to vector<1x128xf32>
    %605 = vector.extract_strided_slice %603 {offsets = [1, 0], sizes = [1, 128], strides = [1, 1]} : vector<2x128xf32> to vector<1x128xf32>
    %606 = arith.addf %604, %605 : vector<1x128xf32>
    %c1_190 = arith.constant 1 : index
    %c0_191 = arith.constant 0 : index
    %c0_192 = arith.constant 0 : index
    %607 = vector.load %arg36[%c1_190, %c0_191, %c0_192] : memref<4x48x128xf32, #tpu.memory_space<vmem>>, vector<1x48x128xf32>
    %608 = vector.shape_cast %607 : vector<1x48x128xf32> to vector<48x128xf32>
    %609 = vector.extract_strided_slice %608 {offsets = [0, 0], sizes = [16, 128], strides = [1, 1]} : vector<48x128xf32> to vector<16x128xf32>
    %cst_193 = arith.constant dense<0.000000e+00> : vector<8x128xf32>
    %610 = tpu.matmul %601, %609, %cst_193 {dimension_numbers = #tpu.dot_dimension_numbers<[1], [0], [0], [1], [0, 0, 1, 1], [], []>} : vector<8x16xf32>, vector<16x128xf32>, vector<8x128xf32> -> vector<8x128xf32>
    %611 = vector.extract_strided_slice %608 {offsets = [16, 0], sizes = [32, 128], strides = [1, 1]} : vector<48x128xf32> to vector<32x128xf32>
    %cst_194 = arith.constant dense<0.000000e+00> : vector<8x128xf32>
    %612 = tpu.matmul %584, %611, %cst_194 {dimension_numbers = #tpu.dot_dimension_numbers<[1], [0], [0], [1], [0, 0, 1, 1], [], []>} : vector<8x32xf32>, vector<32x128xf32>, vector<8x128xf32> -> vector<8x128xf32>
    %613 = arith.addf %610, %612 : vector<8x128xf32>
    %614 = vector.broadcast %606 : vector<1x128xf32> to vector<8x128xf32>
    %615 = arith.addf %613, %614 : vector<8x128xf32>
    %616 = arith.negf %615 : vector<8x128xf32>
    %617 = math.exp %616 : vector<8x128xf32>
    %cst_195 = arith.constant 1.000000e+00 : f32
    %618 = vector.broadcast %cst_195 : f32 to vector<8x128xf32>
    %619 = arith.addf %618, %617 : vector<8x128xf32>
    %620 = arith.divf %618, %619 : vector<8x128xf32>
    %621 = math.tanh %615 : vector<8x128xf32>
    %622 = vector.extract_strided_slice %620 {offsets = [0, 0], sizes = [8, 32], strides = [1, 1]} : vector<8x128xf32> to vector<8x32xf32>
    %623 = vector.extract_strided_slice %620 {offsets = [0, 32], sizes = [8, 32], strides = [1, 1]} : vector<8x128xf32> to vector<8x32xf32>
    %624 = vector.extract_strided_slice %620 {offsets = [0, 96], sizes = [8, 32], strides = [1, 1]} : vector<8x128xf32> to vector<8x32xf32>
    %625 = vector.extract_strided_slice %621 {offsets = [0, 64], sizes = [8, 32], strides = [1, 1]} : vector<8x128xf32> to vector<8x32xf32>
    %626 = arith.mulf %623, %582 : vector<8x32xf32>
    %627 = arith.mulf %622, %625 : vector<8x32xf32>
    %628 = arith.addf %626, %627 : vector<8x32xf32>
    %629 = math.tanh %628 : vector<8x32xf32>
    %630 = arith.mulf %624, %629 : vector<8x32xf32>
    %631 = vector.extract_strided_slice %539 {offsets = [1, 0, 0], sizes = [1, 32, 5], strides = [1, 1, 1]} : vector<4x32x5xf32> to vector<1x32x5xf32>
    %632 = vector.shape_cast %631 : vector<1x32x5xf32> to vector<32x5xf32>
    %cst_196 = arith.constant dense<0.000000e+00> : vector<8x5xf32>
    %633 = tpu.matmul %630, %632, %cst_196 {dimension_numbers = #tpu.dot_dimension_numbers<[1], [0], [0], [1], [0, 0, 1, 1], [], []>} : vector<8x32xf32>, vector<32x5xf32>, vector<8x5xf32> -> vector<8x5xf32>
    %634 = vector.extract_strided_slice %547 {offsets = [1, 0, 0], sizes = [1, 1, 5], strides = [1, 1, 1]} : vector<4x1x5xf32> to vector<1x1x5xf32>
    %635 = vector.shape_cast %634 : vector<1x1x5xf32> to vector<1x5xf32>
    %636 = vector.broadcast %635 : vector<1x5xf32> to vector<8x5xf32>
    %637 = arith.addf %633, %636 : vector<8x5xf32>
    %638 = vector.extract_strided_slice %637 {offsets = [0, 0], sizes = [8, 2], strides = [1, 1]} : vector<8x5xf32> to vector<8x2xf32>
    %639 = arith.addf %638, %593 : vector<8x2xf32>
    %640 = vector.extract_strided_slice %637 {offsets = [0, 2], sizes = [8, 3], strides = [1, 1]} : vector<8x5xf32> to vector<8x3xf32>
    %641 = vector.extract_strided_slice %506 {offsets = [2, 0, 0], sizes = [1, 2, 16], strides = [1, 1, 1]} : vector<4x2x16xf32> to vector<1x2x16xf32>
    %642 = vector.shape_cast %641 : vector<1x2x16xf32> to vector<2x16xf32>
    %cst_197 = arith.constant dense<0.000000e+00> : vector<8x16xf32>
    %643 = tpu.matmul %639, %642, %cst_197 {dimension_numbers = #tpu.dot_dimension_numbers<[1], [0], [0], [1], [0, 0, 1, 1], [], []>} : vector<8x2xf32>, vector<2x16xf32>, vector<8x16xf32> -> vector<8x16xf32>
    %644 = vector.extract_strided_slice %514 {offsets = [2, 0, 0], sizes = [1, 1, 16], strides = [1, 1, 1]} : vector<4x1x16xf32> to vector<1x1x16xf32>
    %645 = vector.shape_cast %644 : vector<1x1x16xf32> to vector<1x16xf32>
    %646 = vector.broadcast %645 : vector<1x16xf32> to vector<8x16xf32>
    %647 = arith.addf %643, %646 : vector<8x16xf32>
    %648 = vector.extract_strided_slice %531 {offsets = [2, 0, 0], sizes = [1, 2, 128], strides = [1, 1, 1]} : vector<4x2x128xf32> to vector<1x2x128xf32>
    %649 = vector.shape_cast %648 : vector<1x2x128xf32> to vector<2x128xf32>
    %650 = vector.extract_strided_slice %649 {offsets = [0, 0], sizes = [1, 128], strides = [1, 1]} : vector<2x128xf32> to vector<1x128xf32>
    %651 = vector.extract_strided_slice %649 {offsets = [1, 0], sizes = [1, 128], strides = [1, 1]} : vector<2x128xf32> to vector<1x128xf32>
    %652 = arith.addf %650, %651 : vector<1x128xf32>
    %c2_198 = arith.constant 2 : index
    %c0_199 = arith.constant 0 : index
    %c0_200 = arith.constant 0 : index
    %653 = vector.load %arg36[%c2_198, %c0_199, %c0_200] : memref<4x48x128xf32, #tpu.memory_space<vmem>>, vector<1x48x128xf32>
    %654 = vector.shape_cast %653 : vector<1x48x128xf32> to vector<48x128xf32>
    %655 = vector.extract_strided_slice %654 {offsets = [0, 0], sizes = [16, 128], strides = [1, 1]} : vector<48x128xf32> to vector<16x128xf32>
    %cst_201 = arith.constant dense<0.000000e+00> : vector<8x128xf32>
    %656 = tpu.matmul %647, %655, %cst_201 {dimension_numbers = #tpu.dot_dimension_numbers<[1], [0], [0], [1], [0, 0, 1, 1], [], []>} : vector<8x16xf32>, vector<16x128xf32>, vector<8x128xf32> -> vector<8x128xf32>
    %657 = vector.extract_strided_slice %654 {offsets = [16, 0], sizes = [32, 128], strides = [1, 1]} : vector<48x128xf32> to vector<32x128xf32>
    %cst_202 = arith.constant dense<0.000000e+00> : vector<8x128xf32>
    %658 = tpu.matmul %630, %657, %cst_202 {dimension_numbers = #tpu.dot_dimension_numbers<[1], [0], [0], [1], [0, 0, 1, 1], [], []>} : vector<8x32xf32>, vector<32x128xf32>, vector<8x128xf32> -> vector<8x128xf32>
    %659 = arith.addf %656, %658 : vector<8x128xf32>
    %660 = vector.broadcast %652 : vector<1x128xf32> to vector<8x128xf32>
    %661 = arith.addf %659, %660 : vector<8x128xf32>
    %662 = arith.negf %661 : vector<8x128xf32>
    %663 = math.exp %662 : vector<8x128xf32>
    %cst_203 = arith.constant 1.000000e+00 : f32
    %664 = vector.broadcast %cst_203 : f32 to vector<8x128xf32>
    %665 = arith.addf %664, %663 : vector<8x128xf32>
    %666 = arith.divf %664, %665 : vector<8x128xf32>
    %667 = math.tanh %661 : vector<8x128xf32>
    %668 = vector.extract_strided_slice %666 {offsets = [0, 0], sizes = [8, 32], strides = [1, 1]} : vector<8x128xf32> to vector<8x32xf32>
    %669 = vector.extract_strided_slice %666 {offsets = [0, 32], sizes = [8, 32], strides = [1, 1]} : vector<8x128xf32> to vector<8x32xf32>
    %670 = vector.extract_strided_slice %666 {offsets = [0, 96], sizes = [8, 32], strides = [1, 1]} : vector<8x128xf32> to vector<8x32xf32>
    %671 = vector.extract_strided_slice %667 {offsets = [0, 64], sizes = [8, 32], strides = [1, 1]} : vector<8x128xf32> to vector<8x32xf32>
    %672 = arith.mulf %669, %628 : vector<8x32xf32>
    %673 = arith.mulf %668, %671 : vector<8x32xf32>
    %674 = arith.addf %672, %673 : vector<8x32xf32>
    %675 = math.tanh %674 : vector<8x32xf32>
    %676 = arith.mulf %670, %675 : vector<8x32xf32>
    %677 = vector.extract_strided_slice %539 {offsets = [2, 0, 0], sizes = [1, 32, 5], strides = [1, 1, 1]} : vector<4x32x5xf32> to vector<1x32x5xf32>
    %678 = vector.shape_cast %677 : vector<1x32x5xf32> to vector<32x5xf32>
    %cst_204 = arith.constant dense<0.000000e+00> : vector<8x5xf32>
    %679 = tpu.matmul %676, %678, %cst_204 {dimension_numbers = #tpu.dot_dimension_numbers<[1], [0], [0], [1], [0, 0, 1, 1], [], []>} : vector<8x32xf32>, vector<32x5xf32>, vector<8x5xf32> -> vector<8x5xf32>
    %680 = vector.extract_strided_slice %547 {offsets = [2, 0, 0], sizes = [1, 1, 5], strides = [1, 1, 1]} : vector<4x1x5xf32> to vector<1x1x5xf32>
    %681 = vector.shape_cast %680 : vector<1x1x5xf32> to vector<1x5xf32>
    %682 = vector.broadcast %681 : vector<1x5xf32> to vector<8x5xf32>
    %683 = arith.addf %679, %682 : vector<8x5xf32>
    %684 = vector.extract_strided_slice %683 {offsets = [0, 0], sizes = [8, 2], strides = [1, 1]} : vector<8x5xf32> to vector<8x2xf32>
    %685 = arith.addf %684, %639 : vector<8x2xf32>
    %686 = vector.extract_strided_slice %683 {offsets = [0, 2], sizes = [8, 3], strides = [1, 1]} : vector<8x5xf32> to vector<8x3xf32>
    %687 = vector.extract_strided_slice %506 {offsets = [3, 0, 0], sizes = [1, 2, 16], strides = [1, 1, 1]} : vector<4x2x16xf32> to vector<1x2x16xf32>
    %688 = vector.shape_cast %687 : vector<1x2x16xf32> to vector<2x16xf32>
    %cst_205 = arith.constant dense<0.000000e+00> : vector<8x16xf32>
    %689 = tpu.matmul %685, %688, %cst_205 {dimension_numbers = #tpu.dot_dimension_numbers<[1], [0], [0], [1], [0, 0, 1, 1], [], []>} : vector<8x2xf32>, vector<2x16xf32>, vector<8x16xf32> -> vector<8x16xf32>
    %690 = vector.extract_strided_slice %514 {offsets = [3, 0, 0], sizes = [1, 1, 16], strides = [1, 1, 1]} : vector<4x1x16xf32> to vector<1x1x16xf32>
    %691 = vector.shape_cast %690 : vector<1x1x16xf32> to vector<1x16xf32>
    %692 = vector.broadcast %691 : vector<1x16xf32> to vector<8x16xf32>
    %693 = arith.addf %689, %692 : vector<8x16xf32>
    %694 = vector.extract_strided_slice %531 {offsets = [3, 0, 0], sizes = [1, 2, 128], strides = [1, 1, 1]} : vector<4x2x128xf32> to vector<1x2x128xf32>
    %695 = vector.shape_cast %694 : vector<1x2x128xf32> to vector<2x128xf32>
    %696 = vector.extract_strided_slice %695 {offsets = [0, 0], sizes = [1, 128], strides = [1, 1]} : vector<2x128xf32> to vector<1x128xf32>
    %697 = vector.extract_strided_slice %695 {offsets = [1, 0], sizes = [1, 128], strides = [1, 1]} : vector<2x128xf32> to vector<1x128xf32>
    %698 = arith.addf %696, %697 : vector<1x128xf32>
    %c3_206 = arith.constant 3 : index
    %c0_207 = arith.constant 0 : index
    %c0_208 = arith.constant 0 : index
    %699 = vector.load %arg36[%c3_206, %c0_207, %c0_208] : memref<4x48x128xf32, #tpu.memory_space<vmem>>, vector<1x48x128xf32>
    %700 = vector.shape_cast %699 : vector<1x48x128xf32> to vector<48x128xf32>
    %701 = vector.extract_strided_slice %700 {offsets = [0, 0], sizes = [16, 128], strides = [1, 1]} : vector<48x128xf32> to vector<16x128xf32>
    %cst_209 = arith.constant dense<0.000000e+00> : vector<8x128xf32>
    %702 = tpu.matmul %693, %701, %cst_209 {dimension_numbers = #tpu.dot_dimension_numbers<[1], [0], [0], [1], [0, 0, 1, 1], [], []>} : vector<8x16xf32>, vector<16x128xf32>, vector<8x128xf32> -> vector<8x128xf32>
    %703 = vector.extract_strided_slice %700 {offsets = [16, 0], sizes = [32, 128], strides = [1, 1]} : vector<48x128xf32> to vector<32x128xf32>
    %cst_210 = arith.constant dense<0.000000e+00> : vector<8x128xf32>
    %704 = tpu.matmul %676, %703, %cst_210 {dimension_numbers = #tpu.dot_dimension_numbers<[1], [0], [0], [1], [0, 0, 1, 1], [], []>} : vector<8x32xf32>, vector<32x128xf32>, vector<8x128xf32> -> vector<8x128xf32>
    %705 = arith.addf %702, %704 : vector<8x128xf32>
    %706 = vector.broadcast %698 : vector<1x128xf32> to vector<8x128xf32>
    %707 = arith.addf %705, %706 : vector<8x128xf32>
    %708 = arith.negf %707 : vector<8x128xf32>
    %709 = math.exp %708 : vector<8x128xf32>
    %cst_211 = arith.constant 1.000000e+00 : f32
    %710 = vector.broadcast %cst_211 : f32 to vector<8x128xf32>
    %711 = arith.addf %710, %709 : vector<8x128xf32>
    %712 = arith.divf %710, %711 : vector<8x128xf32>
    %713 = math.tanh %707 : vector<8x128xf32>
    %714 = vector.extract_strided_slice %712 {offsets = [0, 0], sizes = [8, 32], strides = [1, 1]} : vector<8x128xf32> to vector<8x32xf32>
    %715 = vector.extract_strided_slice %712 {offsets = [0, 32], sizes = [8, 32], strides = [1, 1]} : vector<8x128xf32> to vector<8x32xf32>
    %716 = vector.extract_strided_slice %712 {offsets = [0, 96], sizes = [8, 32], strides = [1, 1]} : vector<8x128xf32> to vector<8x32xf32>
    %717 = vector.extract_strided_slice %713 {offsets = [0, 64], sizes = [8, 32], strides = [1, 1]} : vector<8x128xf32> to vector<8x32xf32>
    %718 = arith.mulf %715, %674 : vector<8x32xf32>
    %719 = arith.mulf %714, %717 : vector<8x32xf32>
    %720 = arith.addf %718, %719 : vector<8x32xf32>
    %721 = math.tanh %720 : vector<8x32xf32>
    %722 = arith.mulf %716, %721 : vector<8x32xf32>
    %723 = vector.extract_strided_slice %539 {offsets = [3, 0, 0], sizes = [1, 32, 5], strides = [1, 1, 1]} : vector<4x32x5xf32> to vector<1x32x5xf32>
    %724 = vector.shape_cast %723 : vector<1x32x5xf32> to vector<32x5xf32>
    %cst_212 = arith.constant dense<0.000000e+00> : vector<8x5xf32>
    %725 = tpu.matmul %722, %724, %cst_212 {dimension_numbers = #tpu.dot_dimension_numbers<[1], [0], [0], [1], [0, 0, 1, 1], [], []>} : vector<8x32xf32>, vector<32x5xf32>, vector<8x5xf32> -> vector<8x5xf32>
    %726 = vector.extract_strided_slice %547 {offsets = [3, 0, 0], sizes = [1, 1, 5], strides = [1, 1, 1]} : vector<4x1x5xf32> to vector<1x1x5xf32>
    %727 = vector.shape_cast %726 : vector<1x1x5xf32> to vector<1x5xf32>
    %728 = vector.broadcast %727 : vector<1x5xf32> to vector<8x5xf32>
    %729 = arith.addf %725, %728 : vector<8x5xf32>
    %730 = vector.extract_strided_slice %729 {offsets = [0, 0], sizes = [8, 2], strides = [1, 1]} : vector<8x5xf32> to vector<8x2xf32>
    %731 = arith.addf %730, %685 : vector<8x2xf32>
    %732 = vector.extract_strided_slice %729 {offsets = [0, 2], sizes = [8, 3], strides = [1, 1]} : vector<8x5xf32> to vector<8x3xf32>
    %733 = vector.shape_cast %593 : vector<8x2xf32> to vector<1x8x2xf32>
    %734 = vector.shape_cast %639 : vector<8x2xf32> to vector<1x8x2xf32>
    %735 = vector.shape_cast %685 : vector<8x2xf32> to vector<1x8x2xf32>
    %736 = vector.shape_cast %731 : vector<8x2xf32> to vector<1x8x2xf32>
    %737 = tpu.concatenate %733, %734, %735, %736 in 0 : vector<1x8x2xf32>, vector<1x8x2xf32>, vector<1x8x2xf32>, vector<1x8x2xf32> -> vector<4x8x2xf32>
    %738 = vector.shape_cast %594 : vector<8x3xf32> to vector<1x8x3xf32>
    %739 = vector.shape_cast %640 : vector<8x3xf32> to vector<1x8x3xf32>
    %740 = vector.shape_cast %686 : vector<8x3xf32> to vector<1x8x3xf32>
    %741 = vector.shape_cast %732 : vector<8x3xf32> to vector<1x8x3xf32>
    %742 = tpu.concatenate %738, %739, %740, %741 in 0 : vector<1x8x3xf32>, vector<1x8x3xf32>, vector<1x8x3xf32>, vector<1x8x3xf32> -> vector<4x8x3xf32>
    %c0_213 = arith.constant 0 : index
    %c0_214 = arith.constant 0 : index
    %c0_215 = arith.constant 0 : index
    %c0_216 = arith.constant 0 : index
    %743 = vector.load %arg32[%c0_213, %c0_214, %c0_215, %c0_216] : memref<1x4x8x2xf32, #tpu.memory_space<vmem>>, vector<1x4x8x2xf32>
    %744 = vector.shape_cast %743 : vector<1x4x8x2xf32> to vector<4x8x2xf32>
    %745 = vector.shape_cast %737 : vector<4x8x2xf32> to vector<1x4x8x2xf32>
    tpu.vector_store %arg32[%c0_213, %c0_214, %c0_215, %c0_216], %745 {strides = array<i32>} : memref<1x4x8x2xf32, #tpu.memory_space<vmem>>, vector<1x4x8x2xf32>,
    %746 = vector.extract_strided_slice %742 {offsets = [0, 0, 0], sizes = [4, 8, 2], strides = [1, 1, 1]} : vector<4x8x3xf32> to vector<4x8x2xf32>
    %747 = math.exp %746 : vector<4x8x2xf32>
    %cst_217 = arith.constant 0.00999999977 : f32
    %748 = vector.broadcast %cst_217 : f32 to vector<4x8x2xf32>
    %749 = arith.addf %747, %748 : vector<4x8x2xf32>
    %750 = vector.extract_strided_slice %749 {offsets = [0, 0, 0], sizes = [4, 8, 1], strides = [1, 1, 1]} : vector<4x8x2xf32> to vector<4x8x1xf32>
    %751 = vector.extract_strided_slice %749 {offsets = [0, 0, 1], sizes = [4, 8, 1], strides = [1, 1, 1]} : vector<4x8x2xf32> to vector<4x8x1xf32>
    %752 = arith.mulf %750, %751 : vector<4x8x1xf32>
    %753 = math.sqrt %752 : vector<4x8x1xf32>
    %754 = vector.extract_strided_slice %742 {offsets = [0, 0, 2], sizes = [4, 8, 1], strides = [1, 1, 1]} : vector<4x8x3xf32> to vector<4x8x1xf32>
    %755 = math.tanh %754 : vector<4x8x1xf32>
    %756 = arith.mulf %753, %755 : vector<4x8x1xf32>
    %cst_218 = arith.constant 0.000000e+00 : f32
    %757 = vector.broadcast %cst_218 : f32 to vector<8x2xf32>
    %758 = vector.extract_strided_slice %749 {offsets = [0, 0, 0], sizes = [1, 8, 2], strides = [1, 1, 1]} : vector<4x8x2xf32> to vector<1x8x2xf32>
    %759 = vector.shape_cast %758 : vector<1x8x2xf32> to vector<8x2xf32>
    %760 = arith.addf %757, %759 : vector<8x2xf32>
    %761 = vector.extract_strided_slice %749 {offsets = [1, 0, 0], sizes = [1, 8, 2], strides = [1, 1, 1]} : vector<4x8x2xf32> to vector<1x8x2xf32>
    %762 = vector.shape_cast %761 : vector<1x8x2xf32> to vector<8x2xf32>
    %763 = arith.addf %760, %762 : vector<8x2xf32>
    %764 = vector.extract_strided_slice %749 {offsets = [2, 0, 0], sizes = [1, 8, 2], strides = [1, 1, 1]} : vector<4x8x2xf32> to vector<1x8x2xf32>
    %765 = vector.shape_cast %764 : vector<1x8x2xf32> to vector<8x2xf32>
    %766 = arith.addf %763, %765 : vector<8x2xf32>
    %767 = vector.extract_strided_slice %749 {offsets = [3, 0, 0], sizes = [1, 8, 2], strides = [1, 1, 1]} : vector<4x8x2xf32> to vector<1x8x2xf32>
    %768 = vector.shape_cast %767 : vector<1x8x2xf32> to vector<8x2xf32>
    %769 = arith.addf %766, %768 : vector<8x2xf32>
    %770 = vector.shape_cast %760 : vector<8x2xf32> to vector<1x8x2xf32>
    %771 = vector.shape_cast %763 : vector<8x2xf32> to vector<1x8x2xf32>
    %772 = vector.shape_cast %766 : vector<8x2xf32> to vector<1x8x2xf32>
    %773 = vector.shape_cast %769 : vector<8x2xf32> to vector<1x8x2xf32>
    %774 = tpu.concatenate %770, %771, %772, %773 in 0 : vector<1x8x2xf32>, vector<1x8x2xf32>, vector<1x8x2xf32>, vector<1x8x2xf32> -> vector<4x8x2xf32>
    %cst_219 = arith.constant 1.600000e-01 : f32
    %775 = vector.broadcast %cst_219 : f32 to vector<4x8x2xf32>
    %776 = arith.mulf %775, %774 : vector<4x8x2xf32>
    %cst_220 = arith.constant 0.000000e+00 : f32
    %777 = vector.broadcast %cst_220 : f32 to vector<8x1xf32>
    %778 = vector.extract_strided_slice %756 {offsets = [0, 0, 0], sizes = [1, 8, 1], strides = [1, 1, 1]} : vector<4x8x1xf32> to vector<1x8x1xf32>
    %779 = vector.shape_cast %778 : vector<1x8x1xf32> to vector<8x1xf32>
    %780 = arith.addf %777, %779 : vector<8x1xf32>
    %781 = vector.extract_strided_slice %756 {offsets = [1, 0, 0], sizes = [1, 8, 1], strides = [1, 1, 1]} : vector<4x8x1xf32> to vector<1x8x1xf32>
    %782 = vector.shape_cast %781 : vector<1x8x1xf32> to vector<8x1xf32>
    %783 = arith.addf %780, %782 : vector<8x1xf32>
    %784 = vector.extract_strided_slice %756 {offsets = [2, 0, 0], sizes = [1, 8, 1], strides = [1, 1, 1]} : vector<4x8x1xf32> to vector<1x8x1xf32>
    %785 = vector.shape_cast %784 : vector<1x8x1xf32> to vector<8x1xf32>
    %786 = arith.addf %783, %785 : vector<8x1xf32>
    %787 = vector.extract_strided_slice %756 {offsets = [3, 0, 0], sizes = [1, 8, 1], strides = [1, 1, 1]} : vector<4x8x1xf32> to vector<1x8x1xf32>
    %788 = vector.shape_cast %787 : vector<1x8x1xf32> to vector<8x1xf32>
    %789 = arith.addf %786, %788 : vector<8x1xf32>
    %790 = vector.shape_cast %780 : vector<8x1xf32> to vector<1x8x1xf32>
    %791 = vector.shape_cast %783 : vector<8x1xf32> to vector<1x8x1xf32>
    %792 = vector.shape_cast %786 : vector<8x1xf32> to vector<1x8x1xf32>
    %793 = vector.shape_cast %789 : vector<8x1xf32> to vector<1x8x1xf32>
    %794 = tpu.concatenate %790, %791, %792, %793 in 0 : vector<1x8x1xf32>, vector<1x8x1xf32>, vector<1x8x1xf32>, vector<1x8x1xf32> -> vector<4x8x1xf32>
    %cst_221 = arith.constant 1.600000e-01 : f32
    %795 = vector.broadcast %cst_221 : f32 to vector<4x8x1xf32>
    %796 = arith.mulf %795, %794 : vector<4x8x1xf32>
    %c0_222 = arith.constant 0 : index
    %c0_223 = arith.constant 0 : index
    %797 = vector.load %arg5[%c0_222, %c0_223] : memref<8x2xf32, #tpu.memory_space<vmem>>, vector<8x2xf32>
    %798 = vector.shape_cast %797 : vector<8x2xf32> to vector<1x8x2xf32>
    %cst_224 = arith.constant 0.000000e+00 : f32
    %799 = vector.broadcast %cst_224 : f32 to vector<8x2xf32>
    %800 = vector.extract_strided_slice %737 {offsets = [0, 0, 0], sizes = [1, 8, 2], strides = [1, 1, 1]} : vector<4x8x2xf32> to vector<1x8x2xf32>
    %801 = vector.shape_cast %800 : vector<1x8x2xf32> to vector<8x2xf32>
    %802 = arith.addf %799, %801 : vector<8x2xf32>
    %803 = vector.extract_strided_slice %737 {offsets = [1, 0, 0], sizes = [1, 8, 2], strides = [1, 1, 1]} : vector<4x8x2xf32> to vector<1x8x2xf32>
    %804 = vector.shape_cast %803 : vector<1x8x2xf32> to vector<8x2xf32>
    %805 = arith.addf %802, %804 : vector<8x2xf32>
    %806 = vector.extract_strided_slice %737 {offsets = [2, 0, 0], sizes = [1, 8, 2], strides = [1, 1, 1]} : vector<4x8x2xf32> to vector<1x8x2xf32>
    %807 = vector.shape_cast %806 : vector<1x8x2xf32> to vector<8x2xf32>
    %808 = arith.addf %805, %807 : vector<8x2xf32>
    %809 = vector.extract_strided_slice %737 {offsets = [3, 0, 0], sizes = [1, 8, 2], strides = [1, 1, 1]} : vector<4x8x2xf32> to vector<1x8x2xf32>
    %810 = vector.shape_cast %809 : vector<1x8x2xf32> to vector<8x2xf32>
    %811 = arith.addf %808, %810 : vector<8x2xf32>
    %812 = vector.shape_cast %802 : vector<8x2xf32> to vector<1x8x2xf32>
    %813 = vector.shape_cast %805 : vector<8x2xf32> to vector<1x8x2xf32>
    %814 = vector.shape_cast %808 : vector<8x2xf32> to vector<1x8x2xf32>
    %815 = vector.shape_cast %811 : vector<8x2xf32> to vector<1x8x2xf32>
    %816 = tpu.concatenate %812, %813, %814, %815 in 0 : vector<1x8x2xf32>, vector<1x8x2xf32>, vector<1x8x2xf32>, vector<1x8x2xf32> -> vector<4x8x2xf32>
    %817 = vector.broadcast %798 : vector<1x8x2xf32> to vector<4x8x2xf32>
    %818 = arith.addf %817, %816 : vector<4x8x2xf32>
    %819 = vector.extract_strided_slice %776 {offsets = [0, 0, 0], sizes = [4, 8, 1], strides = [1, 1, 1]} : vector<4x8x2xf32> to vector<4x8x1xf32>
    %820 = vector.extract_strided_slice %776 {offsets = [0, 0, 1], sizes = [4, 8, 1], strides = [1, 1, 1]} : vector<4x8x2xf32> to vector<4x8x1xf32>
    %821 = arith.mulf %819, %820 : vector<4x8x1xf32>
    %822 = arith.mulf %796, %796 : vector<4x8x1xf32>
    %823 = arith.subf %821, %822 : vector<4x8x1xf32>
    %c0_225 = arith.constant 0 : index
    %c0_226 = arith.constant 0 : index
    %c0_227 = arith.constant 0 : index
    %824 = vector.load %arg3[%c0_225, %c0_226, %c0_227] : memref<4x8x2xf32, #tpu.memory_space<vmem>>, vector<4x8x2xf32>
    %825 = arith.subf %824, %818 : vector<4x8x2xf32>
    %826 = vector.extract_strided_slice %825 {offsets = [0, 0, 0], sizes = [4, 8, 1], strides = [1, 1, 1]} : vector<4x8x2xf32> to vector<4x8x1xf32>
    %827 = vector.extract_strided_slice %825 {offsets = [0, 0, 1], sizes = [4, 8, 1], strides = [1, 1, 1]} : vector<4x8x2xf32> to vector<4x8x1xf32>
    %828 = arith.mulf %826, %826 : vector<4x8x1xf32>
    %829 = arith.mulf %828, %820 : vector<4x8x1xf32>
    %830 = arith.mulf %827, %827 : vector<4x8x1xf32>
    %831 = arith.mulf %830, %819 : vector<4x8x1xf32>
    %832 = arith.addf %829, %831 : vector<4x8x1xf32>
    %cst_228 = arith.constant 2.000000e+00 : f32
    %833 = vector.broadcast %cst_228 : f32 to vector<4x8x1xf32>
    %834 = arith.mulf %833, %796 : vector<4x8x1xf32>
    %835 = arith.mulf %834, %826 : vector<4x8x1xf32>
    %836 = arith.mulf %835, %827 : vector<4x8x1xf32>
    %837 = arith.subf %832, %836 : vector<4x8x1xf32>
    %838 = arith.divf %837, %823 : vector<4x8x1xf32>
    %839 = math.log %823 : vector<4x8x1xf32>
    %840 = arith.addf %838, %839 : vector<4x8x1xf32>
    %cst_229 = arith.constant 5.000000e-01 : f32
    %841 = vector.broadcast %cst_229 : f32 to vector<4x8x1xf32>
    %842 = arith.mulf %841, %840 : vector<4x8x1xf32>
    %843 = vector.shape_cast %842 : vector<4x8x1xf32> to vector<1x4x8x1xf32>
    %cst_230 = arith.constant dense<0.000000e+00> : vector<1xf32>
    %844 = vector.multi_reduction <add>, %843, %cst_230 [1, 2, 3] : vector<1x4x8x1xf32> to vector<1xf32>
    %845 = vector.shape_cast %844 : vector<1xf32> to vector<1x1x1x1xf32>
    %846 = vector.extract %845[0, 0, 0, 0] : f32 from vector<1x1x1x1xf32>
    %847 = vector.broadcast %846 : f32 to vector<1x1xf32>
    %c0_231 = arith.constant 0 : index
    %c0_232 = arith.constant 0 : index
    %c0_233 = arith.constant 0 : index
    %848 = vector.load %arg33[%c0_231, %c0_232, %c0_233] : memref<1x1x1xf32, #tpu.memory_space<vmem>>, vector<1x1x1xf32>
    %849 = vector.shape_cast %848 : vector<1x1x1xf32> to vector<1x1xf32>
    %850 = vector.shape_cast %847 : vector<1x1xf32> to vector<1x1x1xf32>
    tpu.vector_store %arg33[%c0_231, %c0_232, %c0_233], %850 {strides = array<i32>} : memref<1x1x1xf32, #tpu.memory_space<vmem>>, vector<1x1x1xf32>,
    return
  }
  func.func @transform_0(%arg0: i32) -> (i32, i32) {
    %c0_i32 = arith.constant 0 : i32
    %c0_i32_0 = arith.constant 0 : i32
    %c0_i32_1 = arith.constant 0 : i32
    return %c0_i32, %c0_i32_0 : i32, i32
  }
  func.func @transform_1(%arg0: i32) -> (i32, i32, i32) {
    %c0_i32 = arith.constant 0 : i32
    %c0_i32_0 = arith.constant 0 : i32
    %c0_i32_1 = arith.constant 0 : i32
    %c0_i32_2 = arith.constant 0 : i32
    return %c0_i32, %c0_i32_0, %c0_i32_1 : i32, i32, i32
  }
  func.func @transform_2(%arg0: i32) -> (i32, i32, i32) {
    %c0_i32 = arith.constant 0 : i32
    %c0_i32_0 = arith.constant 0 : i32
    %c0_i32_1 = arith.constant 0 : i32
    %c0_i32_2 = arith.constant 0 : i32
    return %c0_i32, %c0_i32_0, %c0_i32_1 : i32, i32, i32
  }
  func.func @transform_3(%arg0: i32) -> (i32, i32) {
    %c0_i32 = arith.constant 0 : i32
    %c0_i32_0 = arith.constant 0 : i32
    %c0_i32_1 = arith.constant 0 : i32
    return %c0_i32, %c0_i32_0 : i32, i32
  }
  func.func @transform_4(%arg0: i32) -> (i32, i32) {
    %c0_i32 = arith.constant 0 : i32
    %c0_i32_0 = arith.constant 0 : i32
    %c0_i32_1 = arith.constant 0 : i32
    return %c0_i32, %c0_i32_0 : i32, i32
  }
  func.func @transform_5(%arg0: i32) -> (i32, i32) {
    %c0_i32 = arith.constant 0 : i32
    %c0_i32_0 = arith.constant 0 : i32
    %c0_i32_1 = arith.constant 0 : i32
    return %c0_i32, %c0_i32_0 : i32, i32
  }
  func.func @transform_6(%arg0: i32) -> (i32, i32) {
    %c0_i32 = arith.constant 0 : i32
    %c0_i32_0 = arith.constant 0 : i32
    %c0_i32_1 = arith.constant 0 : i32
    return %c0_i32, %c0_i32_0 : i32, i32
  }
  func.func @transform_7(%arg0: i32) -> (i32, i32) {
    %c0_i32 = arith.constant 0 : i32
    %c0_i32_0 = arith.constant 0 : i32
    %c0_i32_1 = arith.constant 0 : i32
    return %c0_i32, %c0_i32_0 : i32, i32
  }
  func.func @transform_8(%arg0: i32) -> (i32, i32) {
    %c0_i32 = arith.constant 0 : i32
    %c0_i32_0 = arith.constant 0 : i32
    %c0_i32_1 = arith.constant 0 : i32
    return %c0_i32, %c0_i32_0 : i32, i32
  }
  func.func @transform_9(%arg0: i32) -> (i32, i32) {
    %c0_i32 = arith.constant 0 : i32
    %c0_i32_0 = arith.constant 0 : i32
    %c0_i32_1 = arith.constant 0 : i32
    return %c0_i32, %c0_i32_0 : i32, i32
  }
  func.func @transform_10(%arg0: i32) -> (i32, i32) {
    %c0_i32 = arith.constant 0 : i32
    %c0_i32_0 = arith.constant 0 : i32
    %c0_i32_1 = arith.constant 0 : i32
    return %c0_i32, %c0_i32_0 : i32, i32
  }
  func.func @transform_11(%arg0: i32) -> (i32, i32) {
    %c0_i32 = arith.constant 0 : i32
    %c0_i32_0 = arith.constant 0 : i32
    %c0_i32_1 = arith.constant 0 : i32
    return %c0_i32, %c0_i32_0 : i32, i32
  }
  func.func @transform_12(%arg0: i32) -> (i32, i32) {
    %c0_i32 = arith.constant 0 : i32
    %c0_i32_0 = arith.constant 0 : i32
    %c0_i32_1 = arith.constant 0 : i32
    return %c0_i32, %c0_i32_0 : i32, i32
  }
  func.func @transform_13(%arg0: i32) -> (i32, i32) {
    %c0_i32 = arith.constant 0 : i32
    %c0_i32_0 = arith.constant 0 : i32
    %c0_i32_1 = arith.constant 0 : i32
    return %c0_i32, %c0_i32_0 : i32, i32
  }
  func.func @transform_14(%arg0: i32) -> (i32, i32) {
    %c0_i32 = arith.constant 0 : i32
    %c0_i32_0 = arith.constant 0 : i32
    %c0_i32_1 = arith.constant 0 : i32
    return %c0_i32, %c0_i32_0 : i32, i32
  }
  func.func @transform_15(%arg0: i32) -> (i32, i32) {
    %c0_i32 = arith.constant 0 : i32
    %c0_i32_0 = arith.constant 0 : i32
    %c0_i32_1 = arith.constant 0 : i32
    return %c0_i32, %c0_i32_0 : i32, i32
  }
  func.func @transform_16(%arg0: i32) -> (i32, i32) {
    %c0_i32 = arith.constant 0 : i32
    %c0_i32_0 = arith.constant 0 : i32
    %c0_i32_1 = arith.constant 0 : i32
    return %c0_i32, %c0_i32_0 : i32, i32
  }
  func.func @transform_17(%arg0: i32) -> (i32, i32) {
    %c0_i32 = arith.constant 0 : i32
    %c0_i32_0 = arith.constant 0 : i32
    %c0_i32_1 = arith.constant 0 : i32
    return %c0_i32, %c0_i32_0 : i32, i32
  }
  func.func @transform_18(%arg0: i32) -> (i32, i32) {
    %c0_i32 = arith.constant 0 : i32
    %c0_i32_0 = arith.constant 0 : i32
    %c0_i32_1 = arith.constant 0 : i32
    return %c0_i32, %c0_i32_0 : i32, i32
  }
  func.func @transform_19(%arg0: i32) -> (i32, i32) {
    %c0_i32 = arith.constant 0 : i32
    %c0_i32_0 = arith.constant 0 : i32
    %c0_i32_1 = arith.constant 0 : i32
    return %c0_i32, %c0_i32_0 : i32, i32
  }
  func.func @transform_20(%arg0: i32) -> (i32, i32) {
    %c0_i32 = arith.constant 0 : i32
    %c0_i32_0 = arith.constant 0 : i32
    %c0_i32_1 = arith.constant 0 : i32
    return %c0_i32, %c0_i32_0 : i32, i32
  }
  func.func @transform_21(%arg0: i32) -> (i32, i32, i32) {
    %c0_i32 = arith.constant 0 : i32
    %c0_i32_0 = arith.constant 0 : i32
    %c0_i32_1 = arith.constant 0 : i32
    return %arg0, %c0_i32, %c0_i32_0 : i32, i32, i32
  }
  func.func @transform_22(%arg0: i32) -> (i32, i32, i32) {
    %c0_i32 = arith.constant 0 : i32
    %c0_i32_0 = arith.constant 0 : i32
    %c0_i32_1 = arith.constant 0 : i32
    return %arg0, %c0_i32, %c0_i32_0 : i32, i32, i32
  }
  func.func @transform_23(%arg0: i32) -> (i32, i32, i32, i32) {
    %c0_i32 = arith.constant 0 : i32
    %c0_i32_0 = arith.constant 0 : i32
    %c0_i32_1 = arith.constant 0 : i32
    %c0_i32_2 = arith.constant 0 : i32
    return %arg0, %c0_i32, %c0_i32_0, %c0_i32_1 : i32, i32, i32, i32
  }
  func.func @transform_24(%arg0: i32) -> (i32, i32, i32, i32) {
    %c0_i32 = arith.constant 0 : i32
    %c0_i32_0 = arith.constant 0 : i32
    %c0_i32_1 = arith.constant 0 : i32
    %c0_i32_2 = arith.constant 0 : i32
    return %arg0, %c0_i32, %c0_i32_0, %c0_i32_1 : i32, i32, i32, i32
  }
  func.func @transform_25(%arg0: i32) -> (i32, i32, i32, i32) {
    %c0_i32 = arith.constant 0 : i32
    %c0_i32_0 = arith.constant 0 : i32
    %c0_i32_1 = arith.constant 0 : i32
    %c0_i32_2 = arith.constant 0 : i32
    return %arg0, %c0_i32, %c0_i32_0, %c0_i32_1 : i32, i32, i32, i32
  }
  func.func @transform_26(%arg0: i32) -> (i32, i32, i32, i32) {
    %c0_i32 = arith.constant 0 : i32
    %c0_i32_0 = arith.constant 0 : i32
    %c0_i32_1 = arith.constant 0 : i32
    %c0_i32_2 = arith.constant 0 : i32
    return %arg0, %c0_i32, %c0_i32_0, %c0_i32_1 : i32, i32, i32, i32
  }
  func.func @transform_27(%arg0: i32) -> (i32, i32, i32, i32) {
    %c0_i32 = arith.constant 0 : i32
    %c0_i32_0 = arith.constant 0 : i32
    %c0_i32_1 = arith.constant 0 : i32
    %c0_i32_2 = arith.constant 0 : i32
    return %arg0, %c0_i32, %c0_i32_0, %c0_i32_1 : i32, i32, i32, i32
  }
  func.func @transform_28(%arg0: i32) -> (i32, i32, i32, i32) {
    %c0_i32 = arith.constant 0 : i32
    %c0_i32_0 = arith.constant 0 : i32
    %c0_i32_1 = arith.constant 0 : i32
    %c0_i32_2 = arith.constant 0 : i32
    return %arg0, %c0_i32, %c0_i32_0, %c0_i32_1 : i32, i32, i32, i32
  }
  func.func @transform_29(%arg0: i32) -> (i32, i32, i32, i32) {
    %c0_i32 = arith.constant 0 : i32
    %c0_i32_0 = arith.constant 0 : i32
    %c0_i32_1 = arith.constant 0 : i32
    %c0_i32_2 = arith.constant 0 : i32
    return %arg0, %c0_i32, %c0_i32_0, %c0_i32_1 : i32, i32, i32, i32
  }
  func.func @transform_30(%arg0: i32) -> (i32, i32, i32, i32) {
    %c0_i32 = arith.constant 0 : i32
    %c0_i32_0 = arith.constant 0 : i32
    %c0_i32_1 = arith.constant 0 : i32
    %c0_i32_2 = arith.constant 0 : i32
    return %arg0, %c0_i32, %c0_i32_0, %c0_i32_1 : i32, i32, i32, i32
  }
  func.func @transform_31(%arg0: i32) -> (i32, i32, i32, i32) {
    %c0_i32 = arith.constant 0 : i32
    %c0_i32_0 = arith.constant 0 : i32
    %c0_i32_1 = arith.constant 0 : i32
    %c0_i32_2 = arith.constant 0 : i32
    return %arg0, %c0_i32, %c0_i32_0, %c0_i32_1 : i32, i32, i32, i32
  }
  func.func @transform_32(%arg0: i32) -> (i32, i32, i32) {
    %c0_i32 = arith.constant 0 : i32
    %c0_i32_0 = arith.constant 0 : i32
    %c0_i32_1 = arith.constant 0 : i32
    return %arg0, %c0_i32, %c0_i32_0 : i32, i32, i32
  }
  func.func @transform_33(%arg0: i32) -> (i32, i32, i32) {
    %c0_i32 = arith.constant 0 : i32
    %c0_i32_0 = arith.constant 0 : i32
    %c0_i32_1 = arith.constant 0 : i32
    return %arg0, %c0_i32, %c0_i32_0 : i32, i32, i32
  }
}

</mosaic_0001>

<llo_original>
// kernel: model_forward.3
$region0: #{model_forward.3}
  #allocation0 [shape = 'u32[]', space=smem, size = 0x4, offset = 0x4, fixed_abs, tag = 'smem constant byte address 0x4 - core index']
  #allocation1 [shape = 'u32[144,128]{1,0:T(1,128)}', space=vmem, size = 0x12000, scoped, tag = 'internal scratch']
  #allocation2 [shape = 'f32[8,48,128]{2,1,0:T(8,128)}', space=vmem, size = 0x30000, scoped, tag = 'scratch operand']
  #allocation3 [shape = 'f32[4,48,128]{2,1,0:T(8,128)}', space=vmem, size = 0x18000, scoped, tag = 'scratch operand']
  %s0 = inlined_call_operand.smem [shape: u32[34], index: -1, kind: input, shape index: {}]
  %s1 = sld [smem:[%s0]]
  %s2 = scalar_lea.smem %s0, 1
  %s3 = sld [smem:[%s2]]
  %s4 = scalar_lea.smem %s0, 2
  %s5 = sld [smem:[%s4]]
  %s6 = scalar_lea.smem %s0, 3
  %s7 = sld [smem:[%s6]]
  %s8 = scalar_lea.smem %s0, 4
  %s9 = sld [smem:[%s8]]
  %s10 = scalar_lea.smem %s0, 5
  %s11 = sld [smem:[%s10]]
  %s12 = scalar_lea.smem %s0, 6
  %s13 = sld [smem:[%s12]]
  %s14 = scalar_lea.smem %s0, 7
  %s15 = sld [smem:[%s14]]
  %s16 = scalar_lea.smem %s0, 8
  %s17 = sld [smem:[%s16]]
  %s18 = scalar_lea.smem %s0, 9
  %s19 = sld [smem:[%s18]]
  %s20 = scalar_lea.smem %s0, 10
  %s21 = sld [smem:[%s20]]
  %s22 = scalar_lea.smem %s0, 11
  %s23 = sld [smem:[%s22]]
  %s24 = scalar_lea.smem %s0, 12
  %s25 = sld [smem:[%s24]]
  %s26 = scalar_lea.smem %s0, 13
  %s27 = sld [smem:[%s26]]
  %s28 = scalar_lea.smem %s0, 14
  %s29 = sld [smem:[%s28]]
  %s30 = scalar_lea.smem %s0, 15
  %s31 = sld [smem:[%s30]]
  %s32 = scalar_lea.smem %s0, 16
  %s33 = sld [smem:[%s32]]
  %s34 = scalar_lea.smem %s0, 17
  %s35 = sld [smem:[%s34]]
  %s36 = scalar_lea.smem %s0, 18
  %s37 = sld [smem:[%s36]]
  %s38 = scalar_lea.smem %s0, 19
  %s39 = sld [smem:[%s38]]
  %s40 = scalar_lea.smem %s0, 20
  %s41 = sld [smem:[%s40]]
  %s42 = scalar_lea.smem %s0, 21
  %s43 = sld [smem:[%s42]]
  %s44 = scalar_lea.smem %s0, 22
  %s45 = sld [smem:[%s44]]
  %s46 = scalar_lea.smem %s0, 23
  %s47 = sld [smem:[%s46]]
  %s48 = scalar_lea.smem %s0, 24
  %s49 = sld [smem:[%s48]]
  %s50 = scalar_lea.smem %s0, 25
  %s51 = sld [smem:[%s50]]
  %s52 = scalar_lea.smem %s0, 26
  %s53 = sld [smem:[%s52]]
  %s54 = scalar_lea.smem %s0, 27
  %s55 = sld [smem:[%s54]]
  %s56 = scalar_lea.smem %s0, 28
  %s57 = sld [smem:[%s56]]
  %s58 = scalar_lea.smem %s0, 29
  %s59 = sld [smem:[%s58]]
  %s60 = scalar_lea.smem %s0, 30
  %s61 = sld [smem:[%s60]]
  %s62 = scalar_lea.smem %s0, 31
  %s63 = sld [smem:[%s62]]
  %s64 = scalar_lea.smem %s0, 32
  %s65 = sld [smem:[%s64]]
  %s66 = scalar_lea.smem %s0, 33
  %s67 = sld [smem:[%s66]]
  %68 = xla_tuple %s63, %s65, %s67
  %s69 = sld [smem:[#allocation0]]
  $region173: #{model_forward.3} parent=0
    _
  %s71 = ssub.s32 1, %s69
  %s72 = scalar_select 0, %s71, %s69
  loop: start=0, step=1, limit=4
  $region2: #{model_forward.3} parent=0 // loop_pre_header
    _
  $region3: #{model_forward.3} parent=0 // loop_header
    %s74 = sphi 0, %s78
    %p75 = scmp.ge.s32.totalorder %s74, 4
    %s82 = sphi 0, %s82
    %s84 = sphi 0, %s82
    %s85 = sphi 0, %s84
    %s99 = sphi 0, %s85
    %s103 = sphi 0, %s103
    %s105 = sphi 0, %s103
    %s106 = sphi 0, %s105
    %s120 = sphi 0, %s106
    %s124 = sphi 0, %s124
    %s126 = sphi 0, %s124
    %s127 = sphi 0, %s126
    %s141 = sphi 0, %s127
    %s145 = sphi 0, %s145
    %s147 = sphi 0, %s145
    %s148 = sphi 0, %s147
    %s162 = sphi 0, %s148
    %s166 = sphi 0, %s166
    %s168 = sphi 0, %s166
    %s169 = sphi 0, %s168
    %s183 = sphi 0, %s169
    %s187 = sphi 0, %s187
    %s189 = sphi 0, %s187
    %s190 = sphi 0, %s189
    %s204 = sphi 0, %s190
    %s208 = sphi 0, %s208
    %s210 = sphi 0, %s208
    %s211 = sphi 0, %s210
    %s225 = sphi 0, %s211
    %s229 = sphi 0, %s229
    %s231 = sphi 0, %s229
    %s232 = sphi 0, %s231
    %s246 = sphi 0, %s232
    %s250 = sphi 0, %s250
    %s252 = sphi 0, %s250
    %s253 = sphi 0, %s252
    %s267 = sphi 0, %s253
    %s271 = sphi 0, %s271
    %s273 = sphi 0, %s271
    %s274 = sphi 0, %s273
    %s288 = sphi 0, %s274
    %s292 = sphi 0, %s292
    %s294 = sphi 0, %s292
    %s295 = sphi 0, %s294
    %s309 = sphi 0, %s295
    %s313 = sphi 0, %s313
    %s315 = sphi 0, %s313
    %s316 = sphi 0, %s315
    %s330 = sphi 0, %s316
    %s334 = sphi 0, %s334
    %s336 = sphi 0, %s334
    %s337 = sphi 0, %s336
    %s351 = sphi 0, %s337
    %s355 = sphi 0, %s355
    %s357 = sphi 0, %s355
    %s358 = sphi 0, %s357
    %s372 = sphi 0, %s358
    %s376 = sphi 0, %s376
    %s378 = sphi 0, %s376
    %s379 = sphi 0, %s378
    %s393 = sphi 0, %s379
    %s397 = sphi 0, %s397
    %s399 = sphi 0, %s397
    %s400 = sphi 0, %s399
    %s414 = sphi 0, %s400
    %s418 = sphi 0, %s418
    %s420 = sphi 0, %s418
    %s421 = sphi 0, %s420
    %s435 = sphi 0, %s421
    %s439 = sphi 0, %s439
    %s441 = sphi 0, %s439
    %s442 = sphi 0, %s441
    %s456 = sphi 0, %s442
    %s460 = sphi 0, %s460
    %s462 = sphi 0, %s460
    %s463 = sphi 0, %s462
    %s477 = sphi 0, %s463
    %s481 = sphi 0, %s481
    %s483 = sphi 0, %s481
    %s484 = sphi 0, %s483
    %s498 = sphi 0, %s484
    %s502 = sphi 0, %s502
    %s504 = sphi 0, %s502
    %s505 = sphi 0, %s504
    %s519 = sphi 0, %s505
    %s525 = sphi 0, %s527
    %s528 = sphi 0, %s525
    %s529 = sphi 0, %s528
    %s545 = sphi 0, %s529
    %s551 = sphi 0, %s553
    %s554 = sphi 0, %s551
    %s555 = sphi 0, %s554
    %s571 = sphi 0, %s555
    %s577 = sphi 0, %s579
    %s580 = sphi 0, %s577
    %s581 = sphi 0, %s580
    %s597 = sphi 0, %s581
    %s603 = sphi 0, %s605
    %s606 = sphi 0, %s603
    %s607 = sphi 0, %s606
    %s623 = sphi 0, %s607
    %s629 = sphi 0, %s631
    %s632 = sphi 0, %s629
    %s633 = sphi 0, %s632
    %s649 = sphi 0, %s633
    %s655 = sphi 0, %s657
    %s658 = sphi 0, %s655
    %s659 = sphi 0, %s658
    %s675 = sphi 0, %s659
    %s681 = sphi 0, %s683
    %s684 = sphi 0, %s681
    %s685 = sphi 0, %s684
    %s701 = sphi 0, %s685
    %s707 = sphi 0, %s709
    %s710 = sphi 0, %s707
    %s711 = sphi 0, %s710
    %s727 = sphi 0, %s711
    %s733 = sphi 0, %s735
    %s736 = sphi 0, %s733
    %s737 = sphi 0, %s736
    %s753 = sphi 0, %s737
    %s759 = sphi 0, %s761
    %s762 = sphi 0, %s759
    %s763 = sphi 0, %s762
    %s779 = sphi 0, %s763
    %s785 = sphi 0, %s787
    %s788 = sphi 0, %s785
    %s789 = sphi 0, %s788
    %s805 = sphi 0, %s789
    %s811 = sphi 0, %s813
    %s814 = sphi 0, %s811
    %s815 = sphi 0, %s814
    %s831 = sphi 0, %s815
    %s837 = sphi 0, %s839
    %s840 = sphi 0, %s837
    %s841 = sphi 0, %s840
    %s857 = sphi 0, %s841
  $region4: #{model_forward.3} parent=0 // loop_header_branch
    %77 = sbr.rel (%p75) target = $region8
  $region5: #{model_forward.3} parent=0 // loop_body
    %s79 = ssub.s32 %s74, 1
    %s80 = ssub.s32 %s74, 2
    %s81 = sadd.s32 %s74, 1
    %s83 = sadd.s32 %s82, 1
    %p86 = scmp.eq.s32.totalorder %s74, 1
    %p87 = scmp.ne.s32.totalorder %s82, %s84
    %p88 = scmp.eq.s32.totalorder %s74, 0
    %p89 = por %p87, %p88
    %p90 = scmp.ne.s32.totalorder %s82, %s84
    %p91 = scmp.eq.s32.totalorder %s79, 1
    %p92 = por %p90, %p91
    %p93 = scmp.ne.s32.totalorder %s84, %s85
    %p94 = scmp.eq.s32.totalorder %s79, 0
    %p95 = por %p93, %p94
    %p96 = scmp.ne.s32.totalorder %s84, %s85
    %p97 = scmp.eq.s32.totalorder %s80, 1
    %p98 = por %p96, %p97
    %p100 = scmp.ne.s32.totalorder %s85, %s99
    %p101 = scmp.eq.s32.totalorder %s80, 0
    %p102 = por %p100, %p101
    %s104 = sadd.s32 %s103, 1
    %p107 = scmp.eq.s32.totalorder %s74, 1
    %p108 = scmp.ne.s32.totalorder %s103, %s105
    %p109 = scmp.eq.s32.totalorder %s74, 0
    %p110 = por %p108, %p109
    %p111 = scmp.ne.s32.totalorder %s103, %s105
    %p112 = scmp.eq.s32.totalorder %s79, 1
    %p113 = por %p111, %p112
    %p114 = scmp.ne.s32.totalorder %s105, %s106
    %p115 = scmp.eq.s32.totalorder %s79, 0
    %p116 = por %p114, %p115
    %p117 = scmp.ne.s32.totalorder %s105, %s106
    %p118 = scmp.eq.s32.totalorder %s80, 1
    %p119 = por %p117, %p118
    %p121 = scmp.ne.s32.totalorder %s106, %s120
    %p122 = scmp.eq.s32.totalorder %s80, 0
    %p123 = por %p121, %p122
    %s125 = sadd.s32 %s124, 1
    %p128 = scmp.eq.s32.totalorder %s74, 1
    %p129 = scmp.ne.s32.totalorder %s124, %s126
    %p130 = scmp.eq.s32.totalorder %s74, 0
    %p131 = por %p129, %p130
    %p132 = scmp.ne.s32.totalorder %s124, %s126
    %p133 = scmp.eq.s32.totalorder %s79, 1
    %p134 = por %p132, %p133
    %p135 = scmp.ne.s32.totalorder %s126, %s127
    %p136 = scmp.eq.s32.totalorder %s79, 0
    %p137 = por %p135, %p136
    %p138 = scmp.ne.s32.totalorder %s126, %s127
    %p139 = scmp.eq.s32.totalorder %s80, 1
    %p140 = por %p138, %p139
    %p142 = scmp.ne.s32.totalorder %s127, %s141
    %p143 = scmp.eq.s32.totalorder %s80, 0
    %p144 = por %p142, %p143
    %s146 = sadd.s32 %s145, 1
    %p149 = scmp.eq.s32.totalorder %s74, 1
    %p150 = scmp.ne.s32.totalorder %s145, %s147
    %p151 = scmp.eq.s32.totalorder %s74, 0
    %p152 = por %p150, %p151
    %p153 = scmp.ne.s32.totalorder %s145, %s147
    %p154 = scmp.eq.s32.totalorder %s79, 1
    %p155 = por %p153, %p154
    %p156 = scmp.ne.s32.totalorder %s147, %s148
    %p157 = scmp.eq.s32.totalorder %s79, 0
    %p158 = por %p156, %p157
    %p159 = scmp.ne.s32.totalorder %s147, %s148
    %p160 = scmp.eq.s32.totalorder %s80, 1
    %p161 = por %p159, %p160
    %p163 = scmp.ne.s32.totalorder %s148, %s162
    %p164 = scmp.eq.s32.totalorder %s80, 0
    %p165 = por %p163, %p164
    %s167 = sadd.s32 %s166, 1
    %p170 = scmp.eq.s32.totalorder %s74, 1
    %p171 = scmp.ne.s32.totalorder %s166, %s168
    %p172 = scmp.eq.s32.totalorder %s74, 0
    %p173 = por %p171, %p172
    %p174 = scmp.ne.s32.totalorder %s166, %s168
    %p175 = scmp.eq.s32.totalorder %s79, 1
    %p176 = por %p174, %p175
    %p177 = scmp.ne.s32.totalorder %s168, %s169
    %p178 = scmp.eq.s32.totalorder %s79, 0
    %p179 = por %p177, %p178
    %p180 = scmp.ne.s32.totalorder %s168, %s169
    %p181 = scmp.eq.s32.totalorder %s80, 1
    %p182 = por %p180, %p181
    %p184 = scmp.ne.s32.totalorder %s169, %s183
    %p185 = scmp.eq.s32.totalorder %s80, 0
    %p186 = por %p184, %p185
    %s188 = sadd.s32 %s187, 1
    %p191 = scmp.eq.s32.totalorder %s74, 1
    %p192 = scmp.ne.s32.totalorder %s187, %s189
    %p193 = scmp.eq.s32.totalorder %s74, 0
    %p194 = por %p192, %p193
    %p195 = scmp.ne.s32.totalorder %s187, %s189
    %p196 = scmp.eq.s32.totalorder %s79, 1
    %p197 = por %p195, %p196
    %p198 = scmp.ne.s32.totalorder %s189, %s190
    %p199 = scmp.eq.s32.totalorder %s79, 0
    %p200 = por %p198, %p199
    %p201 = scmp.ne.s32.totalorder %s189, %s190
    %p202 = scmp.eq.s32.totalorder %s80, 1
    %p203 = por %p201, %p202
    %p205 = scmp.ne.s32.totalorder %s190, %s204
    %p206 = scmp.eq.s32.totalorder %s80, 0
    %p207 = por %p205, %p206
    %s209 = sadd.s32 %s208, 1
    %p212 = scmp.eq.s32.totalorder %s74, 1
    %p213 = scmp.ne.s32.totalorder %s208, %s210
    %p214 = scmp.eq.s32.totalorder %s74, 0
    %p215 = por %p213, %p214
    %p216 = scmp.ne.s32.totalorder %s208, %s210
    %p217 = scmp.eq.s32.totalorder %s79, 1
    %p218 = por %p216, %p217
    %p219 = scmp.ne.s32.totalorder %s210, %s211
    %p220 = scmp.eq.s32.totalorder %s79, 0
    %p221 = por %p219, %p220
    %p222 = scmp.ne.s32.totalorder %s210, %s211
    %p223 = scmp.eq.s32.totalorder %s80, 1
    %p224 = por %p222, %p223
    %p226 = scmp.ne.s32.totalorder %s211, %s225
    %p227 = scmp.eq.s32.totalorder %s80, 0
    %p228 = por %p226, %p227
    %s230 = sadd.s32 %s229, 1
    %p233 = scmp.eq.s32.totalorder %s74, 1
    %p234 = scmp.ne.s32.totalorder %s229, %s231
    %p235 = scmp.eq.s32.totalorder %s74, 0
    %p236 = por %p234, %p235
    %p237 = scmp.ne.s32.totalorder %s229, %s231
    %p238 = scmp.eq.s32.totalorder %s79, 1
    %p239 = por %p237, %p238
    %p240 = scmp.ne.s32.totalorder %s231, %s232
    %p241 = scmp.eq.s32.totalorder %s79, 0
    %p242 = por %p240, %p241
    %p243 = scmp.ne.s32.totalorder %s231, %s232
    %p244 = scmp.eq.s32.totalorder %s80, 1
    %p245 = por %p243, %p244
    %p247 = scmp.ne.s32.totalorder %s232, %s246
    %p248 = scmp.eq.s32.totalorder %s80, 0
    %p249 = por %p247, %p248
    %s251 = sadd.s32 %s250, 1
    %p254 = scmp.eq.s32.totalorder %s74, 1
    %p255 = scmp.ne.s32.totalorder %s250, %s252
    %p256 = scmp.eq.s32.totalorder %s74, 0
    %p257 = por %p255, %p256
    %p258 = scmp.ne.s32.totalorder %s250, %s252
    %p259 = scmp.eq.s32.totalorder %s79, 1
    %p260 = por %p258, %p259
    %p261 = scmp.ne.s32.totalorder %s252, %s253
    %p262 = scmp.eq.s32.totalorder %s79, 0
    %p263 = por %p261, %p262
    %p264 = scmp.ne.s32.totalorder %s252, %s253
    %p265 = scmp.eq.s32.totalorder %s80, 1
    %p266 = por %p264, %p265
    %p268 = scmp.ne.s32.totalorder %s253, %s267
    %p269 = scmp.eq.s32.totalorder %s80, 0
    %p270 = por %p268, %p269
    %s272 = sadd.s32 %s271, 1
    %p275 = scmp.eq.s32.totalorder %s74, 1
    %p276 = scmp.ne.s32.totalorder %s271, %s273
    %p277 = scmp.eq.s32.totalorder %s74, 0
    %p278 = por %p276, %p277
    %p279 = scmp.ne.s32.totalorder %s271, %s273
    %p280 = scmp.eq.s32.totalorder %s79, 1
    %p281 = por %p279, %p280
    %p282 = scmp.ne.s32.totalorder %s273, %s274
    %p283 = scmp.eq.s32.totalorder %s79, 0
    %p284 = por %p282, %p283
    %p285 = scmp.ne.s32.totalorder %s273, %s274
    %p286 = scmp.eq.s32.totalorder %s80, 1
    %p287 = por %p285, %p286
    %p289 = scmp.ne.s32.totalorder %s274, %s288
    %p290 = scmp.eq.s32.totalorder %s80, 0
    %p291 = por %p289, %p290
    %s293 = sadd.s32 %s292, 1
    %p296 = scmp.eq.s32.totalorder %s74, 1
    %p297 = scmp.ne.s32.totalorder %s292, %s294
    %p298 = scmp.eq.s32.totalorder %s74, 0
    %p299 = por %p297, %p298
    %p300 = scmp.ne.s32.totalorder %s292, %s294
    %p301 = scmp.eq.s32.totalorder %s79, 1
    %p302 = por %p300, %p301
    %p303 = scmp.ne.s32.totalorder %s294, %s295
    %p304 = scmp.eq.s32.totalorder %s79, 0
    %p305 = por %p303, %p304
    %p306 = scmp.ne.s32.totalorder %s294, %s295
    %p307 = scmp.eq.s32.totalorder %s80, 1
    %p308 = por %p306, %p307
    %p310 = scmp.ne.s32.totalorder %s295, %s309
    %p311 = scmp.eq.s32.totalorder %s80, 0
    %p312 = por %p310, %p311
    %s314 = sadd.s32 %s313, 1
    %p317 = scmp.eq.s32.totalorder %s74, 1
    %p318 = scmp.ne.s32.totalorder %s313, %s315
    %p319 = scmp.eq.s32.totalorder %s74, 0
    %p320 = por %p318, %p319
    %p321 = scmp.ne.s32.totalorder %s313, %s315
    %p322 = scmp.eq.s32.totalorder %s79, 1
    %p323 = por %p321, %p322
    %p324 = scmp.ne.s32.totalorder %s315, %s316
    %p325 = scmp.eq.s32.totalorder %s79, 0
    %p326 = por %p324, %p325
    %p327 = scmp.ne.s32.totalorder %s315, %s316
    %p328 = scmp.eq.s32.totalorder %s80, 1
    %p329 = por %p327, %p328
    %p331 = scmp.ne.s32.totalorder %s316, %s330
    %p332 = scmp.eq.s32.totalorder %s80, 0
    %p333 = por %p331, %p332
    %s335 = sadd.s32 %s334, 1
    %p338 = scmp.eq.s32.totalorder %s74, 1
    %p339 = scmp.ne.s32.totalorder %s334, %s336
    %p340 = scmp.eq.s32.totalorder %s74, 0
    %p341 = por %p339, %p340
    %p342 = scmp.ne.s32.totalorder %s334, %s336
    %p343 = scmp.eq.s32.totalorder %s79, 1
    %p344 = por %p342, %p343
    %p345 = scmp.ne.s32.totalorder %s336, %s337
    %p346 = scmp.eq.s32.totalorder %s79, 0
    %p347 = por %p345, %p346
    %p348 = scmp.ne.s32.totalorder %s336, %s337
    %p349 = scmp.eq.s32.totalorder %s80, 1
    %p350 = por %p348, %p349
    %p352 = scmp.ne.s32.totalorder %s337, %s351
    %p353 = scmp.eq.s32.totalorder %s80, 0
    %p354 = por %p352, %p353
    %s356 = sadd.s32 %s355, 1
    %p359 = scmp.eq.s32.totalorder %s74, 1
    %p360 = scmp.ne.s32.totalorder %s355, %s357
    %p361 = scmp.eq.s32.totalorder %s74, 0
    %p362 = por %p360, %p361
    %p363 = scmp.ne.s32.totalorder %s355, %s357
    %p364 = scmp.eq.s32.totalorder %s79, 1
    %p365 = por %p363, %p364
    %p366 = scmp.ne.s32.totalorder %s357, %s358
    %p367 = scmp.eq.s32.totalorder %s79, 0
    %p368 = por %p366, %p367
    %p369 = scmp.ne.s32.totalorder %s357, %s358
    %p370 = scmp.eq.s32.totalorder %s80, 1
    %p371 = por %p369, %p370
    %p373 = scmp.ne.s32.totalorder %s358, %s372
    %p374 = scmp.eq.s32.totalorder %s80, 0
    %p375 = por %p373, %p374
    %s377 = sadd.s32 %s376, 1
    %p380 = scmp.eq.s32.totalorder %s74, 1
    %p381 = scmp.ne.s32.totalorder %s376, %s378
    %p382 = scmp.eq.s32.totalorder %s74, 0
    %p383 = por %p381, %p382
    %p384 = scmp.ne.s32.totalorder %s376, %s378
    %p385 = scmp.eq.s32.totalorder %s79, 1
    %p386 = por %p384, %p385
    %p387 = scmp.ne.s32.totalorder %s378, %s379
    %p388 = scmp.eq.s32.totalorder %s79, 0
    %p389 = por %p387, %p388
    %p390 = scmp.ne.s32.totalorder %s378, %s379
    %p391 = scmp.eq.s32.totalorder %s80, 1
    %p392 = por %p390, %p391
    %p394 = scmp.ne.s32.totalorder %s379, %s393
    %p395 = scmp.eq.s32.totalorder %s80, 0
    %p396 = por %p394, %p395
    %s398 = sadd.s32 %s397, 1
    %p401 = scmp.eq.s32.totalorder %s74, 1
    %p402 = scmp.ne.s32.totalorder %s397, %s399
    %p403 = scmp.eq.s32.totalorder %s74, 0
    %p404 = por %p402, %p403
    %p405 = scmp.ne.s32.totalorder %s397, %s399
    %p406 = scmp.eq.s32.totalorder %s79, 1
    %p407 = por %p405, %p406
    %p408 = scmp.ne.s32.totalorder %s399, %s400
    %p409 = scmp.eq.s32.totalorder %s79, 0
    %p410 = por %p408, %p409
    %p411 = scmp.ne.s32.totalorder %s399, %s400
    %p412 = scmp.eq.s32.totalorder %s80, 1
    %p413 = por %p411, %p412
    %p415 = scmp.ne.s32.totalorder %s400, %s414
    %p416 = scmp.eq.s32.totalorder %s80, 0
    %p417 = por %p415, %p416
    %s419 = sadd.s32 %s418, 1
    %p422 = scmp.eq.s32.totalorder %s74, 1
    %p423 = scmp.ne.s32.totalorder %s418, %s420
    %p424 = scmp.eq.s32.totalorder %s74, 0
    %p425 = por %p423, %p424
    %p426 = scmp.ne.s32.totalorder %s418, %s420
    %p427 = scmp.eq.s32.totalorder %s79, 1
    %p428 = por %p426, %p427
    %p429 = scmp.ne.s32.totalorder %s420, %s421
    %p430 = scmp.eq.s32.totalorder %s79, 0
    %p431 = por %p429, %p430
    %p432 = scmp.ne.s32.totalorder %s420, %s421
    %p433 = scmp.eq.s32.totalorder %s80, 1
    %p434 = por %p432, %p433
    %p436 = scmp.ne.s32.totalorder %s421, %s435
    %p437 = scmp.eq.s32.totalorder %s80, 0
    %p438 = por %p436, %p437
    %s440 = sadd.s32 %s439, 1
    %p443 = scmp.eq.s32.totalorder %s74, 1
    %p444 = scmp.ne.s32.totalorder %s439, %s441
    %p445 = scmp.eq.s32.totalorder %s74, 0
    %p446 = por %p444, %p445
    %p447 = scmp.ne.s32.totalorder %s439, %s441
    %p448 = scmp.eq.s32.totalorder %s79, 1
    %p449 = por %p447, %p448
    %p450 = scmp.ne.s32.totalorder %s441, %s442
    %p451 = scmp.eq.s32.totalorder %s79, 0
    %p452 = por %p450, %p451
    %p453 = scmp.ne.s32.totalorder %s441, %s442
    %p454 = scmp.eq.s32.totalorder %s80, 1
    %p455 = por %p453, %p454
    %p457 = scmp.ne.s32.totalorder %s442, %s456
    %p458 = scmp.eq.s32.totalorder %s80, 0
    %p459 = por %p457, %p458
    %s461 = sadd.s32 %s460, 1
    %p464 = scmp.eq.s32.totalorder %s74, 1
    %p465 = scmp.ne.s32.totalorder %s460, %s462
    %p466 = scmp.eq.s32.totalorder %s74, 0
    %p467 = por %p465, %p466
    %p468 = scmp.ne.s32.totalorder %s460, %s462
    %p469 = scmp.eq.s32.totalorder %s79, 1
    %p470 = por %p468, %p469
    %p471 = scmp.ne.s32.totalorder %s462, %s463
    %p472 = scmp.eq.s32.totalorder %s79, 0
    %p473 = por %p471, %p472
    %p474 = scmp.ne.s32.totalorder %s462, %s463
    %p475 = scmp.eq.s32.totalorder %s80, 1
    %p476 = por %p474, %p475
    %p478 = scmp.ne.s32.totalorder %s463, %s477
    %p479 = scmp.eq.s32.totalorder %s80, 0
    %p480 = por %p478, %p479
    %s482 = sadd.s32 %s481, 1
    %p485 = scmp.eq.s32.totalorder %s74, 1
    %p486 = scmp.ne.s32.totalorder %s481, %s483
    %p487 = scmp.eq.s32.totalorder %s74, 0
    %p488 = por %p486, %p487
    %p489 = scmp.ne.s32.totalorder %s481, %s483
    %p490 = scmp.eq.s32.totalorder %s79, 1
    %p491 = por %p489, %p490
    %p492 = scmp.ne.s32.totalorder %s483, %s484
    %p493 = scmp.eq.s32.totalorder %s79, 0
    %p494 = por %p492, %p493
    %p495 = scmp.ne.s32.totalorder %s483, %s484
    %p496 = scmp.eq.s32.totalorder %s80, 1
    %p497 = por %p495, %p496
    %p499 = scmp.ne.s32.totalorder %s484, %s498
    %p500 = scmp.eq.s32.totalorder %s80, 0
    %p501 = por %p499, %p500
    %s503 = sadd.s32 %s502, 1
    %p506 = scmp.eq.s32.totalorder %s74, 1
    %p507 = scmp.ne.s32.totalorder %s502, %s504
    %p508 = scmp.eq.s32.totalorder %s74, 0
    %p509 = por %p507, %p508
    %p510 = scmp.ne.s32.totalorder %s502, %s504
    %p511 = scmp.eq.s32.totalorder %s79, 1
    %p512 = por %p510, %p511
    %p513 = scmp.ne.s32.totalorder %s504, %s505
    %p514 = scmp.eq.s32.totalorder %s79, 0
    %p515 = por %p513, %p514
    %p516 = scmp.ne.s32.totalorder %s504, %s505
    %p517 = scmp.eq.s32.totalorder %s80, 1
    %p518 = por %p516, %p517
    %p520 = scmp.ne.s32.totalorder %s505, %s519
    %p521 = scmp.eq.s32.totalorder %s80, 0
    %p522 = por %p520, %p521
    %s523 = ssub.s32 %s74, %s81
    %p524 = scmp.eq.s32.totalorder %s523, 0
    %s526 = sadd.s32 %s525, 1
    %s527 = scalar_select %p524, %s525, %s526
    %p530 = pneg %p524
    %p531 = scmp.eq.s32.totalorder %s74, 1
    %p532 = por %p530, %p531
    %p533 = scmp.ne.s32.totalorder %s525, %s528
    %p534 = scmp.eq.s32.totalorder %s74, 0
    %p535 = por %p533, %p534
    %p536 = scmp.ne.s32.totalorder %s525, %s528
    %p537 = scmp.eq.s32.totalorder %s79, 1
    %p538 = por %p536, %p537
    %p539 = scmp.ne.s32.totalorder %s528, %s529
    %p540 = scmp.eq.s32.totalorder %s79, 0
    %p541 = por %p539, %p540
    %p542 = scmp.ne.s32.totalorder %s528, %s529
    %p543 = scmp.eq.s32.totalorder %s80, 1
    %p544 = por %p542, %p543
    %p546 = scmp.ne.s32.totalorder %s529, %s545
    %p547 = scmp.eq.s32.totalorder %s80, 0
    %p548 = por %p546, %p547
    %s549 = ssub.s32 %s74, %s81
    %p550 = scmp.eq.s32.totalorder %s549, 0
    %s552 = sadd.s32 %s551, 1
    %s553 = scalar_select %p550, %s551, %s552
    %p556 = pneg %p550
    %p557 = scmp.eq.s32.totalorder %s74, 1
    %p558 = por %p556, %p557
    %p559 = scmp.ne.s32.totalorder %s551, %s554
    %p560 = scmp.eq.s32.totalorder %s74, 0
    %p561 = por %p559, %p560
    %p562 = scmp.ne.s32.totalorder %s551, %s554
    %p563 = scmp.eq.s32.totalorder %s79, 1
    %p564 = por %p562, %p563
    %p565 = scmp.ne.s32.totalorder %s554, %s555
    %p566 = scmp.eq.s32.totalorder %s79, 0
    %p567 = por %p565, %p566
    %p568 = scmp.ne.s32.totalorder %s554, %s555
    %p569 = scmp.eq.s32.totalorder %s80, 1
    %p570 = por %p568, %p569
    %p572 = scmp.ne.s32.totalorder %s555, %s571
    %p573 = scmp.eq.s32.totalorder %s80, 0
    %p574 = por %p572, %p573
    %s575 = ssub.s32 %s74, %s81
    %p576 = scmp.eq.s32.totalorder %s575, 0
    %s578 = sadd.s32 %s577, 1
    %s579 = scalar_select %p576, %s577, %s578
    %p582 = pneg %p576
    %p583 = scmp.eq.s32.totalorder %s74, 1
    %p584 = por %p582, %p583
    %p585 = scmp.ne.s32.totalorder %s577, %s580
    %p586 = scmp.eq.s32.totalorder %s74, 0
    %p587 = por %p585, %p586
    %p588 = scmp.ne.s32.totalorder %s577, %s580
    %p589 = scmp.eq.s32.totalorder %s79, 1
    %p590 = por %p588, %p589
    %p591 = scmp.ne.s32.totalorder %s580, %s581
    %p592 = scmp.eq.s32.totalorder %s79, 0
    %p593 = por %p591, %p592
    %p594 = scmp.ne.s32.totalorder %s580, %s581
    %p595 = scmp.eq.s32.totalorder %s80, 1
    %p596 = por %p594, %p595
    %p598 = scmp.ne.s32.totalorder %s581, %s597
    %p599 = scmp.eq.s32.totalorder %s80, 0
    %p600 = por %p598, %p599
    %s601 = ssub.s32 %s74, %s81
    %p602 = scmp.eq.s32.totalorder %s601, 0
    %s604 = sadd.s32 %s603, 1
    %s605 = scalar_select %p602, %s603, %s604
    %p608 = pneg %p602
    %p609 = scmp.eq.s32.totalorder %s74, 1
    %p610 = por %p608, %p609
    %p611 = scmp.ne.s32.totalorder %s603, %s606
    %p612 = scmp.eq.s32.totalorder %s74, 0
    %p613 = por %p611, %p612
    %p614 = scmp.ne.s32.totalorder %s603, %s606
    %p615 = scmp.eq.s32.totalorder %s79, 1
    %p616 = por %p614, %p615
    %p617 = scmp.ne.s32.totalorder %s606, %s607
    %p618 = scmp.eq.s32.totalorder %s79, 0
    %p619 = por %p617, %p618
    %p620 = scmp.ne.s32.totalorder %s606, %s607
    %p621 = scmp.eq.s32.totalorder %s80, 1
    %p622 = por %p620, %p621
    %p624 = scmp.ne.s32.totalorder %s607, %s623
    %p625 = scmp.eq.s32.totalorder %s80, 0
    %p626 = por %p624, %p625
    %s627 = ssub.s32 %s74, %s81
    %p628 = scmp.eq.s32.totalorder %s627, 0
    %s630 = sadd.s32 %s629, 1
    %s631 = scalar_select %p628, %s629, %s630
    %p634 = pneg %p628
    %p635 = scmp.eq.s32.totalorder %s74, 1
    %p636 = por %p634, %p635
    %p637 = scmp.ne.s32.totalorder %s629, %s632
    %p638 = scmp.eq.s32.totalorder %s74, 0
    %p639 = por %p637, %p638
    %p640 = scmp.ne.s32.totalorder %s629, %s632
    %p641 = scmp.eq.s32.totalorder %s79, 1
    %p642 = por %p640, %p641
    %p643 = scmp.ne.s32.totalorder %s632, %s633
    %p644 = scmp.eq.s32.totalorder %s79, 0
    %p645 = por %p643, %p644
    %p646 = scmp.ne.s32.totalorder %s632, %s633
    %p647 = scmp.eq.s32.totalorder %s80, 1
    %p648 = por %p646, %p647
    %p650 = scmp.ne.s32.totalorder %s633, %s649
    %p651 = scmp.eq.s32.totalorder %s80, 0
    %p652 = por %p650, %p651
    %s653 = ssub.s32 %s74, %s81
    %p654 = scmp.eq.s32.totalorder %s653, 0
    %s656 = sadd.s32 %s655, 1
    %s657 = scalar_select %p654, %s655, %s656
    %p660 = pneg %p654
    %p661 = scmp.eq.s32.totalorder %s74, 1
    %p662 = por %p660, %p661
    %p663 = scmp.ne.s32.totalorder %s655, %s658
    %p664 = scmp.eq.s32.totalorder %s74, 0
    %p665 = por %p663, %p664
    %p666 = scmp.ne.s32.totalorder %s655, %s658
    %p667 = scmp.eq.s32.totalorder %s79, 1
    %p668 = por %p666, %p667
    %p669 = scmp.ne.s32.totalorder %s658, %s659
    %p670 = scmp.eq.s32.totalorder %s79, 0
    %p671 = por %p669, %p670
    %p672 = scmp.ne.s32.totalorder %s658, %s659
    %p673 = scmp.eq.s32.totalorder %s80, 1
    %p674 = por %p672, %p673
    %p676 = scmp.ne.s32.totalorder %s659, %s675
    %p677 = scmp.eq.s32.totalorder %s80, 0
    %p678 = por %p676, %p677
    %s679 = ssub.s32 %s74, %s81
    %p680 = scmp.eq.s32.totalorder %s679, 0
    %s682 = sadd.s32 %s681, 1
    %s683 = scalar_select %p680, %s681, %s682
    %p686 = pneg %p680
    %p687 = scmp.eq.s32.totalorder %s74, 1
    %p688 = por %p686, %p687
    %p689 = scmp.ne.s32.totalorder %s681, %s684
    %p690 = scmp.eq.s32.totalorder %s74, 0
    %p691 = por %p689, %p690
    %p692 = scmp.ne.s32.totalorder %s681, %s684
    %p693 = scmp.eq.s32.totalorder %s79, 1
    %p694 = por %p692, %p693
    %p695 = scmp.ne.s32.totalorder %s684, %s685
    %p696 = scmp.eq.s32.totalorder %s79, 0
    %p697 = por %p695, %p696
    %p698 = scmp.ne.s32.totalorder %s684, %s685
    %p699 = scmp.eq.s32.totalorder %s80, 1
    %p700 = por %p698, %p699
    %p702 = scmp.ne.s32.totalorder %s685, %s701
    %p703 = scmp.eq.s32.totalorder %s80, 0
    %p704 = por %p702, %p703
    %s705 = ssub.s32 %s74, %s81
    %p706 = scmp.eq.s32.totalorder %s705, 0
    %s708 = sadd.s32 %s707, 1
    %s709 = scalar_select %p706, %s707, %s708
    %p712 = pneg %p706
    %p713 = scmp.eq.s32.totalorder %s74, 1
    %p714 = por %p712, %p713
    %p715 = scmp.ne.s32.totalorder %s707, %s710
    %p716 = scmp.eq.s32.totalorder %s74, 0
    %p717 = por %p715, %p716
    %p718 = scmp.ne.s32.totalorder %s707, %s710
    %p719 = scmp.eq.s32.totalorder %s79, 1
    %p720 = por %p718, %p719
    %p721 = scmp.ne.s32.totalorder %s710, %s711
    %p722 = scmp.eq.s32.totalorder %s79, 0
    %p723 = por %p721, %p722
    %p724 = scmp.ne.s32.totalorder %s710, %s711
    %p725 = scmp.eq.s32.totalorder %s80, 1
    %p726 = por %p724, %p725
    %p728 = scmp.ne.s32.totalorder %s711, %s727
    %p729 = scmp.eq.s32.totalorder %s80, 0
    %p730 = por %p728, %p729
    %s731 = ssub.s32 %s74, %s81
    %p732 = scmp.eq.s32.totalorder %s731, 0
    %s734 = sadd.s32 %s733, 1
    %s735 = scalar_select %p732, %s733, %s734
    %p738 = pneg %p732
    %p739 = scmp.eq.s32.totalorder %s74, 1
    %p740 = por %p738, %p739
    %p741 = scmp.ne.s32.totalorder %s733, %s736
    %p742 = scmp.eq.s32.totalorder %s74, 0
    %p743 = por %p741, %p742
    %p744 = scmp.ne.s32.totalorder %s733, %s736
    %p745 = scmp.eq.s32.totalorder %s79, 1
    %p746 = por %p744, %p745
    %p747 = scmp.ne.s32.totalorder %s736, %s737
    %p748 = scmp.eq.s32.totalorder %s79, 0
    %p749 = por %p747, %p748
    %p750 = scmp.ne.s32.totalorder %s736, %s737
    %p751 = scmp.eq.s32.totalorder %s80, 1
    %p752 = por %p750, %p751
    %p754 = scmp.ne.s32.totalorder %s737, %s753
    %p755 = scmp.eq.s32.totalorder %s80, 0
    %p756 = por %p754, %p755
    %s757 = ssub.s32 %s74, %s81
    %p758 = scmp.eq.s32.totalorder %s757, 0
    %s760 = sadd.s32 %s759, 1
    %s761 = scalar_select %p758, %s759, %s760
    %p764 = pneg %p758
    %p765 = scmp.eq.s32.totalorder %s74, 1
    %p766 = por %p764, %p765
    %p767 = scmp.ne.s32.totalorder %s759, %s762
    %p768 = scmp.eq.s32.totalorder %s74, 0
    %p769 = por %p767, %p768
    %p770 = scmp.ne.s32.totalorder %s759, %s762
    %p771 = scmp.eq.s32.totalorder %s79, 1
    %p772 = por %p770, %p771
    %p773 = scmp.ne.s32.totalorder %s762, %s763
    %p774 = scmp.eq.s32.totalorder %s79, 0
    %p775 = por %p773, %p774
    %p776 = scmp.ne.s32.totalorder %s762, %s763
    %p777 = scmp.eq.s32.totalorder %s80, 1
    %p778 = por %p776, %p777
    %p780 = scmp.ne.s32.totalorder %s763, %s779
    %p781 = scmp.eq.s32.totalorder %s80, 0
    %p782 = por %p780, %p781
    %s783 = ssub.s32 %s74, %s81
    %p784 = scmp.eq.s32.totalorder %s783, 0
    %s786 = sadd.s32 %s785, 1
    %s787 = scalar_select %p784, %s785, %s786
    %p790 = pneg %p784
    %p791 = scmp.eq.s32.totalorder %s74, 1
    %p792 = por %p790, %p791
    %p793 = scmp.ne.s32.totalorder %s785, %s788
    %p794 = scmp.eq.s32.totalorder %s74, 0
    %p795 = por %p793, %p794
    %p796 = scmp.ne.s32.totalorder %s785, %s788
    %p797 = scmp.eq.s32.totalorder %s79, 1
    %p798 = por %p796, %p797
    %p799 = scmp.ne.s32.totalorder %s788, %s789
    %p800 = scmp.eq.s32.totalorder %s79, 0
    %p801 = por %p799, %p800
    %p802 = scmp.ne.s32.totalorder %s788, %s789
    %p803 = scmp.eq.s32.totalorder %s80, 1
    %p804 = por %p802, %p803
    %p806 = scmp.ne.s32.totalorder %s789, %s805
    %p807 = scmp.eq.s32.totalorder %s80, 0
    %p808 = por %p806, %p807
    %s809 = ssub.s32 %s74, %s81
    %p810 = scmp.eq.s32.totalorder %s809, 0
    %s812 = sadd.s32 %s811, 1
    %s813 = scalar_select %p810, %s811, %s812
    %p816 = pneg %p810
    %p817 = scmp.eq.s32.totalorder %s74, 1
    %p818 = por %p816, %p817
    %p819 = scmp.ne.s32.totalorder %s811, %s814
    %p820 = scmp.eq.s32.totalorder %s74, 0
    %p821 = por %p819, %p820
    %p822 = scmp.ne.s32.totalorder %s811, %s814
    %p823 = scmp.eq.s32.totalorder %s79, 1
    %p824 = por %p822, %p823
    %p825 = scmp.ne.s32.totalorder %s814, %s815
    %p826 = scmp.eq.s32.totalorder %s79, 0
    %p827 = por %p825, %p826
    %p828 = scmp.ne.s32.totalorder %s814, %s815
    %p829 = scmp.eq.s32.totalorder %s80, 1
    %p830 = por %p828, %p829
    %p832 = scmp.ne.s32.totalorder %s815, %s831
    %p833 = scmp.eq.s32.totalorder %s80, 0
    %p834 = por %p832, %p833
    %s835 = ssub.s32 %s74, %s81
    %p836 = scmp.eq.s32.totalorder %s835, 0
    %s838 = sadd.s32 %s837, 1
    %s839 = scalar_select %p836, %s837, %s838
    %p842 = pneg %p836
    %p843 = scmp.eq.s32.totalorder %s74, 1
    %p844 = por %p842, %p843
    %p845 = scmp.ne.s32.totalorder %s837, %s840
    %p846 = scmp.eq.s32.totalorder %s74, 0
    %p847 = por %p845, %p846
    %p848 = scmp.ne.s32.totalorder %s837, %s840
    %p849 = scmp.eq.s32.totalorder %s79, 1
    %p850 = por %p848, %p849
    %p851 = scmp.ne.s32.totalorder %s840, %s841
    %p852 = scmp.eq.s32.totalorder %s79, 0
    %p853 = por %p851, %p852
    %p854 = scmp.ne.s32.totalorder %s840, %s841
    %p855 = scmp.eq.s32.totalorder %s80, 1
    %p856 = por %p854, %p855
    %p858 = scmp.ne.s32.totalorder %s841, %s857
    %p859 = scmp.eq.s32.totalorder %s80, 0
    %p860 = por %p858, %p859
    %p861 = scmp.le.s32.totalorder 1, %s74
    %p862 = scmp.lt.s32.totalorder %s74, 3
    %p863 = pnand %p861, %p862
    %p864 = pneg %p863
    // Predicated region
    $region9: #{model_forward.3} parent=5 // pred_check
      _
    $region10: #{model_forward.3} parent=5 // pred_check_branch
      %866 = sbr.rel (%p863) target = $region12
    $region11: #{model_forward.3} parent=5 // pred_region
      %s867 = ssub.s32 %s74, 1
      // Predicated region
      $region13: #{model_forward.3} parent=11 // pred_check
        %p868 = pneg %p95
      $region14: #{model_forward.3} parent=11 // pred_check_branch
        %870 = sbr.rel (%p868) target = $region16
      $region15: #{model_forward.3} parent=11 // pred_region
        _
      $region16: #{model_forward.3} parent=11 // pred_fallthru
        _
      // Predicated region
      $region17: #{model_forward.3} parent=11 // pred_check
        %p871 = pneg %p116
      $region18: #{model_forward.3} parent=11 // pred_check_branch
        %873 = sbr.rel (%p871) target = $region20
      $region19: #{model_forward.3} parent=11 // pred_region
        _
      $region20: #{model_forward.3} parent=11 // pred_fallthru
        _
      // Predicated region
      $region21: #{model_forward.3} parent=11 // pred_check
        %p874 = pneg %p137
      $region22: #{model_forward.3} parent=11 // pred_check_branch
        %876 = sbr.rel (%p874) target = $region24
      $region23: #{model_forward.3} parent=11 // pred_region
        _
      $region24: #{model_forward.3} parent=11 // pred_fallthru
        _
      // Predicated region
      $region25: #{model_forward.3} parent=11 // pred_check
        %p877 = pneg %p158
      $region26: #{model_forward.3} parent=11 // pred_check_branch
        %879 = sbr.rel (%p877) target = $region28
      $region27: #{model_forward.3} parent=11 // pred_region
        _
      $region28: #{model_forward.3} parent=11 // pred_fallthru
        _
      // Predicated region
      $region29: #{model_forward.3} parent=11 // pred_check
        %p880 = pneg %p179
      $region30: #{model_forward.3} parent=11 // pred_check_branch
        %882 = sbr.rel (%p880) target = $region32
      $region31: #{model_forward.3} parent=11 // pred_region
        _
      $region32: #{model_forward.3} parent=11 // pred_fallthru
        _
      // Predicated region
      $region33: #{model_forward.3} parent=11 // pred_check
        %p883 = pneg %p200
      $region34: #{model_forward.3} parent=11 // pred_check_branch
        %885 = sbr.rel (%p883) target = $region36
      $region35: #{model_forward.3} parent=11 // pred_region
        _
      $region36: #{model_forward.3} parent=11 // pred_fallthru
        _
      // Predicated region
      $region37: #{model_forward.3} parent=11 // pred_check
        %p886 = pneg %p221
      $region38: #{model_forward.3} parent=11 // pred_check_branch
        %888 = sbr.rel (%p886) target = $region40
      $region39: #{model_forward.3} parent=11 // pred_region
        _
      $region40: #{model_forward.3} parent=11 // pred_fallthru
        _
      // Predicated region
      $region41: #{model_forward.3} parent=11 // pred_check
        %p889 = pneg %p242
      $region42: #{model_forward.3} parent=11 // pred_check_branch
        %891 = sbr.rel (%p889) target = $region44
      $region43: #{model_forward.3} parent=11 // pred_region
        _
      $region44: #{model_forward.3} parent=11 // pred_fallthru
        _
      // Predicated region
      $region45: #{model_forward.3} parent=11 // pred_check
        %p892 = pneg %p263
      $region46: #{model_forward.3} parent=11 // pred_check_branch
        %894 = sbr.rel (%p892) target = $region48
      $region47: #{model_forward.3} parent=11 // pred_region
        _
      $region48: #{model_forward.3} parent=11 // pred_fallthru
        _
      // Predicated region
      $region49: #{model_forward.3} parent=11 // pred_check
        %p895 = pneg %p284
      $region50: #{model_forward.3} parent=11 // pred_check_branch
        %897 = sbr.rel (%p895) target = $region52
      $region51: #{model_forward.3} parent=11 // pred_region
        _
      $region52: #{model_forward.3} parent=11 // pred_fallthru
        _
      // Predicated region
      $region53: #{model_forward.3} parent=11 // pred_check
        %p898 = pneg %p305
      $region54: #{model_forward.3} parent=11 // pred_check_branch
        %900 = sbr.rel (%p898) target = $region56
      $region55: #{model_forward.3} parent=11 // pred_region
        _
      $region56: #{model_forward.3} parent=11 // pred_fallthru
        _
      // Predicated region
      $region57: #{model_forward.3} parent=11 // pred_check
        %p901 = pneg %p326
      $region58: #{model_forward.3} parent=11 // pred_check_branch
        %903 = sbr.rel (%p901) target = $region60
      $region59: #{model_forward.3} parent=11 // pred_region
        _
      $region60: #{model_forward.3} parent=11 // pred_fallthru
        _
      // Predicated region
      $region61: #{model_forward.3} parent=11 // pred_check
        %p904 = pneg %p347
      $region62: #{model_forward.3} parent=11 // pred_check_branch
        %906 = sbr.rel (%p904) target = $region64
      $region63: #{model_forward.3} parent=11 // pred_region
        _
      $region64: #{model_forward.3} parent=11 // pred_fallthru
        _
      // Predicated region
      $region65: #{model_forward.3} parent=11 // pred_check
        %p907 = pneg %p368
      $region66: #{model_forward.3} parent=11 // pred_check_branch
        %909 = sbr.rel (%p907) target = $region68
      $region67: #{model_forward.3} parent=11 // pred_region
        _
      $region68: #{model_forward.3} parent=11 // pred_fallthru
        _
      // Predicated region
      $region69: #{model_forward.3} parent=11 // pred_check
        %p910 = pneg %p389
      $region70: #{model_forward.3} parent=11 // pred_check_branch
        %912 = sbr.rel (%p910) target = $region72
      $region71: #{model_forward.3} parent=11 // pred_region
        _
      $region72: #{model_forward.3} parent=11 // pred_fallthru
        _
      // Predicated region
      $region73: #{model_forward.3} parent=11 // pred_check
        %p913 = pneg %p410
      $region74: #{model_forward.3} parent=11 // pred_check_branch
        %915 = sbr.rel (%p913) target = $region76
      $region75: #{model_forward.3} parent=11 // pred_region
        _
      $region76: #{model_forward.3} parent=11 // pred_fallthru
        _
      // Predicated region
      $region77: #{model_forward.3} parent=11 // pred_check
        %p916 = pneg %p431
      $region78: #{model_forward.3} parent=11 // pred_check_branch
        %918 = sbr.rel (%p916) target = $region80
      $region79: #{model_forward.3} parent=11 // pred_region
        _
      $region80: #{model_forward.3} parent=11 // pred_fallthru
        _
      // Predicated region
      $region81: #{model_forward.3} parent=11 // pred_check
        %p919 = pneg %p452
      $region82: #{model_forward.3} parent=11 // pred_check_branch
        %921 = sbr.rel (%p919) target = $region84
      $region83: #{model_forward.3} parent=11 // pred_region
        _
      $region84: #{model_forward.3} parent=11 // pred_fallthru
        _
      // Predicated region
      $region85: #{model_forward.3} parent=11 // pred_check
        %p922 = pneg %p473
      $region86: #{model_forward.3} parent=11 // pred_check_branch
        %924 = sbr.rel (%p922) target = $region88
      $region87: #{model_forward.3} parent=11 // pred_region
        _
      $region88: #{model_forward.3} parent=11 // pred_fallthru
        _
      // Predicated region
      $region89: #{model_forward.3} parent=11 // pred_check
        %p925 = pneg %p494
      $region90: #{model_forward.3} parent=11 // pred_check_branch
        %927 = sbr.rel (%p925) target = $region92
      $region91: #{model_forward.3} parent=11 // pred_region
        _
      $region92: #{model_forward.3} parent=11 // pred_fallthru
        _
      // Predicated region
      $region93: #{model_forward.3} parent=11 // pred_check
        %p928 = pneg %p515
      $region94: #{model_forward.3} parent=11 // pred_check_branch
        %930 = sbr.rel (%p928) target = $region96
      $region95: #{model_forward.3} parent=11 // pred_region
        _
      $region96: #{model_forward.3} parent=11 // pred_fallthru
        _
    $region12: #{model_forward.3} parent=5 // pred_fallthru
      _
    %p931 = scmp.lt.s32.totalorder %s74, 2
    // Predicated region
    $region97: #{model_forward.3} parent=5 // pred_check
      %p932 = pneg %p931
    $region98: #{model_forward.3} parent=5 // pred_check_branch
      %934 = sbr.rel (%p932) target = $region100
    $region99: #{model_forward.3} parent=5 // pred_region
      // Predicated region
      $region101: #{model_forward.3} parent=99 // pred_check
        %p935 = pneg %p535
      $region102: #{model_forward.3} parent=99 // pred_check_branch
        %937 = sbr.rel (%p935) target = $region104
      $region103: #{model_forward.3} parent=99 // pred_region
        %p938 = scmp.lt.s32.totalorder %s74, 1
        %s939 = scalar_select %p938, %s74, 1
        %s940 = smul.addr %s939, 2
        %s941 = scalar_lea.vmem %s43, %s940
      $region104: #{model_forward.3} parent=99 // pred_fallthru
        _
      // Predicated region
      $region105: #{model_forward.3} parent=99 // pred_check
        %p942 = pneg %p561
      $region106: #{model_forward.3} parent=99 // pred_check_branch
        %944 = sbr.rel (%p942) target = $region108
      $region107: #{model_forward.3} parent=99 // pred_region
        %p945 = scmp.lt.s32.totalorder %s74, 1
        %s946 = scalar_select %p945, %s74, 1
        %s947 = scalar_lea.vmem %s45, %s946
      $region108: #{model_forward.3} parent=99 // pred_fallthru
        _
      // Predicated region
      $region109: #{model_forward.3} parent=99 // pred_check
        %p948 = pneg %p587
      $region110: #{model_forward.3} parent=99 // pred_check_branch
        %950 = sbr.rel (%p948) target = $region112
      $region111: #{model_forward.3} parent=99 // pred_region
        %p951 = scmp.lt.s32.totalorder %s74, 1
        %s952 = scalar_select %p951, %s74, 1
        %s953 = smul.addr %s952, 48
        %s954 = smul.addr %s953, 8
        %s955 = scalar_lea.vmem %s47, %s954
      $region112: #{model_forward.3} parent=99 // pred_fallthru
        _
      // Predicated region
      $region113: #{model_forward.3} parent=99 // pred_check
        %p956 = pneg %p613
      $region114: #{model_forward.3} parent=99 // pred_check_branch
        %958 = sbr.rel (%p956) target = $region116
      $region115: #{model_forward.3} parent=99 // pred_region
        %p959 = scmp.lt.s32.totalorder %s74, 1
        %s960 = scalar_select %p959, %s74, 1
        %s961 = smul.addr %s960, 8
        %s962 = smul.addr %s961, 2
        %s963 = scalar_lea.vmem %s49, %s962
      $region116: #{model_forward.3} parent=99 // pred_fallthru
        _
      // Predicated region
      $region117: #{model_forward.3} parent=99 // pred_check
        %p964 = pneg %p639
      $region118: #{model_forward.3} parent=99 // pred_check_branch
        %966 = sbr.rel (%p964) target = $region120
      $region119: #{model_forward.3} parent=99 // pred_region
        %p967 = scmp.lt.s32.totalorder %s74, 1
        %s968 = scalar_select %p967, %s74, 1
        %s969 = smul.addr %s968, 4
        %s970 = smul.addr %s969, 2
        %s971 = scalar_lea.vmem %s51, %s970
      $region120: #{model_forward.3} parent=99 // pred_fallthru
        _
      // Predicated region
      $region121: #{model_forward.3} parent=99 // pred_check
        %p972 = pneg %p665
      $region122: #{model_forward.3} parent=99 // pred_check_branch
        %974 = sbr.rel (%p972) target = $region124
      $region123: #{model_forward.3} parent=99 // pred_region
        %p975 = scmp.lt.s32.totalorder %s74, 1
        %s976 = scalar_select %p975, %s74, 1
        %s977 = smul.addr %s976, 4
        %s978 = scalar_lea.vmem %s53, %s977
      $region124: #{model_forward.3} parent=99 // pred_fallthru
        _
      // Predicated region
      $region125: #{model_forward.3} parent=99 // pred_check
        %p979 = pneg %p691
      $region126: #{model_forward.3} parent=99 // pred_check_branch
        %981 = sbr.rel (%p979) target = $region128
      $region127: #{model_forward.3} parent=99 // pred_region
        %p982 = scmp.lt.s32.totalorder %s74, 1
        %s983 = scalar_select %p982, %s74, 1
        %s984 = smul.addr %s983, 24
        %s985 = smul.addr %s984, 8
        %s986 = scalar_lea.vmem %s55, %s985
      $region128: #{model_forward.3} parent=99 // pred_fallthru
        _
      // Predicated region
      $region129: #{model_forward.3} parent=99 // pred_check
        %p987 = pneg %p717
      $region130: #{model_forward.3} parent=99 // pred_check_branch
        %989 = sbr.rel (%p987) target = $region132
      $region131: #{model_forward.3} parent=99 // pred_region
        %p990 = scmp.lt.s32.totalorder %s74, 1
        %s991 = scalar_select %p990, %s74, 1
        %s992 = smul.addr %s991, 4
        %s993 = smul.addr %s992, 2
        %s994 = scalar_lea.vmem %s57, %s993
      $region132: #{model_forward.3} parent=99 // pred_fallthru
        _
      // Predicated region
      $region133: #{model_forward.3} parent=99 // pred_check
        %p995 = pneg %p743
      $region134: #{model_forward.3} parent=99 // pred_check_branch
        %997 = sbr.rel (%p995) target = $region136
      $region135: #{model_forward.3} parent=99 // pred_region
        %p998 = scmp.lt.s32.totalorder %s74, 1
        %s999 = scalar_select %p998, %s74, 1
        %s1000 = smul.addr %s999, 16
        %s1001 = smul.addr %s1000, 8
        %s1002 = scalar_lea.vmem %s59, %s1001
      $region136: #{model_forward.3} parent=99 // pred_fallthru
        _
      // Predicated region
      $region137: #{model_forward.3} parent=99 // pred_check
        %p1003 = pneg %p769
      $region138: #{model_forward.3} parent=99 // pred_check_branch
        %1005 = sbr.rel (%p1003) target = $region140
      $region139: #{model_forward.3} parent=99 // pred_region
        %p1006 = scmp.lt.s32.totalorder %s74, 1
        %s1007 = scalar_select %p1006, %s74, 1
        %s1008 = smul.addr %s1007, 4
        %s1009 = scalar_lea.vmem %s61, %s1008
      $region140: #{model_forward.3} parent=99 // pred_fallthru
        _
    $region100: #{model_forward.3} parent=5 // pred_fallthru
      _
    %p1010 = scmp.le.s32.totalorder 1, %s74
    %p1011 = scmp.lt.s32.totalorder %s74, 3
    %p1012 = pnand %p1010, %p1011
    %p1013 = pneg %p1012
    // Predicated region
    $region141: #{model_forward.3} parent=5 // pred_check
      _
    $region142: #{model_forward.3} parent=5 // pred_check_branch
      %1015 = sbr.rel (%p1012) target = $region144
    $region143: #{model_forward.3} parent=5 // pred_region
      %s1016 = ssub.s32 %s74, 1
      %p1017 = pneg %p95
      %p1018 = pneg %p92
      %p1019 = pneg %p116
      %p1020 = pneg %p113
      %p1021 = pneg %p137
      %p1022 = pneg %p134
      %p1023 = pneg %p158
      %p1024 = pneg %p155
      %p1025 = pneg %p179
      %p1026 = pneg %p176
      %p1027 = pneg %p200
      %p1028 = pneg %p197
      %p1029 = pneg %p221
      %p1030 = pneg %p218
      %p1031 = pneg %p242
      %p1032 = pneg %p239
      %p1033 = pneg %p263
      %p1034 = pneg %p260
      %p1035 = pneg %p284
      %p1036 = pneg %p281
      %p1037 = pneg %p305
      %p1038 = pneg %p302
      %p1039 = pneg %p326
      %p1040 = pneg %p323
      %p1041 = pneg %p347
      %p1042 = pneg %p344
      %p1043 = pneg %p368
      %p1044 = pneg %p365
      %p1045 = pneg %p389
      %p1046 = pneg %p386
      %p1047 = pneg %p410
      %p1048 = pneg %p407
      %p1049 = pneg %p431
      %p1050 = pneg %p428
      %p1051 = pneg %p452
      %p1052 = pneg %p449
      %p1053 = pneg %p473
      %p1054 = pneg %p470
      %p1055 = pneg %p494
      %p1056 = pneg %p491
      %p1057 = pneg %p515
      %p1058 = pneg %p512
      %p1059 = scmp.lt.s32.totalorder %s79, 1
      %s1060 = scalar_select %p1059, %s79, 1
      %s1061 = smul.addr %s1060, 2
      %s1062 = scalar_lea.vmem %s43, %s1061
      %p1063 = pneg %p541
      %p1064 = pneg %p538
      %p1065 = scmp.lt.s32.totalorder %s79, 1
      %s1066 = scalar_select %p1065, %s79, 1
      %s1067 = scalar_lea.vmem %s45, %s1066
      %p1068 = pneg %p567
      %p1069 = pneg %p564
      %p1070 = scmp.lt.s32.totalorder %s79, 1
      %s1071 = scalar_select %p1070, %s79, 1
      %s1072 = smul.addr %s1071, 48
      %s1073 = smul.addr %s1072, 8
      %s1074 = scalar_lea.vmem %s47, %s1073
      %p1075 = pneg %p593
      %p1076 = pneg %p590
      %p1077 = scmp.lt.s32.totalorder %s79, 1
      %s1078 = scalar_select %p1077, %s79, 1
      %s1079 = smul.addr %s1078, 8
      %s1080 = smul.addr %s1079, 2
      %s1081 = scalar_lea.vmem %s49, %s1080
      %p1082 = pneg %p619
      %p1083 = pneg %p616
      %p1084 = scmp.lt.s32.totalorder %s79, 1
      %s1085 = scalar_select %p1084, %s79, 1
      %s1086 = smul.addr %s1085, 4
      %s1087 = smul.addr %s1086, 2
      %s1088 = scalar_lea.vmem %s51, %s1087
      %p1089 = pneg %p645
      %p1090 = pneg %p642
      %p1091 = scmp.lt.s32.totalorder %s79, 1
      %s1092 = scalar_select %p1091, %s79, 1
      %s1093 = smul.addr %s1092, 4
      %s1094 = scalar_lea.vmem %s53, %s1093
      %p1095 = pneg %p671
      %p1096 = pneg %p668
      %p1097 = scmp.lt.s32.totalorder %s79, 1
      %s1098 = scalar_select %p1097, %s79, 1
      %s1099 = smul.addr %s1098, 24
      %s1100 = smul.addr %s1099, 8
      %s1101 = scalar_lea.vmem %s55, %s1100
      %p1102 = pneg %p697
      %p1103 = pneg %p694
      %p1104 = scmp.lt.s32.totalorder %s79, 1
      %s1105 = scalar_select %p1104, %s79, 1
      %s1106 = smul.addr %s1105, 4
      %s1107 = smul.addr %s1106, 2
      %s1108 = scalar_lea.vmem %s57, %s1107
      %p1109 = pneg %p723
      %p1110 = pneg %p720
      %p1111 = scmp.lt.s32.totalorder %s79, 1
      %s1112 = scalar_select %p1111, %s79, 1
      %s1113 = smul.addr %s1112, 16
      %s1114 = smul.addr %s1113, 8
      %s1115 = scalar_lea.vmem %s59, %s1114
      %p1116 = pneg %p749
      %p1117 = pneg %p746
      %p1118 = scmp.lt.s32.totalorder %s79, 1
      %s1119 = scalar_select %p1118, %s79, 1
      %s1120 = smul.addr %s1119, 4
      %s1121 = scalar_lea.vmem %s61, %s1120
      %p1122 = pneg %p775
      %p1123 = pneg %p772
      %p1124 = pneg %p801
      %p1125 = pneg %p798
      %p1126 = scmp.lt.s32.totalorder %s79, 1
      %s1127 = scalar_select %p1126, %s79, 1
      %s1128 = smul.addr %s1127, 4
      %s1129 = smul.addr %s1128, 8
      %s1130 = scalar_lea.vmem %s63, %s1129
      %p1131 = pneg %p827
      %p1132 = pneg %p824
      %p1133 = scmp.lt.s32.totalorder %s79, 1
      %s1134 = scalar_select %p1133, %s79, 1
      %s1135 = scalar_lea.vmem %s65, %s1134
      %p1136 = pneg %p853
      %p1137 = pneg %p850
      %p1138 = scmp.lt.s32.totalorder %s79, 1
      %s1139 = scalar_select %p1138, %s79, 1
      %s1140 = scalar_lea.vmem %s67, %s1139
      %p1141 = scmp.lt.s32.totalorder %s79, 1
      %s1142 = scalar_select %p1141, %s79, 1
      %s1143 = smul.addr %s1142, 2
      %s1144 = scalar_lea.vmem %s43, %s1143
      %p1145 = scmp.lt.s32.totalorder %s79, 1
      %s1146 = scalar_select %p1145, %s79, 1
      %s1147 = scalar_lea.vmem %s45, %s1146
      %p1148 = scmp.lt.s32.totalorder %s79, 1
      %s1149 = scalar_select %p1148, %s79, 1
      %s1150 = smul.addr %s1149, 48
      %s1151 = smul.addr %s1150, 8
      %s1152 = scalar_lea.vmem %s47, %s1151
      %p1153 = scmp.lt.s32.totalorder %s79, 1
      %s1154 = scalar_select %p1153, %s79, 1
      %s1155 = smul.addr %s1154, 8
      %s1156 = smul.addr %s1155, 2
      %s1157 = scalar_lea.vmem %s49, %s1156
      %p1158 = scmp.lt.s32.totalorder %s79, 1
      %s1159 = scalar_select %p1158, %s79, 1
      %s1160 = smul.addr %s1159, 4
      %s1161 = smul.addr %s1160, 2
      %s1162 = scalar_lea.vmem %s51, %s1161
      %p1163 = scmp.lt.s32.totalorder %s79, 1
      %s1164 = scalar_select %p1163, %s79, 1
      %s1165 = smul.addr %s1164, 4
      %s1166 = scalar_lea.vmem %s53, %s1165
      %p1167 = scmp.lt.s32.totalorder %s79, 1
      %s1168 = scalar_select %p1167, %s79, 1
      %s1169 = smul.addr %s1168, 24
      %s1170 = smul.addr %s1169, 8
      %s1171 = scalar_lea.vmem %s55, %s1170
      %p1172 = scmp.lt.s32.totalorder %s79, 1
      %s1173 = scalar_select %p1172, %s79, 1
      %s1174 = smul.addr %s1173, 4
      %s1175 = smul.addr %s1174, 2
      %s1176 = scalar_lea.vmem %s57, %s1175
      %p1177 = scmp.lt.s32.totalorder %s79, 1
      %s1178 = scalar_select %p1177, %s79, 1
      %s1179 = smul.addr %s1178, 16
      %s1180 = smul.addr %s1179, 8
      %s1181 = scalar_lea.vmem %s59, %s1180
      %p1182 = scmp.lt.s32.totalorder %s79, 1
      %s1183 = scalar_select %p1182, %s79, 1
      %s1184 = smul.addr %s1183, 4
      %s1185 = scalar_lea.vmem %s61, %s1184
      %p1186 = scmp.lt.s32.totalorder %s79, 1
      %s1187 = scalar_select %p1186, %s79, 1
      %s1188 = smul.addr %s1187, 4
      %s1189 = smul.addr %s1188, 8
      %s1190 = scalar_lea.vmem %s63, %s1189
      %p1191 = scmp.lt.s32.totalorder %s79, 1
      %s1192 = scalar_select %p1191, %s79, 1
      %s1193 = scalar_lea.vmem %s65, %s1192
      %p1194 = scmp.lt.s32.totalorder %s79, 1
      %s1195 = scalar_select %p1194, %s79, 1
      %s1196 = scalar_lea.vmem %s67, %s1195
      %v1197 = vld [vmem:[%s11] sm:$0x3]
      %v1198 = vld [vmem:[%s13] sm:$0x3]
      %v1199 = vmax.f32 %v1198, 0.0
      %v1200 = vand.u32 2147483647, %v1198
      %v1201 = vsub.f32 0.0, %v1200
      %v1202 = vmul.f32 %v1201, 1.442695
      %v1203 = vpow.pop %v1202
      %v1204 = vadd.f32 %v1203, 1.0
      %v1205 = vlog2.pop %v1204
      %v1206 = vmul.f32 %v1205, 0.6931472
      %v1207 = vmul.f32 -0.5, %v1203
      %v1208 = vadd.f32 %v1207, 1.0
      %v1209 = vmul.f32 %v1208, %v1203
      %v1210 = vand.u32 2147483647, %v1203
      %vm1211 = vcmp.lt.f32.partialorder %v1210, 0.0004427343
      %v1212 = vsel %vm1211, %v1209, %v1206
      %v1213 = vadd.f32 %v1199, %v1212
      %v1214 = vld [vmem:[%s15] sm:$0x1]
      %v1215 = vld [vmem:[%s17] sm:$0x1]
      %v1216 = vmax.f32 %v1215, 0.0
      %v1217 = vand.u32 2147483647, %v1215
      %v1218 = vsub.f32 0.0, %v1217
      %v1219 = vmul.f32 %v1218, 1.442695
      %v1220 = vpow.pop %v1219
      %v1221 = vadd.f32 %v1220, 1.0
      %v1222 = vlog2.pop %v1221
      %v1223 = vmul.f32 %v1222, 0.6931472
      %v1224 = vmul.f32 -0.5, %v1220
      %v1225 = vadd.f32 %v1224, 1.0
      %v1226 = vmul.f32 %v1225, %v1220
      %v1227 = vand.u32 2147483647, %v1220
      %vm1228 = vcmp.lt.f32.partialorder %v1227, 0.0004427343
      %v1229 = vsel %vm1228, %v1226, %v1223
      %v1230 = vadd.f32 %v1216, %v1229
      %v1231 = vld [vmem:[%s19] sm:$0xff]
      %v1232 = vld [vmem:[%s19 + $0x8] sm:$0xff]
      %v1233 = vld [vmem:[%s19 + $0x10] sm:$0xff]
      %v1234 = vld [vmem:[%s19 + $0x18] sm:$0xff]
      %v1235 = vld [vmem:[%s19 + $0x20] sm:$0xff]
      %v1236 = vld [vmem:[%s19 + $0x28] sm:$0xff]
      %v1237 = vld [vmem:[%s21] sm:$0xff]
      %v1238 = vld [vmem:[%s21 + $0x8] sm:$0xff]
      %v1239 = vld [vmem:[%s21 + $0x10] sm:$0xff]
      %v1240 = vld [vmem:[%s21 + $0x18] sm:$0xff]
      %v1241 = vld [vmem:[%s21 + $0x20] sm:$0xff]
      %v1242 = vld [vmem:[%s21 + $0x28] sm:$0xff]
      %v1243 = vmax.f32 %v1237, 0.0
      %v1244 = vmax.f32 %v1238, 0.0
      %v1245 = vmax.f32 %v1239, 0.0
      %v1246 = vmax.f32 %v1240, 0.0
      %v1247 = vmax.f32 %v1241, 0.0
      %v1248 = vmax.f32 %v1242, 0.0
      %v1249 = vand.u32 2147483647, %v1237
      %v1250 = vand.u32 2147483647, %v1238
      %v1251 = vand.u32 2147483647, %v1239
      %v1252 = vand.u32 2147483647, %v1240
      %v1253 = vand.u32 2147483647, %v1241
      %v1254 = vand.u32 2147483647, %v1242
      %v1255 = vsub.f32 0.0, %v1249
      %v1256 = vsub.f32 0.0, %v1250
      %v1257 = vsub.f32 0.0, %v1251
      %v1258 = vsub.f32 0.0, %v1252
      %v1259 = vsub.f32 0.0, %v1253
      %v1260 = vsub.f32 0.0, %v1254
      %v1261 = vmul.f32 %v1255, 1.442695
      %v1262 = vpow.pop %v1261
      %v1263 = vmul.f32 %v1256, 1.442695
      %v1264 = vpow.pop %v1263
      %v1265 = vmul.f32 %v1257, 1.442695
      %v1266 = vpow.pop %v1265
      %v1267 = vmul.f32 %v1258, 1.442695
      %v1268 = vpow.pop %v1267
      %v1269 = vmul.f32 %v1259, 1.442695
      %v1270 = vpow.pop %v1269
      %v1271 = vmul.f32 %v1260, 1.442695
      %v1272 = vpow.pop %v1271
      %v1273 = vadd.f32 %v1262, 1.0
      %v1274 = vlog2.pop %v1273
      %v1275 = vmul.f32 %v1274, 0.6931472
      %v1276 = vmul.f32 -0.5, %v1262
      %v1277 = vadd.f32 %v1276, 1.0
      %v1278 = vmul.f32 %v1277, %v1262
      %v1279 = vand.u32 2147483647, %v1262
      %vm1280 = vcmp.lt.f32.partialorder %v1279, 0.0004427343
      %v1281 = vsel %vm1280, %v1278, %v1275
      %v1282 = vadd.f32 %v1264, 1.0
      %v1283 = vlog2.pop %v1282
      %v1284 = vmul.f32 %v1283, 0.6931472
      %v1285 = vmul.f32 -0.5, %v1264
      %v1286 = vadd.f32 %v1285, 1.0
      %v1287 = vmul.f32 %v1286, %v1264
      %v1288 = vand.u32 2147483647, %v1264
      %vm1289 = vcmp.lt.f32.partialorder %v1288, 0.0004427343
      %v1290 = vsel %vm1289, %v1287, %v1284
      %v1291 = vadd.f32 %v1266, 1.0
      %v1292 = vlog2.pop %v1291
      %v1293 = vmul.f32 %v1292, 0.6931472
      %v1294 = vmul.f32 -0.5, %v1266
      %v1295 = vadd.f32 %v1294, 1.0
      %v1296 = vmul.f32 %v1295, %v1266
      %v1297 = vand.u32 2147483647, %v1266
      %vm1298 = vcmp.lt.f32.partialorder %v1297, 0.0004427343
      %v1299 = vsel %vm1298, %v1296, %v1293
      %v1300 = vadd.f32 %v1268, 1.0
      %v1301 = vlog2.pop %v1300
      %v1302 = vmul.f32 %v1301, 0.6931472
      %v1303 = vmul.f32 -0.5, %v1268
      %v1304 = vadd.f32 %v1303, 1.0
      %v1305 = vmul.f32 %v1304, %v1268
      %v1306 = vand.u32 2147483647, %v1268
      %vm1307 = vcmp.lt.f32.partialorder %v1306, 0.0004427343
      %v1308 = vsel %vm1307, %v1305, %v1302
      %v1309 = vadd.f32 %v1270, 1.0
      %v1310 = vlog2.pop %v1309
      %v1311 = vmul.f32 %v1310, 0.6931472
      %v1312 = vmul.f32 -0.5, %v1270
      %v1313 = vadd.f32 %v1312, 1.0
      %v1314 = vmul.f32 %v1313, %v1270
      %v1315 = vand.u32 2147483647, %v1270
      %vm1316 = vcmp.lt.f32.partialorder %v1315, 0.0004427343
      %v1317 = vsel %vm1316, %v1314, %v1311
      %v1318 = vadd.f32 %v1272, 1.0
      %v1319 = vlog2.pop %v1318
      %v1320 = vmul.f32 %v1319, 0.6931472
      %v1321 = vmul.f32 -0.5, %v1272
      %v1322 = vadd.f32 %v1321, 1.0
      %v1323 = vmul.f32 %v1322, %v1272
      %v1324 = vand.u32 2147483647, %v1272
      %vm1325 = vcmp.lt.f32.partialorder %v1324, 0.0004427343
      %v1326 = vsel %vm1325, %v1323, %v1320
      %v1327 = vadd.f32 %v1243, %v1281
      %v1328 = vadd.f32 %v1244, %v1290
      %v1329 = vadd.f32 %v1245, %v1299
      %v1330 = vadd.f32 %v1246, %v1308
      %v1331 = vadd.f32 %v1247, %v1317
      %v1332 = vadd.f32 %v1248, %v1326
      %v1333 = vld [vmem:[%s23] sm:$0x3]
      %v1334 = vld [vmem:[%s25] sm:$0x3]
      %v1335 = vmax.f32 %v1334, 0.0
      %v1336 = vand.u32 2147483647, %v1334
      %v1337 = vsub.f32 0.0, %v1336
      %v1338 = vmul.f32 %v1337, 1.442695
      %v1339 = vpow.pop %v1338
      %v1340 = vadd.f32 %v1339, 1.0
      %v1341 = vlog2.pop %v1340
      %v1342 = vmul.f32 %v1341, 0.6931472
      %v1343 = vmul.f32 -0.5, %v1339
      %v1344 = vadd.f32 %v1343, 1.0
      %v1345 = vmul.f32 %v1344, %v1339
      %v1346 = vand.u32 2147483647, %v1339
      %vm1347 = vcmp.lt.f32.partialorder %v1346, 0.0004427343
      %v1348 = vsel %vm1347, %v1345, %v1342
      %v1349 = vadd.f32 %v1335, %v1348
      %v1350 = vld [vmem:[%s27] sm:$0xff]
      %v1351 = vld [vmem:[%s27 + $0x8] sm:$0xff]
      %v1352 = vld [vmem:[%s27 + $0x10] sm:$0xff]
      %v1353 = vld [vmem:[%s27 + $0x18] sm:$0xff]
      %v1354 = vld [vmem:[%s27 + $0x20] sm:$0xff]
      %v1355 = vld [vmem:[%s27 + $0x28] sm:$0xff]
      %v1356 = vld [vmem:[%s29] sm:$0xff]
      %v1357 = vld [vmem:[%s29 + $0x8] sm:$0xff]
      %v1358 = vld [vmem:[%s29 + $0x10] sm:$0xff]
      %v1359 = vld [vmem:[%s29 + $0x18] sm:$0xff]
      %v1360 = vld [vmem:[%s29 + $0x20] sm:$0xff]
      %v1361 = vld [vmem:[%s29 + $0x28] sm:$0xff]
      %v1362 = vmax.f32 %v1356, 0.0
      %v1363 = vmax.f32 %v1357, 0.0
      %v1364 = vmax.f32 %v1358, 0.0
      %v1365 = vmax.f32 %v1359, 0.0
      %v1366 = vmax.f32 %v1360, 0.0
      %v1367 = vmax.f32 %v1361, 0.0
      %v1368 = vand.u32 2147483647, %v1356
      %v1369 = vand.u32 2147483647, %v1357
      %v1370 = vand.u32 2147483647, %v1358
      %v1371 = vand.u32 2147483647, %v1359
      %v1372 = vand.u32 2147483647, %v1360
      %v1373 = vand.u32 2147483647, %v1361
      %v1374 = vsub.f32 0.0, %v1368
      %v1375 = vsub.f32 0.0, %v1369
      %v1376 = vsub.f32 0.0, %v1370
      %v1377 = vsub.f32 0.0, %v1371
      %v1378 = vsub.f32 0.0, %v1372
      %v1379 = vsub.f32 0.0, %v1373
      %v1380 = vmul.f32 %v1374, 1.442695
      %v1381 = vpow.pop %v1380
      %v1382 = vmul.f32 %v1375, 1.442695
      %v1383 = vpow.pop %v1382
      %v1384 = vmul.f32 %v1376, 1.442695
      %v1385 = vpow.pop %v1384
      %v1386 = vmul.f32 %v1377, 1.442695
      %v1387 = vpow.pop %v1386
      %v1388 = vmul.f32 %v1378, 1.442695
      %v1389 = vpow.pop %v1388
      %v1390 = vmul.f32 %v1379, 1.442695
      %v1391 = vpow.pop %v1390
      %v1392 = vadd.f32 %v1381, 1.0
      %v1393 = vlog2.pop %v1392
      %v1394 = vmul.f32 %v1393, 0.6931472
      %v1395 = vmul.f32 -0.5, %v1381
      %v1396 = vadd.f32 %v1395, 1.0
      %v1397 = vmul.f32 %v1396, %v1381
      %v1398 = vand.u32 2147483647, %v1381
      %vm1399 = vcmp.lt.f32.partialorder %v1398, 0.0004427343
      %v1400 = vsel %vm1399, %v1397, %v1394
      %v1401 = vadd.f32 %v1383, 1.0
      %v1402 = vlog2.pop %v1401
      %v1403 = vmul.f32 %v1402, 0.6931472
      %v1404 = vmul.f32 -0.5, %v1383
      %v1405 = vadd.f32 %v1404, 1.0
      %v1406 = vmul.f32 %v1405, %v1383
      %v1407 = vand.u32 2147483647, %v1383
      %vm1408 = vcmp.lt.f32.partialorder %v1407, 0.0004427343
      %v1409 = vsel %vm1408, %v1406, %v1403
      %v1410 = vadd.f32 %v1385, 1.0
      %v1411 = vlog2.pop %v1410
      %v1412 = vmul.f32 %v1411, 0.6931472
      %v1413 = vmul.f32 -0.5, %v1385
      %v1414 = vadd.f32 %v1413, 1.0
      %v1415 = vmul.f32 %v1414, %v1385
      %v1416 = vand.u32 2147483647, %v1385
      %vm1417 = vcmp.lt.f32.partialorder %v1416, 0.0004427343
      %v1418 = vsel %vm1417, %v1415, %v1412
      %v1419 = vadd.f32 %v1387, 1.0
      %v1420 = vlog2.pop %v1419
      %v1421 = vmul.f32 %v1420, 0.6931472
      %v1422 = vmul.f32 -0.5, %v1387
      %v1423 = vadd.f32 %v1422, 1.0
      %v1424 = vmul.f32 %v1423, %v1387
      %v1425 = vand.u32 2147483647, %v1387
      %vm1426 = vcmp.lt.f32.partialorder %v1425, 0.0004427343
      %v1427 = vsel %vm1426, %v1424, %v1421
      %v1428 = vadd.f32 %v1389, 1.0
      %v1429 = vlog2.pop %v1428
      %v1430 = vmul.f32 %v1429, 0.6931472
      %v1431 = vmul.f32 -0.5, %v1389
      %v1432 = vadd.f32 %v1431, 1.0
      %v1433 = vmul.f32 %v1432, %v1389
      %v1434 = vand.u32 2147483647, %v1389
      %vm1435 = vcmp.lt.f32.partialorder %v1434, 0.0004427343
      %v1436 = vsel %vm1435, %v1433, %v1430
      %v1437 = vadd.f32 %v1391, 1.0
      %v1438 = vlog2.pop %v1437
      %v1439 = vmul.f32 %v1438, 0.6931472
      %v1440 = vmul.f32 -0.5, %v1391
      %v1441 = vadd.f32 %v1440, 1.0
      %v1442 = vmul.f32 %v1441, %v1391
      %v1443 = vand.u32 2147483647, %v1391
      %vm1444 = vcmp.lt.f32.partialorder %v1443, 0.0004427343
      %v1445 = vsel %vm1444, %v1442, %v1439
      %v1446 = vadd.f32 %v1362, %v1400
      %v1447 = vadd.f32 %v1363, %v1409
      %v1448 = vadd.f32 %v1364, %v1418
      %v1449 = vadd.f32 %v1365, %v1427
      %v1450 = vadd.f32 %v1366, %v1436
      %v1451 = vadd.f32 %v1367, %v1445
      %v1452 = vld [vmem:[%s31] sm:$0x3]
      %v1453 = vld [vmem:[%s33] sm:$0x3]
      %v1454 = vmax.f32 %v1453, 0.0
      %v1455 = vand.u32 2147483647, %v1453
      %v1456 = vsub.f32 0.0, %v1455
      %v1457 = vmul.f32 %v1456, 1.442695
      %v1458 = vpow.pop %v1457
      %v1459 = vadd.f32 %v1458, 1.0
      %v1460 = vlog2.pop %v1459
      %v1461 = vmul.f32 %v1460, 0.6931472
      %v1462 = vmul.f32 -0.5, %v1458
      %v1463 = vadd.f32 %v1462, 1.0
      %v1464 = vmul.f32 %v1463, %v1458
      %v1465 = vand.u32 2147483647, %v1458
      %vm1466 = vcmp.lt.f32.partialorder %v1465, 0.0004427343
      %v1467 = vsel %vm1466, %v1464, %v1461
      %v1468 = vadd.f32 %v1454, %v1467
      %v1469 = vld [vmem:[%s35] sm:$0xff]
      %v1470 = vld [vmem:[%s35 + $0x8] sm:$0xff]
      %v1471 = vld [vmem:[%s35 + $0x10] sm:$0xff]
      %v1472 = vld [vmem:[%s35 + $0x18] sm:$0xff]
      %v1473 = vld [vmem:[%s37] sm:$0xff]
      %v1474 = vld [vmem:[%s37 + $0x8] sm:$0xff]
      %v1475 = vld [vmem:[%s37 + $0x10] sm:$0xff]
      %v1476 = vld [vmem:[%s37 + $0x18] sm:$0xff]
      %v1477 = vmax.f32 %v1473, 0.0
      %v1478 = vmax.f32 %v1474, 0.0
      %v1479 = vmax.f32 %v1475, 0.0
      %v1480 = vmax.f32 %v1476, 0.0
      %v1481 = vand.u32 2147483647, %v1473
      %v1482 = vand.u32 2147483647, %v1474
      %v1483 = vand.u32 2147483647, %v1475
      %v1484 = vand.u32 2147483647, %v1476
      %v1485 = vsub.f32 0.0, %v1481
      %v1486 = vsub.f32 0.0, %v1482
      %v1487 = vsub.f32 0.0, %v1483
      %v1488 = vsub.f32 0.0, %v1484
      %v1489 = vmul.f32 %v1485, 1.442695
      %v1490 = vpow.pop %v1489
      %v1491 = vmul.f32 %v1486, 1.442695
      %v1492 = vpow.pop %v1491
      %v1493 = vmul.f32 %v1487, 1.442695
      %v1494 = vpow.pop %v1493
      %v1495 = vmul.f32 %v1488, 1.442695
      %v1496 = vpow.pop %v1495
      %v1497 = vadd.f32 %v1490, 1.0
      %v1498 = vlog2.pop %v1497
      %v1499 = vmul.f32 %v1498, 0.6931472
      %v1500 = vmul.f32 -0.5, %v1490
      %v1501 = vadd.f32 %v1500, 1.0
      %v1502 = vmul.f32 %v1501, %v1490
      %v1503 = vand.u32 2147483647, %v1490
      %vm1504 = vcmp.lt.f32.partialorder %v1503, 0.0004427343
      %v1505 = vsel %vm1504, %v1502, %v1499
      %v1506 = vadd.f32 %v1492, 1.0
      %v1507 = vlog2.pop %v1506
      %v1508 = vmul.f32 %v1507, 0.6931472
      %v1509 = vmul.f32 -0.5, %v1492
      %v1510 = vadd.f32 %v1509, 1.0
      %v1511 = vmul.f32 %v1510, %v1492
      %v1512 = vand.u32 2147483647, %v1492
      %vm1513 = vcmp.lt.f32.partialorder %v1512, 0.0004427343
      %v1514 = vsel %vm1513, %v1511, %v1508
      %v1515 = vadd.f32 %v1494, 1.0
      %v1516 = vlog2.pop %v1515
      %v1517 = vmul.f32 %v1516, 0.6931472
      %v1518 = vmul.f32 -0.5, %v1494
      %v1519 = vadd.f32 %v1518, 1.0
      %v1520 = vmul.f32 %v1519, %v1494
      %v1521 = vand.u32 2147483647, %v1494
      %vm1522 = vcmp.lt.f32.partialorder %v1521, 0.0004427343
      %v1523 = vsel %vm1522, %v1520, %v1517
      %v1524 = vadd.f32 %v1496, 1.0
      %v1525 = vlog2.pop %v1524
      %v1526 = vmul.f32 %v1525, 0.6931472
      %v1527 = vmul.f32 -0.5, %v1496
      %v1528 = vadd.f32 %v1527, 1.0
      %v1529 = vmul.f32 %v1528, %v1496
      %v1530 = vand.u32 2147483647, %v1496
      %vm1531 = vcmp.lt.f32.partialorder %v1530, 0.0004427343
      %v1532 = vsel %vm1531, %v1529, %v1526
      %v1533 = vadd.f32 %v1477, %v1505
      %v1534 = vadd.f32 %v1478, %v1514
      %v1535 = vadd.f32 %v1479, %v1523
      %v1536 = vadd.f32 %v1480, %v1532
      %v1537 = vld [vmem:[%s39] sm:$0x1]
      %v1538 = vld [vmem:[%s41] sm:$0x1]
      %v1539 = vmax.f32 %v1538, 0.0
      %v1540 = vand.u32 2147483647, %v1538
      %v1541 = vsub.f32 0.0, %v1540
      %v1542 = vmul.f32 %v1541, 1.442695
      %v1543 = vpow.pop %v1542
      %v1544 = vadd.f32 %v1543, 1.0
      %v1545 = vlog2.pop %v1544
      %v1546 = vmul.f32 %v1545, 0.6931472
      %v1547 = vmul.f32 -0.5, %v1543
      %v1548 = vadd.f32 %v1547, 1.0
      %v1549 = vmul.f32 %v1548, %v1543
      %v1550 = vand.u32 2147483647, %v1543
      %vm1551 = vcmp.lt.f32.partialorder %v1550, 0.0004427343
      %v1552 = vsel %vm1551, %v1549, %v1546
      %v1553 = vadd.f32 %v1539, %v1552
      %v1554 = vlog2.pop %v1213
      %v1555 = vmul.f32 %v1554, 0.6931472
      %v1556 = vsub.f32 0.0, %v1555
      %v1557 = vmul.f32 %v1213, %v1213
      %v1558 = vmul.f32 %v1197, %v1197
      %v1559 = vadd.f32 %v1557, %v1558
      %v1560 = vrcp.pop 2.0
      %v1561 = vmul.f32 %v1559, %v1560
      %v1562 = vadd.f32 %v1556, %v1561
      %v1563 = vsub.f32 %v1562, 0.5
      %vm1564 = vcmask 123904
      %v1565 = vsel %vm1564, %v1563, 0.0
      %1566 = vadd.xlane.f32.xlu0 %v1565
      %v1567 = vpop.xlane.xlu0 %1566
      %v1568 = vrot.slane %v1567, 4
      %v1569 = vadd.f32 %v1567, %v1568
      %v1570 = vrot.slane %v1569, 2
      %v1571 = vadd.f32 %v1569, %v1570
      %v1572 = vrot.slane %v1571, 1
      %v1573 = vadd.f32 %v1571, %v1572
      %s1574 = vtos %v1573
      %v1575 = vlog2.pop %v1230
      %v1576 = vmul.f32 %v1575, 0.6931472
      %v1577 = vsub.f32 0.0, %v1576
      %v1578 = vmul.f32 %v1230, %v1230
      %v1579 = vmul.f32 %v1214, %v1214
      %v1580 = vadd.f32 %v1578, %v1579
      %v1581 = vmul.f32 %v1580, %v1560
      %v1582 = vadd.f32 %v1577, %v1581
      %v1583 = vsub.f32 %v1582, 0.5
      %vm1584 = vcmask 122880
      %v1585 = vsel %vm1584, %v1583, 0.0
      %1586 = vadd.xlane.f32.xlu0 %v1585
      %v1587 = vpop.xlane.xlu0 %1586
      %v1588 = vrot.slane %v1587, 4
      %v1589 = vadd.f32 %v1587, %v1588
      %v1590 = vrot.slane %v1589, 2
      %v1591 = vadd.f32 %v1589, %v1590
      %v1592 = vrot.slane %v1591, 1
      %v1593 = vadd.f32 %v1591, %v1592
      %s1594 = vtos %v1593
      %s1595 = sadd.f32 %s1574, %s1594
      %v1596 = vlog2.pop %v1327
      %v1597 = vmul.f32 %v1596, 0.6931472
      %v1598 = vlog2.pop %v1328
      %v1599 = vmul.f32 %v1598, 0.6931472
      %v1600 = vlog2.pop %v1329
      %v1601 = vmul.f32 %v1600, 0.6931472
      %v1602 = vlog2.pop %v1330
      %v1603 = vmul.f32 %v1602, 0.6931472
      %v1604 = vlog2.pop %v1331
      %v1605 = vmul.f32 %v1604, 0.6931472
      %v1606 = vlog2.pop %v1332
      %v1607 = vmul.f32 %v1606, 0.6931472
      %v1608 = vsub.f32 0.0, %v1597
      %v1609 = vsub.f32 0.0, %v1599
      %v1610 = vsub.f32 0.0, %v1601
      %v1611 = vsub.f32 0.0, %v1603
      %v1612 = vsub.f32 0.0, %v1605
      %v1613 = vsub.f32 0.0, %v1607
      %v1614 = vmul.f32 %v1327, %v1327
      %v1615 = vmul.f32 %v1328, %v1328
      %v1616 = vmul.f32 %v1329, %v1329
      %v1617 = vmul.f32 %v1330, %v1330
      %v1618 = vmul.f32 %v1331, %v1331
      %v1619 = vmul.f32 %v1332, %v1332
      %v1620 = vmul.f32 %v1231, %v1231
      %v1621 = vmul.f32 %v1232, %v1232
      %v1622 = vmul.f32 %v1233, %v1233
      %v1623 = vmul.f32 %v1234, %v1234
      %v1624 = vmul.f32 %v1235, %v1235
      %v1625 = vmul.f32 %v1236, %v1236
      %v1626 = vadd.f32 %v1614, %v1620
      %v1627 = vadd.f32 %v1615, %v1621
      %v1628 = vadd.f32 %v1616, %v1622
      %v1629 = vadd.f32 %v1617, %v1623
      %v1630 = vadd.f32 %v1618, %v1624
      %v1631 = vadd.f32 %v1619, %v1625
      %v1632 = vmul.f32 %v1626, %v1560
      %v1633 = vmul.f32 %v1627, %v1560
      %v1634 = vmul.f32 %v1628, %v1560
      %v1635 = vmul.f32 %v1629, %v1560
      %v1636 = vmul.f32 %v1630, %v1560
      %v1637 = vmul.f32 %v1631, %v1560
      %v1638 = vadd.f32 %v1608, %v1632
      %v1639 = vadd.f32 %v1609, %v1633
      %v1640 = vadd.f32 %v1610, %v1634
      %v1641 = vadd.f32 %v1611, %v1635
      %v1642 = vadd.f32 %v1612, %v1636
      %v1643 = vadd.f32 %v1613, %v1637
      %v1644 = vsub.f32 %v1638, 0.5
      %v1645 = vsub.f32 %v1639, 0.5
      %v1646 = vsub.f32 %v1640, 0.5
      %v1647 = vsub.f32 %v1641, 0.5
      %v1648 = vsub.f32 %v1642, 0.5
      %v1649 = vsub.f32 %v1643, 0.5
      %v1650 = vadd.f32 %v1644, %v1645
      %v1651 = vadd.f32 %v1650, %v1646
      %v1652 = vadd.f32 %v1651, %v1647
      %v1653 = vadd.f32 %v1652, %v1648
      %v1654 = vadd.f32 %v1653, %v1649
      %1655 = vadd.xlane.f32.xlu0 %v1654
      %v1656 = vpop.xlane.xlu0 %1655
      %v1657 = vrot.slane %v1656, 4
      %v1658 = vadd.f32 %v1656, %v1657
      %v1659 = vrot.slane %v1658, 2
      %v1660 = vadd.f32 %v1658, %v1659
      %v1661 = vrot.slane %v1660, 1
      %v1662 = vadd.f32 %v1660, %v1661
      %s1663 = vtos %v1662
      %v1664 = vlog2.pop %v1349
      %v1665 = vmul.f32 %v1664, 0.6931472
      %v1666 = vsub.f32 0.0, %v1665
      %v1667 = vmul.f32 %v1349, %v1349
      %v1668 = vmul.f32 %v1333, %v1333
      %v1669 = vadd.f32 %v1667, %v1668
      %v1670 = vmul.f32 %v1669, %v1560
      %v1671 = vadd.f32 %v1666, %v1670
      %v1672 = vsub.f32 %v1671, 0.5
      %vm1673 = vcmask 1041408
      %v1674 = vsel %vm1673, %v1672, 0.0
      %1675 = vadd.xlane.f32.xlu0 %v1674
      %v1676 = vpop.xlane.xlu0 %1675
      %v1677 = vrot.slane %v1676, 4
      %v1678 = vadd.f32 %v1676, %v1677
      %v1679 = vrot.slane %v1678, 2
      %v1680 = vadd.f32 %v1678, %v1679
      %v1681 = vrot.slane %v1680, 1
      %v1682 = vadd.f32 %v1680, %v1681
      %s1683 = vtos %v1682
      %s1684 = sadd.f32 %s1663, %s1683
      %v1685 = vlog2.pop %v1446
      %v1686 = vmul.f32 %v1685, 0.6931472
      %v1687 = vlog2.pop %v1447
      %v1688 = vmul.f32 %v1687, 0.6931472
      %v1689 = vlog2.pop %v1448
      %v1690 = vmul.f32 %v1689, 0.6931472
      %v1691 = vlog2.pop %v1449
      %v1692 = vmul.f32 %v1691, 0.6931472
      %v1693 = vlog2.pop %v1450
      %v1694 = vmul.f32 %v1693, 0.6931472
      %v1695 = vlog2.pop %v1451
      %v1696 = vmul.f32 %v1695, 0.6931472
      %v1697 = vsub.f32 0.0, %v1686
      %v1698 = vsub.f32 0.0, %v1688
      %v1699 = vsub.f32 0.0, %v1690
      %v1700 = vsub.f32 0.0, %v1692
      %v1701 = vsub.f32 0.0, %v1694
      %v1702 = vsub.f32 0.0, %v1696
      %v1703 = vmul.f32 %v1446, %v1446
      %v1704 = vmul.f32 %v1447, %v1447
      %v1705 = vmul.f32 %v1448, %v1448
      %v1706 = vmul.f32 %v1449, %v1449
      %v1707 = vmul.f32 %v1450, %v1450
      %v1708 = vmul.f32 %v1451, %v1451
      %v1709 = vmul.f32 %v1350, %v1350
      %v1710 = vmul.f32 %v1351, %v1351
      %v1711 = vmul.f32 %v1352, %v1352
      %v1712 = vmul.f32 %v1353, %v1353
      %v1713 = vmul.f32 %v1354, %v1354
      %v1714 = vmul.f32 %v1355, %v1355
      %v1715 = vadd.f32 %v1703, %v1709
      %v1716 = vadd.f32 %v1704, %v1710
      %v1717 = vadd.f32 %v1705, %v1711
      %v1718 = vadd.f32 %v1706, %v1712
      %v1719 = vadd.f32 %v1707, %v1713
      %v1720 = vadd.f32 %v1708, %v1714
      %v1721 = vmul.f32 %v1715, %v1560
      %v1722 = vmul.f32 %v1716, %v1560
      %v1723 = vmul.f32 %v1717, %v1560
      %v1724 = vmul.f32 %v1718, %v1560
      %v1725 = vmul.f32 %v1719, %v1560
      %v1726 = vmul.f32 %v1720, %v1560
      %v1727 = vadd.f32 %v1697, %v1721
      %v1728 = vadd.f32 %v1698, %v1722
      %v1729 = vadd.f32 %v1699, %v1723
      %v1730 = vadd.f32 %v1700, %v1724
      %v1731 = vadd.f32 %v1701, %v1725
      %v1732 = vadd.f32 %v1702, %v1726
      %v1733 = vsub.f32 %v1727, 0.5
      %v1734 = vsub.f32 %v1728, 0.5
      %v1735 = vsub.f32 %v1729, 0.5
      %v1736 = vsub.f32 %v1730, 0.5
      %v1737 = vsub.f32 %v1731, 0.5
      %v1738 = vsub.f32 %v1732, 0.5
      %v1739 = vadd.f32 %v1733, %v1734
      %v1740 = vadd.f32 %v1739, %v1735
      %v1741 = vadd.f32 %v1740, %v1736
      %v1742 = vadd.f32 %v1741, %v1737
      %v1743 = vadd.f32 %v1742, %v1738
      %1744 = vadd.xlane.f32.xlu0 %v1743
      %v1745 = vpop.xlane.xlu0 %1744
      %v1746 = vrot.slane %v1745, 4
      %v1747 = vadd.f32 %v1745, %v1746
      %v1748 = vrot.slane %v1747, 2
      %v1749 = vadd.f32 %v1747, %v1748
      %v1750 = vrot.slane %v1749, 1
      %v1751 = vadd.f32 %v1749, %v1750
      %s1752 = vtos %v1751
      %v1753 = vlog2.pop %v1468
      %v1754 = vmul.f32 %v1753, 0.6931472
      %v1755 = vsub.f32 0.0, %v1754
      %v1756 = vmul.f32 %v1468, %v1468
      %v1757 = vmul.f32 %v1452, %v1452
      %v1758 = vadd.f32 %v1756, %v1757
      %v1759 = vmul.f32 %v1758, %v1560
      %v1760 = vadd.f32 %v1755, %v1759
      %v1761 = vsub.f32 %v1760, 0.5
      %v1762 = vsel %vm1673, %v1761, 0.0
      %1763 = vadd.xlane.f32.xlu0 %v1762
      %v1764 = vpop.xlane.xlu0 %1763
      %v1765 = vrot.slane %v1764, 4
      %v1766 = vadd.f32 %v1764, %v1765
      %v1767 = vrot.slane %v1766, 2
      %v1768 = vadd.f32 %v1766, %v1767
      %v1769 = vrot.slane %v1768, 1
      %v1770 = vadd.f32 %v1768, %v1769
      %s1771 = vtos %v1770
      %s1772 = sadd.f32 %s1752, %s1771
      %v1773 = vlog2.pop %v1533
      %v1774 = vmul.f32 %v1773, 0.6931472
      %v1775 = vlog2.pop %v1534
      %v1776 = vmul.f32 %v1775, 0.6931472
      %v1777 = vlog2.pop %v1535
      %v1778 = vmul.f32 %v1777, 0.6931472
      %v1779 = vlog2.pop %v1536
      %v1780 = vmul.f32 %v1779, 0.6931472
      %v1781 = vsub.f32 0.0, %v1774
      %v1782 = vsub.f32 0.0, %v1776
      %v1783 = vsub.f32 0.0, %v1778
      %v1784 = vsub.f32 0.0, %v1780
      %v1785 = vmul.f32 %v1533, %v1533
      %v1786 = vmul.f32 %v1534, %v1534
      %v1787 = vmul.f32 %v1535, %v1535
      %v1788 = vmul.f32 %v1536, %v1536
      %v1789 = vmul.f32 %v1469, %v1469
      %v1790 = vmul.f32 %v1470, %v1470
      %v1791 = vmul.f32 %v1471, %v1471
      %v1792 = vmul.f32 %v1472, %v1472
      %v1793 = vadd.f32 %v1785, %v1789
      %v1794 = vadd.f32 %v1786, %v1790
      %v1795 = vadd.f32 %v1787, %v1791
      %v1796 = vadd.f32 %v1788, %v1792
      %v1797 = vmul.f32 %v1793, %v1560
      %v1798 = vmul.f32 %v1794, %v1560
      %v1799 = vmul.f32 %v1795, %v1560
      %v1800 = vmul.f32 %v1796, %v1560
      %v1801 = vadd.f32 %v1781, %v1797
      %v1802 = vadd.f32 %v1782, %v1798
      %v1803 = vadd.f32 %v1783, %v1799
      %v1804 = vadd.f32 %v1784, %v1800
      %v1805 = vsub.f32 %v1801, 0.5
      %v1806 = vsub.f32 %v1802, 0.5
      %v1807 = vsub.f32 %v1803, 0.5
      %v1808 = vsub.f32 %v1804, 0.5
      %vm1809 = vcmask 39936
      %v1810 = vsel %vm1809, %v1805, 0.0
      %v1811 = vsel %vm1809, %v1806, 0.0
      %v1812 = vadd.f32 %v1810, %v1811
      %v1813 = vsel %vm1809, %v1807, 0.0
      %v1814 = vadd.f32 %v1812, %v1813
      %v1815 = vsel %vm1809, %v1808, 0.0
      %v1816 = vadd.f32 %v1814, %v1815
      %1817 = vadd.xlane.f32.xlu0 %v1816
      %v1818 = vpop.xlane.xlu0 %1817
      %v1819 = vrot.slane %v1818, 4
      %v1820 = vadd.f32 %v1818, %v1819
      %v1821 = vrot.slane %v1820, 2
      %v1822 = vadd.f32 %v1820, %v1821
      %v1823 = vrot.slane %v1822, 1
      %v1824 = vadd.f32 %v1822, %v1823
      %s1825 = vtos %v1824
      %v1826 = vlog2.pop %v1553
      %v1827 = vmul.f32 %v1826, 0.6931472
      %v1828 = vsub.f32 0.0, %v1827
      %v1829 = vmul.f32 %v1553, %v1553
      %v1830 = vmul.f32 %v1537, %v1537
      %v1831 = vadd.f32 %v1829, %v1830
      %v1832 = vmul.f32 %v1831, %v1560
      %v1833 = vadd.f32 %v1828, %v1832
      %v1834 = vsub.f32 %v1833, 0.5
      %vm1835 = vcmask 32768
      %v1836 = vsel %vm1835, %v1834, 0.0
      %1837 = vadd.xlane.f32.xlu0 %v1836
      %v1838 = vpop.xlane.xlu0 %1837
      %v1839 = vrot.slane %v1838, 4
      %v1840 = vadd.f32 %v1838, %v1839
      %v1841 = vrot.slane %v1840, 2
      %v1842 = vadd.f32 %v1840, %v1841
      %v1843 = vrot.slane %v1842, 1
      %v1844 = vadd.f32 %v1842, %v1843
      %s1845 = vtos %v1844
      %s1846 = sadd.f32 %s1825, %s1845
      %s1847 = sadd.f32 %s1595, %s1684
      %s1848 = sadd.f32 %s1595, %s1772
      %s1849 = sadd.f32 %s1848, %s1846
      %s1850 = sadd.f32 %s1847, %s1849
      %v1851 = vstv %s1850
      %vm1852 = vcmask 0
      %1853 = vst.msk [vmem:[%s1196] sm:$0x1] %vm1852, %v1851
      %v1854 = vld [vmem:[%s1144] sm:$0x3]
      %v1855 = vmul.f32 %v1213, %v1854
      %v1856 = vadd.f32 %v1197, %v1855
      %v1857 = vld [vmem:[%s1147] sm:$0x1]
      %v1858 = vmul.f32 %v1230, %v1857
      %v1859 = vadd.f32 %v1214, %v1858
      %v1860 = vld [vmem:[%s1] sm:$0xff]
      %v1861 = vld [vmem:[%s1 + $0x8] sm:$0xff]
      %v1862 = vld [vmem:[%s1 + $0x10] sm:$0xff]
      %v1863 = vld [vmem:[%s1 + $0x18] sm:$0xff]
      %v1864 = vld [vmem:[%s1 + $0x20] sm:$0xff]
      %v1865 = vld [vmem:[%s1 + $0x28] sm:$0xff]
      %v1866 = vld [vmem:[%s1 + $0x30] sm:$0xff]
      %v1867 = vld [vmem:[%s1 + $0x38] sm:$0xff]
      %v1869 = vlaneseq
      %v1870 = vshrl.u32 %v1869, 7
      %v1871 = vsub.s32 0, %v1870
      %v1872 = vrot.slane %v1859, %v1871
      %vm1874 = vcmask 15360
      %v1876 = vsel %vm1874, %v1860, 0
      %v1879 = vsel %vm1874, %v1861, 0
      %v1882 = vsel %vm1874, %v1862, 0
      %v1885 = vsel %vm1874, %v1863, 0
      %v1888 = vsel %vm1874, %v1864, 0
      %v1891 = vsel %vm1874, %v1865, 0
      %v1894 = vsel %vm1874, %v1866, 0
      %v1897 = vsel %vm1874, %v1867, 0
      %v1900 = vsel %vm1673, %v1856, 0
      %1902 = vmatprep.subr.mxu0 0.0
      %1903 = vmatpush1.msra.mxu0 %v1900
      %1904 = vmatprep.subr.mxu0 0.0
      %1905 = vmatpush1.msra.mxu0 0.0
      %1906 = vmatprep.subr.mxu0 0.0
      %1907 = vmatpush1.msra.mxu0 0.0
      %1908 = vmatprep.subr.mxu0 0.0
      %1909 = vmatpush1.msra.mxu0 0.0
      %1910 = vmatprep.subr.mxu0 0.0
      %1911 = vmatpush1.msra.mxu0 0.0
      %1912 = vmatprep.subr.mxu0 0.0
      %1913 = vmatpush1.msra.mxu0 0.0
      %1914 = vmatprep.subr.mxu0 0.0
      %1915 = vmatpush1.msra.mxu0 0.0
      %1916 = vmatprep.subr.mxu0 0.0
      %1917 = vmatpush1.msra.mxu0 0.0
      %1918 = vmatprep.subr.mxu0 0.0
      %1919 = vmatpush1.msra.mxu0 0.0
      %1920 = vmatprep.subr.mxu0 0.0
      %1921 = vmatpush1.msra.mxu0 0.0
      %1922 = vmatprep.subr.mxu0 0.0
      %1923 = vmatpush1.msra.mxu0 0.0
      %1924 = vmatprep.subr.mxu0 0.0
      %1925 = vmatpush1.msra.mxu0 0.0
      %1926 = vmatprep.subr.mxu0 0.0
      %1927 = vmatpush1.msra.mxu0 0.0
      %1928 = vmatprep.subr.mxu0 0.0
      %1929 = vmatpush1.msra.mxu0 0.0
      %1930 = vmatprep.subr.mxu0 0.0
      %1931 = vmatpush1.msra.mxu0 0.0
      %1932 = vmatprep.subr.mxu0 0.0
      %1933 = vmatpush1.msra.mxu0 0.0
      %1934 = vmatprep.subr.mxu0 0.0
      %1935 = vmatpush1.msra.mxu0 0.0
      %1936 = vmatprep.subr.mxu0 0.0
      %1937 = vmatpush1.msra.mxu0 0.0
      %1938 = vmatprep.subr.mxu0 0.0
      %1939 = vmatpush1.msra.mxu0 0.0
      %1940 = vmatprep.subr.mxu0 0.0
      %1941 = vmatpush1.msra.mxu0 0.0
      %1942 = vmatprep.subr.mxu0 0.0
      %1943 = vmatpush1.msra.mxu0 0.0
      %1944 = vmatprep.subr.mxu0 0.0
      %1945 = vmatpush1.msra.mxu0 0.0
      %1946 = vmatprep.subr.mxu0 0.0
      %1947 = vmatpush1.msra.mxu0 0.0
      %1948 = vmatprep.subr.mxu0 0.0
      %1949 = vmatpush1.msra.mxu0 0.0
      %1950 = vmatprep.subr.mxu0 0.0
      %1951 = vmatpush1.msra.mxu0 0.0
      %1952 = vmatprep.subr.mxu0 0.0
      %1953 = vmatpush1.msra.mxu0 0.0
      %1954 = vmatprep.subr.mxu0 0.0
      %1955 = vmatpush1.msra.mxu0 0.0
      %1956 = vmatprep.subr.mxu0 0.0
      %1957 = vmatpush1.msra.mxu0 0.0
      %1958 = vmatprep.subr.mxu0 0.0
      %1959 = vmatpush1.msra.mxu0 0.0
      %1960 = vmatprep.subr.mxu0 0.0
      %1961 = vmatpush1.msra.mxu0 0.0
      %1962 = vmatprep.subr.mxu0 0.0
      %1963 = vmatpush1.msra.mxu0 0.0
      %1964 = vmatprep.subr.mxu0 0.0
      %1965 = vmatpush1.msra.mxu0 0.0
      %1966 = vmatprep.mubr.f32.mxu0 0.0
      %1967 = vmatmul.mubr.f32.gmra.mrb[0].mxu0 %v1876
      %v1968 = vpop.f32.mrb[0].mxu0
      %v1969 = vadd.f32 %v1872, %v1968
      %v1970 = vpop.f32.mrb[0].mxu0
      %1971 = vmatprep.mubr.f32.mxu0 0.0
      %1972 = vmatmul.mubr.f32.gmra.mrb[0].mxu0 %v1879
      %v1973 = vpop.f32.mrb[0].mxu0
      %v1974 = vadd.f32 %v1872, %v1973
      %v1975 = vpop.f32.mrb[0].mxu0
      %1976 = vmatprep.mubr.f32.mxu0 0.0
      %1977 = vmatmul.mubr.f32.gmra.mrb[0].mxu0 %v1882
      %v1978 = vpop.f32.mrb[0].mxu0
      %v1979 = vadd.f32 %v1872, %v1978
      %v1980 = vpop.f32.mrb[0].mxu0
      %1981 = vmatprep.mubr.f32.mxu0 0.0
      %1982 = vmatmul.mubr.f32.gmra.mrb[0].mxu0 %v1885
      %v1983 = vpop.f32.mrb[0].mxu0
      %v1984 = vadd.f32 %v1872, %v1983
      %v1985 = vpop.f32.mrb[0].mxu0
      %1986 = vmatprep.mubr.f32.mxu0 0.0
      %1987 = vmatmul.mubr.f32.gmra.mrb[0].mxu0 %v1888
      %v1988 = vpop.f32.mrb[0].mxu0
      %v1989 = vadd.f32 %v1872, %v1988
      %v1990 = vpop.f32.mrb[0].mxu0
      %1991 = vmatprep.mubr.f32.mxu0 0.0
      %1992 = vmatmul.mubr.f32.gmra.mrb[0].mxu0 %v1891
      %v1993 = vpop.f32.mrb[0].mxu0
      %v1994 = vadd.f32 %v1872, %v1993
      %v1995 = vpop.f32.mrb[0].mxu0
      %1996 = vmatprep.mubr.f32.mxu0 0.0
      %1997 = vmatmul.mubr.f32.gmra.mrb[0].mxu0 %v1894
      %v1998 = vpop.f32.mrb[0].mxu0
      %v1999 = vadd.f32 %v1872, %v1998
      %v2000 = vpop.f32.mrb[0].mxu0
      %2001 = vmatprep.mubr.f32.mxu0 0.0
      %2002 = vmatmul.mubr.f32.gmra.mrb[0].mxu0 %v1897
      %v2003 = vpop.f32.mrb[0].mxu0
      %v2004 = vadd.f32 %v1872, %v2003
      %v2005 = vpop.f32.mrb[0].mxu0
      %2006 = vdwg.mxu0
      %v2007 = vld [vmem:[%s1152] sm:$0xff]
      %v2008 = vld [vmem:[%s1152 + $0x8] sm:$0xff]
      %v2009 = vld [vmem:[%s1152 + $0x10] sm:$0xff]
      %v2010 = vld [vmem:[%s1152 + $0x18] sm:$0xff]
      %v2011 = vld [vmem:[%s1152 + $0x20] sm:$0xff]
      %v2012 = vld [vmem:[%s1152 + $0x28] sm:$0xff]
      %v2013 = vld [vmem:[%s1152 + $0x30] sm:$0xff]
      %v2014 = vld [vmem:[%s1152 + $0x38] sm:$0xff]
      %v2015 = vld [vmem:[%s1152 + $0x40] sm:$0xff]
      %v2016 = vld [vmem:[%s1152 + $0x48] sm:$0xff]
      %v2017 = vld [vmem:[%s1152 + $0x50] sm:$0xff]
      %v2018 = vld [vmem:[%s1152 + $0x58] sm:$0xff]
      %v2019 = vld [vmem:[%s1152 + $0x60] sm:$0xff]
      %v2020 = vld [vmem:[%s1152 + $0x68] sm:$0xff]
      %v2021 = vld [vmem:[%s1152 + $0x70] sm:$0xff]
      %v2022 = vld [vmem:[%s1152 + $0x78] sm:$0xff]
      %v2023 = vld [vmem:[%s1152 + $0x80] sm:$0xff]
      %v2024 = vld [vmem:[%s1152 + $0x88] sm:$0xff]
      %v2025 = vld [vmem:[%s1152 + $0x90] sm:$0xff]
      %v2026 = vld [vmem:[%s1152 + $0x98] sm:$0xff]
      %v2027 = vld [vmem:[%s1152 + $0xa0] sm:$0xff]
      %v2028 = vld [vmem:[%s1152 + $0xa8] sm:$0xff]
      %v2029 = vld [vmem:[%s1152 + $0xb0] sm:$0xff]
      %v2030 = vld [vmem:[%s1152 + $0xb8] sm:$0xff]
      %v2031 = vld [vmem:[%s1152 + $0xc0] sm:$0xff]
      %v2032 = vld [vmem:[%s1152 + $0xc8] sm:$0xff]
      %v2033 = vld [vmem:[%s1152 + $0xd0] sm:$0xff]
      %v2034 = vld [vmem:[%s1152 + $0xd8] sm:$0xff]
      %v2035 = vld [vmem:[%s1152 + $0xe0] sm:$0xff]
      %v2036 = vld [vmem:[%s1152 + $0xe8] sm:$0xff]
      %v2037 = vld [vmem:[%s1152 + $0xf0] sm:$0xff]
      %v2038 = vld [vmem:[%s1152 + $0xf8] sm:$0xff]
      %v2039 = vld [vmem:[%s1152 + $0x100] sm:$0xff]
      %v2040 = vld [vmem:[%s1152 + $0x108] sm:$0xff]
      %v2041 = vld [vmem:[%s1152 + $0x110] sm:$0xff]
      %v2042 = vld [vmem:[%s1152 + $0x118] sm:$0xff]
      %v2043 = vld [vmem:[%s1152 + $0x120] sm:$0xff]
      %v2044 = vld [vmem:[%s1152 + $0x128] sm:$0xff]
      %v2045 = vld [vmem:[%s1152 + $0x130] sm:$0xff]
      %v2046 = vld [vmem:[%s1152 + $0x138] sm:$0xff]
      %v2047 = vld [vmem:[%s1152 + $0x140] sm:$0xff]
      %v2048 = vld [vmem:[%s1152 + $0x148] sm:$0xff]
      %v2049 = vld [vmem:[%s1152 + $0x150] sm:$0xff]
      %v2050 = vld [vmem:[%s1152 + $0x158] sm:$0xff]
      %v2051 = vld [vmem:[%s1152 + $0x160] sm:$0xff]
      %v2052 = vld [vmem:[%s1152 + $0x168] sm:$0xff]
      %v2053 = vld [vmem:[%s1152 + $0x170] sm:$0xff]
      %v2054 = vld [vmem:[%s1152 + $0x178] sm:$0xff]
      %v2055 = vmul.f32 %v1327, %v2007
      %v2056 = vmul.f32 %v1328, %v2008
      %v2057 = vmul.f32 %v1329, %v2009
      %v2058 = vmul.f32 %v1330, %v2010
      %v2059 = vmul.f32 %v1331, %v2011
      %v2060 = vmul.f32 %v1332, %v2012
      %v2061 = vmul.f32 %v1327, %v2013
      %v2062 = vmul.f32 %v1328, %v2014
      %v2063 = vmul.f32 %v1329, %v2015
      %v2064 = vmul.f32 %v1330, %v2016
      %v2065 = vmul.f32 %v1331, %v2017
      %v2066 = vmul.f32 %v1332, %v2018
      %v2067 = vmul.f32 %v1327, %v2019
      %v2068 = vmul.f32 %v1328, %v2020
      %v2069 = vmul.f32 %v1329, %v2021
      %v2070 = vmul.f32 %v1330, %v2022
      %v2071 = vmul.f32 %v1331, %v2023
      %v2072 = vmul.f32 %v1332, %v2024
      %v2073 = vmul.f32 %v1327, %v2025
      %v2074 = vmul.f32 %v1328, %v2026
      %v2075 = vmul.f32 %v1329, %v2027
      %v2076 = vmul.f32 %v1330, %v2028
      %v2077 = vmul.f32 %v1331, %v2029
      %v2078 = vmul.f32 %v1332, %v2030
      %v2079 = vmul.f32 %v1327, %v2031
      %v2080 = vmul.f32 %v1328, %v2032
      %v2081 = vmul.f32 %v1329, %v2033
      %v2082 = vmul.f32 %v1330, %v2034
      %v2083 = vmul.f32 %v1331, %v2035
      %v2084 = vmul.f32 %v1332, %v2036
      %v2085 = vmul.f32 %v1327, %v2037
      %v2086 = vmul.f32 %v1328, %v2038
      %v2087 = vmul.f32 %v1329, %v2039
      %v2088 = vmul.f32 %v1330, %v2040
      %v2089 = vmul.f32 %v1331, %v2041
      %v2090 = vmul.f32 %v1332, %v2042
      %v2091 = vmul.f32 %v1327, %v2043
      %v2092 = vmul.f32 %v1328, %v2044
      %v2093 = vmul.f32 %v1329, %v2045
      %v2094 = vmul.f32 %v1330, %v2046
      %v2095 = vmul.f32 %v1331, %v2047
      %v2096 = vmul.f32 %v1332, %v2048
      %v2097 = vmul.f32 %v1327, %v2049
      %v2098 = vmul.f32 %v1328, %v2050
      %v2099 = vmul.f32 %v1329, %v2051
      %v2100 = vmul.f32 %v1330, %v2052
      %v2101 = vmul.f32 %v1331, %v2053
      %v2102 = vmul.f32 %v1332, %v2054
      %v2103 = vadd.f32 %v1231, %v2055
      %v2104 = vadd.f32 %v1232, %v2056
      %v2105 = vadd.f32 %v1233, %v2057
      %v2106 = vadd.f32 %v1234, %v2058
      %v2107 = vadd.f32 %v1235, %v2059
      %v2108 = vadd.f32 %v1236, %v2060
      %v2109 = vadd.f32 %v1231, %v2061
      %v2110 = vadd.f32 %v1232, %v2062
      %v2111 = vadd.f32 %v1233, %v2063
      %v2112 = vadd.f32 %v1234, %v2064
      %v2113 = vadd.f32 %v1235, %v2065
      %v2114 = vadd.f32 %v1236, %v2066
      %v2115 = vadd.f32 %v1231, %v2067
      %v2116 = vadd.f32 %v1232, %v2068
      %v2117 = vadd.f32 %v1233, %v2069
      %v2118 = vadd.f32 %v1234, %v2070
      %v2119 = vadd.f32 %v1235, %v2071
      %v2120 = vadd.f32 %v1236, %v2072
      %v2121 = vadd.f32 %v1231, %v2073
      %v2122 = vadd.f32 %v1232, %v2074
      %v2123 = vadd.f32 %v1233, %v2075
      %v2124 = vadd.f32 %v1234, %v2076
      %v2125 = vadd.f32 %v1235, %v2077
      %v2126 = vadd.f32 %v1236, %v2078
      %v2127 = vadd.f32 %v1231, %v2079
      %v2128 = vadd.f32 %v1232, %v2080
      %v2129 = vadd.f32 %v1233, %v2081
      %v2130 = vadd.f32 %v1234, %v2082
      %v2131 = vadd.f32 %v1235, %v2083
      %v2132 = vadd.f32 %v1236, %v2084
      %v2133 = vadd.f32 %v1231, %v2085
      %v2134 = vadd.f32 %v1232, %v2086
      %v2135 = vadd.f32 %v1233, %v2087
      %v2136 = vadd.f32 %v1234, %v2088
      %v2137 = vadd.f32 %v1235, %v2089
      %v2138 = vadd.f32 %v1236, %v2090
      %v2139 = vadd.f32 %v1231, %v2091
      %v2140 = vadd.f32 %v1232, %v2092
      %v2141 = vadd.f32 %v1233, %v2093
      %v2142 = vadd.f32 %v1234, %v2094
      %v2143 = vadd.f32 %v1235, %v2095
      %v2144 = vadd.f32 %v1236, %v2096
      %v2145 = vadd.f32 %v1231, %v2097
      %v2146 = vadd.f32 %v1232, %v2098
      %v2147 = vadd.f32 %v1233, %v2099
      %v2148 = vadd.f32 %v1234, %v2100
      %v2149 = vadd.f32 %v1235, %v2101
      %v2150 = vadd.f32 %v1236, %v2102
      %2151 = vst [vmem:[#allocation2] sm:$0xff] %v2103
      %2152 = vst [vmem:[#allocation2 + $0x8] sm:$0xff] %v2104
      %2153 = vst [vmem:[#allocation2 + $0x10] sm:$0xff] %v2105
      %2154 = vst [vmem:[#allocation2 + $0x18] sm:$0xff] %v2106
      %2155 = vst [vmem:[#allocation2 + $0x20] sm:$0xff] %v2107
      %2156 = vst [vmem:[#allocation2 + $0x28] sm:$0xff] %v2108
      %2157 = vst [vmem:[#allocation2 + $0x30] sm:$0xff] %v2109
      %2158 = vst [vmem:[#allocation2 + $0x38] sm:$0xff] %v2110
      %2159 = vst [vmem:[#allocation2 + $0x40] sm:$0xff] %v2111
      %2160 = vst [vmem:[#allocation2 + $0x48] sm:$0xff] %v2112
      %2161 = vst [vmem:[#allocation2 + $0x50] sm:$0xff] %v2113
      %2162 = vst [vmem:[#allocation2 + $0x58] sm:$0xff] %v2114
      %2163 = vst [vmem:[#allocation2 + $0x60] sm:$0xff] %v2115
      %2164 = vst [vmem:[#allocation2 + $0x68] sm:$0xff] %v2116
      %2165 = vst [vmem:[#allocation2 + $0x70] sm:$0xff] %v2117
      %2166 = vst [vmem:[#allocation2 + $0x78] sm:$0xff] %v2118
      %2167 = vst [vmem:[#allocation2 + $0x80] sm:$0xff] %v2119
      %2168 = vst [vmem:[#allocation2 + $0x88] sm:$0xff] %v2120
      %2169 = vst [vmem:[#allocation2 + $0x90] sm:$0xff] %v2121
      %2170 = vst [vmem:[#allocation2 + $0x98] sm:$0xff] %v2122
      %2171 = vst [vmem:[#allocation2 + $0xa0] sm:$0xff] %v2123
      %2172 = vst [vmem:[#allocation2 + $0xa8] sm:$0xff] %v2124
      %2173 = vst [vmem:[#allocation2 + $0xb0] sm:$0xff] %v2125
      %2174 = vst [vmem:[#allocation2 + $0xb8] sm:$0xff] %v2126
      %2175 = vst [vmem:[#allocation2 + $0xc0] sm:$0xff] %v2127
      %2176 = vst [vmem:[#allocation2 + $0xc8] sm:$0xff] %v2128
      %2177 = vst [vmem:[#allocation2 + $0xd0] sm:$0xff] %v2129
      %2178 = vst [vmem:[#allocation2 + $0xd8] sm:$0xff] %v2130
      %2179 = vst [vmem:[#allocation2 + $0xe0] sm:$0xff] %v2131
      %2180 = vst [vmem:[#allocation2 + $0xe8] sm:$0xff] %v2132
      %2181 = vst [vmem:[#allocation2 + $0xf0] sm:$0xff] %v2133
      %2182 = vst [vmem:[#allocation2 + $0xf8] sm:$0xff] %v2134
      %2183 = vst [vmem:[#allocation2 + $0x100] sm:$0xff] %v2135
      %2184 = vst [vmem:[#allocation2 + $0x108] sm:$0xff] %v2136
      %2185 = vst [vmem:[#allocation2 + $0x110] sm:$0xff] %v2137
      %2186 = vst [vmem:[#allocation2 + $0x118] sm:$0xff] %v2138
      %2187 = vst [vmem:[#allocation2 + $0x120] sm:$0xff] %v2139
      %2188 = vst [vmem:[#allocation2 + $0x128] sm:$0xff] %v2140
      %2189 = vst [vmem:[#allocation2 + $0x130] sm:$0xff] %v2141
      %2190 = vst [vmem:[#allocation2 + $0x138] sm:$0xff] %v2142
      %2191 = vst [vmem:[#allocation2 + $0x140] sm:$0xff] %v2143
      %2192 = vst [vmem:[#allocation2 + $0x148] sm:$0xff] %v2144
      %2193 = vst [vmem:[#allocation2 + $0x150] sm:$0xff] %v2145
      %2194 = vst [vmem:[#allocation2 + $0x158] sm:$0xff] %v2146
      %2195 = vst [vmem:[#allocation2 + $0x160] sm:$0xff] %v2147
      %2196 = vst [vmem:[#allocation2 + $0x168] sm:$0xff] %v2148
      %2197 = vst [vmem:[#allocation2 + $0x170] sm:$0xff] %v2149
      %2198 = vst [vmem:[#allocation2 + $0x178] sm:$0xff] %v2150
      %v2199 = vld [vmem:[%s1157] sm:$0x3]
      %v2200 = vld [vmem:[%s1157 + $0x2] sm:$0x3]
      %v2201 = vld [vmem:[%s1157 + $0x4] sm:$0x3]
      %v2202 = vld [vmem:[%s1157 + $0x6] sm:$0x3]
      %v2203 = vld [vmem:[%s1157 + $0x8] sm:$0x3]
      %v2204 = vld [vmem:[%s1157 + $0xa] sm:$0x3]
      %v2205 = vld [vmem:[%s1157 + $0xc] sm:$0x3]
      %v2206 = vld [vmem:[%s1157 + $0xe] sm:$0x3]
      %v2207 = vmul.f32 %v1349, %v2199
      %v2208 = vmul.f32 %v1349, %v2200
      %v2209 = vmul.f32 %v1349, %v2201
      %v2210 = vmul.f32 %v1349, %v2202
      %v2211 = vmul.f32 %v1349, %v2203
      %v2212 = vmul.f32 %v1349, %v2204
      %v2213 = vmul.f32 %v1349, %v2205
      %v2214 = vmul.f32 %v1349, %v2206
      %v2215 = vadd.f32 %v1333, %v2207
      %v2216 = vadd.f32 %v1333, %v2208
      %v2217 = vadd.f32 %v1333, %v2209
      %v2218 = vadd.f32 %v1333, %v2210
      %v2219 = vadd.f32 %v1333, %v2211
      %v2220 = vadd.f32 %v1333, %v2212
      %v2221 = vadd.f32 %v1333, %v2213
      %v2222 = vadd.f32 %v1333, %v2214
      %v2224 = vrot.slane %v2215, 1
      %v2226 = vadd.f32 %v2215, %v2224
      %v2227 = vld [vmem:[#allocation2] sm:$0xff]
      %v2228 = vld [vmem:[#allocation2 + $0x8] sm:$0xff]
      %v2229 = vld [vmem:[#allocation2 + $0x10] sm:$0xff]
      %v2230 = vld [vmem:[#allocation2 + $0x18] sm:$0xff]
      %v2231 = vld [vmem:[#allocation2 + $0x20] sm:$0xff]
      %v2232 = vld [vmem:[#allocation2 + $0x28] sm:$0xff]
      %vm2233 = vcmask 261120
      %v2235 = vsel %vm2233, 0.0, 0
      %2237 = vmatprep.subr.mxu0 0.0
      %2238 = vmatpush1.msra.mxu0 %v2229
      %2239 = vmatprep.subr.mxu0 0.0
      %2240 = vmatpush1.msra.mxu0 %v2230
      %2241 = vmatprep.subr.mxu0 0.0
      %2242 = vmatpush1.msra.mxu0 %v2231
      %2243 = vmatprep.subr.mxu0 0.0
      %2244 = vmatpush1.msra.mxu0 %v2232
      %2245 = vmatprep.subr.mxu0 0.0
      %2246 = vmatpush1.msra.mxu0 0.0
      %2247 = vmatprep.subr.mxu0 0.0
      %2248 = vmatpush1.msra.mxu0 0.0
      %2249 = vmatprep.subr.mxu0 0.0
      %2250 = vmatpush1.msra.mxu0 0.0
      %2251 = vmatprep.subr.mxu0 0.0
      %2252 = vmatpush1.msra.mxu0 0.0
      %2253 = vmatprep.subr.mxu0 0.0
      %2254 = vmatpush1.msra.mxu0 0.0
      %2255 = vmatprep.subr.mxu0 0.0
      %2256 = vmatpush1.msra.mxu0 0.0
      %2257 = vmatprep.subr.mxu0 0.0
      %2258 = vmatpush1.msra.mxu0 0.0
      %2259 = vmatprep.subr.mxu0 0.0
      %2260 = vmatpush1.msra.mxu0 0.0
      %2261 = vmatprep.subr.mxu0 0.0
      %2262 = vmatpush1.msra.mxu0 0.0
      %2263 = vmatprep.subr.mxu0 0.0
      %2264 = vmatpush1.msra.mxu0 0.0
      %2265 = vmatprep.subr.mxu0 0.0
      %2266 = vmatpush1.msra.mxu0 0.0
      %2267 = vmatprep.subr.mxu0 0.0
      %2268 = vmatpush1.msra.mxu0 0.0
      %2269 = vmatprep.subr.mxu0 0.0
      %2270 = vmatpush1.msra.mxu0 0.0
      %2271 = vmatprep.subr.mxu0 0.0
      %2272 = vmatpush1.msra.mxu0 0.0
      %2273 = vmatprep.subr.mxu0 0.0
      %2274 = vmatpush1.msra.mxu0 0.0
      %2275 = vmatprep.subr.mxu0 0.0
      %2276 = vmatpush1.msra.mxu0 0.0
      %2277 = vmatprep.subr.mxu0 0.0
      %2278 = vmatpush1.msra.mxu0 0.0
      %2279 = vmatprep.subr.mxu0 0.0
      %2280 = vmatpush1.msra.mxu0 0.0
      %2281 = vmatprep.subr.mxu0 0.0
      %2282 = vmatpush1.msra.mxu0 0.0
      %2283 = vmatprep.subr.mxu0 0.0
      %2284 = vmatpush1.msra.mxu0 0.0
      %2285 = vmatprep.subr.mxu0 0.0
      %2286 = vmatpush1.msra.mxu0 0.0
      %2287 = vmatprep.subr.mxu0 0.0
      %2288 = vmatpush1.msra.mxu0 0.0
      %2289 = vmatprep.subr.mxu0 0.0
      %2290 = vmatpush1.msra.mxu0 0.0
      %2291 = vmatprep.subr.mxu0 0.0
      %2292 = vmatpush1.msra.mxu0 0.0
      %2293 = vmatprep.subr.mxu0 0.0
      %2294 = vmatpush1.msra.mxu0 0.0
      %2295 = vmatprep.subr.mxu0 0.0
      %2296 = vmatpush1.msra.mxu0 0.0
      %2297 = vmatprep.subr.mxu0 0.0
      %2298 = vmatpush1.msra.mxu0 0.0
      %2299 = vmatprep.subr.mxu0 0.0
      %2300 = vmatpush1.msra.mxu0 0.0
      %2301 = vmatprep.mubr.f32.mxu0 0.0
      %2302 = vmatmul.mubr.f32.gmra.mrb[0].mxu0 %v2235
      %v2303 = vpop.f32.mrb[0].mxu0
      %v2304 = vadd.f32 0.0, %v2303
      %v2305 = vpop.f32.mrb[0].mxu0
      %2306 = vdwg.mxu0
      %vm2307 = vcmask 130048
      %v2309 = vsel %vm2307, %v1969, 0
      %2311 = vmatprep.subr.mxu0 0.0
      %2312 = vmatpush1.msra.mxu0 %v2227
      %2313 = vmatprep.subr.mxu0 0.0
      %2314 = vmatpush1.msra.mxu0 %v2228
      %2315 = vmatprep.subr.mxu0 0.0
      %2316 = vmatpush1.msra.mxu0 0.0
      %2317 = vmatprep.subr.mxu0 0.0
      %2318 = vmatpush1.msra.mxu0 0.0
      %2319 = vmatprep.subr.mxu0 0.0
      %2320 = vmatpush1.msra.mxu0 0.0
      %2321 = vmatprep.subr.mxu0 0.0
      %2322 = vmatpush1.msra.mxu0 0.0
      %2323 = vmatprep.subr.mxu0 0.0
      %2324 = vmatpush1.msra.mxu0 0.0
      %2325 = vmatprep.subr.mxu0 0.0
      %2326 = vmatpush1.msra.mxu0 0.0
      %2327 = vmatprep.subr.mxu0 0.0
      %2328 = vmatpush1.msra.mxu0 0.0
      %2329 = vmatprep.subr.mxu0 0.0
      %2330 = vmatpush1.msra.mxu0 0.0
      %2331 = vmatprep.subr.mxu0 0.0
      %2332 = vmatpush1.msra.mxu0 0.0
      %2333 = vmatprep.subr.mxu0 0.0
      %2334 = vmatpush1.msra.mxu0 0.0
      %2335 = vmatprep.subr.mxu0 0.0
      %2336 = vmatpush1.msra.mxu0 0.0
      %2337 = vmatprep.subr.mxu0 0.0
      %2338 = vmatpush1.msra.mxu0 0.0
      %2339 = vmatprep.subr.mxu0 0.0
      %2340 = vmatpush1.msra.mxu0 0.0
      %2341 = vmatprep.subr.mxu0 0.0
      %2342 = vmatpush1.msra.mxu0 0.0
      %2343 = vmatprep.subr.mxu0 0.0
      %2344 = vmatpush1.msra.mxu0 0.0
      %2345 = vmatprep.subr.mxu0 0.0
      %2346 = vmatpush1.msra.mxu0 0.0
      %2347 = vmatprep.subr.mxu0 0.0
      %2348 = vmatpush1.msra.mxu0 0.0
      %2349 = vmatprep.subr.mxu0 0.0
      %2350 = vmatpush1.msra.mxu0 0.0
      %2351 = vmatprep.subr.mxu0 0.0
      %2352 = vmatpush1.msra.mxu0 0.0
      %2353 = vmatprep.subr.mxu0 0.0
      %2354 = vmatpush1.msra.mxu0 0.0
      %2355 = vmatprep.subr.mxu0 0.0
      %2356 = vmatpush1.msra.mxu0 0.0
      %2357 = vmatprep.subr.mxu0 0.0
      %2358 = vmatpush1.msra.mxu0 0.0
      %2359 = vmatprep.subr.mxu0 0.0
      %2360 = vmatpush1.msra.mxu0 0.0
      %2361 = vmatprep.subr.mxu0 0.0
      %2362 = vmatpush1.msra.mxu0 0.0
      %2363 = vmatprep.subr.mxu0 0.0
      %2364 = vmatpush1.msra.mxu0 0.0
      %2365 = vmatprep.subr.mxu0 0.0
      %2366 = vmatpush1.msra.mxu0 0.0
      %2367 = vmatprep.subr.mxu0 0.0
      %2368 = vmatpush1.msra.mxu0 0.0
      %2369 = vmatprep.subr.mxu0 0.0
      %2370 = vmatpush1.msra.mxu0 0.0
      %2371 = vmatprep.subr.mxu0 0.0
      %2372 = vmatpush1.msra.mxu0 0.0
      %2373 = vmatprep.subr.mxu0 0.0
      %2374 = vmatpush1.msra.mxu0 0.0
      %2375 = vmatprep.mubr.f32.mxu0 0.0
      %2376 = vmatmul.mubr.f32.gmra.mrb[0].mxu0 %v2309
      %v2377 = vpop.f32.mrb[0].mxu0
      %v2378 = vadd.f32 %v2304, %v2377
      %v2379 = vpop.f32.mrb[0].mxu0
      %2380 = vdwg.mxu0
      %v2381 = vlaneseq
      %v2382 = vshrl.u32 %v2381, 7
      %v2383 = vsub.s32 0, %v2382
      %v2384 = vrot.slane %v2226, %v2383
      %v2385 = vadd.f32 %v2378, %v2384
      %v2386 = vxor.u32 %v2385, 2147483648
      %v2387 = vmul.f32 %v2386, 1.442695
      %v2388 = vpow.pop %v2387
      %v2389 = vadd.f32 %v2388, 1.0
      %v2390 = vrcp.pop %v2389
      %v2391 = vmul.f32 1.0, %v2390
      %v2392 = vtanh.pop %v2385
      %v2393 = vmul.f32 %v2391, 0.0
      %2395 = vrot.lane.b32.xlu0 %v2392, 64
      %v2396 = vpop.permute.xlu0 %2395
      %v2398 = vmul.f32 %v2391, %v2396
      %2400 = vrot.lane.b32.xlu0 %v2398, 32
      %v2401 = vpop.permute.xlu0 %2400
      %v2403 = vadd.f32 %v2393, %v2401
      %v2404 = vtanh.pop %v2403
      %2406 = vrot.lane.b32.xlu0 %v2404, 64
      %v2407 = vpop.permute.xlu0 %2406
      %v2409 = vmul.f32 %v2391, %v2407
      %v2411 = vrot.slane %v2216, 1
      %v2413 = vadd.f32 %v2216, %v2411
      %s2414 = scalar_lea.vmem [#allocation2], 48
      %v2415 = vld [vmem:[%s2414] sm:$0xff]
      %v2416 = vld [vmem:[%s2414 + $0x8] sm:$0xff]
      %v2417 = vld [vmem:[%s2414 + $0x10] sm:$0xff]
      %v2418 = vld [vmem:[%s2414 + $0x18] sm:$0xff]
      %v2419 = vld [vmem:[%s2414 + $0x20] sm:$0xff]
      %v2420 = vld [vmem:[%s2414 + $0x28] sm:$0xff]
      %2422 = vrot.lane.b32.xlu0 %v2409, 32
      %v2423 = vpop.permute.xlu0 %2422
      %v2424 = vsel %vm2233, %v2423, 0
      %2426 = vmatprep.subr.mxu0 0.0
      %2427 = vmatpush1.msra.mxu0 %v2417
      %2428 = vmatprep.subr.mxu0 0.0
      %2429 = vmatpush1.msra.mxu0 %v2418
      %2430 = vmatprep.subr.mxu0 0.0
      %2431 = vmatpush1.msra.mxu0 %v2419
      %2432 = vmatprep.subr.mxu0 0.0
      %2433 = vmatpush1.msra.mxu0 %v2420
      %2434 = vmatprep.subr.mxu0 0.0
      %2435 = vmatpush1.msra.mxu0 0.0
      %2436 = vmatprep.subr.mxu0 0.0
      %2437 = vmatpush1.msra.mxu0 0.0
      %2438 = vmatprep.subr.mxu0 0.0
      %2439 = vmatpush1.msra.mxu0 0.0
      %2440 = vmatprep.subr.mxu0 0.0
      %2441 = vmatpush1.msra.mxu0 0.0
      %2442 = vmatprep.subr.mxu0 0.0
      %2443 = vmatpush1.msra.mxu0 0.0
      %2444 = vmatprep.subr.mxu0 0.0
      %2445 = vmatpush1.msra.mxu0 0.0
      %2446 = vmatprep.subr.mxu0 0.0
      %2447 = vmatpush1.msra.mxu0 0.0
      %2448 = vmatprep.subr.mxu0 0.0
      %2449 = vmatpush1.msra.mxu0 0.0
      %2450 = vmatprep.subr.mxu0 0.0
      %2451 = vmatpush1.msra.mxu0 0.0
      %2452 = vmatprep.subr.mxu0 0.0
      %2453 = vmatpush1.msra.mxu0 0.0
      %2454 = vmatprep.subr.mxu0 0.0
      %2455 = vmatpush1.msra.mxu0 0.0
      %2456 = vmatprep.subr.mxu0 0.0
      %2457 = vmatpush1.msra.mxu0 0.0
      %2458 = vmatprep.subr.mxu0 0.0
      %2459 = vmatpush1.msra.mxu0 0.0
      %2460 = vmatprep.subr.mxu0 0.0
      %2461 = vmatpush1.msra.mxu0 0.0
      %2462 = vmatprep.subr.mxu0 0.0
      %2463 = vmatpush1.msra.mxu0 0.0
      %2464 = vmatprep.subr.mxu0 0.0
      %2465 = vmatpush1.msra.mxu0 0.0
      %2466 = vmatprep.subr.mxu0 0.0
      %2467 = vmatpush1.msra.mxu0 0.0
      %2468 = vmatprep.subr.mxu0 0.0
      %2469 = vmatpush1.msra.mxu0 0.0
      %2470 = vmatprep.subr.mxu0 0.0
      %2471 = vmatpush1.msra.mxu0 0.0
      %2472 = vmatprep.subr.mxu0 0.0
      %2473 = vmatpush1.msra.mxu0 0.0
      %2474 = vmatprep.subr.mxu0 0.0
      %2475 = vmatpush1.msra.mxu0 0.0
      %2476 = vmatprep.subr.mxu0 0.0
      %2477 = vmatpush1.msra.mxu0 0.0
      %2478 = vmatprep.subr.mxu0 0.0
      %2479 = vmatpush1.msra.mxu0 0.0
      %2480 = vmatprep.subr.mxu0 0.0
      %2481 = vmatpush1.msra.mxu0 0.0
      %2482 = vmatprep.subr.mxu0 0.0
      %2483 = vmatpush1.msra.mxu0 0.0
      %2484 = vmatprep.subr.mxu0 0.0
      %2485 = vmatpush1.msra.mxu0 0.0
      %2486 = vmatprep.subr.mxu0 0.0
      %2487 = vmatpush1.msra.mxu0 0.0
      %2488 = vmatprep.subr.mxu0 0.0
      %2489 = vmatpush1.msra.mxu0 0.0
      %2490 = vmatprep.mubr.f32.mxu0 0.0
      %2491 = vmatmul.mubr.f32.gmra.mrb[0].mxu0 %v2424
      %v2492 = vpop.f32.mrb[0].mxu0
      %v2493 = vadd.f32 0.0, %v2492
      %v2494 = vpop.f32.mrb[0].mxu0
      %2495 = vdwg.mxu0
      %v2497 = vsel %vm2307, %v1974, 0
      %2499 = vmatprep.subr.mxu0 0.0
      %2500 = vmatpush1.msra.mxu0 %v2415
      %2501 = vmatprep.subr.mxu0 0.0
      %2502 = vmatpush1.msra.mxu0 %v2416
      %2503 = vmatprep.subr.mxu0 0.0
      %2504 = vmatpush1.msra.mxu0 0.0
      %2505 = vmatprep.subr.mxu0 0.0
      %2506 = vmatpush1.msra.mxu0 0.0
      %2507 = vmatprep.subr.mxu0 0.0
      %2508 = vmatpush1.msra.mxu0 0.0
      %2509 = vmatprep.subr.mxu0 0.0
      %2510 = vmatpush1.msra.mxu0 0.0
      %2511 = vmatprep.subr.mxu0 0.0
      %2512 = vmatpush1.msra.mxu0 0.0
      %2513 = vmatprep.subr.mxu0 0.0
      %2514 = vmatpush1.msra.mxu0 0.0
      %2515 = vmatprep.subr.mxu0 0.0
      %2516 = vmatpush1.msra.mxu0 0.0
      %2517 = vmatprep.subr.mxu0 0.0
      %2518 = vmatpush1.msra.mxu0 0.0
      %2519 = vmatprep.subr.mxu0 0.0
      %2520 = vmatpush1.msra.mxu0 0.0
      %2521 = vmatprep.subr.mxu0 0.0
      %2522 = vmatpush1.msra.mxu0 0.0
      %2523 = vmatprep.subr.mxu0 0.0
      %2524 = vmatpush1.msra.mxu0 0.0
      %2525 = vmatprep.subr.mxu0 0.0
      %2526 = vmatpush1.msra.mxu0 0.0
      %2527 = vmatprep.subr.mxu0 0.0
      %2528 = vmatpush1.msra.mxu0 0.0
      %2529 = vmatprep.subr.mxu0 0.0
      %2530 = vmatpush1.msra.mxu0 0.0
      %2531 = vmatprep.subr.mxu0 0.0
      %2532 = vmatpush1.msra.mxu0 0.0
      %2533 = vmatprep.subr.mxu0 0.0
      %2534 = vmatpush1.msra.mxu0 0.0
      %2535 = vmatprep.subr.mxu0 0.0
      %2536 = vmatpush1.msra.mxu0 0.0
      %2537 = vmatprep.subr.mxu0 0.0
      %2538 = vmatpush1.msra.mxu0 0.0
      %2539 = vmatprep.subr.mxu0 0.0
      %2540 = vmatpush1.msra.mxu0 0.0
      %2541 = vmatprep.subr.mxu0 0.0
      %2542 = vmatpush1.msra.mxu0 0.0
      %2543 = vmatprep.subr.mxu0 0.0
      %2544 = vmatpush1.msra.mxu0 0.0
      %2545 = vmatprep.subr.mxu0 0.0
      %2546 = vmatpush1.msra.mxu0 0.0
      %2547 = vmatprep.subr.mxu0 0.0
      %2548 = vmatpush1.msra.mxu0 0.0
      %2549 = vmatprep.subr.mxu0 0.0
      %2550 = vmatpush1.msra.mxu0 0.0
      %2551 = vmatprep.subr.mxu0 0.0
      %2552 = vmatpush1.msra.mxu0 0.0
      %2553 = vmatprep.subr.mxu0 0.0
      %2554 = vmatpush1.msra.mxu0 0.0
      %2555 = vmatprep.subr.mxu0 0.0
      %2556 = vmatpush1.msra.mxu0 0.0
      %2557 = vmatprep.subr.mxu0 0.0
      %2558 = vmatpush1.msra.mxu0 0.0
      %2559 = vmatprep.subr.mxu0 0.0
      %2560 = vmatpush1.msra.mxu0 0.0
      %2561 = vmatprep.subr.mxu0 0.0
      %2562 = vmatpush1.msra.mxu0 0.0
      %2563 = vmatprep.mubr.f32.mxu0 0.0
      %2564 = vmatmul.mubr.f32.gmra.mrb[0].mxu0 %v2497
      %v2565 = vpop.f32.mrb[0].mxu0
      %v2566 = vadd.f32 %v2493, %v2565
      %v2567 = vpop.f32.mrb[0].mxu0
      %2568 = vdwg.mxu0
      %v2569 = vlaneseq
      %v2570 = vshrl.u32 %v2569, 7
      %v2571 = vsub.s32 0, %v2570
      %v2572 = vrot.slane %v2413, %v2571
      %v2573 = vadd.f32 %v2566, %v2572
      %v2574 = vxor.u32 %v2573, 2147483648
      %v2575 = vmul.f32 %v2574, 1.442695
      %v2576 = vpow.pop %v2575
      %v2577 = vadd.f32 %v2576, 1.0
      %v2578 = vrcp.pop %v2577
      %v2579 = vmul.f32 1.0, %v2578
      %v2580 = vtanh.pop %v2573
      %v2581 = vmul.f32 %v2579, %v2403
      %2583 = vrot.lane.b32.xlu0 %v2580, 64
      %v2584 = vpop.permute.xlu0 %2583
      %v2586 = vmul.f32 %v2579, %v2584
      %2588 = vrot.lane.b32.xlu0 %v2586, 32
      %v2589 = vpop.permute.xlu0 %2588
      %v2591 = vadd.f32 %v2581, %v2589
      %v2592 = vtanh.pop %v2591
      %2594 = vrot.lane.b32.xlu0 %v2592, 64
      %v2595 = vpop.permute.xlu0 %2594
      %v2597 = vmul.f32 %v2579, %v2595
      %v2599 = vrot.slane %v2217, 1
      %v2601 = vadd.f32 %v2217, %v2599
      %s2602 = scalar_lea.vmem [#allocation2], 96
      %v2603 = vld [vmem:[%s2602] sm:$0xff]
      %v2604 = vld [vmem:[%s2602 + $0x8] sm:$0xff]
      %v2605 = vld [vmem:[%s2602 + $0x10] sm:$0xff]
      %v2606 = vld [vmem:[%s2602 + $0x18] sm:$0xff]
      %v2607 = vld [vmem:[%s2602 + $0x20] sm:$0xff]
      %v2608 = vld [vmem:[%s2602 + $0x28] sm:$0xff]
      %2610 = vrot.lane.b32.xlu0 %v2597, 32
      %v2611 = vpop.permute.xlu0 %2610
      %v2612 = vsel %vm2233, %v2611, 0
      %2614 = vmatprep.subr.mxu0 0.0
      %2615 = vmatpush1.msra.mxu0 %v2605
      %2616 = vmatprep.subr.mxu0 0.0
      %2617 = vmatpush1.msra.mxu0 %v2606
      %2618 = vmatprep.subr.mxu0 0.0
      %2619 = vmatpush1.msra.mxu0 %v2607
      %2620 = vmatprep.subr.mxu0 0.0
      %2621 = vmatpush1.msra.mxu0 %v2608
      %2622 = vmatprep.subr.mxu0 0.0
      %2623 = vmatpush1.msra.mxu0 0.0
      %2624 = vmatprep.subr.mxu0 0.0
      %2625 = vmatpush1.msra.mxu0 0.0
      %2626 = vmatprep.subr.mxu0 0.0
      %2627 = vmatpush1.msra.mxu0 0.0
      %2628 = vmatprep.subr.mxu0 0.0
      %2629 = vmatpush1.msra.mxu0 0.0
      %2630 = vmatprep.subr.mxu0 0.0
      %2631 = vmatpush1.msra.mxu0 0.0
      %2632 = vmatprep.subr.mxu0 0.0
      %2633 = vmatpush1.msra.mxu0 0.0
      %2634 = vmatprep.subr.mxu0 0.0
      %2635 = vmatpush1.msra.mxu0 0.0
      %2636 = vmatprep.subr.mxu0 0.0
      %2637 = vmatpush1.msra.mxu0 0.0
      %2638 = vmatprep.subr.mxu0 0.0
      %2639 = vmatpush1.msra.mxu0 0.0
      %2640 = vmatprep.subr.mxu0 0.0
      %2641 = vmatpush1.msra.mxu0 0.0
      %2642 = vmatprep.subr.mxu0 0.0
      %2643 = vmatpush1.msra.mxu0 0.0
      %2644 = vmatprep.subr.mxu0 0.0
      %2645 = vmatpush1.msra.mxu0 0.0
      %2646 = vmatprep.subr.mxu0 0.0
      %2647 = vmatpush1.msra.mxu0 0.0
      %2648 = vmatprep.subr.mxu0 0.0
      %2649 = vmatpush1.msra.mxu0 0.0
      %2650 = vmatprep.subr.mxu0 0.0
      %2651 = vmatpush1.msra.mxu0 0.0
      %2652 = vmatprep.subr.mxu0 0.0
      %2653 = vmatpush1.msra.mxu0 0.0
      %2654 = vmatprep.subr.mxu0 0.0
      %2655 = vmatpush1.msra.mxu0 0.0
      %2656 = vmatprep.subr.mxu0 0.0
      %2657 = vmatpush1.msra.mxu0 0.0
      %2658 = vmatprep.subr.mxu0 0.0
      %2659 = vmatpush1.msra.mxu0 0.0
      %2660 = vmatprep.subr.mxu0 0.0
      %2661 = vmatpush1.msra.mxu0 0.0
      %2662 = vmatprep.subr.mxu0 0.0
      %2663 = vmatpush1.msra.mxu0 0.0
      %2664 = vmatprep.subr.mxu0 0.0
      %2665 = vmatpush1.msra.mxu0 0.0
      %2666 = vmatprep.subr.mxu0 0.0
      %2667 = vmatpush1.msra.mxu0 0.0
      %2668 = vmatprep.subr.mxu0 0.0
      %2669 = vmatpush1.msra.mxu0 0.0
      %2670 = vmatprep.subr.mxu0 0.0
      %2671 = vmatpush1.msra.mxu0 0.0
      %2672 = vmatprep.subr.mxu0 0.0
      %2673 = vmatpush1.msra.mxu0 0.0
      %2674 = vmatprep.subr.mxu0 0.0
      %2675 = vmatpush1.msra.mxu0 0.0
      %2676 = vmatprep.subr.mxu0 0.0
      %2677 = vmatpush1.msra.mxu0 0.0
      %2678 = vmatprep.mubr.f32.mxu0 0.0
      %2679 = vmatmul.mubr.f32.gmra.mrb[0].mxu0 %v2612
      %v2680 = vpop.f32.mrb[0].mxu0
      %v2681 = vadd.f32 0.0, %v2680
      %v2682 = vpop.f32.mrb[0].mxu0
      %2683 = vdwg.mxu0
      %v2685 = vsel %vm2307, %v1979, 0
      %2687 = vmatprep.subr.mxu0 0.0
      %2688 = vmatpush1.msra.mxu0 %v2603
      %2689 = vmatprep.subr.mxu0 0.0
      %2690 = vmatpush1.msra.mxu0 %v2604
      %2691 = vmatprep.subr.mxu0 0.0
      %2692 = vmatpush1.msra.mxu0 0.0
      %2693 = vmatprep.subr.mxu0 0.0
      %2694 = vmatpush1.msra.mxu0 0.0
      %2695 = vmatprep.subr.mxu0 0.0
      %2696 = vmatpush1.msra.mxu0 0.0
      %2697 = vmatprep.subr.mxu0 0.0
      %2698 = vmatpush1.msra.mxu0 0.0
      %2699 = vmatprep.subr.mxu0 0.0
      %2700 = vmatpush1.msra.mxu0 0.0
      %2701 = vmatprep.subr.mxu0 0.0
      %2702 = vmatpush1.msra.mxu0 0.0
      %2703 = vmatprep.subr.mxu0 0.0
      %2704 = vmatpush1.msra.mxu0 0.0
      %2705 = vmatprep.subr.mxu0 0.0
      %2706 = vmatpush1.msra.mxu0 0.0
      %2707 = vmatprep.subr.mxu0 0.0
      %2708 = vmatpush1.msra.mxu0 0.0
      %2709 = vmatprep.subr.mxu0 0.0
      %2710 = vmatpush1.msra.mxu0 0.0
      %2711 = vmatprep.subr.mxu0 0.0
      %2712 = vmatpush1.msra.mxu0 0.0
      %2713 = vmatprep.subr.mxu0 0.0
      %2714 = vmatpush1.msra.mxu0 0.0
      %2715 = vmatprep.subr.mxu0 0.0
      %2716 = vmatpush1.msra.mxu0 0.0
      %2717 = vmatprep.subr.mxu0 0.0
      %2718 = vmatpush1.msra.mxu0 0.0
      %2719 = vmatprep.subr.mxu0 0.0
      %2720 = vmatpush1.msra.mxu0 0.0
      %2721 = vmatprep.subr.mxu0 0.0
      %2722 = vmatpush1.msra.mxu0 0.0
      %2723 = vmatprep.subr.mxu0 0.0
      %2724 = vmatpush1.msra.mxu0 0.0
      %2725 = vmatprep.subr.mxu0 0.0
      %2726 = vmatpush1.msra.mxu0 0.0
      %2727 = vmatprep.subr.mxu0 0.0
      %2728 = vmatpush1.msra.mxu0 0.0
      %2729 = vmatprep.subr.mxu0 0.0
      %2730 = vmatpush1.msra.mxu0 0.0
      %2731 = vmatprep.subr.mxu0 0.0
      %2732 = vmatpush1.msra.mxu0 0.0
      %2733 = vmatprep.subr.mxu0 0.0
      %2734 = vmatpush1.msra.mxu0 0.0
      %2735 = vmatprep.subr.mxu0 0.0
      %2736 = vmatpush1.msra.mxu0 0.0
      %2737 = vmatprep.subr.mxu0 0.0
      %2738 = vmatpush1.msra.mxu0 0.0
      %2739 = vmatprep.subr.mxu0 0.0
      %2740 = vmatpush1.msra.mxu0 0.0
      %2741 = vmatprep.subr.mxu0 0.0
      %2742 = vmatpush1.msra.mxu0 0.0
      %2743 = vmatprep.subr.mxu0 0.0
      %2744 = vmatpush1.msra.mxu0 0.0
      %2745 = vmatprep.subr.mxu0 0.0
      %2746 = vmatpush1.msra.mxu0 0.0
      %2747 = vmatprep.subr.mxu0 0.0
      %2748 = vmatpush1.msra.mxu0 0.0
      %2749 = vmatprep.subr.mxu0 0.0
      %2750 = vmatpush1.msra.mxu0 0.0
      %2751 = vmatprep.mubr.f32.mxu0 0.0
      %2752 = vmatmul.mubr.f32.gmra.mrb[0].mxu0 %v2685
      %v2753 = vpop.f32.mrb[0].mxu0
      %v2754 = vadd.f32 %v2681, %v2753
      %v2755 = vpop.f32.mrb[0].mxu0
      %2756 = vdwg.mxu0
      %v2757 = vlaneseq
      %v2758 = vshrl.u32 %v2757, 7
      %v2759 = vsub.s32 0, %v2758
      %v2760 = vrot.slane %v2601, %v2759
      %v2761 = vadd.f32 %v2754, %v2760
      %v2762 = vxor.u32 %v2761, 2147483648
      %v2763 = vmul.f32 %v2762, 1.442695
      %v2764 = vpow.pop %v2763
      %v2765 = vadd.f32 %v2764, 1.0
      %v2766 = vrcp.pop %v2765
      %v2767 = vmul.f32 1.0, %v2766
      %v2768 = vtanh.pop %v2761
      %v2769 = vmul.f32 %v2767, %v2591
      %2771 = vrot.lane.b32.xlu0 %v2768, 64
      %v2772 = vpop.permute.xlu0 %2771
      %v2774 = vmul.f32 %v2767, %v2772
      %2776 = vrot.lane.b32.xlu0 %v2774, 32
      %v2777 = vpop.permute.xlu0 %2776
      %v2779 = vadd.f32 %v2769, %v2777
      %v2780 = vtanh.pop %v2779
      %2782 = vrot.lane.b32.xlu0 %v2780, 64
      %v2783 = vpop.permute.xlu0 %2782
      %v2785 = vmul.f32 %v2767, %v2783
      %v2787 = vrot.slane %v2218, 1
      %v2789 = vadd.f32 %v2218, %v2787
      %s2790 = scalar_lea.vmem [#allocation2], 144
      %v2791 = vld [vmem:[%s2790] sm:$0xff]
      %v2792 = vld [vmem:[%s2790 + $0x8] sm:$0xff]
      %v2793 = vld [vmem:[%s2790 + $0x10] sm:$0xff]
      %v2794 = vld [vmem:[%s2790 + $0x18] sm:$0xff]
      %v2795 = vld [vmem:[%s2790 + $0x20] sm:$0xff]
      %v2796 = vld [vmem:[%s2790 + $0x28] sm:$0xff]
      %2798 = vrot.lane.b32.xlu0 %v2785, 32
      %v2799 = vpop.permute.xlu0 %2798
      %v2800 = vsel %vm2233, %v2799, 0
      %2802 = vmatprep.subr.mxu0 0.0
      %2803 = vmatpush1.msra.mxu0 %v2793
      %2804 = vmatprep.subr.mxu0 0.0
      %2805 = vmatpush1.msra.mxu0 %v2794
      %2806 = vmatprep.subr.mxu0 0.0
      %2807 = vmatpush1.msra.mxu0 %v2795
      %2808 = vmatprep.subr.mxu0 0.0
      %2809 = vmatpush1.msra.mxu0 %v2796
      %2810 = vmatprep.subr.mxu0 0.0
      %2811 = vmatpush1.msra.mxu0 0.0
      %2812 = vmatprep.subr.mxu0 0.0
      %2813 = vmatpush1.msra.mxu0 0.0
      %2814 = vmatprep.subr.mxu0 0.0
      %2815 = vmatpush1.msra.mxu0 0.0
      %2816 = vmatprep.subr.mxu0 0.0
      %2817 = vmatpush1.msra.mxu0 0.0
      %2818 = vmatprep.subr.mxu0 0.0
      %2819 = vmatpush1.msra.mxu0 0.0
      %2820 = vmatprep.subr.mxu0 0.0
      %2821 = vmatpush1.msra.mxu0 0.0
      %2822 = vmatprep.subr.mxu0 0.0
      %2823 = vmatpush1.msra.mxu0 0.0
      %2824 = vmatprep.subr.mxu0 0.0
      %2825 = vmatpush1.msra.mxu0 0.0
      %2826 = vmatprep.subr.mxu0 0.0
      %2827 = vmatpush1.msra.mxu0 0.0
      %2828 = vmatprep.subr.mxu0 0.0
      %2829 = vmatpush1.msra.mxu0 0.0
      %2830 = vmatprep.subr.mxu0 0.0
      %2831 = vmatpush1.msra.mxu0 0.0
      %2832 = vmatprep.subr.mxu0 0.0
      %2833 = vmatpush1.msra.mxu0 0.0
      %2834 = vmatprep.subr.mxu0 0.0
      %2835 = vmatpush1.msra.mxu0 0.0
      %2836 = vmatprep.subr.mxu0 0.0
      %2837 = vmatpush1.msra.mxu0 0.0
      %2838 = vmatprep.subr.mxu0 0.0
      %2839 = vmatpush1.msra.mxu0 0.0
      %2840 = vmatprep.subr.mxu0 0.0
      %2841 = vmatpush1.msra.mxu0 0.0
      %2842 = vmatprep.subr.mxu0 0.0
      %2843 = vmatpush1.msra.mxu0 0.0
      %2844 = vmatprep.subr.mxu0 0.0
      %2845 = vmatpush1.msra.mxu0 0.0
      %2846 = vmatprep.subr.mxu0 0.0
      %2847 = vmatpush1.msra.mxu0 0.0
      %2848 = vmatprep.subr.mxu0 0.0
      %2849 = vmatpush1.msra.mxu0 0.0
      %2850 = vmatprep.subr.mxu0 0.0
      %2851 = vmatpush1.msra.mxu0 0.0
      %2852 = vmatprep.subr.mxu0 0.0
      %2853 = vmatpush1.msra.mxu0 0.0
      %2854 = vmatprep.subr.mxu0 0.0
      %2855 = vmatpush1.msra.mxu0 0.0
      %2856 = vmatprep.subr.mxu0 0.0
      %2857 = vmatpush1.msra.mxu0 0.0
      %2858 = vmatprep.subr.mxu0 0.0
      %2859 = vmatpush1.msra.mxu0 0.0
      %2860 = vmatprep.subr.mxu0 0.0
      %2861 = vmatpush1.msra.mxu0 0.0
      %2862 = vmatprep.subr.mxu0 0.0
      %2863 = vmatpush1.msra.mxu0 0.0
      %2864 = vmatprep.subr.mxu0 0.0
      %2865 = vmatpush1.msra.mxu0 0.0
      %2866 = vmatprep.mubr.f32.mxu0 0.0
      %2867 = vmatmul.mubr.f32.gmra.mrb[0].mxu0 %v2800
      %v2868 = vpop.f32.mrb[0].mxu0
      %v2869 = vadd.f32 0.0, %v2868
      %v2870 = vpop.f32.mrb[0].mxu0
      %2871 = vdwg.mxu0
      %v2873 = vsel %vm2307, %v1984, 0
      %2875 = vmatprep.subr.mxu0 0.0
      %2876 = vmatpush1.msra.mxu0 %v2791
      %2877 = vmatprep.subr.mxu0 0.0
      %2878 = vmatpush1.msra.mxu0 %v2792
      %2879 = vmatprep.subr.mxu0 0.0
      %2880 = vmatpush1.msra.mxu0 0.0
      %2881 = vmatprep.subr.mxu0 0.0
      %2882 = vmatpush1.msra.mxu0 0.0
      %2883 = vmatprep.subr.mxu0 0.0
      %2884 = vmatpush1.msra.mxu0 0.0
      %2885 = vmatprep.subr.mxu0 0.0
      %2886 = vmatpush1.msra.mxu0 0.0
      %2887 = vmatprep.subr.mxu0 0.0
      %2888 = vmatpush1.msra.mxu0 0.0
      %2889 = vmatprep.subr.mxu0 0.0
      %2890 = vmatpush1.msra.mxu0 0.0
      %2891 = vmatprep.subr.mxu0 0.0
      %2892 = vmatpush1.msra.mxu0 0.0
      %2893 = vmatprep.subr.mxu0 0.0
      %2894 = vmatpush1.msra.mxu0 0.0
      %2895 = vmatprep.subr.mxu0 0.0
      %2896 = vmatpush1.msra.mxu0 0.0
      %2897 = vmatprep.subr.mxu0 0.0
      %2898 = vmatpush1.msra.mxu0 0.0
      %2899 = vmatprep.subr.mxu0 0.0
      %2900 = vmatpush1.msra.mxu0 0.0
      %2901 = vmatprep.subr.mxu0 0.0
      %2902 = vmatpush1.msra.mxu0 0.0
      %2903 = vmatprep.subr.mxu0 0.0
      %2904 = vmatpush1.msra.mxu0 0.0
      %2905 = vmatprep.subr.mxu0 0.0
      %2906 = vmatpush1.msra.mxu0 0.0
      %2907 = vmatprep.subr.mxu0 0.0
      %2908 = vmatpush1.msra.mxu0 0.0
      %2909 = vmatprep.subr.mxu0 0.0
      %2910 = vmatpush1.msra.mxu0 0.0
      %2911 = vmatprep.subr.mxu0 0.0
      %2912 = vmatpush1.msra.mxu0 0.0
      %2913 = vmatprep.subr.mxu0 0.0
      %2914 = vmatpush1.msra.mxu0 0.0
      %2915 = vmatprep.subr.mxu0 0.0
      %2916 = vmatpush1.msra.mxu0 0.0
      %2917 = vmatprep.subr.mxu0 0.0
      %2918 = vmatpush1.msra.mxu0 0.0
      %2919 = vmatprep.subr.mxu0 0.0
      %2920 = vmatpush1.msra.mxu0 0.0
      %2921 = vmatprep.subr.mxu0 0.0
      %2922 = vmatpush1.msra.mxu0 0.0
      %2923 = vmatprep.subr.mxu0 0.0
      %2924 = vmatpush1.msra.mxu0 0.0
      %2925 = vmatprep.subr.mxu0 0.0
      %2926 = vmatpush1.msra.mxu0 0.0
      %2927 = vmatprep.subr.mxu0 0.0
      %2928 = vmatpush1.msra.mxu0 0.0
      %2929 = vmatprep.subr.mxu0 0.0
      %2930 = vmatpush1.msra.mxu0 0.0
      %2931 = vmatprep.subr.mxu0 0.0
      %2932 = vmatpush1.msra.mxu0 0.0
      %2933 = vmatprep.subr.mxu0 0.0
      %2934 = vmatpush1.msra.mxu0 0.0
      %2935 = vmatprep.subr.mxu0 0.0
      %2936 = vmatpush1.msra.mxu0 0.0
      %2937 = vmatprep.subr.mxu0 0.0
      %2938 = vmatpush1.msra.mxu0 0.0
      %2939 = vmatprep.mubr.f32.mxu0 0.0
      %2940 = vmatmul.mubr.f32.gmra.mrb[0].mxu0 %v2873
      %v2941 = vpop.f32.mrb[0].mxu0
      %v2942 = vadd.f32 %v2869, %v2941
      %v2943 = vpop.f32.mrb[0].mxu0
      %2944 = vdwg.mxu0
      %v2945 = vlaneseq
      %v2946 = vshrl.u32 %v2945, 7
      %v2947 = vsub.s32 0, %v2946
      %v2948 = vrot.slane %v2789, %v2947
      %v2949 = vadd.f32 %v2942, %v2948
      %v2950 = vxor.u32 %v2949, 2147483648
      %v2951 = vmul.f32 %v2950, 1.442695
      %v2952 = vpow.pop %v2951
      %v2953 = vadd.f32 %v2952, 1.0
      %v2954 = vrcp.pop %v2953
      %v2955 = vmul.f32 1.0, %v2954
      %v2956 = vtanh.pop %v2949
      %v2957 = vmul.f32 %v2955, %v2779
      %2959 = vrot.lane.b32.xlu0 %v2956, 64
      %v2960 = vpop.permute.xlu0 %2959
      %v2962 = vmul.f32 %v2955, %v2960
      %2964 = vrot.lane.b32.xlu0 %v2962, 32
      %v2965 = vpop.permute.xlu0 %2964
      %v2967 = vadd.f32 %v2957, %v2965
      %v2968 = vtanh.pop %v2967
      %2970 = vrot.lane.b32.xlu0 %v2968, 64
      %v2971 = vpop.permute.xlu0 %2970
      %v2973 = vmul.f32 %v2955, %v2971
      %v2975 = vrot.slane %v2219, 1
      %v2977 = vadd.f32 %v2219, %v2975
      %s2978 = scalar_lea.vmem [#allocation2], 192
      %v2979 = vld [vmem:[%s2978] sm:$0xff]
      %v2980 = vld [vmem:[%s2978 + $0x8] sm:$0xff]
      %v2981 = vld [vmem:[%s2978 + $0x10] sm:$0xff]
      %v2982 = vld [vmem:[%s2978 + $0x18] sm:$0xff]
      %v2983 = vld [vmem:[%s2978 + $0x20] sm:$0xff]
      %v2984 = vld [vmem:[%s2978 + $0x28] sm:$0xff]
      %2986 = vrot.lane.b32.xlu0 %v2973, 32
      %v2987 = vpop.permute.xlu0 %2986
      %v2988 = vsel %vm2233, %v2987, 0
      %2990 = vmatprep.subr.mxu0 0.0
      %2991 = vmatpush1.msra.mxu0 %v2981
      %2992 = vmatprep.subr.mxu0 0.0
      %2993 = vmatpush1.msra.mxu0 %v2982
      %2994 = vmatprep.subr.mxu0 0.0
      %2995 = vmatpush1.msra.mxu0 %v2983
      %2996 = vmatprep.subr.mxu0 0.0
      %2997 = vmatpush1.msra.mxu0 %v2984
      %2998 = vmatprep.subr.mxu0 0.0
      %2999 = vmatpush1.msra.mxu0 0.0
      %3000 = vmatprep.subr.mxu0 0.0
      %3001 = vmatpush1.msra.mxu0 0.0
      %3002 = vmatprep.subr.mxu0 0.0
      %3003 = vmatpush1.msra.mxu0 0.0
      %3004 = vmatprep.subr.mxu0 0.0
      %3005 = vmatpush1.msra.mxu0 0.0
      %3006 = vmatprep.subr.mxu0 0.0
      %3007 = vmatpush1.msra.mxu0 0.0
      %3008 = vmatprep.subr.mxu0 0.0
      %3009 = vmatpush1.msra.mxu0 0.0
      %3010 = vmatprep.subr.mxu0 0.0
      %3011 = vmatpush1.msra.mxu0 0.0
      %3012 = vmatprep.subr.mxu0 0.0
      %3013 = vmatpush1.msra.mxu0 0.0
      %3014 = vmatprep.subr.mxu0 0.0
      %3015 = vmatpush1.msra.mxu0 0.0
      %3016 = vmatprep.subr.mxu0 0.0
      %3017 = vmatpush1.msra.mxu0 0.0
      %3018 = vmatprep.subr.mxu0 0.0
      %3019 = vmatpush1.msra.mxu0 0.0
      %3020 = vmatprep.subr.mxu0 0.0
      %3021 = vmatpush1.msra.mxu0 0.0
      %3022 = vmatprep.subr.mxu0 0.0
      %3023 = vmatpush1.msra.mxu0 0.0
      %3024 = vmatprep.subr.mxu0 0.0
      %3025 = vmatpush1.msra.mxu0 0.0
      %3026 = vmatprep.subr.mxu0 0.0
      %3027 = vmatpush1.msra.mxu0 0.0
      %3028 = vmatprep.subr.mxu0 0.0
      %3029 = vmatpush1.msra.mxu0 0.0
      %3030 = vmatprep.subr.mxu0 0.0
      %3031 = vmatpush1.msra.mxu0 0.0
      %3032 = vmatprep.subr.mxu0 0.0
      %3033 = vmatpush1.msra.mxu0 0.0
      %3034 = vmatprep.subr.mxu0 0.0
      %3035 = vmatpush1.msra.mxu0 0.0
      %3036 = vmatprep.subr.mxu0 0.0
      %3037 = vmatpush1.msra.mxu0 0.0
      %3038 = vmatprep.subr.mxu0 0.0
      %3039 = vmatpush1.msra.mxu0 0.0
      %3040 = vmatprep.subr.mxu0 0.0
      %3041 = vmatpush1.msra.mxu0 0.0
      %3042 = vmatprep.subr.mxu0 0.0
      %3043 = vmatpush1.msra.mxu0 0.0
      %3044 = vmatprep.subr.mxu0 0.0
      %3045 = vmatpush1.msra.mxu0 0.0
      %3046 = vmatprep.subr.mxu0 0.0
      %3047 = vmatpush1.msra.mxu0 0.0
      %3048 = vmatprep.subr.mxu0 0.0
      %3049 = vmatpush1.msra.mxu0 0.0
      %3050 = vmatprep.subr.mxu0 0.0
      %3051 = vmatpush1.msra.mxu0 0.0
      %3052 = vmatprep.subr.mxu0 0.0
      %3053 = vmatpush1.msra.mxu0 0.0
      %3054 = vmatprep.mubr.f32.mxu0 0.0
      %3055 = vmatmul.mubr.f32.gmra.mrb[0].mxu0 %v2988
      %v3056 = vpop.f32.mrb[0].mxu0
      %v3057 = vadd.f32 0.0, %v3056
      %v3058 = vpop.f32.mrb[0].mxu0
      %3059 = vdwg.mxu0
      %v3061 = vsel %vm2307, %v1989, 0
      %3063 = vmatprep.subr.mxu0 0.0
      %3064 = vmatpush1.msra.mxu0 %v2979
      %3065 = vmatprep.subr.mxu0 0.0
      %3066 = vmatpush1.msra.mxu0 %v2980
      %3067 = vmatprep.subr.mxu0 0.0
      %3068 = vmatpush1.msra.mxu0 0.0
      %3069 = vmatprep.subr.mxu0 0.0
      %3070 = vmatpush1.msra.mxu0 0.0
      %3071 = vmatprep.subr.mxu0 0.0
      %3072 = vmatpush1.msra.mxu0 0.0
      %3073 = vmatprep.subr.mxu0 0.0
      %3074 = vmatpush1.msra.mxu0 0.0
      %3075 = vmatprep.subr.mxu0 0.0
      %3076 = vmatpush1.msra.mxu0 0.0
      %3077 = vmatprep.subr.mxu0 0.0
      %3078 = vmatpush1.msra.mxu0 0.0
      %3079 = vmatprep.subr.mxu0 0.0
      %3080 = vmatpush1.msra.mxu0 0.0
      %3081 = vmatprep.subr.mxu0 0.0
      %3082 = vmatpush1.msra.mxu0 0.0
      %3083 = vmatprep.subr.mxu0 0.0
      %3084 = vmatpush1.msra.mxu0 0.0
      %3085 = vmatprep.subr.mxu0 0.0
      %3086 = vmatpush1.msra.mxu0 0.0
      %3087 = vmatprep.subr.mxu0 0.0
      %3088 = vmatpush1.msra.mxu0 0.0
      %3089 = vmatprep.subr.mxu0 0.0
      %3090 = vmatpush1.msra.mxu0 0.0
      %3091 = vmatprep.subr.mxu0 0.0
      %3092 = vmatpush1.msra.mxu0 0.0
      %3093 = vmatprep.subr.mxu0 0.0
      %3094 = vmatpush1.msra.mxu0 0.0
      %3095 = vmatprep.subr.mxu0 0.0
      %3096 = vmatpush1.msra.mxu0 0.0
      %3097 = vmatprep.subr.mxu0 0.0
      %3098 = vmatpush1.msra.mxu0 0.0
      %3099 = vmatprep.subr.mxu0 0.0
      %3100 = vmatpush1.msra.mxu0 0.0
      %3101 = vmatprep.subr.mxu0 0.0
      %3102 = vmatpush1.msra.mxu0 0.0
      %3103 = vmatprep.subr.mxu0 0.0
      %3104 = vmatpush1.msra.mxu0 0.0
      %3105 = vmatprep.subr.mxu0 0.0
      %3106 = vmatpush1.msra.mxu0 0.0
      %3107 = vmatprep.subr.mxu0 0.0
      %3108 = vmatpush1.msra.mxu0 0.0
      %3109 = vmatprep.subr.mxu0 0.0
      %3110 = vmatpush1.msra.mxu0 0.0
      %3111 = vmatprep.subr.mxu0 0.0
      %3112 = vmatpush1.msra.mxu0 0.0
      %3113 = vmatprep.subr.mxu0 0.0
      %3114 = vmatpush1.msra.mxu0 0.0
      %3115 = vmatprep.subr.mxu0 0.0
      %3116 = vmatpush1.msra.mxu0 0.0
      %3117 = vmatprep.subr.mxu0 0.0
      %3118 = vmatpush1.msra.mxu0 0.0
      %3119 = vmatprep.subr.mxu0 0.0
      %3120 = vmatpush1.msra.mxu0 0.0
      %3121 = vmatprep.subr.mxu0 0.0
      %3122 = vmatpush1.msra.mxu0 0.0
      %3123 = vmatprep.subr.mxu0 0.0
      %3124 = vmatpush1.msra.mxu0 0.0
      %3125 = vmatprep.subr.mxu0 0.0
      %3126 = vmatpush1.msra.mxu0 0.0
      %3127 = vmatprep.mubr.f32.mxu0 0.0
      %3128 = vmatmul.mubr.f32.gmra.mrb[0].mxu0 %v3061
      %v3129 = vpop.f32.mrb[0].mxu0
      %v3130 = vadd.f32 %v3057, %v3129
      %v3131 = vpop.f32.mrb[0].mxu0
      %3132 = vdwg.mxu0
      %v3133 = vlaneseq
      %v3134 = vshrl.u32 %v3133, 7
      %v3135 = vsub.s32 0, %v3134
      %v3136 = vrot.slane %v2977, %v3135
      %v3137 = vadd.f32 %v3130, %v3136
      %v3138 = vxor.u32 %v3137, 2147483648
      %v3139 = vmul.f32 %v3138, 1.442695
      %v3140 = vpow.pop %v3139
      %v3141 = vadd.f32 %v3140, 1.0
      %v3142 = vrcp.pop %v3141
      %v3143 = vmul.f32 1.0, %v3142
      %v3144 = vtanh.pop %v3137
      %v3145 = vmul.f32 %v3143, %v2967
      %3147 = vrot.lane.b32.xlu0 %v3144, 64
      %v3148 = vpop.permute.xlu0 %3147
      %v3150 = vmul.f32 %v3143, %v3148
      %3152 = vrot.lane.b32.xlu0 %v3150, 32
      %v3153 = vpop.permute.xlu0 %3152
      %v3155 = vadd.f32 %v3145, %v3153
      %v3156 = vtanh.pop %v3155
      %3158 = vrot.lane.b32.xlu0 %v3156, 64
      %v3159 = vpop.permute.xlu0 %3158
      %v3161 = vmul.f32 %v3143, %v3159
      %v3163 = vrot.slane %v2220, 1
      %v3165 = vadd.f32 %v2220, %v3163
      %s3166 = scalar_lea.vmem [#allocation2], 240
      %v3167 = vld [vmem:[%s3166] sm:$0xff]
      %v3168 = vld [vmem:[%s3166 + $0x8] sm:$0xff]
      %v3169 = vld [vmem:[%s3166 + $0x10] sm:$0xff]
      %v3170 = vld [vmem:[%s3166 + $0x18] sm:$0xff]
      %v3171 = vld [vmem:[%s3166 + $0x20] sm:$0xff]
      %v3172 = vld [vmem:[%s3166 + $0x28] sm:$0xff]
      %3174 = vrot.lane.b32.xlu0 %v3161, 32
      %v3175 = vpop.permute.xlu0 %3174
      %v3176 = vsel %vm2233, %v3175, 0
      %3178 = vmatprep.subr.mxu0 0.0
      %3179 = vmatpush1.msra.mxu0 %v3169
      %3180 = vmatprep.subr.mxu0 0.0
      %3181 = vmatpush1.msra.mxu0 %v3170
      %3182 = vmatprep.subr.mxu0 0.0
      %3183 = vmatpush1.msra.mxu0 %v3171
      %3184 = vmatprep.subr.mxu0 0.0
      %3185 = vmatpush1.msra.mxu0 %v3172
      %3186 = vmatprep.subr.mxu0 0.0
      %3187 = vmatpush1.msra.mxu0 0.0
      %3188 = vmatprep.subr.mxu0 0.0
      %3189 = vmatpush1.msra.mxu0 0.0
      %3190 = vmatprep.subr.mxu0 0.0
      %3191 = vmatpush1.msra.mxu0 0.0
      %3192 = vmatprep.subr.mxu0 0.0
      %3193 = vmatpush1.msra.mxu0 0.0
      %3194 = vmatprep.subr.mxu0 0.0
      %3195 = vmatpush1.msra.mxu0 0.0
      %3196 = vmatprep.subr.mxu0 0.0
      %3197 = vmatpush1.msra.mxu0 0.0
      %3198 = vmatprep.subr.mxu0 0.0
      %3199 = vmatpush1.msra.mxu0 0.0
      %3200 = vmatprep.subr.mxu0 0.0
      %3201 = vmatpush1.msra.mxu0 0.0
      %3202 = vmatprep.subr.mxu0 0.0
      %3203 = vmatpush1.msra.mxu0 0.0
      %3204 = vmatprep.subr.mxu0 0.0
      %3205 = vmatpush1.msra.mxu0 0.0
      %3206 = vmatprep.subr.mxu0 0.0
      %3207 = vmatpush1.msra.mxu0 0.0
      %3208 = vmatprep.subr.mxu0 0.0
      %3209 = vmatpush1.msra.mxu0 0.0
      %3210 = vmatprep.subr.mxu0 0.0
      %3211 = vmatpush1.msra.mxu0 0.0
      %3212 = vmatprep.subr.mxu0 0.0
      %3213 = vmatpush1.msra.mxu0 0.0
      %3214 = vmatprep.subr.mxu0 0.0
      %3215 = vmatpush1.msra.mxu0 0.0
      %3216 = vmatprep.subr.mxu0 0.0
      %3217 = vmatpush1.msra.mxu0 0.0
      %3218 = vmatprep.subr.mxu0 0.0
      %3219 = vmatpush1.msra.mxu0 0.0
      %3220 = vmatprep.subr.mxu0 0.0
      %3221 = vmatpush1.msra.mxu0 0.0
      %3222 = vmatprep.subr.mxu0 0.0
      %3223 = vmatpush1.msra.mxu0 0.0
      %3224 = vmatprep.subr.mxu0 0.0
      %3225 = vmatpush1.msra.mxu0 0.0
      %3226 = vmatprep.subr.mxu0 0.0
      %3227 = vmatpush1.msra.mxu0 0.0
      %3228 = vmatprep.subr.mxu0 0.0
      %3229 = vmatpush1.msra.mxu0 0.0
      %3230 = vmatprep.subr.mxu0 0.0
      %3231 = vmatpush1.msra.mxu0 0.0
      %3232 = vmatprep.subr.mxu0 0.0
      %3233 = vmatpush1.msra.mxu0 0.0
      %3234 = vmatprep.subr.mxu0 0.0
      %3235 = vmatpush1.msra.mxu0 0.0
      %3236 = vmatprep.subr.mxu0 0.0
      %3237 = vmatpush1.msra.mxu0 0.0
      %3238 = vmatprep.subr.mxu0 0.0
      %3239 = vmatpush1.msra.mxu0 0.0
      %3240 = vmatprep.subr.mxu0 0.0
      %3241 = vmatpush1.msra.mxu0 0.0
      %3242 = vmatprep.mubr.f32.mxu0 0.0
      %3243 = vmatmul.mubr.f32.gmra.mrb[0].mxu0 %v3176
      %v3244 = vpop.f32.mrb[0].mxu0
      %v3245 = vadd.f32 0.0, %v3244
      %v3246 = vpop.f32.mrb[0].mxu0
      %3247 = vdwg.mxu0
      %v3249 = vsel %vm2307, %v1994, 0
      %3251 = vmatprep.subr.mxu0 0.0
      %3252 = vmatpush1.msra.mxu0 %v3167
      %3253 = vmatprep.subr.mxu0 0.0
      %3254 = vmatpush1.msra.mxu0 %v3168
      %3255 = vmatprep.subr.mxu0 0.0
      %3256 = vmatpush1.msra.mxu0 0.0
      %3257 = vmatprep.subr.mxu0 0.0
      %3258 = vmatpush1.msra.mxu0 0.0
      %3259 = vmatprep.subr.mxu0 0.0
      %3260 = vmatpush1.msra.mxu0 0.0
      %3261 = vmatprep.subr.mxu0 0.0
      %3262 = vmatpush1.msra.mxu0 0.0
      %3263 = vmatprep.subr.mxu0 0.0
      %3264 = vmatpush1.msra.mxu0 0.0
      %3265 = vmatprep.subr.mxu0 0.0
      %3266 = vmatpush1.msra.mxu0 0.0
      %3267 = vmatprep.subr.mxu0 0.0
      %3268 = vmatpush1.msra.mxu0 0.0
      %3269 = vmatprep.subr.mxu0 0.0
      %3270 = vmatpush1.msra.mxu0 0.0
      %3271 = vmatprep.subr.mxu0 0.0
      %3272 = vmatpush1.msra.mxu0 0.0
      %3273 = vmatprep.subr.mxu0 0.0
      %3274 = vmatpush1.msra.mxu0 0.0
      %3275 = vmatprep.subr.mxu0 0.0
      %3276 = vmatpush1.msra.mxu0 0.0
      %3277 = vmatprep.subr.mxu0 0.0
      %3278 = vmatpush1.msra.mxu0 0.0
      %3279 = vmatprep.subr.mxu0 0.0
      %3280 = vmatpush1.msra.mxu0 0.0
      %3281 = vmatprep.subr.mxu0 0.0
      %3282 = vmatpush1.msra.mxu0 0.0
      %3283 = vmatprep.subr.mxu0 0.0
      %3284 = vmatpush1.msra.mxu0 0.0
      %3285 = vmatprep.subr.mxu0 0.0
      %3286 = vmatpush1.msra.mxu0 0.0
      %3287 = vmatprep.subr.mxu0 0.0
      %3288 = vmatpush1.msra.mxu0 0.0
      %3289 = vmatprep.subr.mxu0 0.0
      %3290 = vmatpush1.msra.mxu0 0.0
      %3291 = vmatprep.subr.mxu0 0.0
      %3292 = vmatpush1.msra.mxu0 0.0
      %3293 = vmatprep.subr.mxu0 0.0
      %3294 = vmatpush1.msra.mxu0 0.0
      %3295 = vmatprep.subr.mxu0 0.0
      %3296 = vmatpush1.msra.mxu0 0.0
      %3297 = vmatprep.subr.mxu0 0.0
      %3298 = vmatpush1.msra.mxu0 0.0
      %3299 = vmatprep.subr.mxu0 0.0
      %3300 = vmatpush1.msra.mxu0 0.0
      %3301 = vmatprep.subr.mxu0 0.0
      %3302 = vmatpush1.msra.mxu0 0.0
      %3303 = vmatprep.subr.mxu0 0.0
      %3304 = vmatpush1.msra.mxu0 0.0
      %3305 = vmatprep.subr.mxu0 0.0
      %3306 = vmatpush1.msra.mxu0 0.0
      %3307 = vmatprep.subr.mxu0 0.0
      %3308 = vmatpush1.msra.mxu0 0.0
      %3309 = vmatprep.subr.mxu0 0.0
      %3310 = vmatpush1.msra.mxu0 0.0
      %3311 = vmatprep.subr.mxu0 0.0
      %3312 = vmatpush1.msra.mxu0 0.0
      %3313 = vmatprep.subr.mxu0 0.0
      %3314 = vmatpush1.msra.mxu0 0.0
      %3315 = vmatprep.mubr.f32.mxu0 0.0
      %3316 = vmatmul.mubr.f32.gmra.mrb[0].mxu0 %v3249
      %v3317 = vpop.f32.mrb[0].mxu0
      %v3318 = vadd.f32 %v3245, %v3317
      %v3319 = vpop.f32.mrb[0].mxu0
      %3320 = vdwg.mxu0
      %v3321 = vlaneseq
      %v3322 = vshrl.u32 %v3321, 7
      %v3323 = vsub.s32 0, %v3322
      %v3324 = vrot.slane %v3165, %v3323
      %v3325 = vadd.f32 %v3318, %v3324
      %v3326 = vxor.u32 %v3325, 2147483648
      %v3327 = vmul.f32 %v3326, 1.442695
      %v3328 = vpow.pop %v3327
      %v3329 = vadd.f32 %v3328, 1.0
      %v3330 = vrcp.pop %v3329
      %v3331 = vmul.f32 1.0, %v3330
      %v3332 = vtanh.pop %v3325
      %v3333 = vmul.f32 %v3331, %v3155
      %3335 = vrot.lane.b32.xlu0 %v3332, 64
      %v3336 = vpop.permute.xlu0 %3335
      %v3338 = vmul.f32 %v3331, %v3336
      %3340 = vrot.lane.b32.xlu0 %v3338, 32
      %v3341 = vpop.permute.xlu0 %3340
      %v3343 = vadd.f32 %v3333, %v3341
      %v3344 = vtanh.pop %v3343
      %3346 = vrot.lane.b32.xlu0 %v3344, 64
      %v3347 = vpop.permute.xlu0 %3346
      %v3349 = vmul.f32 %v3331, %v3347
      %v3351 = vrot.slane %v2221, 1
      %v3353 = vadd.f32 %v2221, %v3351
      %s3354 = scalar_lea.vmem [#allocation2], 288
      %v3355 = vld [vmem:[%s3354] sm:$0xff]
      %v3356 = vld [vmem:[%s3354 + $0x8] sm:$0xff]
      %v3357 = vld [vmem:[%s3354 + $0x10] sm:$0xff]
      %v3358 = vld [vmem:[%s3354 + $0x18] sm:$0xff]
      %v3359 = vld [vmem:[%s3354 + $0x20] sm:$0xff]
      %v3360 = vld [vmem:[%s3354 + $0x28] sm:$0xff]
      %3362 = vrot.lane.b32.xlu0 %v3349, 32
      %v3363 = vpop.permute.xlu0 %3362
      %v3364 = vsel %vm2233, %v3363, 0
      %3366 = vmatprep.subr.mxu0 0.0
      %3367 = vmatpush1.msra.mxu0 %v3357
      %3368 = vmatprep.subr.mxu0 0.0
      %3369 = vmatpush1.msra.mxu0 %v3358
      %3370 = vmatprep.subr.mxu0 0.0
      %3371 = vmatpush1.msra.mxu0 %v3359
      %3372 = vmatprep.subr.mxu0 0.0
      %3373 = vmatpush1.msra.mxu0 %v3360
      %3374 = vmatprep.subr.mxu0 0.0
      %3375 = vmatpush1.msra.mxu0 0.0
      %3376 = vmatprep.subr.mxu0 0.0
      %3377 = vmatpush1.msra.mxu0 0.0
      %3378 = vmatprep.subr.mxu0 0.0
      %3379 = vmatpush1.msra.mxu0 0.0
      %3380 = vmatprep.subr.mxu0 0.0
      %3381 = vmatpush1.msra.mxu0 0.0
      %3382 = vmatprep.subr.mxu0 0.0
      %3383 = vmatpush1.msra.mxu0 0.0
      %3384 = vmatprep.subr.mxu0 0.0
      %3385 = vmatpush1.msra.mxu0 0.0
      %3386 = vmatprep.subr.mxu0 0.0
      %3387 = vmatpush1.msra.mxu0 0.0
      %3388 = vmatprep.subr.mxu0 0.0
      %3389 = vmatpush1.msra.mxu0 0.0
      %3390 = vmatprep.subr.mxu0 0.0
      %3391 = vmatpush1.msra.mxu0 0.0
      %3392 = vmatprep.subr.mxu0 0.0
      %3393 = vmatpush1.msra.mxu0 0.0
      %3394 = vmatprep.subr.mxu0 0.0
      %3395 = vmatpush1.msra.mxu0 0.0
      %3396 = vmatprep.subr.mxu0 0.0
      %3397 = vmatpush1.msra.mxu0 0.0
      %3398 = vmatprep.subr.mxu0 0.0
      %3399 = vmatpush1.msra.mxu0 0.0
      %3400 = vmatprep.subr.mxu0 0.0
      %3401 = vmatpush1.msra.mxu0 0.0
      %3402 = vmatprep.subr.mxu0 0.0
      %3403 = vmatpush1.msra.mxu0 0.0
      %3404 = vmatprep.subr.mxu0 0.0
      %3405 = vmatpush1.msra.mxu0 0.0
      %3406 = vmatprep.subr.mxu0 0.0
      %3407 = vmatpush1.msra.mxu0 0.0
      %3408 = vmatprep.subr.mxu0 0.0
      %3409 = vmatpush1.msra.mxu0 0.0
      %3410 = vmatprep.subr.mxu0 0.0
      %3411 = vmatpush1.msra.mxu0 0.0
      %3412 = vmatprep.subr.mxu0 0.0
      %3413 = vmatpush1.msra.mxu0 0.0
      %3414 = vmatprep.subr.mxu0 0.0
      %3415 = vmatpush1.msra.mxu0 0.0
      %3416 = vmatprep.subr.mxu0 0.0
      %3417 = vmatpush1.msra.mxu0 0.0
      %3418 = vmatprep.subr.mxu0 0.0
      %3419 = vmatpush1.msra.mxu0 0.0
      %3420 = vmatprep.subr.mxu0 0.0
      %3421 = vmatpush1.msra.mxu0 0.0
      %3422 = vmatprep.subr.mxu0 0.0
      %3423 = vmatpush1.msra.mxu0 0.0
      %3424 = vmatprep.subr.mxu0 0.0
      %3425 = vmatpush1.msra.mxu0 0.0
      %3426 = vmatprep.subr.mxu0 0.0
      %3427 = vmatpush1.msra.mxu0 0.0
      %3428 = vmatprep.subr.mxu0 0.0
      %3429 = vmatpush1.msra.mxu0 0.0
      %3430 = vmatprep.mubr.f32.mxu0 0.0
      %3431 = vmatmul.mubr.f32.gmra.mrb[0].mxu0 %v3364
      %v3432 = vpop.f32.mrb[0].mxu0
      %v3433 = vadd.f32 0.0, %v3432
      %v3434 = vpop.f32.mrb[0].mxu0
      %3435 = vdwg.mxu0
      %v3437 = vsel %vm2307, %v1999, 0
      %3439 = vmatprep.subr.mxu0 0.0
      %3440 = vmatpush1.msra.mxu0 %v3355
      %3441 = vmatprep.subr.mxu0 0.0
      %3442 = vmatpush1.msra.mxu0 %v3356
      %3443 = vmatprep.subr.mxu0 0.0
      %3444 = vmatpush1.msra.mxu0 0.0
      %3445 = vmatprep.subr.mxu0 0.0
      %3446 = vmatpush1.msra.mxu0 0.0
      %3447 = vmatprep.subr.mxu0 0.0
      %3448 = vmatpush1.msra.mxu0 0.0
      %3449 = vmatprep.subr.mxu0 0.0
      %3450 = vmatpush1.msra.mxu0 0.0
      %3451 = vmatprep.subr.mxu0 0.0
      %3452 = vmatpush1.msra.mxu0 0.0
      %3453 = vmatprep.subr.mxu0 0.0
      %3454 = vmatpush1.msra.mxu0 0.0
      %3455 = vmatprep.subr.mxu0 0.0
      %3456 = vmatpush1.msra.mxu0 0.0
      %3457 = vmatprep.subr.mxu0 0.0
      %3458 = vmatpush1.msra.mxu0 0.0
      %3459 = vmatprep.subr.mxu0 0.0
      %3460 = vmatpush1.msra.mxu0 0.0
      %3461 = vmatprep.subr.mxu0 0.0
      %3462 = vmatpush1.msra.mxu0 0.0
      %3463 = vmatprep.subr.mxu0 0.0
      %3464 = vmatpush1.msra.mxu0 0.0
      %3465 = vmatprep.subr.mxu0 0.0
      %3466 = vmatpush1.msra.mxu0 0.0
      %3467 = vmatprep.subr.mxu0 0.0
      %3468 = vmatpush1.msra.mxu0 0.0
      %3469 = vmatprep.subr.mxu0 0.0
      %3470 = vmatpush1.msra.mxu0 0.0
      %3471 = vmatprep.subr.mxu0 0.0
      %3472 = vmatpush1.msra.mxu0 0.0
      %3473 = vmatprep.subr.mxu0 0.0
      %3474 = vmatpush1.msra.mxu0 0.0
      %3475 = vmatprep.subr.mxu0 0.0
      %3476 = vmatpush1.msra.mxu0 0.0
      %3477 = vmatprep.subr.mxu0 0.0
      %3478 = vmatpush1.msra.mxu0 0.0
      %3479 = vmatprep.subr.mxu0 0.0
      %3480 = vmatpush1.msra.mxu0 0.0
      %3481 = vmatprep.subr.mxu0 0.0
      %3482 = vmatpush1.msra.mxu0 0.0
      %3483 = vmatprep.subr.mxu0 0.0
      %3484 = vmatpush1.msra.mxu0 0.0
      %3485 = vmatprep.subr.mxu0 0.0
      %3486 = vmatpush1.msra.mxu0 0.0
      %3487 = vmatprep.subr.mxu0 0.0
      %3488 = vmatpush1.msra.mxu0 0.0
      %3489 = vmatprep.subr.mxu0 0.0
      %3490 = vmatpush1.msra.mxu0 0.0
      %3491 = vmatprep.subr.mxu0 0.0
      %3492 = vmatpush1.msra.mxu0 0.0
      %3493 = vmatprep.subr.mxu0 0.0
      %3494 = vmatpush1.msra.mxu0 0.0
      %3495 = vmatprep.subr.mxu0 0.0
      %3496 = vmatpush1.msra.mxu0 0.0
      %3497 = vmatprep.subr.mxu0 0.0
      %3498 = vmatpush1.msra.mxu0 0.0
      %3499 = vmatprep.subr.mxu0 0.0
      %3500 = vmatpush1.msra.mxu0 0.0
      %3501 = vmatprep.subr.mxu0 0.0
      %3502 = vmatpush1.msra.mxu0 0.0
      %3503 = vmatprep.mubr.f32.mxu0 0.0
      %3504 = vmatmul.mubr.f32.gmra.mrb[0].mxu0 %v3437
      %v3505 = vpop.f32.mrb[0].mxu0
      %v3506 = vadd.f32 %v3433, %v3505
      %v3507 = vpop.f32.mrb[0].mxu0
      %3508 = vdwg.mxu0
      %v3509 = vlaneseq
      %v3510 = vshrl.u32 %v3509, 7
      %v3511 = vsub.s32 0, %v3510
      %v3512 = vrot.slane %v3353, %v3511
      %v3513 = vadd.f32 %v3506, %v3512
      %v3514 = vxor.u32 %v3513, 2147483648
      %v3515 = vmul.f32 %v3514, 1.442695
      %v3516 = vpow.pop %v3515
      %v3517 = vadd.f32 %v3516, 1.0
      %v3518 = vrcp.pop %v3517
      %v3519 = vmul.f32 1.0, %v3518
      %v3520 = vtanh.pop %v3513
      %v3521 = vmul.f32 %v3519, %v3343
      %3523 = vrot.lane.b32.xlu0 %v3520, 64
      %v3524 = vpop.permute.xlu0 %3523
      %v3526 = vmul.f32 %v3519, %v3524
      %3528 = vrot.lane.b32.xlu0 %v3526, 32
      %v3529 = vpop.permute.xlu0 %3528
      %v3531 = vadd.f32 %v3521, %v3529
      %v3532 = vtanh.pop %v3531
      %3534 = vrot.lane.b32.xlu0 %v3532, 64
      %v3535 = vpop.permute.xlu0 %3534
      %v3537 = vmul.f32 %v3519, %v3535
      %v3539 = vrot.slane %v2222, 1
      %v3541 = vadd.f32 %v2222, %v3539
      %s3542 = scalar_lea.vmem [#allocation2], 336
      %v3543 = vld [vmem:[%s3542] sm:$0xff]
      %v3544 = vld [vmem:[%s3542 + $0x8] sm:$0xff]
      %v3545 = vld [vmem:[%s3542 + $0x10] sm:$0xff]
      %v3546 = vld [vmem:[%s3542 + $0x18] sm:$0xff]
      %v3547 = vld [vmem:[%s3542 + $0x20] sm:$0xff]
      %v3548 = vld [vmem:[%s3542 + $0x28] sm:$0xff]
      %3550 = vrot.lane.b32.xlu0 %v3537, 32
      %v3551 = vpop.permute.xlu0 %3550
      %v3552 = vsel %vm2233, %v3551, 0
      %3554 = vmatprep.subr.mxu0 0.0
      %3555 = vmatpush1.msra.mxu0 %v3545
      %3556 = vmatprep.subr.mxu0 0.0
      %3557 = vmatpush1.msra.mxu0 %v3546
      %3558 = vmatprep.subr.mxu0 0.0
      %3559 = vmatpush1.msra.mxu0 %v3547
      %3560 = vmatprep.subr.mxu0 0.0
      %3561 = vmatpush1.msra.mxu0 %v3548
      %3562 = vmatprep.subr.mxu0 0.0
      %3563 = vmatpush1.msra.mxu0 0.0
      %3564 = vmatprep.subr.mxu0 0.0
      %3565 = vmatpush1.msra.mxu0 0.0
      %3566 = vmatprep.subr.mxu0 0.0
      %3567 = vmatpush1.msra.mxu0 0.0
      %3568 = vmatprep.subr.mxu0 0.0
      %3569 = vmatpush1.msra.mxu0 0.0
      %3570 = vmatprep.subr.mxu0 0.0
      %3571 = vmatpush1.msra.mxu0 0.0
      %3572 = vmatprep.subr.mxu0 0.0
      %3573 = vmatpush1.msra.mxu0 0.0
      %3574 = vmatprep.subr.mxu0 0.0
      %3575 = vmatpush1.msra.mxu0 0.0
      %3576 = vmatprep.subr.mxu0 0.0
      %3577 = vmatpush1.msra.mxu0 0.0
      %3578 = vmatprep.subr.mxu0 0.0
      %3579 = vmatpush1.msra.mxu0 0.0
      %3580 = vmatprep.subr.mxu0 0.0
      %3581 = vmatpush1.msra.mxu0 0.0
      %3582 = vmatprep.subr.mxu0 0.0
      %3583 = vmatpush1.msra.mxu0 0.0
      %3584 = vmatprep.subr.mxu0 0.0
      %3585 = vmatpush1.msra.mxu0 0.0
      %3586 = vmatprep.subr.mxu0 0.0
      %3587 = vmatpush1.msra.mxu0 0.0
      %3588 = vmatprep.subr.mxu0 0.0
      %3589 = vmatpush1.msra.mxu0 0.0
      %3590 = vmatprep.subr.mxu0 0.0
      %3591 = vmatpush1.msra.mxu0 0.0
      %3592 = vmatprep.subr.mxu0 0.0
      %3593 = vmatpush1.msra.mxu0 0.0
      %3594 = vmatprep.subr.mxu0 0.0
      %3595 = vmatpush1.msra.mxu0 0.0
      %3596 = vmatprep.subr.mxu0 0.0
      %3597 = vmatpush1.msra.mxu0 0.0
      %3598 = vmatprep.subr.mxu0 0.0
      %3599 = vmatpush1.msra.mxu0 0.0
      %3600 = vmatprep.subr.mxu0 0.0
      %3601 = vmatpush1.msra.mxu0 0.0
      %3602 = vmatprep.subr.mxu0 0.0
      %3603 = vmatpush1.msra.mxu0 0.0
      %3604 = vmatprep.subr.mxu0 0.0
      %3605 = vmatpush1.msra.mxu0 0.0
      %3606 = vmatprep.subr.mxu0 0.0
      %3607 = vmatpush1.msra.mxu0 0.0
      %3608 = vmatprep.subr.mxu0 0.0
      %3609 = vmatpush1.msra.mxu0 0.0
      %3610 = vmatprep.subr.mxu0 0.0
      %3611 = vmatpush1.msra.mxu0 0.0
      %3612 = vmatprep.subr.mxu0 0.0
      %3613 = vmatpush1.msra.mxu0 0.0
      %3614 = vmatprep.subr.mxu0 0.0
      %3615 = vmatpush1.msra.mxu0 0.0
      %3616 = vmatprep.subr.mxu0 0.0
      %3617 = vmatpush1.msra.mxu0 0.0
      %3618 = vmatprep.mubr.f32.mxu0 0.0
      %3619 = vmatmul.mubr.f32.gmra.mrb[0].mxu0 %v3552
      %v3620 = vpop.f32.mrb[0].mxu0
      %v3621 = vadd.f32 0.0, %v3620
      %v3622 = vpop.f32.mrb[0].mxu0
      %3623 = vdwg.mxu0
      %v3625 = vsel %vm2307, %v2004, 0
      %3627 = vmatprep.subr.mxu0 0.0
      %3628 = vmatpush1.msra.mxu0 %v3543
      %3629 = vmatprep.subr.mxu0 0.0
      %3630 = vmatpush1.msra.mxu0 %v3544
      %3631 = vmatprep.subr.mxu0 0.0
      %3632 = vmatpush1.msra.mxu0 0.0
      %3633 = vmatprep.subr.mxu0 0.0
      %3634 = vmatpush1.msra.mxu0 0.0
      %3635 = vmatprep.subr.mxu0 0.0
      %3636 = vmatpush1.msra.mxu0 0.0
      %3637 = vmatprep.subr.mxu0 0.0
      %3638 = vmatpush1.msra.mxu0 0.0
      %3639 = vmatprep.subr.mxu0 0.0
      %3640 = vmatpush1.msra.mxu0 0.0
      %3641 = vmatprep.subr.mxu0 0.0
      %3642 = vmatpush1.msra.mxu0 0.0
      %3643 = vmatprep.subr.mxu0 0.0
      %3644 = vmatpush1.msra.mxu0 0.0
      %3645 = vmatprep.subr.mxu0 0.0
      %3646 = vmatpush1.msra.mxu0 0.0
      %3647 = vmatprep.subr.mxu0 0.0
      %3648 = vmatpush1.msra.mxu0 0.0
      %3649 = vmatprep.subr.mxu0 0.0
      %3650 = vmatpush1.msra.mxu0 0.0
      %3651 = vmatprep.subr.mxu0 0.0
      %3652 = vmatpush1.msra.mxu0 0.0
      %3653 = vmatprep.subr.mxu0 0.0
      %3654 = vmatpush1.msra.mxu0 0.0
      %3655 = vmatprep.subr.mxu0 0.0
      %3656 = vmatpush1.msra.mxu0 0.0
      %3657 = vmatprep.subr.mxu0 0.0
      %3658 = vmatpush1.msra.mxu0 0.0
      %3659 = vmatprep.subr.mxu0 0.0
      %3660 = vmatpush1.msra.mxu0 0.0
      %3661 = vmatprep.subr.mxu0 0.0
      %3662 = vmatpush1.msra.mxu0 0.0
      %3663 = vmatprep.subr.mxu0 0.0
      %3664 = vmatpush1.msra.mxu0 0.0
      %3665 = vmatprep.subr.mxu0 0.0
      %3666 = vmatpush1.msra.mxu0 0.0
      %3667 = vmatprep.subr.mxu0 0.0
      %3668 = vmatpush1.msra.mxu0 0.0
      %3669 = vmatprep.subr.mxu0 0.0
      %3670 = vmatpush1.msra.mxu0 0.0
      %3671 = vmatprep.subr.mxu0 0.0
      %3672 = vmatpush1.msra.mxu0 0.0
      %3673 = vmatprep.subr.mxu0 0.0
      %3674 = vmatpush1.msra.mxu0 0.0
      %3675 = vmatprep.subr.mxu0 0.0
      %3676 = vmatpush1.msra.mxu0 0.0
      %3677 = vmatprep.subr.mxu0 0.0
      %3678 = vmatpush1.msra.mxu0 0.0
      %3679 = vmatprep.subr.mxu0 0.0
      %3680 = vmatpush1.msra.mxu0 0.0
      %3681 = vmatprep.subr.mxu0 0.0
      %3682 = vmatpush1.msra.mxu0 0.0
      %3683 = vmatprep.subr.mxu0 0.0
      %3684 = vmatpush1.msra.mxu0 0.0
      %3685 = vmatprep.subr.mxu0 0.0
      %3686 = vmatpush1.msra.mxu0 0.0
      %3687 = vmatprep.subr.mxu0 0.0
      %3688 = vmatpush1.msra.mxu0 0.0
      %3689 = vmatprep.subr.mxu0 0.0
      %3690 = vmatpush1.msra.mxu0 0.0
      %3691 = vmatprep.mubr.f32.mxu0 0.0
      %3692 = vmatmul.mubr.f32.gmra.mrb[0].mxu0 %v3625
      %v3693 = vpop.f32.mrb[0].mxu0
      %v3694 = vadd.f32 %v3621, %v3693
      %v3695 = vpop.f32.mrb[0].mxu0
      %3696 = vdwg.mxu0
      %v3697 = vlaneseq
      %v3698 = vshrl.u32 %v3697, 7
      %v3699 = vsub.s32 0, %v3698
      %v3700 = vrot.slane %v3541, %v3699
      %v3701 = vadd.f32 %v3694, %v3700
      %v3702 = vxor.u32 %v3701, 2147483648
      %v3703 = vmul.f32 %v3702, 1.442695
      %v3704 = vpow.pop %v3703
      %v3705 = vadd.f32 %v3704, 1.0
      %v3706 = vrcp.pop %v3705
      %v3707 = vmul.f32 1.0, %v3706
      %v3708 = vtanh.pop %v3701
      %v3709 = vmul.f32 %v3707, %v3531
      %3711 = vrot.lane.b32.xlu0 %v3708, 64
      %v3712 = vpop.permute.xlu0 %3711
      %v3714 = vmul.f32 %v3707, %v3712
      %3716 = vrot.lane.b32.xlu0 %v3714, 32
      %v3717 = vpop.permute.xlu0 %3716
      %v3719 = vadd.f32 %v3709, %v3717
      %v3720 = vtanh.pop %v3719
      %3722 = vrot.lane.b32.xlu0 %v3720, 64
      %v3723 = vpop.permute.xlu0 %3722
      %v3725 = vmul.f32 %v3707, %v3723
      %v3726 = vld [vmem:[%s1162] sm:$0x3]
      %v3727 = vld [vmem:[%s1162 + $0x2] sm:$0x3]
      %v3728 = vld [vmem:[%s1162 + $0x4] sm:$0x3]
      %v3729 = vld [vmem:[%s1162 + $0x6] sm:$0x3]
      %v3730 = vmul.f32 %v1213, %v3726
      %v3731 = vmul.f32 %v1213, %v3727
      %v3732 = vmul.f32 %v1213, %v3728
      %v3733 = vmul.f32 %v1213, %v3729
      %v3734 = vadd.f32 %v1197, %v3730
      %v3735 = vadd.f32 %v1197, %v3731
      %v3736 = vadd.f32 %v1197, %v3732
      %v3737 = vadd.f32 %v1197, %v3733
      %v3738 = vld [vmem:[%s1166] sm:$0x1]
      %v3739 = vld [vmem:[%s1166 + $0x1] sm:$0x1]
      %v3740 = vld [vmem:[%s1166 + $0x2] sm:$0x1]
      %v3741 = vld [vmem:[%s1166 + $0x3] sm:$0x1]
      %v3742 = vmul.f32 %v1230, %v3738
      %v3743 = vmul.f32 %v1230, %v3739
      %v3744 = vmul.f32 %v1230, %v3740
      %v3745 = vmul.f32 %v1230, %v3741
      %v3746 = vadd.f32 %v1214, %v3742
      %v3747 = vadd.f32 %v1214, %v3743
      %v3748 = vadd.f32 %v1214, %v3744
      %v3749 = vadd.f32 %v1214, %v3745
      %v3750 = vld [vmem:[%s1171] sm:$0xff]
      %v3751 = vld [vmem:[%s1171 + $0x8] sm:$0xff]
      %v3752 = vld [vmem:[%s1171 + $0x10] sm:$0xff]
      %v3753 = vld [vmem:[%s1171 + $0x18] sm:$0xff]
      %v3754 = vld [vmem:[%s1171 + $0x20] sm:$0xff]
      %v3755 = vld [vmem:[%s1171 + $0x28] sm:$0xff]
      %v3756 = vld [vmem:[%s1171 + $0x30] sm:$0xff]
      %v3757 = vld [vmem:[%s1171 + $0x38] sm:$0xff]
      %v3758 = vld [vmem:[%s1171 + $0x40] sm:$0xff]
      %v3759 = vld [vmem:[%s1171 + $0x48] sm:$0xff]
      %v3760 = vld [vmem:[%s1171 + $0x50] sm:$0xff]
      %v3761 = vld [vmem:[%s1171 + $0x58] sm:$0xff]
      %v3762 = vld [vmem:[%s1171 + $0x60] sm:$0xff]
      %v3763 = vld [vmem:[%s1171 + $0x68] sm:$0xff]
      %v3764 = vld [vmem:[%s1171 + $0x70] sm:$0xff]
      %v3765 = vld [vmem:[%s1171 + $0x78] sm:$0xff]
      %v3766 = vld [vmem:[%s1171 + $0x80] sm:$0xff]
      %v3767 = vld [vmem:[%s1171 + $0x88] sm:$0xff]
      %v3768 = vld [vmem:[%s1171 + $0x90] sm:$0xff]
      %v3769 = vld [vmem:[%s1171 + $0x98] sm:$0xff]
      %v3770 = vld [vmem:[%s1171 + $0xa0] sm:$0xff]
      %v3771 = vld [vmem:[%s1171 + $0xa8] sm:$0xff]
      %v3772 = vld [vmem:[%s1171 + $0xb0] sm:$0xff]
      %v3773 = vld [vmem:[%s1171 + $0xb8] sm:$0xff]
      %v3774 = vmul.f32 %v1446, %v3750
      %v3775 = vmul.f32 %v1447, %v3751
      %v3776 = vmul.f32 %v1448, %v3752
      %v3777 = vmul.f32 %v1449, %v3753
      %v3778 = vmul.f32 %v1450, %v3754
      %v3779 = vmul.f32 %v1451, %v3755
      %v3780 = vmul.f32 %v1446, %v3756
      %v3781 = vmul.f32 %v1447, %v3757
      %v3782 = vmul.f32 %v1448, %v3758
      %v3783 = vmul.f32 %v1449, %v3759
      %v3784 = vmul.f32 %v1450, %v3760
      %v3785 = vmul.f32 %v1451, %v3761
      %v3786 = vmul.f32 %v1446, %v3762
      %v3787 = vmul.f32 %v1447, %v3763
      %v3788 = vmul.f32 %v1448, %v3764
      %v3789 = vmul.f32 %v1449, %v3765
      %v3790 = vmul.f32 %v1450, %v3766
      %v3791 = vmul.f32 %v1451, %v3767
      %v3792 = vmul.f32 %v1446, %v3768
      %v3793 = vmul.f32 %v1447, %v3769
      %v3794 = vmul.f32 %v1448, %v3770
      %v3795 = vmul.f32 %v1449, %v3771
      %v3796 = vmul.f32 %v1450, %v3772
      %v3797 = vmul.f32 %v1451, %v3773
      %v3798 = vadd.f32 %v1350, %v3774
      %v3799 = vadd.f32 %v1351, %v3775
      %v3800 = vadd.f32 %v1352, %v3776
      %v3801 = vadd.f32 %v1353, %v3777
      %v3802 = vadd.f32 %v1354, %v3778
      %v3803 = vadd.f32 %v1355, %v3779
      %v3804 = vadd.f32 %v1350, %v3780
      %v3805 = vadd.f32 %v1351, %v3781
      %v3806 = vadd.f32 %v1352, %v3782
      %v3807 = vadd.f32 %v1353, %v3783
      %v3808 = vadd.f32 %v1354, %v3784
      %v3809 = vadd.f32 %v1355, %v3785
      %v3810 = vadd.f32 %v1350, %v3786
      %v3811 = vadd.f32 %v1351, %v3787
      %v3812 = vadd.f32 %v1352, %v3788
      %v3813 = vadd.f32 %v1353, %v3789
      %v3814 = vadd.f32 %v1354, %v3790
      %v3815 = vadd.f32 %v1355, %v3791
      %v3816 = vadd.f32 %v1350, %v3792
      %v3817 = vadd.f32 %v1351, %v3793
      %v3818 = vadd.f32 %v1352, %v3794
      %v3819 = vadd.f32 %v1353, %v3795
      %v3820 = vadd.f32 %v1354, %v3796
      %v3821 = vadd.f32 %v1355, %v3797
      %3822 = vst [vmem:[#allocation3] sm:$0xff] %v3798
      %3823 = vst [vmem:[#allocation3 + $0x8] sm:$0xff] %v3799
      %3824 = vst [vmem:[#allocation3 + $0x10] sm:$0xff] %v3800
      %3825 = vst [vmem:[#allocation3 + $0x18] sm:$0xff] %v3801
      %3826 = vst [vmem:[#allocation3 + $0x20] sm:$0xff] %v3802
      %3827 = vst [vmem:[#allocation3 + $0x28] sm:$0xff] %v3803
      %3828 = vst [vmem:[#allocation3 + $0x30] sm:$0xff] %v3804
      %3829 = vst [vmem:[#allocation3 + $0x38] sm:$0xff] %v3805
      %3830 = vst [vmem:[#allocation3 + $0x40] sm:$0xff] %v3806
      %3831 = vst [vmem:[#allocation3 + $0x48] sm:$0xff] %v3807
      %3832 = vst [vmem:[#allocation3 + $0x50] sm:$0xff] %v3808
      %3833 = vst [vmem:[#allocation3 + $0x58] sm:$0xff] %v3809
      %3834 = vst [vmem:[#allocation3 + $0x60] sm:$0xff] %v3810
      %3835 = vst [vmem:[#allocation3 + $0x68] sm:$0xff] %v3811
      %3836 = vst [vmem:[#allocation3 + $0x70] sm:$0xff] %v3812
      %3837 = vst [vmem:[#allocation3 + $0x78] sm:$0xff] %v3813
      %3838 = vst [vmem:[#allocation3 + $0x80] sm:$0xff] %v3814
      %3839 = vst [vmem:[#allocation3 + $0x88] sm:$0xff] %v3815
      %3840 = vst [vmem:[#allocation3 + $0x90] sm:$0xff] %v3816
      %3841 = vst [vmem:[#allocation3 + $0x98] sm:$0xff] %v3817
      %3842 = vst [vmem:[#allocation3 + $0xa0] sm:$0xff] %v3818
      %3843 = vst [vmem:[#allocation3 + $0xa8] sm:$0xff] %v3819
      %3844 = vst [vmem:[#allocation3 + $0xb0] sm:$0xff] %v3820
      %3845 = vst [vmem:[#allocation3 + $0xb8] sm:$0xff] %v3821
      %v3846 = vld [vmem:[%s1176] sm:$0x3]
      %v3847 = vld [vmem:[%s1176 + $0x2] sm:$0x3]
      %v3848 = vld [vmem:[%s1176 + $0x4] sm:$0x3]
      %v3849 = vld [vmem:[%s1176 + $0x6] sm:$0x3]
      %v3850 = vmul.f32 %v1468, %v3846
      %v3851 = vmul.f32 %v1468, %v3847
      %v3852 = vmul.f32 %v1468, %v3848
      %v3853 = vmul.f32 %v1468, %v3849
      %v3854 = vadd.f32 %v1452, %v3850
      %v3855 = vadd.f32 %v1452, %v3851
      %v3856 = vadd.f32 %v1452, %v3852
      %v3857 = vadd.f32 %v1452, %v3853
      %v3858 = vld [vmem:[%s1181] sm:$0xff]
      %v3859 = vld [vmem:[%s1181 + $0x8] sm:$0xff]
      %v3860 = vld [vmem:[%s1181 + $0x10] sm:$0xff]
      %v3861 = vld [vmem:[%s1181 + $0x18] sm:$0xff]
      %v3862 = vld [vmem:[%s1181 + $0x20] sm:$0xff]
      %v3863 = vld [vmem:[%s1181 + $0x28] sm:$0xff]
      %v3864 = vld [vmem:[%s1181 + $0x30] sm:$0xff]
      %v3865 = vld [vmem:[%s1181 + $0x38] sm:$0xff]
      %v3866 = vld [vmem:[%s1181 + $0x40] sm:$0xff]
      %v3867 = vld [vmem:[%s1181 + $0x48] sm:$0xff]
      %v3868 = vld [vmem:[%s1181 + $0x50] sm:$0xff]
      %v3869 = vld [vmem:[%s1181 + $0x58] sm:$0xff]
      %v3870 = vld [vmem:[%s1181 + $0x60] sm:$0xff]
      %v3871 = vld [vmem:[%s1181 + $0x68] sm:$0xff]
      %v3872 = vld [vmem:[%s1181 + $0x70] sm:$0xff]
      %v3873 = vld [vmem:[%s1181 + $0x78] sm:$0xff]
      %v3874 = vmul.f32 %v1533, %v3858
      %v3875 = vmul.f32 %v1534, %v3859
      %v3876 = vmul.f32 %v1535, %v3860
      %v3877 = vmul.f32 %v1536, %v3861
      %v3878 = vmul.f32 %v1533, %v3862
      %v3879 = vmul.f32 %v1534, %v3863
      %v3880 = vmul.f32 %v1535, %v3864
      %v3881 = vmul.f32 %v1536, %v3865
      %v3882 = vmul.f32 %v1533, %v3866
      %v3883 = vmul.f32 %v1534, %v3867
      %v3884 = vmul.f32 %v1535, %v3868
      %v3885 = vmul.f32 %v1536, %v3869
      %v3886 = vmul.f32 %v1533, %v3870
      %v3887 = vmul.f32 %v1534, %v3871
      %v3888 = vmul.f32 %v1535, %v3872
      %v3889 = vmul.f32 %v1536, %v3873
      %v3890 = vadd.f32 %v1469, %v3874
      %v3891 = vadd.f32 %v1470, %v3875
      %v3892 = vadd.f32 %v1471, %v3876
      %v3893 = vadd.f32 %v1472, %v3877
      %v3894 = vadd.f32 %v1469, %v3878
      %v3895 = vadd.f32 %v1470, %v3879
      %v3896 = vadd.f32 %v1471, %v3880
      %v3897 = vadd.f32 %v1472, %v3881
      %v3898 = vadd.f32 %v1469, %v3882
      %v3899 = vadd.f32 %v1470, %v3883
      %v3900 = vadd.f32 %v1471, %v3884
      %v3901 = vadd.f32 %v1472, %v3885
      %v3902 = vadd.f32 %v1469, %v3886
      %v3903 = vadd.f32 %v1470, %v3887
      %v3904 = vadd.f32 %v1471, %v3888
      %v3905 = vadd.f32 %v1472, %v3889
      %v3906 = vld [vmem:[%s1185] sm:$0x1]
      %v3907 = vld [vmem:[%s1185 + $0x1] sm:$0x1]
      %v3908 = vld [vmem:[%s1185 + $0x2] sm:$0x1]
      %v3909 = vld [vmem:[%s1185 + $0x3] sm:$0x1]
      %v3910 = vmul.f32 %v1553, %v3906
      %v3911 = vmul.f32 %v1553, %v3907
      %v3912 = vmul.f32 %v1553, %v3908
      %v3913 = vmul.f32 %v1553, %v3909
      %v3914 = vadd.f32 %v1537, %v3910
      %v3915 = vadd.f32 %v1537, %v3911
      %v3916 = vadd.f32 %v1537, %v3912
      %v3917 = vadd.f32 %v1537, %v3913
      %v3918 = vld [vmem:[%s7] sm:$0xff]
      %v3920 = vlaneseq
      %v3921 = vshrl.u32 %v3920, 7
      %v3922 = vsub.s32 0, %v3921
      %v3923 = vrot.slane %v3746, %v3922
      %v3926 = vsel %vm1874, %v3918, 0
      %v3929 = vsel %vm1673, %v3734, 0
      %3931 = vmatprep.subr.mxu0 0.0
      %3932 = vmatpush1.msra.mxu0 %v3929
      %3933 = vmatprep.subr.mxu0 0.0
      %3934 = vmatpush1.msra.mxu0 0.0
      %3935 = vmatprep.subr.mxu0 0.0
      %3936 = vmatpush1.msra.mxu0 0.0
      %3937 = vmatprep.subr.mxu0 0.0
      %3938 = vmatpush1.msra.mxu0 0.0
      %3939 = vmatprep.subr.mxu0 0.0
      %3940 = vmatpush1.msra.mxu0 0.0
      %3941 = vmatprep.subr.mxu0 0.0
      %3942 = vmatpush1.msra.mxu0 0.0
      %3943 = vmatprep.subr.mxu0 0.0
      %3944 = vmatpush1.msra.mxu0 0.0
      %3945 = vmatprep.subr.mxu0 0.0
      %3946 = vmatpush1.msra.mxu0 0.0
      %3947 = vmatprep.subr.mxu0 0.0
      %3948 = vmatpush1.msra.mxu0 0.0
      %3949 = vmatprep.subr.mxu0 0.0
      %3950 = vmatpush1.msra.mxu0 0.0
      %3951 = vmatprep.subr.mxu0 0.0
      %3952 = vmatpush1.msra.mxu0 0.0
      %3953 = vmatprep.subr.mxu0 0.0
      %3954 = vmatpush1.msra.mxu0 0.0
      %3955 = vmatprep.subr.mxu0 0.0
      %3956 = vmatpush1.msra.mxu0 0.0
      %3957 = vmatprep.subr.mxu0 0.0
      %3958 = vmatpush1.msra.mxu0 0.0
      %3959 = vmatprep.subr.mxu0 0.0
      %3960 = vmatpush1.msra.mxu0 0.0
      %3961 = vmatprep.subr.mxu0 0.0
      %3962 = vmatpush1.msra.mxu0 0.0
      %3963 = vmatprep.subr.mxu0 0.0
      %3964 = vmatpush1.msra.mxu0 0.0
      %3965 = vmatprep.subr.mxu0 0.0
      %3966 = vmatpush1.msra.mxu0 0.0
      %3967 = vmatprep.subr.mxu0 0.0
      %3968 = vmatpush1.msra.mxu0 0.0
      %3969 = vmatprep.subr.mxu0 0.0
      %3970 = vmatpush1.msra.mxu0 0.0
      %3971 = vmatprep.subr.mxu0 0.0
      %3972 = vmatpush1.msra.mxu0 0.0
      %3973 = vmatprep.subr.mxu0 0.0
      %3974 = vmatpush1.msra.mxu0 0.0
      %3975 = vmatprep.subr.mxu0 0.0
      %3976 = vmatpush1.msra.mxu0 0.0
      %3977 = vmatprep.subr.mxu0 0.0
      %3978 = vmatpush1.msra.mxu0 0.0
      %3979 = vmatprep.subr.mxu0 0.0
      %3980 = vmatpush1.msra.mxu0 0.0
      %3981 = vmatprep.subr.mxu0 0.0
      %3982 = vmatpush1.msra.mxu0 0.0
      %3983 = vmatprep.subr.mxu0 0.0
      %3984 = vmatpush1.msra.mxu0 0.0
      %3985 = vmatprep.subr.mxu0 0.0
      %3986 = vmatpush1.msra.mxu0 0.0
      %3987 = vmatprep.subr.mxu0 0.0
      %3988 = vmatpush1.msra.mxu0 0.0
      %3989 = vmatprep.subr.mxu0 0.0
      %3990 = vmatpush1.msra.mxu0 0.0
      %3991 = vmatprep.subr.mxu0 0.0
      %3992 = vmatpush1.msra.mxu0 0.0
      %3993 = vmatprep.subr.mxu0 0.0
      %3994 = vmatpush1.msra.mxu0 0.0
      %3995 = vmatprep.mubr.f32.mxu0 0.0
      %3996 = vmatmul.mubr.f32.gmra.mrb[0].mxu0 %v3926
      %v3997 = vpop.f32.mrb[0].mxu0
      %v3998 = vadd.f32 %v3923, %v3997
      %v3999 = vpop.f32.mrb[0].mxu0
      %4000 = vdwg.mxu0
      %v4002 = vrot.slane %v3854, 1
      %v4004 = vadd.f32 %v3854, %v4002
      %v4005 = vld [vmem:[#allocation3] sm:$0xff]
      %v4006 = vld [vmem:[#allocation3 + $0x8] sm:$0xff]
      %v4007 = vld [vmem:[#allocation3 + $0x10] sm:$0xff]
      %v4008 = vld [vmem:[#allocation3 + $0x18] sm:$0xff]
      %v4009 = vld [vmem:[#allocation3 + $0x20] sm:$0xff]
      %v4010 = vld [vmem:[#allocation3 + $0x28] sm:$0xff]
      %4012 = vrot.lane.b32.xlu0 %v3725, 32
      %v4013 = vpop.permute.xlu0 %4012
      %v4014 = vsel %vm2233, %v4013, 0
      %4016 = vmatprep.subr.mxu0 0.0
      %4017 = vmatpush1.msra.mxu0 %v4007
      %4018 = vmatprep.subr.mxu0 0.0
      %4019 = vmatpush1.msra.mxu0 %v4008
      %4020 = vmatprep.subr.mxu0 0.0
      %4021 = vmatpush1.msra.mxu0 %v4009
      %4022 = vmatprep.subr.mxu0 0.0
      %4023 = vmatpush1.msra.mxu0 %v4010
      %4024 = vmatprep.subr.mxu0 0.0
      %4025 = vmatpush1.msra.mxu0 0.0
      %4026 = vmatprep.subr.mxu0 0.0
      %4027 = vmatpush1.msra.mxu0 0.0
      %4028 = vmatprep.subr.mxu0 0.0
      %4029 = vmatpush1.msra.mxu0 0.0
      %4030 = vmatprep.subr.mxu0 0.0
      %4031 = vmatpush1.msra.mxu0 0.0
      %4032 = vmatprep.subr.mxu0 0.0
      %4033 = vmatpush1.msra.mxu0 0.0
      %4034 = vmatprep.subr.mxu0 0.0
      %4035 = vmatpush1.msra.mxu0 0.0
      %4036 = vmatprep.subr.mxu0 0.0
      %4037 = vmatpush1.msra.mxu0 0.0
      %4038 = vmatprep.subr.mxu0 0.0
      %4039 = vmatpush1.msra.mxu0 0.0
      %4040 = vmatprep.subr.mxu0 0.0
      %4041 = vmatpush1.msra.mxu0 0.0
      %4042 = vmatprep.subr.mxu0 0.0
      %4043 = vmatpush1.msra.mxu0 0.0
      %4044 = vmatprep.subr.mxu0 0.0
      %4045 = vmatpush1.msra.mxu0 0.0
      %4046 = vmatprep.subr.mxu0 0.0
      %4047 = vmatpush1.msra.mxu0 0.0
      %4048 = vmatprep.subr.mxu0 0.0
      %4049 = vmatpush1.msra.mxu0 0.0
      %4050 = vmatprep.subr.mxu0 0.0
      %4051 = vmatpush1.msra.mxu0 0.0
      %4052 = vmatprep.subr.mxu0 0.0
      %4053 = vmatpush1.msra.mxu0 0.0
      %4054 = vmatprep.subr.mxu0 0.0
      %4055 = vmatpush1.msra.mxu0 0.0
      %4056 = vmatprep.subr.mxu0 0.0
      %4057 = vmatpush1.msra.mxu0 0.0
      %4058 = vmatprep.subr.mxu0 0.0
      %4059 = vmatpush1.msra.mxu0 0.0
      %4060 = vmatprep.subr.mxu0 0.0
      %4061 = vmatpush1.msra.mxu0 0.0
      %4062 = vmatprep.subr.mxu0 0.0
      %4063 = vmatpush1.msra.mxu0 0.0
      %4064 = vmatprep.subr.mxu0 0.0
      %4065 = vmatpush1.msra.mxu0 0.0
      %4066 = vmatprep.subr.mxu0 0.0
      %4067 = vmatpush1.msra.mxu0 0.0
      %4068 = vmatprep.subr.mxu0 0.0
      %4069 = vmatpush1.msra.mxu0 0.0
      %4070 = vmatprep.subr.mxu0 0.0
      %4071 = vmatpush1.msra.mxu0 0.0
      %4072 = vmatprep.subr.mxu0 0.0
      %4073 = vmatpush1.msra.mxu0 0.0
      %4074 = vmatprep.subr.mxu0 0.0
      %4075 = vmatpush1.msra.mxu0 0.0
      %4076 = vmatprep.subr.mxu0 0.0
      %4077 = vmatpush1.msra.mxu0 0.0
      %4078 = vmatprep.subr.mxu0 0.0
      %4079 = vmatpush1.msra.mxu0 0.0
      %4080 = vmatprep.mubr.f32.mxu0 0.0
      %4081 = vmatmul.mubr.f32.gmra.mrb[0].mxu0 %v4014
      %v4082 = vpop.f32.mrb[0].mxu0
      %v4083 = vadd.f32 0.0, %v4082
      %v4084 = vpop.f32.mrb[0].mxu0
      %4085 = vdwg.mxu0
      %v4087 = vsel %vm2307, %v3998, 0
      %4089 = vmatprep.subr.mxu0 0.0
      %4090 = vmatpush1.msra.mxu0 %v4005
      %4091 = vmatprep.subr.mxu0 0.0
      %4092 = vmatpush1.msra.mxu0 %v4006
      %4093 = vmatprep.subr.mxu0 0.0
      %4094 = vmatpush1.msra.mxu0 0.0
      %4095 = vmatprep.subr.mxu0 0.0
      %4096 = vmatpush1.msra.mxu0 0.0
      %4097 = vmatprep.subr.mxu0 0.0
      %4098 = vmatpush1.msra.mxu0 0.0
      %4099 = vmatprep.subr.mxu0 0.0
      %4100 = vmatpush1.msra.mxu0 0.0
      %4101 = vmatprep.subr.mxu0 0.0
      %4102 = vmatpush1.msra.mxu0 0.0
      %4103 = vmatprep.subr.mxu0 0.0
      %4104 = vmatpush1.msra.mxu0 0.0
      %4105 = vmatprep.subr.mxu0 0.0
      %4106 = vmatpush1.msra.mxu0 0.0
      %4107 = vmatprep.subr.mxu0 0.0
      %4108 = vmatpush1.msra.mxu0 0.0
      %4109 = vmatprep.subr.mxu0 0.0
      %4110 = vmatpush1.msra.mxu0 0.0
      %4111 = vmatprep.subr.mxu0 0.0
      %4112 = vmatpush1.msra.mxu0 0.0
      %4113 = vmatprep.subr.mxu0 0.0
      %4114 = vmatpush1.msra.mxu0 0.0
      %4115 = vmatprep.subr.mxu0 0.0
      %4116 = vmatpush1.msra.mxu0 0.0
      %4117 = vmatprep.subr.mxu0 0.0
      %4118 = vmatpush1.msra.mxu0 0.0
      %4119 = vmatprep.subr.mxu0 0.0
      %4120 = vmatpush1.msra.mxu0 0.0
      %4121 = vmatprep.subr.mxu0 0.0
      %4122 = vmatpush1.msra.mxu0 0.0
      %4123 = vmatprep.subr.mxu0 0.0
      %4124 = vmatpush1.msra.mxu0 0.0
      %4125 = vmatprep.subr.mxu0 0.0
      %4126 = vmatpush1.msra.mxu0 0.0
      %4127 = vmatprep.subr.mxu0 0.0
      %4128 = vmatpush1.msra.mxu0 0.0
      %4129 = vmatprep.subr.mxu0 0.0
      %4130 = vmatpush1.msra.mxu0 0.0
      %4131 = vmatprep.subr.mxu0 0.0
      %4132 = vmatpush1.msra.mxu0 0.0
      %4133 = vmatprep.subr.mxu0 0.0
      %4134 = vmatpush1.msra.mxu0 0.0
      %4135 = vmatprep.subr.mxu0 0.0
      %4136 = vmatpush1.msra.mxu0 0.0
      %4137 = vmatprep.subr.mxu0 0.0
      %4138 = vmatpush1.msra.mxu0 0.0
      %4139 = vmatprep.subr.mxu0 0.0
      %4140 = vmatpush1.msra.mxu0 0.0
      %4141 = vmatprep.subr.mxu0 0.0
      %4142 = vmatpush1.msra.mxu0 0.0
      %4143 = vmatprep.subr.mxu0 0.0
      %4144 = vmatpush1.msra.mxu0 0.0
      %4145 = vmatprep.subr.mxu0 0.0
      %4146 = vmatpush1.msra.mxu0 0.0
      %4147 = vmatprep.subr.mxu0 0.0
      %4148 = vmatpush1.msra.mxu0 0.0
      %4149 = vmatprep.subr.mxu0 0.0
      %4150 = vmatpush1.msra.mxu0 0.0
      %4151 = vmatprep.subr.mxu0 0.0
      %4152 = vmatpush1.msra.mxu0 0.0
      %4153 = vmatprep.mubr.f32.mxu0 0.0
      %4154 = vmatmul.mubr.f32.gmra.mrb[0].mxu0 %v4087
      %v4155 = vpop.f32.mrb[0].mxu0
      %v4156 = vadd.f32 %v4083, %v4155
      %v4157 = vpop.f32.mrb[0].mxu0
      %4158 = vdwg.mxu0
      %v4159 = vlaneseq
      %v4160 = vshrl.u32 %v4159, 7
      %v4161 = vsub.s32 0, %v4160
      %v4162 = vrot.slane %v4004, %v4161
      %v4163 = vadd.f32 %v4156, %v4162
      %v4164 = vxor.u32 %v4163, 2147483648
      %v4165 = vmul.f32 %v4164, 1.442695
      %v4166 = vpow.pop %v4165
      %v4167 = vadd.f32 %v4166, 1.0
      %v4168 = vrcp.pop %v4167
      %v4169 = vmul.f32 1.0, %v4168
      %v4170 = vtanh.pop %v4163
      %v4171 = vmul.f32 %v4169, %v3719
      %4173 = vrot.lane.b32.xlu0 %v4170, 64
      %v4174 = vpop.permute.xlu0 %4173
      %v4176 = vmul.f32 %v4169, %v4174
      %4178 = vrot.lane.b32.xlu0 %v4176, 32
      %v4179 = vpop.permute.xlu0 %4178
      %v4181 = vadd.f32 %v4171, %v4179
      %v4182 = vtanh.pop %v4181
      %4184 = vrot.lane.b32.xlu0 %v4182, 64
      %v4185 = vpop.permute.xlu0 %4184
      %v4187 = vmul.f32 %v4169, %v4185
      %v4189 = vlaneseq
      %v4190 = vshrl.u32 %v4189, 7
      %v4191 = vsub.s32 0, %v4190
      %v4192 = vrot.slane %v3914, %v4191
      %4195 = vrot.lane.b32.xlu0 %v4187, 32
      %v4196 = vpop.permute.xlu0 %4195
      %v4197 = vsel %vm2233, %v4196, 0
      %4199 = vmatprep.subr.mxu0 0.0
      %4200 = vmatpush1.msra.mxu0 %v3890
      %4201 = vmatprep.subr.mxu0 0.0
      %4202 = vmatpush1.msra.mxu0 %v3891
      %4203 = vmatprep.subr.mxu0 0.0
      %4204 = vmatpush1.msra.mxu0 %v3892
      %4205 = vmatprep.subr.mxu0 0.0
      %4206 = vmatpush1.msra.mxu0 %v3893
      %4207 = vmatprep.subr.mxu0 0.0
      %4208 = vmatpush1.msra.mxu0 0.0
      %4209 = vmatprep.subr.mxu0 0.0
      %4210 = vmatpush1.msra.mxu0 0.0
      %4211 = vmatprep.subr.mxu0 0.0
      %4212 = vmatpush1.msra.mxu0 0.0
      %4213 = vmatprep.subr.mxu0 0.0
      %4214 = vmatpush1.msra.mxu0 0.0
      %4215 = vmatprep.subr.mxu0 0.0
      %4216 = vmatpush1.msra.mxu0 0.0
      %4217 = vmatprep.subr.mxu0 0.0
      %4218 = vmatpush1.msra.mxu0 0.0
      %4219 = vmatprep.subr.mxu0 0.0
      %4220 = vmatpush1.msra.mxu0 0.0
      %4221 = vmatprep.subr.mxu0 0.0
      %4222 = vmatpush1.msra.mxu0 0.0
      %4223 = vmatprep.subr.mxu0 0.0
      %4224 = vmatpush1.msra.mxu0 0.0
      %4225 = vmatprep.subr.mxu0 0.0
      %4226 = vmatpush1.msra.mxu0 0.0
      %4227 = vmatprep.subr.mxu0 0.0
      %4228 = vmatpush1.msra.mxu0 0.0
      %4229 = vmatprep.subr.mxu0 0.0
      %4230 = vmatpush1.msra.mxu0 0.0
      %4231 = vmatprep.subr.mxu0 0.0
      %4232 = vmatpush1.msra.mxu0 0.0
      %4233 = vmatprep.subr.mxu0 0.0
      %4234 = vmatpush1.msra.mxu0 0.0
      %4235 = vmatprep.subr.mxu0 0.0
      %4236 = vmatpush1.msra.mxu0 0.0
      %4237 = vmatprep.subr.mxu0 0.0
      %4238 = vmatpush1.msra.mxu0 0.0
      %4239 = vmatprep.subr.mxu0 0.0
      %4240 = vmatpush1.msra.mxu0 0.0
      %4241 = vmatprep.subr.mxu0 0.0
      %4242 = vmatpush1.msra.mxu0 0.0
      %4243 = vmatprep.subr.mxu0 0.0
      %4244 = vmatpush1.msra.mxu0 0.0
      %4245 = vmatprep.subr.mxu0 0.0
      %4246 = vmatpush1.msra.mxu0 0.0
      %4247 = vmatprep.subr.mxu0 0.0
      %4248 = vmatpush1.msra.mxu0 0.0
      %4249 = vmatprep.subr.mxu0 0.0
      %4250 = vmatpush1.msra.mxu0 0.0
      %4251 = vmatprep.subr.mxu0 0.0
      %4252 = vmatpush1.msra.mxu0 0.0
      %4253 = vmatprep.subr.mxu0 0.0
      %4254 = vmatpush1.msra.mxu0 0.0
      %4255 = vmatprep.subr.mxu0 0.0
      %4256 = vmatpush1.msra.mxu0 0.0
      %4257 = vmatprep.subr.mxu0 0.0
      %4258 = vmatpush1.msra.mxu0 0.0
      %4259 = vmatprep.subr.mxu0 0.0
      %4260 = vmatpush1.msra.mxu0 0.0
      %4261 = vmatprep.subr.mxu0 0.0
      %4262 = vmatpush1.msra.mxu0 0.0
      %4263 = vmatprep.mubr.f32.mxu0 0.0
      %4264 = vmatmul.mubr.f32.gmra.mrb[0].mxu0 %v4197
      %v4265 = vpop.f32.mrb[0].mxu0
      %v4266 = vadd.f32 %v4192, %v4265
      %v4267 = vpop.f32.mrb[0].mxu0
      %4268 = vdwg.mxu0
      %v4269 = vadd.f32 %v4266, %v3918
      %v4271 = vlaneseq
      %v4272 = vshrl.u32 %v4271, 7
      %v4273 = vsub.s32 0, %v4272
      %v4274 = vrot.slane %v3747, %v4273
      %v4277 = vsel %vm1874, %v4269, 0
      %v4280 = vsel %vm1673, %v3735, 0
      %4282 = vmatprep.subr.mxu0 0.0
      %4283 = vmatpush1.msra.mxu0 %v4280
      %4284 = vmatprep.subr.mxu0 0.0
      %4285 = vmatpush1.msra.mxu0 0.0
      %4286 = vmatprep.subr.mxu0 0.0
      %4287 = vmatpush1.msra.mxu0 0.0
      %4288 = vmatprep.subr.mxu0 0.0
      %4289 = vmatpush1.msra.mxu0 0.0
      %4290 = vmatprep.subr.mxu0 0.0
      %4291 = vmatpush1.msra.mxu0 0.0
      %4292 = vmatprep.subr.mxu0 0.0
      %4293 = vmatpush1.msra.mxu0 0.0
      %4294 = vmatprep.subr.mxu0 0.0
      %4295 = vmatpush1.msra.mxu0 0.0
      %4296 = vmatprep.subr.mxu0 0.0
      %4297 = vmatpush1.msra.mxu0 0.0
      %4298 = vmatprep.subr.mxu0 0.0
      %4299 = vmatpush1.msra.mxu0 0.0
      %4300 = vmatprep.subr.mxu0 0.0
      %4301 = vmatpush1.msra.mxu0 0.0
      %4302 = vmatprep.subr.mxu0 0.0
      %4303 = vmatpush1.msra.mxu0 0.0
      %4304 = vmatprep.subr.mxu0 0.0
      %4305 = vmatpush1.msra.mxu0 0.0
      %4306 = vmatprep.subr.mxu0 0.0
      %4307 = vmatpush1.msra.mxu0 0.0
      %4308 = vmatprep.subr.mxu0 0.0
      %4309 = vmatpush1.msra.mxu0 0.0
      %4310 = vmatprep.subr.mxu0 0.0
      %4311 = vmatpush1.msra.mxu0 0.0
      %4312 = vmatprep.subr.mxu0 0.0
      %4313 = vmatpush1.msra.mxu0 0.0
      %4314 = vmatprep.subr.mxu0 0.0
      %4315 = vmatpush1.msra.mxu0 0.0
      %4316 = vmatprep.subr.mxu0 0.0
      %4317 = vmatpush1.msra.mxu0 0.0
      %4318 = vmatprep.subr.mxu0 0.0
      %4319 = vmatpush1.msra.mxu0 0.0
      %4320 = vmatprep.subr.mxu0 0.0
      %4321 = vmatpush1.msra.mxu0 0.0
      %4322 = vmatprep.subr.mxu0 0.0
      %4323 = vmatpush1.msra.mxu0 0.0
      %4324 = vmatprep.subr.mxu0 0.0
      %4325 = vmatpush1.msra.mxu0 0.0
      %4326 = vmatprep.subr.mxu0 0.0
      %4327 = vmatpush1.msra.mxu0 0.0
      %4328 = vmatprep.subr.mxu0 0.0
      %4329 = vmatpush1.msra.mxu0 0.0
      %4330 = vmatprep.subr.mxu0 0.0
      %4331 = vmatpush1.msra.mxu0 0.0
      %4332 = vmatprep.subr.mxu0 0.0
      %4333 = vmatpush1.msra.mxu0 0.0
      %4334 = vmatprep.subr.mxu0 0.0
      %4335 = vmatpush1.msra.mxu0 0.0
      %4336 = vmatprep.subr.mxu0 0.0
      %4337 = vmatpush1.msra.mxu0 0.0
      %4338 = vmatprep.subr.mxu0 0.0
      %4339 = vmatpush1.msra.mxu0 0.0
      %4340 = vmatprep.subr.mxu0 0.0
      %4341 = vmatpush1.msra.mxu0 0.0
      %4342 = vmatprep.subr.mxu0 0.0
      %4343 = vmatpush1.msra.mxu0 0.0
      %4344 = vmatprep.subr.mxu0 0.0
      %4345 = vmatpush1.msra.mxu0 0.0
      %4346 = vmatprep.mubr.f32.mxu0 0.0
      %4347 = vmatmul.mubr.f32.gmra.mrb[0].mxu0 %v4277
      %v4348 = vpop.f32.mrb[0].mxu0
      %v4349 = vadd.f32 %v4274, %v4348
      %v4350 = vpop.f32.mrb[0].mxu0
      %4351 = vdwg.mxu0
      %v4353 = vrot.slane %v3855, 1
      %v4355 = vadd.f32 %v3855, %v4353
      %s4356 = scalar_lea.vmem [#allocation3], 48
      %v4357 = vld [vmem:[%s4356] sm:$0xff]
      %v4358 = vld [vmem:[%s4356 + $0x8] sm:$0xff]
      %v4359 = vld [vmem:[%s4356 + $0x10] sm:$0xff]
      %v4360 = vld [vmem:[%s4356 + $0x18] sm:$0xff]
      %v4361 = vld [vmem:[%s4356 + $0x20] sm:$0xff]
      %v4362 = vld [vmem:[%s4356 + $0x28] sm:$0xff]
      %4363 = vmatprep.subr.mxu0 0.0
      %4364 = vmatpush1.msra.mxu0 %v4359
      %4365 = vmatprep.subr.mxu0 0.0
      %4366 = vmatpush1.msra.mxu0 %v4360
      %4367 = vmatprep.subr.mxu0 0.0
      %4368 = vmatpush1.msra.mxu0 %v4361
      %4369 = vmatprep.subr.mxu0 0.0
      %4370 = vmatpush1.msra.mxu0 %v4362
      %4371 = vmatprep.subr.mxu0 0.0
      %4372 = vmatpush1.msra.mxu0 0.0
      %4373 = vmatprep.subr.mxu0 0.0
      %4374 = vmatpush1.msra.mxu0 0.0
      %4375 = vmatprep.subr.mxu0 0.0
      %4376 = vmatpush1.msra.mxu0 0.0
      %4377 = vmatprep.subr.mxu0 0.0
      %4378 = vmatpush1.msra.mxu0 0.0
      %4379 = vmatprep.subr.mxu0 0.0
      %4380 = vmatpush1.msra.mxu0 0.0
      %4381 = vmatprep.subr.mxu0 0.0
      %4382 = vmatpush1.msra.mxu0 0.0
      %4383 = vmatprep.subr.mxu0 0.0
      %4384 = vmatpush1.msra.mxu0 0.0
      %4385 = vmatprep.subr.mxu0 0.0
      %4386 = vmatpush1.msra.mxu0 0.0
      %4387 = vmatprep.subr.mxu0 0.0
      %4388 = vmatpush1.msra.mxu0 0.0
      %4389 = vmatprep.subr.mxu0 0.0
      %4390 = vmatpush1.msra.mxu0 0.0
      %4391 = vmatprep.subr.mxu0 0.0
      %4392 = vmatpush1.msra.mxu0 0.0
      %4393 = vmatprep.subr.mxu0 0.0
      %4394 = vmatpush1.msra.mxu0 0.0
      %4395 = vmatprep.subr.mxu0 0.0
      %4396 = vmatpush1.msra.mxu0 0.0
      %4397 = vmatprep.subr.mxu0 0.0
      %4398 = vmatpush1.msra.mxu0 0.0
      %4399 = vmatprep.subr.mxu0 0.0
      %4400 = vmatpush1.msra.mxu0 0.0
      %4401 = vmatprep.subr.mxu0 0.0
      %4402 = vmatpush1.msra.mxu0 0.0
      %4403 = vmatprep.subr.mxu0 0.0
      %4404 = vmatpush1.msra.mxu0 0.0
      %4405 = vmatprep.subr.mxu0 0.0
      %4406 = vmatpush1.msra.mxu0 0.0
      %4407 = vmatprep.subr.mxu0 0.0
      %4408 = vmatpush1.msra.mxu0 0.0
      %4409 = vmatprep.subr.mxu0 0.0
      %4410 = vmatpush1.msra.mxu0 0.0
      %4411 = vmatprep.subr.mxu0 0.0
      %4412 = vmatpush1.msra.mxu0 0.0
      %4413 = vmatprep.subr.mxu0 0.0
      %4414 = vmatpush1.msra.mxu0 0.0
      %4415 = vmatprep.subr.mxu0 0.0
      %4416 = vmatpush1.msra.mxu0 0.0
      %4417 = vmatprep.subr.mxu0 0.0
      %4418 = vmatpush1.msra.mxu0 0.0
      %4419 = vmatprep.subr.mxu0 0.0
      %4420 = vmatpush1.msra.mxu0 0.0
      %4421 = vmatprep.subr.mxu0 0.0
      %4422 = vmatpush1.msra.mxu0 0.0
      %4423 = vmatprep.subr.mxu0 0.0
      %4424 = vmatpush1.msra.mxu0 0.0
      %4425 = vmatprep.subr.mxu0 0.0
      %4426 = vmatpush1.msra.mxu0 0.0
      %4427 = vmatprep.mubr.f32.mxu0 0.0
      %4428 = vmatmul.mubr.f32.gmra.mrb[0].mxu0 %v4197
      %v4429 = vpop.f32.mrb[0].mxu0
      %v4430 = vadd.f32 0.0, %v4429
      %v4431 = vpop.f32.mrb[0].mxu0
      %4432 = vdwg.mxu0
      %v4434 = vsel %vm2307, %v4349, 0
      %4436 = vmatprep.subr.mxu0 0.0
      %4437 = vmatpush1.msra.mxu0 %v4357
      %4438 = vmatprep.subr.mxu0 0.0
      %4439 = vmatpush1.msra.mxu0 %v4358
      %4440 = vmatprep.subr.mxu0 0.0
      %4441 = vmatpush1.msra.mxu0 0.0
      %4442 = vmatprep.subr.mxu0 0.0
      %4443 = vmatpush1.msra.mxu0 0.0
      %4444 = vmatprep.subr.mxu0 0.0
      %4445 = vmatpush1.msra.mxu0 0.0
      %4446 = vmatprep.subr.mxu0 0.0
      %4447 = vmatpush1.msra.mxu0 0.0
      %4448 = vmatprep.subr.mxu0 0.0
      %4449 = vmatpush1.msra.mxu0 0.0
      %4450 = vmatprep.subr.mxu0 0.0
      %4451 = vmatpush1.msra.mxu0 0.0
      %4452 = vmatprep.subr.mxu0 0.0
      %4453 = vmatpush1.msra.mxu0 0.0
      %4454 = vmatprep.subr.mxu0 0.0
      %4455 = vmatpush1.msra.mxu0 0.0
      %4456 = vmatprep.subr.mxu0 0.0
      %4457 = vmatpush1.msra.mxu0 0.0
      %4458 = vmatprep.subr.mxu0 0.0
      %4459 = vmatpush1.msra.mxu0 0.0
      %4460 = vmatprep.subr.mxu0 0.0
      %4461 = vmatpush1.msra.mxu0 0.0
      %4462 = vmatprep.subr.mxu0 0.0
      %4463 = vmatpush1.msra.mxu0 0.0
      %4464 = vmatprep.subr.mxu0 0.0
      %4465 = vmatpush1.msra.mxu0 0.0
      %4466 = vmatprep.subr.mxu0 0.0
      %4467 = vmatpush1.msra.mxu0 0.0
      %4468 = vmatprep.subr.mxu0 0.0
      %4469 = vmatpush1.msra.mxu0 0.0
      %4470 = vmatprep.subr.mxu0 0.0
      %4471 = vmatpush1.msra.mxu0 0.0
      %4472 = vmatprep.subr.mxu0 0.0
      %4473 = vmatpush1.msra.mxu0 0.0
      %4474 = vmatprep.subr.mxu0 0.0
      %4475 = vmatpush1.msra.mxu0 0.0
      %4476 = vmatprep.subr.mxu0 0.0
      %4477 = vmatpush1.msra.mxu0 0.0
      %4478 = vmatprep.subr.mxu0 0.0
      %4479 = vmatpush1.msra.mxu0 0.0
      %4480 = vmatprep.subr.mxu0 0.0
      %4481 = vmatpush1.msra.mxu0 0.0
      %4482 = vmatprep.subr.mxu0 0.0
      %4483 = vmatpush1.msra.mxu0 0.0
      %4484 = vmatprep.subr.mxu0 0.0
      %4485 = vmatpush1.msra.mxu0 0.0
      %4486 = vmatprep.subr.mxu0 0.0
      %4487 = vmatpush1.msra.mxu0 0.0
      %4488 = vmatprep.subr.mxu0 0.0
      %4489 = vmatpush1.msra.mxu0 0.0
      %4490 = vmatprep.subr.mxu0 0.0
      %4491 = vmatpush1.msra.mxu0 0.0
      %4492 = vmatprep.subr.mxu0 0.0
      %4493 = vmatpush1.msra.mxu0 0.0
      %4494 = vmatprep.subr.mxu0 0.0
      %4495 = vmatpush1.msra.mxu0 0.0
      %4496 = vmatprep.subr.mxu0 0.0
      %4497 = vmatpush1.msra.mxu0 0.0
      %4498 = vmatprep.subr.mxu0 0.0
      %4499 = vmatpush1.msra.mxu0 0.0
      %4500 = vmatprep.mubr.f32.mxu0 0.0
      %4501 = vmatmul.mubr.f32.gmra.mrb[0].mxu0 %v4434
      %v4502 = vpop.f32.mrb[0].mxu0
      %v4503 = vadd.f32 %v4430, %v4502
      %v4504 = vpop.f32.mrb[0].mxu0
      %4505 = vdwg.mxu0
      %v4506 = vlaneseq
      %v4507 = vshrl.u32 %v4506, 7
      %v4508 = vsub.s32 0, %v4507
      %v4509 = vrot.slane %v4355, %v4508
      %v4510 = vadd.f32 %v4503, %v4509
      %v4511 = vxor.u32 %v4510, 2147483648
      %v4512 = vmul.f32 %v4511, 1.442695
      %v4513 = vpow.pop %v4512
      %v4514 = vadd.f32 %v4513, 1.0
      %v4515 = vrcp.pop %v4514
      %v4516 = vmul.f32 1.0, %v4515
      %v4517 = vtanh.pop %v4510
      %v4518 = vmul.f32 %v4516, %v4181
      %4520 = vrot.lane.b32.xlu0 %v4517, 64
      %v4521 = vpop.permute.xlu0 %4520
      %v4523 = vmul.f32 %v4516, %v4521
      %4525 = vrot.lane.b32.xlu0 %v4523, 32
      %v4526 = vpop.permute.xlu0 %4525
      %v4528 = vadd.f32 %v4518, %v4526
      %v4529 = vtanh.pop %v4528
      %4531 = vrot.lane.b32.xlu0 %v4529, 64
      %v4532 = vpop.permute.xlu0 %4531
      %v4534 = vmul.f32 %v4516, %v4532
      %v4536 = vlaneseq
      %v4537 = vshrl.u32 %v4536, 7
      %v4538 = vsub.s32 0, %v4537
      %v4539 = vrot.slane %v3915, %v4538
      %4542 = vrot.lane.b32.xlu0 %v4534, 32
      %v4543 = vpop.permute.xlu0 %4542
      %v4544 = vsel %vm2233, %v4543, 0
      %4546 = vmatprep.subr.mxu0 0.0
      %4547 = vmatpush1.msra.mxu0 %v3894
      %4548 = vmatprep.subr.mxu0 0.0
      %4549 = vmatpush1.msra.mxu0 %v3895
      %4550 = vmatprep.subr.mxu0 0.0
      %4551 = vmatpush1.msra.mxu0 %v3896
      %4552 = vmatprep.subr.mxu0 0.0
      %4553 = vmatpush1.msra.mxu0 %v3897
      %4554 = vmatprep.subr.mxu0 0.0
      %4555 = vmatpush1.msra.mxu0 0.0
      %4556 = vmatprep.subr.mxu0 0.0
      %4557 = vmatpush1.msra.mxu0 0.0
      %4558 = vmatprep.subr.mxu0 0.0
      %4559 = vmatpush1.msra.mxu0 0.0
      %4560 = vmatprep.subr.mxu0 0.0
      %4561 = vmatpush1.msra.mxu0 0.0
      %4562 = vmatprep.subr.mxu0 0.0
      %4563 = vmatpush1.msra.mxu0 0.0
      %4564 = vmatprep.subr.mxu0 0.0
      %4565 = vmatpush1.msra.mxu0 0.0
      %4566 = vmatprep.subr.mxu0 0.0
      %4567 = vmatpush1.msra.mxu0 0.0
      %4568 = vmatprep.subr.mxu0 0.0
      %4569 = vmatpush1.msra.mxu0 0.0
      %4570 = vmatprep.subr.mxu0 0.0
      %4571 = vmatpush1.msra.mxu0 0.0
      %4572 = vmatprep.subr.mxu0 0.0
      %4573 = vmatpush1.msra.mxu0 0.0
      %4574 = vmatprep.subr.mxu0 0.0
      %4575 = vmatpush1.msra.mxu0 0.0
      %4576 = vmatprep.subr.mxu0 0.0
      %4577 = vmatpush1.msra.mxu0 0.0
      %4578 = vmatprep.subr.mxu0 0.0
      %4579 = vmatpush1.msra.mxu0 0.0
      %4580 = vmatprep.subr.mxu0 0.0
      %4581 = vmatpush1.msra.mxu0 0.0
      %4582 = vmatprep.subr.mxu0 0.0
      %4583 = vmatpush1.msra.mxu0 0.0
      %4584 = vmatprep.subr.mxu0 0.0
      %4585 = vmatpush1.msra.mxu0 0.0
      %4586 = vmatprep.subr.mxu0 0.0
      %4587 = vmatpush1.msra.mxu0 0.0
      %4588 = vmatprep.subr.mxu0 0.0
      %4589 = vmatpush1.msra.mxu0 0.0
      %4590 = vmatprep.subr.mxu0 0.0
      %4591 = vmatpush1.msra.mxu0 0.0
      %4592 = vmatprep.subr.mxu0 0.0
      %4593 = vmatpush1.msra.mxu0 0.0
      %4594 = vmatprep.subr.mxu0 0.0
      %4595 = vmatpush1.msra.mxu0 0.0
      %4596 = vmatprep.subr.mxu0 0.0
      %4597 = vmatpush1.msra.mxu0 0.0
      %4598 = vmatprep.subr.mxu0 0.0
      %4599 = vmatpush1.msra.mxu0 0.0
      %4600 = vmatprep.subr.mxu0 0.0
      %4601 = vmatpush1.msra.mxu0 0.0
      %4602 = vmatprep.subr.mxu0 0.0
      %4603 = vmatpush1.msra.mxu0 0.0
      %4604 = vmatprep.subr.mxu0 0.0
      %4605 = vmatpush1.msra.mxu0 0.0
      %4606 = vmatprep.subr.mxu0 0.0
      %4607 = vmatpush1.msra.mxu0 0.0
      %4608 = vmatprep.subr.mxu0 0.0
      %4609 = vmatpush1.msra.mxu0 0.0
      %4610 = vmatprep.mubr.f32.mxu0 0.0
      %4611 = vmatmul.mubr.f32.gmra.mrb[0].mxu0 %v4544
      %v4612 = vpop.f32.mrb[0].mxu0
      %v4613 = vadd.f32 %v4539, %v4612
      %v4614 = vpop.f32.mrb[0].mxu0
      %4615 = vdwg.mxu0
      %v4616 = vadd.f32 %v4613, %v4269
      %v4618 = vlaneseq
      %v4619 = vshrl.u32 %v4618, 7
      %v4620 = vsub.s32 0, %v4619
      %v4621 = vrot.slane %v3748, %v4620
      %v4624 = vsel %vm1874, %v4616, 0
      %v4627 = vsel %vm1673, %v3736, 0
      %4629 = vmatprep.subr.mxu0 0.0
      %4630 = vmatpush1.msra.mxu0 %v4627
      %4631 = vmatprep.subr.mxu0 0.0
      %4632 = vmatpush1.msra.mxu0 0.0
      %4633 = vmatprep.subr.mxu0 0.0
      %4634 = vmatpush1.msra.mxu0 0.0
      %4635 = vmatprep.subr.mxu0 0.0
      %4636 = vmatpush1.msra.mxu0 0.0
      %4637 = vmatprep.subr.mxu0 0.0
      %4638 = vmatpush1.msra.mxu0 0.0
      %4639 = vmatprep.subr.mxu0 0.0
      %4640 = vmatpush1.msra.mxu0 0.0
      %4641 = vmatprep.subr.mxu0 0.0
      %4642 = vmatpush1.msra.mxu0 0.0
      %4643 = vmatprep.subr.mxu0 0.0
      %4644 = vmatpush1.msra.mxu0 0.0
      %4645 = vmatprep.subr.mxu0 0.0
      %4646 = vmatpush1.msra.mxu0 0.0
      %4647 = vmatprep.subr.mxu0 0.0
      %4648 = vmatpush1.msra.mxu0 0.0
      %4649 = vmatprep.subr.mxu0 0.0
      %4650 = vmatpush1.msra.mxu0 0.0
      %4651 = vmatprep.subr.mxu0 0.0
      %4652 = vmatpush1.msra.mxu0 0.0
      %4653 = vmatprep.subr.mxu0 0.0
      %4654 = vmatpush1.msra.mxu0 0.0
      %4655 = vmatprep.subr.mxu0 0.0
      %4656 = vmatpush1.msra.mxu0 0.0
      %4657 = vmatprep.subr.mxu0 0.0
      %4658 = vmatpush1.msra.mxu0 0.0
      %4659 = vmatprep.subr.mxu0 0.0
      %4660 = vmatpush1.msra.mxu0 0.0
      %4661 = vmatprep.subr.mxu0 0.0
      %4662 = vmatpush1.msra.mxu0 0.0
      %4663 = vmatprep.subr.mxu0 0.0
      %4664 = vmatpush1.msra.mxu0 0.0
      %4665 = vmatprep.subr.mxu0 0.0
      %4666 = vmatpush1.msra.mxu0 0.0
      %4667 = vmatprep.subr.mxu0 0.0
      %4668 = vmatpush1.msra.mxu0 0.0
      %4669 = vmatprep.subr.mxu0 0.0
      %4670 = vmatpush1.msra.mxu0 0.0
      %4671 = vmatprep.subr.mxu0 0.0
      %4672 = vmatpush1.msra.mxu0 0.0
      %4673 = vmatprep.subr.mxu0 0.0
      %4674 = vmatpush1.msra.mxu0 0.0
      %4675 = vmatprep.subr.mxu0 0.0
      %4676 = vmatpush1.msra.mxu0 0.0
      %4677 = vmatprep.subr.mxu0 0.0
      %4678 = vmatpush1.msra.mxu0 0.0
      %4679 = vmatprep.subr.mxu0 0.0
      %4680 = vmatpush1.msra.mxu0 0.0
      %4681 = vmatprep.subr.mxu0 0.0
      %4682 = vmatpush1.msra.mxu0 0.0
      %4683 = vmatprep.subr.mxu0 0.0
      %4684 = vmatpush1.msra.mxu0 0.0
      %4685 = vmatprep.subr.mxu0 0.0
      %4686 = vmatpush1.msra.mxu0 0.0
      %4687 = vmatprep.subr.mxu0 0.0
      %4688 = vmatpush1.msra.mxu0 0.0
      %4689 = vmatprep.subr.mxu0 0.0
      %4690 = vmatpush1.msra.mxu0 0.0
      %4691 = vmatprep.subr.mxu0 0.0
      %4692 = vmatpush1.msra.mxu0 0.0
      %4693 = vmatprep.mubr.f32.mxu0 0.0
      %4694 = vmatmul.mubr.f32.gmra.mrb[0].mxu0 %v4624
      %v4695 = vpop.f32.mrb[0].mxu0
      %v4696 = vadd.f32 %v4621, %v4695
      %v4697 = vpop.f32.mrb[0].mxu0
      %4698 = vdwg.mxu0
      %v4700 = vrot.slane %v3856, 1
      %v4702 = vadd.f32 %v3856, %v4700
      %s4703 = scalar_lea.vmem [#allocation3], 96
      %v4704 = vld [vmem:[%s4703] sm:$0xff]
      %v4705 = vld [vmem:[%s4703 + $0x8] sm:$0xff]
      %v4706 = vld [vmem:[%s4703 + $0x10] sm:$0xff]
      %v4707 = vld [vmem:[%s4703 + $0x18] sm:$0xff]
      %v4708 = vld [vmem:[%s4703 + $0x20] sm:$0xff]
      %v4709 = vld [vmem:[%s4703 + $0x28] sm:$0xff]
      %4710 = vmatprep.subr.mxu0 0.0
      %4711 = vmatpush1.msra.mxu0 %v4706
      %4712 = vmatprep.subr.mxu0 0.0
      %4713 = vmatpush1.msra.mxu0 %v4707
      %4714 = vmatprep.subr.mxu0 0.0
      %4715 = vmatpush1.msra.mxu0 %v4708
      %4716 = vmatprep.subr.mxu0 0.0
      %4717 = vmatpush1.msra.mxu0 %v4709
      %4718 = vmatprep.subr.mxu0 0.0
      %4719 = vmatpush1.msra.mxu0 0.0
      %4720 = vmatprep.subr.mxu0 0.0
      %4721 = vmatpush1.msra.mxu0 0.0
      %4722 = vmatprep.subr.mxu0 0.0
      %4723 = vmatpush1.msra.mxu0 0.0
      %4724 = vmatprep.subr.mxu0 0.0
      %4725 = vmatpush1.msra.mxu0 0.0
      %4726 = vmatprep.subr.mxu0 0.0
      %4727 = vmatpush1.msra.mxu0 0.0
      %4728 = vmatprep.subr.mxu0 0.0
      %4729 = vmatpush1.msra.mxu0 0.0
      %4730 = vmatprep.subr.mxu0 0.0
      %4731 = vmatpush1.msra.mxu0 0.0
      %4732 = vmatprep.subr.mxu0 0.0
      %4733 = vmatpush1.msra.mxu0 0.0
      %4734 = vmatprep.subr.mxu0 0.0
      %4735 = vmatpush1.msra.mxu0 0.0
      %4736 = vmatprep.subr.mxu0 0.0
      %4737 = vmatpush1.msra.mxu0 0.0
      %4738 = vmatprep.subr.mxu0 0.0
      %4739 = vmatpush1.msra.mxu0 0.0
      %4740 = vmatprep.subr.mxu0 0.0
      %4741 = vmatpush1.msra.mxu0 0.0
      %4742 = vmatprep.subr.mxu0 0.0
      %4743 = vmatpush1.msra.mxu0 0.0
      %4744 = vmatprep.subr.mxu0 0.0
      %4745 = vmatpush1.msra.mxu0 0.0
      %4746 = vmatprep.subr.mxu0 0.0
      %4747 = vmatpush1.msra.mxu0 0.0
      %4748 = vmatprep.subr.mxu0 0.0
      %4749 = vmatpush1.msra.mxu0 0.0
      %4750 = vmatprep.subr.mxu0 0.0
      %4751 = vmatpush1.msra.mxu0 0.0
      %4752 = vmatprep.subr.mxu0 0.0
      %4753 = vmatpush1.msra.mxu0 0.0
      %4754 = vmatprep.subr.mxu0 0.0
      %4755 = vmatpush1.msra.mxu0 0.0
      %4756 = vmatprep.subr.mxu0 0.0
      %4757 = vmatpush1.msra.mxu0 0.0
      %4758 = vmatprep.subr.mxu0 0.0
      %4759 = vmatpush1.msra.mxu0 0.0
      %4760 = vmatprep.subr.mxu0 0.0
      %4761 = vmatpush1.msra.mxu0 0.0
      %4762 = vmatprep.subr.mxu0 0.0
      %4763 = vmatpush1.msra.mxu0 0.0
      %4764 = vmatprep.subr.mxu0 0.0
      %4765 = vmatpush1.msra.mxu0 0.0
      %4766 = vmatprep.subr.mxu0 0.0
      %4767 = vmatpush1.msra.mxu0 0.0
      %4768 = vmatprep.subr.mxu0 0.0
      %4769 = vmatpush1.msra.mxu0 0.0
      %4770 = vmatprep.subr.mxu0 0.0
      %4771 = vmatpush1.msra.mxu0 0.0
      %4772 = vmatprep.subr.mxu0 0.0
      %4773 = vmatpush1.msra.mxu0 0.0
      %4774 = vmatprep.mubr.f32.mxu0 0.0
      %4775 = vmatmul.mubr.f32.gmra.mrb[0].mxu0 %v4544
      %v4776 = vpop.f32.mrb[0].mxu0
      %v4777 = vadd.f32 0.0, %v4776
      %v4778 = vpop.f32.mrb[0].mxu0
      %4779 = vdwg.mxu0
      %v4781 = vsel %vm2307, %v4696, 0
      %4783 = vmatprep.subr.mxu0 0.0
      %4784 = vmatpush1.msra.mxu0 %v4704
      %4785 = vmatprep.subr.mxu0 0.0
      %4786 = vmatpush1.msra.mxu0 %v4705
      %4787 = vmatprep.subr.mxu0 0.0
      %4788 = vmatpush1.msra.mxu0 0.0
      %4789 = vmatprep.subr.mxu0 0.0
      %4790 = vmatpush1.msra.mxu0 0.0
      %4791 = vmatprep.subr.mxu0 0.0
      %4792 = vmatpush1.msra.mxu0 0.0
      %4793 = vmatprep.subr.mxu0 0.0
      %4794 = vmatpush1.msra.mxu0 0.0
      %4795 = vmatprep.subr.mxu0 0.0
      %4796 = vmatpush1.msra.mxu0 0.0
      %4797 = vmatprep.subr.mxu0 0.0
      %4798 = vmatpush1.msra.mxu0 0.0
      %4799 = vmatprep.subr.mxu0 0.0
      %4800 = vmatpush1.msra.mxu0 0.0
      %4801 = vmatprep.subr.mxu0 0.0
      %4802 = vmatpush1.msra.mxu0 0.0
      %4803 = vmatprep.subr.mxu0 0.0
      %4804 = vmatpush1.msra.mxu0 0.0
      %4805 = vmatprep.subr.mxu0 0.0
      %4806 = vmatpush1.msra.mxu0 0.0
      %4807 = vmatprep.subr.mxu0 0.0
      %4808 = vmatpush1.msra.mxu0 0.0
      %4809 = vmatprep.subr.mxu0 0.0
      %4810 = vmatpush1.msra.mxu0 0.0
      %4811 = vmatprep.subr.mxu0 0.0
      %4812 = vmatpush1.msra.mxu0 0.0
      %4813 = vmatprep.subr.mxu0 0.0
      %4814 = vmatpush1.msra.mxu0 0.0
      %4815 = vmatprep.subr.mxu0 0.0
      %4816 = vmatpush1.msra.mxu0 0.0
      %4817 = vmatprep.subr.mxu0 0.0
      %4818 = vmatpush1.msra.mxu0 0.0
      %4819 = vmatprep.subr.mxu0 0.0
      %4820 = vmatpush1.msra.mxu0 0.0
      %4821 = vmatprep.subr.mxu0 0.0
      %4822 = vmatpush1.msra.mxu0 0.0
      %4823 = vmatprep.subr.mxu0 0.0
      %4824 = vmatpush1.msra.mxu0 0.0
      %4825 = vmatprep.subr.mxu0 0.0
      %4826 = vmatpush1.msra.mxu0 0.0
      %4827 = vmatprep.subr.mxu0 0.0
      %4828 = vmatpush1.msra.mxu0 0.0
      %4829 = vmatprep.subr.mxu0 0.0
      %4830 = vmatpush1.msra.mxu0 0.0
      %4831 = vmatprep.subr.mxu0 0.0
      %4832 = vmatpush1.msra.mxu0 0.0
      %4833 = vmatprep.subr.mxu0 0.0
      %4834 = vmatpush1.msra.mxu0 0.0
      %4835 = vmatprep.subr.mxu0 0.0
      %4836 = vmatpush1.msra.mxu0 0.0
      %4837 = vmatprep.subr.mxu0 0.0
      %4838 = vmatpush1.msra.mxu0 0.0
      %4839 = vmatprep.subr.mxu0 0.0
      %4840 = vmatpush1.msra.mxu0 0.0
      %4841 = vmatprep.subr.mxu0 0.0
      %4842 = vmatpush1.msra.mxu0 0.0
      %4843 = vmatprep.subr.mxu0 0.0
      %4844 = vmatpush1.msra.mxu0 0.0
      %4845 = vmatprep.subr.mxu0 0.0
      %4846 = vmatpush1.msra.mxu0 0.0
      %4847 = vmatprep.mubr.f32.mxu0 0.0
      %4848 = vmatmul.mubr.f32.gmra.mrb[0].mxu0 %v4781
      %v4849 = vpop.f32.mrb[0].mxu0
      %v4850 = vadd.f32 %v4777, %v4849
      %v4851 = vpop.f32.mrb[0].mxu0
      %4852 = vdwg.mxu0
      %v4853 = vlaneseq
      %v4854 = vshrl.u32 %v4853, 7
      %v4855 = vsub.s32 0, %v4854
      %v4856 = vrot.slane %v4702, %v4855
      %v4857 = vadd.f32 %v4850, %v4856
      %v4858 = vxor.u32 %v4857, 2147483648
      %v4859 = vmul.f32 %v4858, 1.442695
      %v4860 = vpow.pop %v4859
      %v4861 = vadd.f32 %v4860, 1.0
      %v4862 = vrcp.pop %v4861
      %v4863 = vmul.f32 1.0, %v4862
      %v4864 = vtanh.pop %v4857
      %v4865 = vmul.f32 %v4863, %v4528
      %4867 = vrot.lane.b32.xlu0 %v4864, 64
      %v4868 = vpop.permute.xlu0 %4867
      %v4870 = vmul.f32 %v4863, %v4868
      %4872 = vrot.lane.b32.xlu0 %v4870, 32
      %v4873 = vpop.permute.xlu0 %4872
      %v4875 = vadd.f32 %v4865, %v4873
      %v4876 = vtanh.pop %v4875
      %4878 = vrot.lane.b32.xlu0 %v4876, 64
      %v4879 = vpop.permute.xlu0 %4878
      %v4881 = vmul.f32 %v4863, %v4879
      %v4883 = vlaneseq
      %v4884 = vshrl.u32 %v4883, 7
      %v4885 = vsub.s32 0, %v4884
      %v4886 = vrot.slane %v3916, %v4885
      %4889 = vrot.lane.b32.xlu0 %v4881, 32
      %v4890 = vpop.permute.xlu0 %4889
      %v4891 = vsel %vm2233, %v4890, 0
      %4893 = vmatprep.subr.mxu0 0.0
      %4894 = vmatpush1.msra.mxu0 %v3898
      %4895 = vmatprep.subr.mxu0 0.0
      %4896 = vmatpush1.msra.mxu0 %v3899
      %4897 = vmatprep.subr.mxu0 0.0
      %4898 = vmatpush1.msra.mxu0 %v3900
      %4899 = vmatprep.subr.mxu0 0.0
      %4900 = vmatpush1.msra.mxu0 %v3901
      %4901 = vmatprep.subr.mxu0 0.0
      %4902 = vmatpush1.msra.mxu0 0.0
      %4903 = vmatprep.subr.mxu0 0.0
      %4904 = vmatpush1.msra.mxu0 0.0
      %4905 = vmatprep.subr.mxu0 0.0
      %4906 = vmatpush1.msra.mxu0 0.0
      %4907 = vmatprep.subr.mxu0 0.0
      %4908 = vmatpush1.msra.mxu0 0.0
      %4909 = vmatprep.subr.mxu0 0.0
      %4910 = vmatpush1.msra.mxu0 0.0
      %4911 = vmatprep.subr.mxu0 0.0
      %4912 = vmatpush1.msra.mxu0 0.0
      %4913 = vmatprep.subr.mxu0 0.0
      %4914 = vmatpush1.msra.mxu0 0.0
      %4915 = vmatprep.subr.mxu0 0.0
      %4916 = vmatpush1.msra.mxu0 0.0
      %4917 = vmatprep.subr.mxu0 0.0
      %4918 = vmatpush1.msra.mxu0 0.0
      %4919 = vmatprep.subr.mxu0 0.0
      %4920 = vmatpush1.msra.mxu0 0.0
      %4921 = vmatprep.subr.mxu0 0.0
      %4922 = vmatpush1.msra.mxu0 0.0
      %4923 = vmatprep.subr.mxu0 0.0
      %4924 = vmatpush1.msra.mxu0 0.0
      %4925 = vmatprep.subr.mxu0 0.0
      %4926 = vmatpush1.msra.mxu0 0.0
      %4927 = vmatprep.subr.mxu0 0.0
      %4928 = vmatpush1.msra.mxu0 0.0
      %4929 = vmatprep.subr.mxu0 0.0
      %4930 = vmatpush1.msra.mxu0 0.0
      %4931 = vmatprep.subr.mxu0 0.0
      %4932 = vmatpush1.msra.mxu0 0.0
      %4933 = vmatprep.subr.mxu0 0.0
      %4934 = vmatpush1.msra.mxu0 0.0
      %4935 = vmatprep.subr.mxu0 0.0
      %4936 = vmatpush1.msra.mxu0 0.0
      %4937 = vmatprep.subr.mxu0 0.0
      %4938 = vmatpush1.msra.mxu0 0.0
      %4939 = vmatprep.subr.mxu0 0.0
      %4940 = vmatpush1.msra.mxu0 0.0
      %4941 = vmatprep.subr.mxu0 0.0
      %4942 = vmatpush1.msra.mxu0 0.0
      %4943 = vmatprep.subr.mxu0 0.0
      %4944 = vmatpush1.msra.mxu0 0.0
      %4945 = vmatprep.subr.mxu0 0.0
      %4946 = vmatpush1.msra.mxu0 0.0
      %4947 = vmatprep.subr.mxu0 0.0
      %4948 = vmatpush1.msra.mxu0 0.0
      %4949 = vmatprep.subr.mxu0 0.0
      %4950 = vmatpush1.msra.mxu0 0.0
      %4951 = vmatprep.subr.mxu0 0.0
      %4952 = vmatpush1.msra.mxu0 0.0
      %4953 = vmatprep.subr.mxu0 0.0
      %4954 = vmatpush1.msra.mxu0 0.0
      %4955 = vmatprep.subr.mxu0 0.0
      %4956 = vmatpush1.msra.mxu0 0.0
      %4957 = vmatprep.mubr.f32.mxu0 0.0
      %4958 = vmatmul.mubr.f32.gmra.mrb[0].mxu0 %v4891
      %v4959 = vpop.f32.mrb[0].mxu0
      %v4960 = vadd.f32 %v4886, %v4959
      %v4961 = vpop.f32.mrb[0].mxu0
      %4962 = vdwg.mxu0
      %v4963 = vadd.f32 %v4960, %v4616
      %v4965 = vlaneseq
      %v4966 = vshrl.u32 %v4965, 7
      %v4967 = vsub.s32 0, %v4966
      %v4968 = vrot.slane %v3749, %v4967
      %v4971 = vsel %vm1874, %v4963, 0
      %v4974 = vsel %vm1673, %v3737, 0
      %4976 = vmatprep.subr.mxu0 0.0
      %4977 = vmatpush1.msra.mxu0 %v4974
      %4978 = vmatprep.subr.mxu0 0.0
      %4979 = vmatpush1.msra.mxu0 0.0
      %4980 = vmatprep.subr.mxu0 0.0
      %4981 = vmatpush1.msra.mxu0 0.0
      %4982 = vmatprep.subr.mxu0 0.0
      %4983 = vmatpush1.msra.mxu0 0.0
      %4984 = vmatprep.subr.mxu0 0.0
      %4985 = vmatpush1.msra.mxu0 0.0
      %4986 = vmatprep.subr.mxu0 0.0
      %4987 = vmatpush1.msra.mxu0 0.0
      %4988 = vmatprep.subr.mxu0 0.0
      %4989 = vmatpush1.msra.mxu0 0.0
      %4990 = vmatprep.subr.mxu0 0.0
      %4991 = vmatpush1.msra.mxu0 0.0
      %4992 = vmatprep.subr.mxu0 0.0
      %4993 = vmatpush1.msra.mxu0 0.0
      %4994 = vmatprep.subr.mxu0 0.0
      %4995 = vmatpush1.msra.mxu0 0.0
      %4996 = vmatprep.subr.mxu0 0.0
      %4997 = vmatpush1.msra.mxu0 0.0
      %4998 = vmatprep.subr.mxu0 0.0
      %4999 = vmatpush1.msra.mxu0 0.0
      %5000 = vmatprep.subr.mxu0 0.0
      %5001 = vmatpush1.msra.mxu0 0.0
      %5002 = vmatprep.subr.mxu0 0.0
      %5003 = vmatpush1.msra.mxu0 0.0
      %5004 = vmatprep.subr.mxu0 0.0
      %5005 = vmatpush1.msra.mxu0 0.0
      %5006 = vmatprep.subr.mxu0 0.0
      %5007 = vmatpush1.msra.mxu0 0.0
      %5008 = vmatprep.subr.mxu0 0.0
      %5009 = vmatpush1.msra.mxu0 0.0
      %5010 = vmatprep.subr.mxu0 0.0
      %5011 = vmatpush1.msra.mxu0 0.0
      %5012 = vmatprep.subr.mxu0 0.0
      %5013 = vmatpush1.msra.mxu0 0.0
      %5014 = vmatprep.subr.mxu0 0.0
      %5015 = vmatpush1.msra.mxu0 0.0
      %5016 = vmatprep.subr.mxu0 0.0
      %5017 = vmatpush1.msra.mxu0 0.0
      %5018 = vmatprep.subr.mxu0 0.0
      %5019 = vmatpush1.msra.mxu0 0.0
      %5020 = vmatprep.subr.mxu0 0.0
      %5021 = vmatpush1.msra.mxu0 0.0
      %5022 = vmatprep.subr.mxu0 0.0
      %5023 = vmatpush1.msra.mxu0 0.0
      %5024 = vmatprep.subr.mxu0 0.0
      %5025 = vmatpush1.msra.mxu0 0.0
      %5026 = vmatprep.subr.mxu0 0.0
      %5027 = vmatpush1.msra.mxu0 0.0
      %5028 = vmatprep.subr.mxu0 0.0
      %5029 = vmatpush1.msra.mxu0 0.0
      %5030 = vmatprep.subr.mxu0 0.0
      %5031 = vmatpush1.msra.mxu0 0.0
      %5032 = vmatprep.subr.mxu0 0.0
      %5033 = vmatpush1.msra.mxu0 0.0
      %5034 = vmatprep.subr.mxu0 0.0
      %5035 = vmatpush1.msra.mxu0 0.0
      %5036 = vmatprep.subr.mxu0 0.0
      %5037 = vmatpush1.msra.mxu0 0.0
      %5038 = vmatprep.subr.mxu0 0.0
      %5039 = vmatpush1.msra.mxu0 0.0
      %5040 = vmatprep.mubr.f32.mxu0 0.0
      %5041 = vmatmul.mubr.f32.gmra.mrb[0].mxu0 %v4971
      %v5042 = vpop.f32.mrb[0].mxu0
      %v5043 = vadd.f32 %v4968, %v5042
      %v5044 = vpop.f32.mrb[0].mxu0
      %5045 = vdwg.mxu0
      %v5047 = vrot.slane %v3857, 1
      %v5049 = vadd.f32 %v3857, %v5047
      %s5050 = scalar_lea.vmem [#allocation3], 144
      %v5051 = vld [vmem:[%s5050] sm:$0xff]
      %v5052 = vld [vmem:[%s5050 + $0x8] sm:$0xff]
      %v5053 = vld [vmem:[%s5050 + $0x10] sm:$0xff]
      %v5054 = vld [vmem:[%s5050 + $0x18] sm:$0xff]
      %v5055 = vld [vmem:[%s5050 + $0x20] sm:$0xff]
      %v5056 = vld [vmem:[%s5050 + $0x28] sm:$0xff]
      %5057 = vmatprep.subr.mxu0 0.0
      %5058 = vmatpush1.msra.mxu0 %v5053
      %5059 = vmatprep.subr.mxu0 0.0
      %5060 = vmatpush1.msra.mxu0 %v5054
      %5061 = vmatprep.subr.mxu0 0.0
      %5062 = vmatpush1.msra.mxu0 %v5055
      %5063 = vmatprep.subr.mxu0 0.0
      %5064 = vmatpush1.msra.mxu0 %v5056
      %5065 = vmatprep.subr.mxu0 0.0
      %5066 = vmatpush1.msra.mxu0 0.0
      %5067 = vmatprep.subr.mxu0 0.0
      %5068 = vmatpush1.msra.mxu0 0.0
      %5069 = vmatprep.subr.mxu0 0.0
      %5070 = vmatpush1.msra.mxu0 0.0
      %5071 = vmatprep.subr.mxu0 0.0
      %5072 = vmatpush1.msra.mxu0 0.0
      %5073 = vmatprep.subr.mxu0 0.0
      %5074 = vmatpush1.msra.mxu0 0.0
      %5075 = vmatprep.subr.mxu0 0.0
      %5076 = vmatpush1.msra.mxu0 0.0
      %5077 = vmatprep.subr.mxu0 0.0
      %5078 = vmatpush1.msra.mxu0 0.0
      %5079 = vmatprep.subr.mxu0 0.0
      %5080 = vmatpush1.msra.mxu0 0.0
      %5081 = vmatprep.subr.mxu0 0.0
      %5082 = vmatpush1.msra.mxu0 0.0
      %5083 = vmatprep.subr.mxu0 0.0
      %5084 = vmatpush1.msra.mxu0 0.0
      %5085 = vmatprep.subr.mxu0 0.0
      %5086 = vmatpush1.msra.mxu0 0.0
      %5087 = vmatprep.subr.mxu0 0.0
      %5088 = vmatpush1.msra.mxu0 0.0
      %5089 = vmatprep.subr.mxu0 0.0
      %5090 = vmatpush1.msra.mxu0 0.0
      %5091 = vmatprep.subr.mxu0 0.0
      %5092 = vmatpush1.msra.mxu0 0.0
      %5093 = vmatprep.subr.mxu0 0.0
      %5094 = vmatpush1.msra.mxu0 0.0
      %5095 = vmatprep.subr.mxu0 0.0
      %5096 = vmatpush1.msra.mxu0 0.0
      %5097 = vmatprep.subr.mxu0 0.0
      %5098 = vmatpush1.msra.mxu0 0.0
      %5099 = vmatprep.subr.mxu0 0.0
      %5100 = vmatpush1.msra.mxu0 0.0
      %5101 = vmatprep.subr.mxu0 0.0
      %5102 = vmatpush1.msra.mxu0 0.0
      %5103 = vmatprep.subr.mxu0 0.0
      %5104 = vmatpush1.msra.mxu0 0.0
      %5105 = vmatprep.subr.mxu0 0.0
      %5106 = vmatpush1.msra.mxu0 0.0
      %5107 = vmatprep.subr.mxu0 0.0
      %5108 = vmatpush1.msra.mxu0 0.0
      %5109 = vmatprep.subr.mxu0 0.0
      %5110 = vmatpush1.msra.mxu0 0.0
      %5111 = vmatprep.subr.mxu0 0.0
      %5112 = vmatpush1.msra.mxu0 0.0
      %5113 = vmatprep.subr.mxu0 0.0
      %5114 = vmatpush1.msra.mxu0 0.0
      %5115 = vmatprep.subr.mxu0 0.0
      %5116 = vmatpush1.msra.mxu0 0.0
      %5117 = vmatprep.subr.mxu0 0.0
      %5118 = vmatpush1.msra.mxu0 0.0
      %5119 = vmatprep.subr.mxu0 0.0
      %5120 = vmatpush1.msra.mxu0 0.0
      %5121 = vmatprep.mubr.f32.mxu0 0.0
      %5122 = vmatmul.mubr.f32.gmra.mrb[0].mxu0 %v4891
      %v5123 = vpop.f32.mrb[0].mxu0
      %v5124 = vadd.f32 0.0, %v5123
      %v5125 = vpop.f32.mrb[0].mxu0
      %5126 = vdwg.mxu0
      %v5128 = vsel %vm2307, %v5043, 0
      %5130 = vmatprep.subr.mxu0 0.0
      %5131 = vmatpush1.msra.mxu0 %v5051
      %5132 = vmatprep.subr.mxu0 0.0
      %5133 = vmatpush1.msra.mxu0 %v5052
      %5134 = vmatprep.subr.mxu0 0.0
      %5135 = vmatpush1.msra.mxu0 0.0
      %5136 = vmatprep.subr.mxu0 0.0
      %5137 = vmatpush1.msra.mxu0 0.0
      %5138 = vmatprep.subr.mxu0 0.0
      %5139 = vmatpush1.msra.mxu0 0.0
      %5140 = vmatprep.subr.mxu0 0.0
      %5141 = vmatpush1.msra.mxu0 0.0
      %5142 = vmatprep.subr.mxu0 0.0
      %5143 = vmatpush1.msra.mxu0 0.0
      %5144 = vmatprep.subr.mxu0 0.0
      %5145 = vmatpush1.msra.mxu0 0.0
      %5146 = vmatprep.subr.mxu0 0.0
      %5147 = vmatpush1.msra.mxu0 0.0
      %5148 = vmatprep.subr.mxu0 0.0
      %5149 = vmatpush1.msra.mxu0 0.0
      %5150 = vmatprep.subr.mxu0 0.0
      %5151 = vmatpush1.msra.mxu0 0.0
      %5152 = vmatprep.subr.mxu0 0.0
      %5153 = vmatpush1.msra.mxu0 0.0
      %5154 = vmatprep.subr.mxu0 0.0
      %5155 = vmatpush1.msra.mxu0 0.0
      %5156 = vmatprep.subr.mxu0 0.0
      %5157 = vmatpush1.msra.mxu0 0.0
      %5158 = vmatprep.subr.mxu0 0.0
      %5159 = vmatpush1.msra.mxu0 0.0
      %5160 = vmatprep.subr.mxu0 0.0
      %5161 = vmatpush1.msra.mxu0 0.0
      %5162 = vmatprep.subr.mxu0 0.0
      %5163 = vmatpush1.msra.mxu0 0.0
      %5164 = vmatprep.subr.mxu0 0.0
      %5165 = vmatpush1.msra.mxu0 0.0
      %5166 = vmatprep.subr.mxu0 0.0
      %5167 = vmatpush1.msra.mxu0 0.0
      %5168 = vmatprep.subr.mxu0 0.0
      %5169 = vmatpush1.msra.mxu0 0.0
      %5170 = vmatprep.subr.mxu0 0.0
      %5171 = vmatpush1.msra.mxu0 0.0
      %5172 = vmatprep.subr.mxu0 0.0
      %5173 = vmatpush1.msra.mxu0 0.0
      %5174 = vmatprep.subr.mxu0 0.0
      %5175 = vmatpush1.msra.mxu0 0.0
      %5176 = vmatprep.subr.mxu0 0.0
      %5177 = vmatpush1.msra.mxu0 0.0
      %5178 = vmatprep.subr.mxu0 0.0
      %5179 = vmatpush1.msra.mxu0 0.0
      %5180 = vmatprep.subr.mxu0 0.0
      %5181 = vmatpush1.msra.mxu0 0.0
      %5182 = vmatprep.subr.mxu0 0.0
      %5183 = vmatpush1.msra.mxu0 0.0
      %5184 = vmatprep.subr.mxu0 0.0
      %5185 = vmatpush1.msra.mxu0 0.0
      %5186 = vmatprep.subr.mxu0 0.0
      %5187 = vmatpush1.msra.mxu0 0.0
      %5188 = vmatprep.subr.mxu0 0.0
      %5189 = vmatpush1.msra.mxu0 0.0
      %5190 = vmatprep.subr.mxu0 0.0
      %5191 = vmatpush1.msra.mxu0 0.0
      %5192 = vmatprep.subr.mxu0 0.0
      %5193 = vmatpush1.msra.mxu0 0.0
      %5194 = vmatprep.mubr.f32.mxu0 0.0
      %5195 = vmatmul.mubr.f32.gmra.mrb[0].mxu0 %v5128
      %v5196 = vpop.f32.mrb[0].mxu0
      %v5197 = vadd.f32 %v5124, %v5196
      %v5198 = vpop.f32.mrb[0].mxu0
      %5199 = vdwg.mxu0
      %v5200 = vlaneseq
      %v5201 = vshrl.u32 %v5200, 7
      %v5202 = vsub.s32 0, %v5201
      %v5203 = vrot.slane %v5049, %v5202
      %v5204 = vadd.f32 %v5197, %v5203
      %v5205 = vxor.u32 %v5204, 2147483648
      %v5206 = vmul.f32 %v5205, 1.442695
      %v5207 = vpow.pop %v5206
      %v5208 = vadd.f32 %v5207, 1.0
      %v5209 = vrcp.pop %v5208
      %v5210 = vmul.f32 1.0, %v5209
      %v5211 = vtanh.pop %v5204
      %v5212 = vmul.f32 %v5210, %v4875
      %5214 = vrot.lane.b32.xlu0 %v5211, 64
      %v5215 = vpop.permute.xlu0 %5214
      %v5217 = vmul.f32 %v5210, %v5215
      %5219 = vrot.lane.b32.xlu0 %v5217, 32
      %v5220 = vpop.permute.xlu0 %5219
      %v5222 = vadd.f32 %v5212, %v5220
      %v5223 = vtanh.pop %v5222
      %5225 = vrot.lane.b32.xlu0 %v5223, 64
      %v5226 = vpop.permute.xlu0 %5225
      %v5228 = vmul.f32 %v5210, %v5226
      %v5230 = vlaneseq
      %v5231 = vshrl.u32 %v5230, 7
      %v5232 = vsub.s32 0, %v5231
      %v5233 = vrot.slane %v3917, %v5232
      %5236 = vrot.lane.b32.xlu0 %v5228, 32
      %v5237 = vpop.permute.xlu0 %5236
      %v5238 = vsel %vm2233, %v5237, 0
      %5240 = vmatprep.subr.mxu0 0.0
      %5241 = vmatpush1.msra.mxu0 %v3902
      %5242 = vmatprep.subr.mxu0 0.0
      %5243 = vmatpush1.msra.mxu0 %v3903
      %5244 = vmatprep.subr.mxu0 0.0
      %5245 = vmatpush1.msra.mxu0 %v3904
      %5246 = vmatprep.subr.mxu0 0.0
      %5247 = vmatpush1.msra.mxu0 %v3905
      %5248 = vmatprep.subr.mxu0 0.0
      %5249 = vmatpush1.msra.mxu0 0.0
      %5250 = vmatprep.subr.mxu0 0.0
      %5251 = vmatpush1.msra.mxu0 0.0
      %5252 = vmatprep.subr.mxu0 0.0
      %5253 = vmatpush1.msra.mxu0 0.0
      %5254 = vmatprep.subr.mxu0 0.0
      %5255 = vmatpush1.msra.mxu0 0.0
      %5256 = vmatprep.subr.mxu0 0.0
      %5257 = vmatpush1.msra.mxu0 0.0
      %5258 = vmatprep.subr.mxu0 0.0
      %5259 = vmatpush1.msra.mxu0 0.0
      %5260 = vmatprep.subr.mxu0 0.0
      %5261 = vmatpush1.msra.mxu0 0.0
      %5262 = vmatprep.subr.mxu0 0.0
      %5263 = vmatpush1.msra.mxu0 0.0
      %5264 = vmatprep.subr.mxu0 0.0
      %5265 = vmatpush1.msra.mxu0 0.0
      %5266 = vmatprep.subr.mxu0 0.0
      %5267 = vmatpush1.msra.mxu0 0.0
      %5268 = vmatprep.subr.mxu0 0.0
      %5269 = vmatpush1.msra.mxu0 0.0
      %5270 = vmatprep.subr.mxu0 0.0
      %5271 = vmatpush1.msra.mxu0 0.0
      %5272 = vmatprep.subr.mxu0 0.0
      %5273 = vmatpush1.msra.mxu0 0.0
      %5274 = vmatprep.subr.mxu0 0.0
      %5275 = vmatpush1.msra.mxu0 0.0
      %5276 = vmatprep.subr.mxu0 0.0
      %5277 = vmatpush1.msra.mxu0 0.0
      %5278 = vmatprep.subr.mxu0 0.0
      %5279 = vmatpush1.msra.mxu0 0.0
      %5280 = vmatprep.subr.mxu0 0.0
      %5281 = vmatpush1.msra.mxu0 0.0
      %5282 = vmatprep.subr.mxu0 0.0
      %5283 = vmatpush1.msra.mxu0 0.0
      %5284 = vmatprep.subr.mxu0 0.0
      %5285 = vmatpush1.msra.mxu0 0.0
      %5286 = vmatprep.subr.mxu0 0.0
      %5287 = vmatpush1.msra.mxu0 0.0
      %5288 = vmatprep.subr.mxu0 0.0
      %5289 = vmatpush1.msra.mxu0 0.0
      %5290 = vmatprep.subr.mxu0 0.0
      %5291 = vmatpush1.msra.mxu0 0.0
      %5292 = vmatprep.subr.mxu0 0.0
      %5293 = vmatpush1.msra.mxu0 0.0
      %5294 = vmatprep.subr.mxu0 0.0
      %5295 = vmatpush1.msra.mxu0 0.0
      %5296 = vmatprep.subr.mxu0 0.0
      %5297 = vmatpush1.msra.mxu0 0.0
      %5298 = vmatprep.subr.mxu0 0.0
      %5299 = vmatpush1.msra.mxu0 0.0
      %5300 = vmatprep.subr.mxu0 0.0
      %5301 = vmatpush1.msra.mxu0 0.0
      %5302 = vmatprep.subr.mxu0 0.0
      %5303 = vmatpush1.msra.mxu0 0.0
      %5304 = vmatprep.mubr.f32.mxu0 0.0
      %5305 = vmatmul.mubr.f32.gmra.mrb[0].mxu0 %v5238
      %v5306 = vpop.f32.mrb[0].mxu0
      %v5307 = vadd.f32 %v5233, %v5306
      %v5308 = vpop.f32.mrb[0].mxu0
      %5309 = vdwg.mxu0
      %v5310 = vadd.f32 %v5307, %v4963
      %5311 = vst.msk [vmem:[%s1190] sm:$0xff] %vm1874, %v4269
      %5312 = vst.msk [vmem:[%s1190 + $0x8] sm:$0xff] %vm1874, %v4616
      %5313 = vst.msk [vmem:[%s1190 + $0x10] sm:$0xff] %vm1874, %v4963
      %5314 = vst.msk [vmem:[%s1190 + $0x18] sm:$0xff] %vm1874, %v5310
      %v5315 = vmul.f32 %v4266, 1.442695
      %v5316 = vpow.pop %v5315
      %v5317 = vmul.f32 %v4613, 1.442695
      %v5318 = vpow.pop %v5317
      %v5319 = vmul.f32 %v4960, 1.442695
      %v5320 = vpow.pop %v5319
      %v5321 = vmul.f32 %v5307, 1.442695
      %v5322 = vpow.pop %v5321
      %v5323 = vadd.f32 %v5316, 0.01
      %v5324 = vadd.f32 %v5318, 0.01
      %v5325 = vadd.f32 %v5320, 0.01
      %v5326 = vadd.f32 %v5322, 0.01
      %5331 = vrot.lane.b32.xlu0 %v5323, 127
      %v5332 = vpop.permute.xlu0 %5331
      %5333 = vrot.lane.b32.xlu0 %v5324, 127
      %v5334 = vpop.permute.xlu0 %5333
      %5335 = vrot.lane.b32.xlu0 %v5325, 127
      %v5336 = vpop.permute.xlu0 %5335
      %5337 = vrot.lane.b32.xlu0 %v5326, 127
      %v5338 = vpop.permute.xlu0 %5337
      %v5343 = vmul.f32 %v5323, %v5332
      %v5344 = vmul.f32 %v5324, %v5334
      %v5345 = vmul.f32 %v5325, %v5336
      %v5346 = vmul.f32 %v5326, %v5338
      %v5347 = vrsqrt.pop %v5343
      %v5348 = vmul.f32 %v5343, %v5347
      %vm5349 = vcmp.eq.f32.partialorder %v5343, inf
      %v5350 = vsel %vm5349, %v5343, %v5348
      %vm5351 = vcmp.eq.f32.partialorder %v5343, 0.0
      %v5352 = vand.u32 %v5343, 2147483648
      %v5353 = vsel %vm5351, %v5352, %v5350
      %v5354 = vrsqrt.pop %v5344
      %v5355 = vmul.f32 %v5344, %v5354
      %vm5356 = vcmp.eq.f32.partialorder %v5344, inf
      %v5357 = vsel %vm5356, %v5344, %v5355
      %vm5358 = vcmp.eq.f32.partialorder %v5344, 0.0
      %v5359 = vand.u32 %v5344, 2147483648
      %v5360 = vsel %vm5358, %v5359, %v5357
      %v5361 = vrsqrt.pop %v5345
      %v5362 = vmul.f32 %v5345, %v5361
      %vm5363 = vcmp.eq.f32.partialorder %v5345, inf
      %v5364 = vsel %vm5363, %v5345, %v5362
      %vm5365 = vcmp.eq.f32.partialorder %v5345, 0.0
      %v5366 = vand.u32 %v5345, 2147483648
      %v5367 = vsel %vm5365, %v5366, %v5364
      %v5368 = vrsqrt.pop %v5346
      %v5369 = vmul.f32 %v5346, %v5368
      %vm5370 = vcmp.eq.f32.partialorder %v5346, inf
      %v5371 = vsel %vm5370, %v5346, %v5369
      %vm5372 = vcmp.eq.f32.partialorder %v5346, 0.0
      %v5373 = vand.u32 %v5346, 2147483648
      %v5374 = vsel %vm5372, %v5373, %v5371
      %v5375 = vtanh.pop %v4266
      %v5376 = vtanh.pop %v4613
      %v5377 = vtanh.pop %v4960
      %v5378 = vtanh.pop %v5307
      %5383 = vrot.lane.b32.xlu0 %v5375, 126
      %v5384 = vpop.permute.xlu0 %5383
      %5385 = vrot.lane.b32.xlu0 %v5376, 126
      %v5386 = vpop.permute.xlu0 %5385
      %5387 = vrot.lane.b32.xlu0 %v5377, 126
      %v5388 = vpop.permute.xlu0 %5387
      %5389 = vrot.lane.b32.xlu0 %v5378, 126
      %v5390 = vpop.permute.xlu0 %5389
      %v5395 = vmul.f32 %v5353, %v5384
      %v5396 = vmul.f32 %v5360, %v5386
      %v5397 = vmul.f32 %v5367, %v5388
      %v5398 = vmul.f32 %v5374, %v5390
      %v5399 = vadd.f32 %v5323, 0.0
      %v5400 = vadd.f32 %v5399, %v5324
      %v5401 = vadd.f32 %v5400, %v5325
      %v5402 = vadd.f32 %v5401, %v5326
      %v5403 = vmul.f32 %v5399, 0.16
      %v5404 = vmul.f32 %v5400, 0.16
      %v5405 = vmul.f32 %v5401, 0.16
      %v5406 = vmul.f32 %v5402, 0.16
      %v5407 = vadd.f32 %v5395, 0.0
      %v5408 = vadd.f32 %v5407, %v5396
      %v5409 = vadd.f32 %v5408, %v5397
      %v5410 = vadd.f32 %v5409, %v5398
      %v5411 = vmul.f32 %v5407, 0.16
      %v5412 = vmul.f32 %v5408, 0.16
      %v5413 = vmul.f32 %v5409, 0.16
      %v5414 = vmul.f32 %v5410, 0.16
      %v5415 = vld [vmem:[%s9] sm:$0xff]
      %v5416 = vadd.f32 %v4269, 0.0
      %v5417 = vadd.f32 %v5416, %v4616
      %v5418 = vadd.f32 %v5417, %v4963
      %v5419 = vadd.f32 %v5418, %v5310
      %v5420 = vadd.f32 %v5415, %v5416
      %v5421 = vadd.f32 %v5415, %v5417
      %v5422 = vadd.f32 %v5415, %v5418
      %v5423 = vadd.f32 %v5415, %v5419
      %5428 = vrot.lane.b32.xlu0 %v5403, 127
      %v5429 = vpop.permute.xlu0 %5428
      %5430 = vrot.lane.b32.xlu0 %v5404, 127
      %v5431 = vpop.permute.xlu0 %5430
      %5432 = vrot.lane.b32.xlu0 %v5405, 127
      %v5433 = vpop.permute.xlu0 %5432
      %5434 = vrot.lane.b32.xlu0 %v5406, 127
      %v5435 = vpop.permute.xlu0 %5434
      %v5440 = vmul.f32 %v5403, %v5429
      %v5441 = vmul.f32 %v5404, %v5431
      %v5442 = vmul.f32 %v5405, %v5433
      %v5443 = vmul.f32 %v5406, %v5435
      %v5444 = vmul.f32 %v5411, %v5411
      %v5445 = vmul.f32 %v5412, %v5412
      %v5446 = vmul.f32 %v5413, %v5413
      %v5447 = vmul.f32 %v5414, %v5414
      %v5448 = vsub.f32 %v5440, %v5444
      %v5449 = vsub.f32 %v5441, %v5445
      %v5450 = vsub.f32 %v5442, %v5446
      %v5451 = vsub.f32 %v5443, %v5447
      %v5452 = vld [vmem:[%s5] sm:$0xff]
      %v5453 = vld [vmem:[%s5 + $0x8] sm:$0xff]
      %v5454 = vld [vmem:[%s5 + $0x10] sm:$0xff]
      %v5455 = vld [vmem:[%s5 + $0x18] sm:$0xff]
      %v5456 = vsub.f32 %v5452, %v5420
      %v5457 = vsub.f32 %v5453, %v5421
      %v5458 = vsub.f32 %v5454, %v5422
      %v5459 = vsub.f32 %v5455, %v5423
      %v5460 = vmul.f32 %v5456, %v5456
      %v5461 = vmul.f32 %v5457, %v5457
      %v5462 = vmul.f32 %v5458, %v5458
      %v5463 = vmul.f32 %v5459, %v5459
      %5464 = vrot.lane.b32.xlu0 %v5403, 125
      %v5465 = vpop.permute.xlu0 %5464
      %5466 = vrot.lane.b32.xlu0 %v5404, 125
      %v5467 = vpop.permute.xlu0 %5466
      %5468 = vrot.lane.b32.xlu0 %v5405, 125
      %v5469 = vpop.permute.xlu0 %5468
      %5470 = vrot.lane.b32.xlu0 %v5406, 125
      %v5471 = vpop.permute.xlu0 %5470
      %v5476 = vmul.f32 %v5460, %v5465
      %v5477 = vmul.f32 %v5461, %v5467
      %v5478 = vmul.f32 %v5462, %v5469
      %v5479 = vmul.f32 %v5463, %v5471
      %v5480 = vmul.f32 %v5460, %v5429
      %v5481 = vmul.f32 %v5461, %v5431
      %v5482 = vmul.f32 %v5462, %v5433
      %v5483 = vmul.f32 %v5463, %v5435
      %5488 = vrot.lane.b32.xlu0 %v5480, 127
      %v5489 = vpop.permute.xlu0 %5488
      %5490 = vrot.lane.b32.xlu0 %v5481, 127
      %v5491 = vpop.permute.xlu0 %5490
      %5492 = vrot.lane.b32.xlu0 %v5482, 127
      %v5493 = vpop.permute.xlu0 %5492
      %5494 = vrot.lane.b32.xlu0 %v5483, 127
      %v5495 = vpop.permute.xlu0 %5494
      %v5500 = vadd.f32 %v5476, %v5489
      %v5501 = vadd.f32 %v5477, %v5491
      %v5502 = vadd.f32 %v5478, %v5493
      %v5503 = vadd.f32 %v5479, %v5495
      %v5504 = vmul.f32 %v5411, 2.0
      %v5505 = vmul.f32 %v5412, 2.0
      %v5506 = vmul.f32 %v5413, 2.0
      %v5507 = vmul.f32 %v5414, 2.0
      %5512 = vrot.lane.b32.xlu0 %v5456, 2
      %v5513 = vpop.permute.xlu0 %5512
      %5514 = vrot.lane.b32.xlu0 %v5457, 2
      %v5515 = vpop.permute.xlu0 %5514
      %5516 = vrot.lane.b32.xlu0 %v5458, 2
      %v5517 = vpop.permute.xlu0 %5516
      %5518 = vrot.lane.b32.xlu0 %v5459, 2
      %v5519 = vpop.permute.xlu0 %5518
      %v5524 = vmul.f32 %v5504, %v5513
      %v5525 = vmul.f32 %v5505, %v5515
      %v5526 = vmul.f32 %v5506, %v5517
      %v5527 = vmul.f32 %v5507, %v5519
      %5528 = vrot.lane.b32.xlu0 %v5456, 1
      %v5529 = vpop.permute.xlu0 %5528
      %5530 = vrot.lane.b32.xlu0 %v5457, 1
      %v5531 = vpop.permute.xlu0 %5530
      %5532 = vrot.lane.b32.xlu0 %v5458, 1
      %v5533 = vpop.permute.xlu0 %5532
      %5534 = vrot.lane.b32.xlu0 %v5459, 1
      %v5535 = vpop.permute.xlu0 %5534
      %v5540 = vmul.f32 %v5524, %v5529
      %v5541 = vmul.f32 %v5525, %v5531
      %v5542 = vmul.f32 %v5526, %v5533
      %v5543 = vmul.f32 %v5527, %v5535
      %5548 = vrot.lane.b32.xlu0 %v5540, 126
      %v5549 = vpop.permute.xlu0 %5548
      %5550 = vrot.lane.b32.xlu0 %v5541, 126
      %v5551 = vpop.permute.xlu0 %5550
      %5552 = vrot.lane.b32.xlu0 %v5542, 126
      %v5553 = vpop.permute.xlu0 %5552
      %5554 = vrot.lane.b32.xlu0 %v5543, 126
      %v5555 = vpop.permute.xlu0 %5554
      %v5560 = vsub.f32 %v5500, %v5549
      %v5561 = vsub.f32 %v5501, %v5551
      %v5562 = vsub.f32 %v5502, %v5553
      %v5563 = vsub.f32 %v5503, %v5555
      %5568 = vrot.lane.b32.xlu0 %v5448, 126
      %v5569 = vpop.permute.xlu0 %5568
      %5570 = vrot.lane.b32.xlu0 %v5449, 126
      %v5571 = vpop.permute.xlu0 %5570
      %5572 = vrot.lane.b32.xlu0 %v5450, 126
      %v5573 = vpop.permute.xlu0 %5572
      %5574 = vrot.lane.b32.xlu0 %v5451, 126
      %v5575 = vpop.permute.xlu0 %5574
      %v5580 = vrcp.pop %v5569
      %v5581 = vmul.f32 %v5560, %v5580
      %v5582 = vrcp.pop %v5571
      %v5583 = vmul.f32 %v5561, %v5582
      %v5584 = vrcp.pop %v5573
      %v5585 = vmul.f32 %v5562, %v5584
      %v5586 = vrcp.pop %v5575
      %v5587 = vmul.f32 %v5563, %v5586
      %v5588 = vlog2.pop %v5448
      %v5589 = vmul.f32 %v5588, 0.6931472
      %v5590 = vlog2.pop %v5449
      %v5591 = vmul.f32 %v5590, 0.6931472
      %v5592 = vlog2.pop %v5450
      %v5593 = vmul.f32 %v5592, 0.6931472
      %v5594 = vlog2.pop %v5451
      %v5595 = vmul.f32 %v5594, 0.6931472
      %5600 = vrot.lane.b32.xlu0 %v5589, 126
      %v5601 = vpop.permute.xlu0 %5600
      %5602 = vrot.lane.b32.xlu0 %v5591, 126
      %v5603 = vpop.permute.xlu0 %5602
      %5604 = vrot.lane.b32.xlu0 %v5593, 126
      %v5605 = vpop.permute.xlu0 %5604
      %5606 = vrot.lane.b32.xlu0 %v5595, 126
      %v5607 = vpop.permute.xlu0 %5606
      %v5612 = vadd.f32 %v5581, %v5601
      %v5613 = vadd.f32 %v5583, %v5603
      %v5614 = vadd.f32 %v5585, %v5605
      %v5615 = vadd.f32 %v5587, %v5607
      %v5616 = vmul.f32 %v5612, 0.5
      %v5617 = vmul.f32 %v5613, 0.5
      %v5618 = vmul.f32 %v5614, 0.5
      %v5619 = vmul.f32 %v5615, 0.5
      %vm5620 = vcmask 7168
      %v5621 = vsel %vm5620, %v5616, 0.0
      %v5622 = vsel %vm5620, %v5617, 0.0
      %v5623 = vadd.f32 %v5621, %v5622
      %v5624 = vsel %vm5620, %v5618, 0.0
      %v5625 = vadd.f32 %v5623, %v5624
      %v5626 = vsel %vm5620, %v5619, 0.0
      %v5627 = vadd.f32 %v5625, %v5626
      %5628 = vadd.xlane.f32.xlu0 %v5627
      %v5629 = vpop.xlane.xlu0 %5628
      %v5630 = vrot.slane %v5629, 4
      %v5631 = vadd.f32 %v5629, %v5630
      %v5632 = vrot.slane %v5631, 2
      %v5633 = vadd.f32 %v5631, %v5632
      %v5634 = vrot.slane %v5633, 1
      %v5635 = vadd.f32 %v5633, %v5634
      %s5636 = vtos %v5635
      %v5637 = vstv %s5636
      %5638 = vst.msk [vmem:[%s1193] sm:$0x1] %vm1852, %v5637
      %p5639 = scmp.lt.s32.totalorder %s79, 1
      %s5640 = scalar_select %p5639, %s79, 1
      %s5641 = smul.addr %s5640, 4
      %s5642 = smul.addr %s5641, 8
      %s5643 = scalar_lea.vmem %s63, %s5642
      %p5644 = scmp.lt.s32.totalorder %s79, 1
      %s5645 = scalar_select %p5644, %s79, 1
      %s5646 = scalar_lea.vmem %s65, %s5645
      %p5647 = scmp.lt.s32.totalorder %s79, 1
      %s5648 = scalar_select %p5647, %s79, 1
      %s5649 = scalar_lea.vmem %s67, %s5648
      // Predicated region
      $region145: #{model_forward.3} parent=143 // pred_check
        %p5650 = pneg %p798
      $region146: #{model_forward.3} parent=143 // pred_check_branch
        %5652 = sbr.rel (%p5650) target = $region148
      $region147: #{model_forward.3} parent=143 // pred_region
        _
      $region148: #{model_forward.3} parent=143 // pred_fallthru
        _
      // Predicated region
      $region149: #{model_forward.3} parent=143 // pred_check
        %p5653 = pneg %p824
      $region150: #{model_forward.3} parent=143 // pred_check_branch
        %5655 = sbr.rel (%p5653) target = $region152
      $region151: #{model_forward.3} parent=143 // pred_region
        _
      $region152: #{model_forward.3} parent=143 // pred_fallthru
        _
      // Predicated region
      $region153: #{model_forward.3} parent=143 // pred_check
        %p5656 = pneg %p850
      $region154: #{model_forward.3} parent=143 // pred_check_branch
        %5658 = sbr.rel (%p5656) target = $region156
      $region155: #{model_forward.3} parent=143 // pred_region
        _
      $region156: #{model_forward.3} parent=143 // pred_fallthru
        _
    $region144: #{model_forward.3} parent=5 // pred_fallthru
      _
    %p5659 = scmp.le.s32.totalorder 2, %s74
    // Predicated region
    $region157: #{model_forward.3} parent=5 // pred_check
      %p5660 = pneg %p5659
    $region158: #{model_forward.3} parent=5 // pred_check_branch
      %5662 = sbr.rel (%p5660) target = $region160
    $region159: #{model_forward.3} parent=5 // pred_region
      %s5663 = ssub.s32 %s74, 2
      // Predicated region
      $region161: #{model_forward.3} parent=159 // pred_check
        %p5664 = pneg %p804
      $region162: #{model_forward.3} parent=159 // pred_check_branch
        %5666 = sbr.rel (%p5664) target = $region164
      $region163: #{model_forward.3} parent=159 // pred_region
        %p5667 = scmp.lt.s32.totalorder %s80, 1
        %s5668 = scalar_select %p5667, %s80, 1
        %s5669 = smul.addr %s5668, 4
        %s5670 = smul.addr %s5669, 8
        %s5671 = scalar_lea.vmem %s63, %s5670
      $region164: #{model_forward.3} parent=159 // pred_fallthru
        _
      // Predicated region
      $region165: #{model_forward.3} parent=159 // pred_check
        %p5672 = pneg %p830
      $region166: #{model_forward.3} parent=159 // pred_check_branch
        %5674 = sbr.rel (%p5672) target = $region168
      $region167: #{model_forward.3} parent=159 // pred_region
        %p5675 = scmp.lt.s32.totalorder %s80, 1
        %s5676 = scalar_select %p5675, %s80, 1
        %s5677 = scalar_lea.vmem %s65, %s5676
      $region168: #{model_forward.3} parent=159 // pred_fallthru
        _
      // Predicated region
      $region169: #{model_forward.3} parent=159 // pred_check
        %p5678 = pneg %p856
      $region170: #{model_forward.3} parent=159 // pred_check_branch
        %5680 = sbr.rel (%p5678) target = $region172
      $region171: #{model_forward.3} parent=159 // pred_region
        %p5681 = scmp.lt.s32.totalorder %s80, 1
        %s5682 = scalar_select %p5681, %s80, 1
        %s5683 = scalar_lea.vmem %s67, %s5682
      $region172: #{model_forward.3} parent=159 // pred_fallthru
        _
    $region160: #{model_forward.3} parent=5 // pred_fallthru
      _
  $region6: #{model_forward.3} parent=0 // loop_footer
    %s78 = sadd.s32 1, %s74
  $region7: #{model_forward.3} parent=0 // loop_footer_branch
    %73 = sbr.rel target = $region3
  $region8: #{model_forward.3} parent=0 // loop_exit
    _

</llo_original>
